<compile_context>
chip_gen: v5e
topology: v5e:2x2
jax: 0.10.0
libtpu: 0.0.40
codegen_flags: <defaults>
</compile_context>

<pallas_src>
import jax
import jax.numpy as jnp
from jax import lax
from jax.experimental import pallas as pl
from jax.experimental.pallas import tpu as pltpu


def _residual_block_kernel(x_ref, w1_ref, w2_ref, o_ref, pad_ref, stage_ref):
    # x_ref    : (1, H, W, C)    f32   input tile (also the exact-f32 residual)
    # w1_ref   : (3, 3*C, C)     bf16  conv1 weights, ky-major, kx folded into K
    # w2_ref   : (3, 3*C, C)     bf16  conv2 weights
    # o_ref    : (1, H, W, C)    f32   output tile
    # pad_ref  : (H+2, W+2, C)   VMEM scratch: zero-padded activation
    # stage_ref: (H+2, W, 3*C)   VMEM scratch: kx-shifted slabs at lane offsets
    #                            0 / C / 2C (multiples of 128)
    _, H, W, C = o_ref.shape
    sdt = pad_ref.dtype

    # ---- zero ONLY the 1-wide borders; interior is fully overwritten --------
    zrow = jnp.zeros((1, W + 2, C), sdt)
    zcol = jnp.zeros((H + 2, 1, C), sdt)
    pad_ref[0:1, :, :] = zrow
    pad_ref[H + 1:H + 2, :, :] = zrow
    pad_ref[:, 0:1, :] = zcol
    pad_ref[:, W + 1:W + 2, :] = zcol

    # Input activation into the padded interior (single cast if staging is bf16).
    pad_ref[1:H + 1, 1:W + 1, :] = x_ref[0].astype(sdt)

    def conv3x3(w_ref):
        # Stage the three kx-shifted slabs side by side on the lane axis, then
        # one matmul per ky with K = 3*C.
        for kx in range(3):
            stage_ref[:, :, kx * C:(kx + 1) * C] = pad_ref[:, kx:kx + W, :]
        acc = jnp.zeros((H * W, C), jnp.float32)
        for ky in range(3):
            patch = stage_ref[ky:ky + H, :, :].reshape(H * W, 3 * C)
            acc = acc + jnp.dot(patch.astype(jnp.bfloat16), w_ref[ky],
                                preferred_element_type=jnp.float32)
        return acc

    # conv1 + ReLU; the intermediate y stays entirely in VMEM.
    y = jnp.maximum(conv3x3(w1_ref), 0.0)
    pad_ref[1:H + 1, 1:W + 1, :] = y.reshape(H, W, C).astype(sdt)  # borders stay 0

    # conv2, then *0.1 and residual add in exact f32 (residual = resident x tile).
    z = conv3x3(w2_ref)
    o_ref[...] = (z.reshape(1, H, W, C) * jnp.float32(0.1)
                  + x_ref[...]).astype(o_ref.dtype)


def _prep_weight(w_oihw):
    # OIHW -> HWIO -> (ky, kx*Cin + cin, cout): kx folded into the contraction dim.
    O, I, KH, KW = w_oihw.shape
    w = jnp.transpose(w_oihw, (2, 3, 1, 0))              # (ky, kx, I, O)
    return w.reshape(KH, KW * I, O).astype(jnp.bfloat16)


def residual_block_forward(x_nchw, w1_oihw, w2_oihw):
    """Pallas implementation of _Residual_Block.forward (NCHW in, NCHW out)."""
    N, C, H, W = x_nchw.shape
    x = jnp.transpose(x_nchw, (0, 2, 3, 1))              # NHWC, channels on lanes
    w1 = _prep_weight(w1_oihw)
    w2 = _prep_weight(w2_oihw)

    # bf16 staging halves pad/stage VMEM and copy bytes and removes in-loop
    # casts, but the layout-free (H, W, 3C) -> (H*W, 3C) reshape needs
    # W % 16 == 0 for packed bf16 (8 for f32); fall back to f32 staging else.
    stage_dtype = jnp.bfloat16 if W % 16 == 0 else jnp.float32

    # NOTE: for larger images on v7x (64 MiB VMEM) add spatial row-tiling with a
    # 1-row halo and re-budget scratch; for better MXU row occupancy on v6e,
    # block several batch images per grid step so M = nb*H*W approaches 256.
    out = pl.pallas_call(
        _residual_block_kernel,
        out_shape=jax.ShapeDtypeStruct((N, H, W, C), x.dtype),
        grid=(N,),
        in_specs=[
            pl.BlockSpec((1, H, W, C), lambda n: (n, 0, 0, 0)),
            pl.BlockSpec((3, 3 * C, C), lambda n: (0, 0, 0)),
            pl.BlockSpec((3, 3 * C, C), lambda n: (0, 0, 0)),
        ],
        out_specs=pl.BlockSpec((1, H, W, C), lambda n: (n, 0, 0, 0)),
        scratch_shapes=[
            pltpu.VMEM((H + 2, W + 2, C), stage_dtype),
            pltpu.VMEM((H + 2, W, 3 * C), stage_dtype),
        ],
        compiler_params=pltpu.CompilerParams(
            dimension_semantics=("parallel",)),           # batch across TCs
    )(x, w1, w2)
    return jnp.transpose(out, (0, 3, 1, 2))               # back to NCHW


def _reference(x_nchw, w1_oihw, w2_oihw):
    dn = lax.conv_dimension_numbers(x_nchw.shape, w1_oihw.shape,
                                    ('NCHW', 'OIHW', 'NCHW'))
    y = lax.conv_general_dilated(x_nchw, w1_oihw, (1, 1), 'SAME',
                                 dimension_numbers=dn)
    y = jnp.maximum(y, 0.0)
    z = lax.conv_general_dilated(y, w2_oihw, (1, 1), 'SAME',
                                 dimension_numbers=dn)
    return z * 0.1 + x_nchw


if __name__ == "__main__":
    key = jax.random.PRNGKey(0)
    kx, k1, k2 = jax.random.split(key, 3)

    # Module forces 256 channels; keep batch/spatial small for the demo.
    N, C, H, W = 2, 256, 8, 8
    x = jax.random.normal(kx, (N, C, H, W), jnp.float32)

    # Deterministic Kaiming-style init for the two 3x3 conv weights (OIHW, no bias).
    fan_in = C * 3 * 3
    scale = (2.0 / fan_in) ** 0.5
    w1 = jax.random.normal(k1, (C, C, 3, 3), jnp.float32) * scale
    w2 = jax.random.normal(k2, (C, C, 3, 3), jnp.float32) * scale

    out = jax.jit(residual_block_forward)(x, w1, w2)
    out = jax.block_until_ready(out)

    ref = _reference(x, w1, w2)
    assert out.shape == ref.shape == (N, C, H, W)
    max_err = float(jnp.max(jnp.abs(out - ref)))
    # Tolerance reflects bf16 MXU operands (f32 accumulation); the residual/scale
    # path is exact f32.
    assert jnp.allclose(out, ref, atol=3e-2, rtol=3e-2), max_err
    print("KERNEL_OK")
</pallas_src>

<mosaic_0001>
module attributes {stable_mosaic.version = 11 : i64} {
  func.func @_residual_block_kernel(%arg0: i32, %arg1: memref<1x8x8x256xf32, #tpu.memory_space<vmem>>, %arg2: memref<3x768x256xbf16, #tpu.memory_space<vmem>>, %arg3: memref<3x768x256xbf16, #tpu.memory_space<vmem>>, %arg4: memref<1x8x8x256xf32, #tpu.memory_space<vmem>>, %arg5: memref<10x10x256xf32, #tpu.memory_space<vmem>>, %arg6: memref<10x8x768xf32, #tpu.memory_space<vmem>>) attributes {dimension_semantics = [#tpu.dimension_semantics<parallel>], iteration_bounds = array<i64: 2>, scalar_prefetch = 0 : i64, scratch_operands = 2 : i64, tpu.core_type = #tpu.core_type<tc>, window_params = [{transform_indices = @transform_0, window_bounds = array<i64: 1, 8, 8, 256>}, {pipeline_mode = #tpu.pipeline_mode<synchronous>, transform_indices = @transform_1, window_bounds = array<i64: 3, 768, 256>}, {pipeline_mode = #tpu.pipeline_mode<synchronous>, transform_indices = @transform_2, window_bounds = array<i64: 3, 768, 256>}, {transform_indices = @transform_3, window_bounds = array<i64: 1, 8, 8, 256>}]} {
    %cst = arith.constant 0.000000e+00 : f32
    %0 = vector.broadcast %cst : f32 to vector<1x10x256xf32>
    %cst_0 = arith.constant 0.000000e+00 : f32
    %1 = vector.broadcast %cst_0 : f32 to vector<10x1x256xf32>
    %c0 = arith.constant 0 : index
    %c0_1 = arith.constant 0 : index
    %c0_2 = arith.constant 0 : index
    %2 = vector.load %arg5[%c0, %c0_1, %c0_2] : memref<10x10x256xf32, #tpu.memory_space<vmem>>, vector<1x10x256xf32>
    tpu.vector_store %arg5[%c0, %c0_1, %c0_2], %0 {strides = array<i32>} : memref<10x10x256xf32, #tpu.memory_space<vmem>>, vector<1x10x256xf32>,
    %c9 = arith.constant 9 : index
    %c0_3 = arith.constant 0 : index
    %c0_4 = arith.constant 0 : index
    %3 = vector.load %arg5[%c9, %c0_3, %c0_4] : memref<10x10x256xf32, #tpu.memory_space<vmem>>, vector<1x10x256xf32>
    tpu.vector_store %arg5[%c9, %c0_3, %c0_4], %0 {strides = array<i32>} : memref<10x10x256xf32, #tpu.memory_space<vmem>>, vector<1x10x256xf32>,
    %c0_5 = arith.constant 0 : index
    %c0_6 = arith.constant 0 : index
    %c0_7 = arith.constant 0 : index
    %4 = vector.load %arg5[%c0_5, %c0_6, %c0_7] : memref<10x10x256xf32, #tpu.memory_space<vmem>>, vector<10x1x256xf32>
    tpu.vector_store %arg5[%c0_5, %c0_6, %c0_7], %1 {strides = array<i32>} : memref<10x10x256xf32, #tpu.memory_space<vmem>>, vector<10x1x256xf32>,
    %c0_8 = arith.constant 0 : index
    %c9_9 = arith.constant 9 : index
    %c0_10 = arith.constant 0 : index
    %5 = vector.load %arg5[%c0_8, %c9_9, %c0_10] : memref<10x10x256xf32, #tpu.memory_space<vmem>>, vector<10x1x256xf32>
    tpu.vector_store %arg5[%c0_8, %c9_9, %c0_10], %1 {strides = array<i32>} : memref<10x10x256xf32, #tpu.memory_space<vmem>>, vector<10x1x256xf32>,
    %c0_11 = arith.constant 0 : index
    %c0_12 = arith.constant 0 : index
    %c0_13 = arith.constant 0 : index
    %c0_14 = arith.constant 0 : index
    %6 = vector.load %arg1[%c0_11, %c0_12, %c0_13, %c0_14] : memref<1x8x8x256xf32, #tpu.memory_space<vmem>>, vector<1x8x8x256xf32>
    %7 = vector.shape_cast %6 : vector<1x8x8x256xf32> to vector<8x8x256xf32>
    %c1 = arith.constant 1 : index
    %c1_15 = arith.constant 1 : index
    %c0_16 = arith.constant 0 : index
    %8 = vector.load %arg5[%c1, %c1_15, %c0_16] : memref<10x10x256xf32, #tpu.memory_space<vmem>>, vector<8x8x256xf32>
    tpu.vector_store %arg5[%c1, %c1_15, %c0_16], %7 {strides = array<i32>} : memref<10x10x256xf32, #tpu.memory_space<vmem>>, vector<8x8x256xf32>,
    %c0_17 = arith.constant 0 : index
    %c0_18 = arith.constant 0 : index
    %c0_19 = arith.constant 0 : index
    %9 = vector.load %arg5[%c0_17, %c0_18, %c0_19] : memref<10x10x256xf32, #tpu.memory_space<vmem>>, vector<10x8x256xf32>
    %c0_20 = arith.constant 0 : index
    %c0_21 = arith.constant 0 : index
    %c0_22 = arith.constant 0 : index
    %10 = vector.load %arg6[%c0_20, %c0_21, %c0_22] : memref<10x8x768xf32, #tpu.memory_space<vmem>>, vector<10x8x256xf32>
    tpu.vector_store %arg6[%c0_20, %c0_21, %c0_22], %9 {strides = array<i32>} : memref<10x8x768xf32, #tpu.memory_space<vmem>>, vector<10x8x256xf32>,
    %c0_23 = arith.constant 0 : index
    %c1_24 = arith.constant 1 : index
    %c0_25 = arith.constant 0 : index
    %11 = vector.load %arg5[%c0_23, %c1_24, %c0_25] : memref<10x10x256xf32, #tpu.memory_space<vmem>>, vector<10x8x256xf32>
    %c0_26 = arith.constant 0 : index
    %c0_27 = arith.constant 0 : index
    %c256 = arith.constant 256 : index
    %12 = vector.load %arg6[%c0_26, %c0_27, %c256] : memref<10x8x768xf32, #tpu.memory_space<vmem>>, vector<10x8x256xf32>
    tpu.vector_store %arg6[%c0_26, %c0_27, %c256], %11 {strides = array<i32>} : memref<10x8x768xf32, #tpu.memory_space<vmem>>, vector<10x8x256xf32>,
    %c0_28 = arith.constant 0 : index
    %c2 = arith.constant 2 : index
    %c0_29 = arith.constant 0 : index
    %13 = vector.load %arg5[%c0_28, %c2, %c0_29] : memref<10x10x256xf32, #tpu.memory_space<vmem>>, vector<10x8x256xf32>
    %c0_30 = arith.constant 0 : index
    %c0_31 = arith.constant 0 : index
    %c512 = arith.constant 512 : index
    %14 = vector.load %arg6[%c0_30, %c0_31, %c512] : memref<10x8x768xf32, #tpu.memory_space<vmem>>, vector<10x8x256xf32>
    tpu.vector_store %arg6[%c0_30, %c0_31, %c512], %13 {strides = array<i32>} : memref<10x8x768xf32, #tpu.memory_space<vmem>>, vector<10x8x256xf32>,
    %cst_32 = arith.constant 0.000000e+00 : f32
    %15 = vector.broadcast %cst_32 : f32 to vector<64x256xf32>
    %c0_33 = arith.constant 0 : index
    %c0_34 = arith.constant 0 : index
    %c0_35 = arith.constant 0 : index
    %16 = vector.load %arg6[%c0_33, %c0_34, %c0_35] : memref<10x8x768xf32, #tpu.memory_space<vmem>>, vector<8x8x768xf32>
    %17 = vector.shape_cast %16 : vector<8x8x768xf32> to vector<64x768xf32>
    %18 = arith.truncf %17 : vector<64x768xf32> to vector<64x768xbf16>
    %c0_36 = arith.constant 0 : index
    %c0_37 = arith.constant 0 : index
    %c0_38 = arith.constant 0 : index
    %19 = vector.load %arg2[%c0_36, %c0_37, %c0_38] : memref<3x768x256xbf16, #tpu.memory_space<vmem>>, vector<1x768x256xbf16>
    %20 = vector.shape_cast %19 : vector<1x768x256xbf16> to vector<768x256xbf16>
    %cst_39 = arith.constant dense<0.000000e+00> : vector<64x256xf32>
    %21 = tpu.matmul %18, %20, %cst_39 {dimension_numbers = #tpu.dot_dimension_numbers<[1], [0], [0], [1], [0, 0, 1, 1], [], []>} : vector<64x768xbf16>, vector<768x256xbf16>, vector<64x256xf32> -> vector<64x256xf32>
    %22 = arith.addf %15, %21 : vector<64x256xf32>
    %c1_40 = arith.constant 1 : index
    %c0_41 = arith.constant 0 : index
    %c0_42 = arith.constant 0 : index
    %23 = vector.load %arg6[%c1_40, %c0_41, %c0_42] : memref<10x8x768xf32, #tpu.memory_space<vmem>>, vector<8x8x768xf32>
    %24 = vector.shape_cast %23 : vector<8x8x768xf32> to vector<64x768xf32>
    %25 = arith.truncf %24 : vector<64x768xf32> to vector<64x768xbf16>
    %c1_43 = arith.constant 1 : index
    %c0_44 = arith.constant 0 : index
    %c0_45 = arith.constant 0 : index
    %26 = vector.load %arg2[%c1_43, %c0_44, %c0_45] : memref<3x768x256xbf16, #tpu.memory_space<vmem>>, vector<1x768x256xbf16>
    %27 = vector.shape_cast %26 : vector<1x768x256xbf16> to vector<768x256xbf16>
    %cst_46 = arith.constant dense<0.000000e+00> : vector<64x256xf32>
    %28 = tpu.matmul %25, %27, %cst_46 {dimension_numbers = #tpu.dot_dimension_numbers<[1], [0], [0], [1], [0, 0, 1, 1], [], []>} : vector<64x768xbf16>, vector<768x256xbf16>, vector<64x256xf32> -> vector<64x256xf32>
    %29 = arith.addf %22, %28 : vector<64x256xf32>
    %c2_47 = arith.constant 2 : index
    %c0_48 = arith.constant 0 : index
    %c0_49 = arith.constant 0 : index
    %30 = vector.load %arg6[%c2_47, %c0_48, %c0_49] : memref<10x8x768xf32, #tpu.memory_space<vmem>>, vector<8x8x768xf32>
    %31 = vector.shape_cast %30 : vector<8x8x768xf32> to vector<64x768xf32>
    %32 = arith.truncf %31 : vector<64x768xf32> to vector<64x768xbf16>
    %c2_50 = arith.constant 2 : index
    %c0_51 = arith.constant 0 : index
    %c0_52 = arith.constant 0 : index
    %33 = vector.load %arg2[%c2_50, %c0_51, %c0_52] : memref<3x768x256xbf16, #tpu.memory_space<vmem>>, vector<1x768x256xbf16>
    %34 = vector.shape_cast %33 : vector<1x768x256xbf16> to vector<768x256xbf16>
    %cst_53 = arith.constant dense<0.000000e+00> : vector<64x256xf32>
    %35 = tpu.matmul %32, %34, %cst_53 {dimension_numbers = #tpu.dot_dimension_numbers<[1], [0], [0], [1], [0, 0, 1, 1], [], []>} : vector<64x768xbf16>, vector<768x256xbf16>, vector<64x256xf32> -> vector<64x256xf32>
    %36 = arith.addf %29, %35 : vector<64x256xf32>
    %cst_54 = arith.constant 0.000000e+00 : f32
    %37 = vector.broadcast %cst_54 : f32 to vector<64x256xf32>
    %38 = arith.maximumf %36, %37 : vector<64x256xf32>
    %39 = vector.shape_cast %38 : vector<64x256xf32> to vector<8x8x256xf32>
    %c1_55 = arith.constant 1 : index
    %c1_56 = arith.constant 1 : index
    %c0_57 = arith.constant 0 : index
    %40 = vector.load %arg5[%c1_55, %c1_56, %c0_57] : memref<10x10x256xf32, #tpu.memory_space<vmem>>, vector<8x8x256xf32>
    tpu.vector_store %arg5[%c1_55, %c1_56, %c0_57], %39 {strides = array<i32>} : memref<10x10x256xf32, #tpu.memory_space<vmem>>, vector<8x8x256xf32>,
    %c0_58 = arith.constant 0 : index
    %c0_59 = arith.constant 0 : index
    %c0_60 = arith.constant 0 : index
    %41 = vector.load %arg5[%c0_58, %c0_59, %c0_60] : memref<10x10x256xf32, #tpu.memory_space<vmem>>, vector<10x8x256xf32>
    %c0_61 = arith.constant 0 : index
    %c0_62 = arith.constant 0 : index
    %c0_63 = arith.constant 0 : index
    %42 = vector.load %arg6[%c0_61, %c0_62, %c0_63] : memref<10x8x768xf32, #tpu.memory_space<vmem>>, vector<10x8x256xf32>
    tpu.vector_store %arg6[%c0_61, %c0_62, %c0_63], %41 {strides = array<i32>} : memref<10x8x768xf32, #tpu.memory_space<vmem>>, vector<10x8x256xf32>,
    %c0_64 = arith.constant 0 : index
    %c1_65 = arith.constant 1 : index
    %c0_66 = arith.constant 0 : index
    %43 = vector.load %arg5[%c0_64, %c1_65, %c0_66] : memref<10x10x256xf32, #tpu.memory_space<vmem>>, vector<10x8x256xf32>
    %c0_67 = arith.constant 0 : index
    %c0_68 = arith.constant 0 : index
    %c256_69 = arith.constant 256 : index
    %44 = vector.load %arg6[%c0_67, %c0_68, %c256_69] : memref<10x8x768xf32, #tpu.memory_space<vmem>>, vector<10x8x256xf32>
    tpu.vector_store %arg6[%c0_67, %c0_68, %c256_69], %43 {strides = array<i32>} : memref<10x8x768xf32, #tpu.memory_space<vmem>>, vector<10x8x256xf32>,
    %c0_70 = arith.constant 0 : index
    %c2_71 = arith.constant 2 : index
    %c0_72 = arith.constant 0 : index
    %45 = vector.load %arg5[%c0_70, %c2_71, %c0_72] : memref<10x10x256xf32, #tpu.memory_space<vmem>>, vector<10x8x256xf32>
    %c0_73 = arith.constant 0 : index
    %c0_74 = arith.constant 0 : index
    %c512_75 = arith.constant 512 : index
    %46 = vector.load %arg6[%c0_73, %c0_74, %c512_75] : memref<10x8x768xf32, #tpu.memory_space<vmem>>, vector<10x8x256xf32>
    tpu.vector_store %arg6[%c0_73, %c0_74, %c512_75], %45 {strides = array<i32>} : memref<10x8x768xf32, #tpu.memory_space<vmem>>, vector<10x8x256xf32>,
    %cst_76 = arith.constant 0.000000e+00 : f32
    %47 = vector.broadcast %cst_76 : f32 to vector<64x256xf32>
    %c0_77 = arith.constant 0 : index
    %c0_78 = arith.constant 0 : index
    %c0_79 = arith.constant 0 : index
    %48 = vector.load %arg6[%c0_77, %c0_78, %c0_79] : memref<10x8x768xf32, #tpu.memory_space<vmem>>, vector<8x8x768xf32>
    %49 = vector.shape_cast %48 : vector<8x8x768xf32> to vector<64x768xf32>
    %50 = arith.truncf %49 : vector<64x768xf32> to vector<64x768xbf16>
    %c0_80 = arith.constant 0 : index
    %c0_81 = arith.constant 0 : index
    %c0_82 = arith.constant 0 : index
    %51 = vector.load %arg3[%c0_80, %c0_81, %c0_82] : memref<3x768x256xbf16, #tpu.memory_space<vmem>>, vector<1x768x256xbf16>
    %52 = vector.shape_cast %51 : vector<1x768x256xbf16> to vector<768x256xbf16>
    %cst_83 = arith.constant dense<0.000000e+00> : vector<64x256xf32>
    %53 = tpu.matmul %50, %52, %cst_83 {dimension_numbers = #tpu.dot_dimension_numbers<[1], [0], [0], [1], [0, 0, 1, 1], [], []>} : vector<64x768xbf16>, vector<768x256xbf16>, vector<64x256xf32> -> vector<64x256xf32>
    %54 = arith.addf %47, %53 : vector<64x256xf32>
    %c1_84 = arith.constant 1 : index
    %c0_85 = arith.constant 0 : index
    %c0_86 = arith.constant 0 : index
    %55 = vector.load %arg6[%c1_84, %c0_85, %c0_86] : memref<10x8x768xf32, #tpu.memory_space<vmem>>, vector<8x8x768xf32>
    %56 = vector.shape_cast %55 : vector<8x8x768xf32> to vector<64x768xf32>
    %57 = arith.truncf %56 : vector<64x768xf32> to vector<64x768xbf16>
    %c1_87 = arith.constant 1 : index
    %c0_88 = arith.constant 0 : index
    %c0_89 = arith.constant 0 : index
    %58 = vector.load %arg3[%c1_87, %c0_88, %c0_89] : memref<3x768x256xbf16, #tpu.memory_space<vmem>>, vector<1x768x256xbf16>
    %59 = vector.shape_cast %58 : vector<1x768x256xbf16> to vector<768x256xbf16>
    %cst_90 = arith.constant dense<0.000000e+00> : vector<64x256xf32>
    %60 = tpu.matmul %57, %59, %cst_90 {dimension_numbers = #tpu.dot_dimension_numbers<[1], [0], [0], [1], [0, 0, 1, 1], [], []>} : vector<64x768xbf16>, vector<768x256xbf16>, vector<64x256xf32> -> vector<64x256xf32>
    %61 = arith.addf %54, %60 : vector<64x256xf32>
    %c2_91 = arith.constant 2 : index
    %c0_92 = arith.constant 0 : index
    %c0_93 = arith.constant 0 : index
    %62 = vector.load %arg6[%c2_91, %c0_92, %c0_93] : memref<10x8x768xf32, #tpu.memory_space<vmem>>, vector<8x8x768xf32>
    %63 = vector.shape_cast %62 : vector<8x8x768xf32> to vector<64x768xf32>
    %64 = arith.truncf %63 : vector<64x768xf32> to vector<64x768xbf16>
    %c2_94 = arith.constant 2 : index
    %c0_95 = arith.constant 0 : index
    %c0_96 = arith.constant 0 : index
    %65 = vector.load %arg3[%c2_94, %c0_95, %c0_96] : memref<3x768x256xbf16, #tpu.memory_space<vmem>>, vector<1x768x256xbf16>
    %66 = vector.shape_cast %65 : vector<1x768x256xbf16> to vector<768x256xbf16>
    %cst_97 = arith.constant dense<0.000000e+00> : vector<64x256xf32>
    %67 = tpu.matmul %64, %66, %cst_97 {dimension_numbers = #tpu.dot_dimension_numbers<[1], [0], [0], [1], [0, 0, 1, 1], [], []>} : vector<64x768xbf16>, vector<768x256xbf16>, vector<64x256xf32> -> vector<64x256xf32>
    %68 = arith.addf %61, %67 : vector<64x256xf32>
    %69 = vector.shape_cast %68 : vector<64x256xf32> to vector<1x8x8x256xf32>
    %cst_98 = arith.constant 1.000000e-01 : f32
    %70 = vector.broadcast %cst_98 : f32 to vector<1x8x8x256xf32>
    %71 = arith.mulf %69, %70 : vector<1x8x8x256xf32>
    %c0_99 = arith.constant 0 : index
    %c0_100 = arith.constant 0 : index
    %c0_101 = arith.constant 0 : index
    %c0_102 = arith.constant 0 : index
    %72 = vector.load %arg1[%c0_99, %c0_100, %c0_101, %c0_102] : memref<1x8x8x256xf32, #tpu.memory_space<vmem>>, vector<1x8x8x256xf32>
    %73 = arith.addf %71, %72 : vector<1x8x8x256xf32>
    %c0_103 = arith.constant 0 : index
    %c0_104 = arith.constant 0 : index
    %c0_105 = arith.constant 0 : index
    %c0_106 = arith.constant 0 : index
    %74 = vector.load %arg4[%c0_103, %c0_104, %c0_105, %c0_106] : memref<1x8x8x256xf32, #tpu.memory_space<vmem>>, vector<1x8x8x256xf32>
    tpu.vector_store %arg4[%c0_103, %c0_104, %c0_105, %c0_106], %73 {strides = array<i32>} : memref<1x8x8x256xf32, #tpu.memory_space<vmem>>, vector<1x8x8x256xf32>,
    return
  }
  func.func @transform_0(%arg0: i32) -> (i32, i32, i32, i32) {
    %c0_i32 = arith.constant 0 : i32
    %c0_i32_0 = arith.constant 0 : i32
    %c0_i32_1 = arith.constant 0 : i32
    %c0_i32_2 = arith.constant 0 : i32
    return %arg0, %c0_i32, %c0_i32_0, %c0_i32_1 : i32, i32, i32, i32
  }
  func.func @transform_1(%arg0: i32) -> (i32, i32, i32) {
    %c0_i32 = arith.constant 0 : i32
    %c0_i32_0 = arith.constant 0 : i32
    %c0_i32_1 = arith.constant 0 : i32
    %c0_i32_2 = arith.constant 0 : i32
    return %c0_i32, %c0_i32_0, %c0_i32_1 : i32, i32, i32
  }
  func.func @transform_2(%arg0: i32) -> (i32, i32, i32) {
    %c0_i32 = arith.constant 0 : i32
    %c0_i32_0 = arith.constant 0 : i32
    %c0_i32_1 = arith.constant 0 : i32
    %c0_i32_2 = arith.constant 0 : i32
    return %c0_i32, %c0_i32_0, %c0_i32_1 : i32, i32, i32
  }
  func.func @transform_3(%arg0: i32) -> (i32, i32, i32, i32) {
    %c0_i32 = arith.constant 0 : i32
    %c0_i32_0 = arith.constant 0 : i32
    %c0_i32_1 = arith.constant 0 : i32
    %c0_i32_2 = arith.constant 0 : i32
    return %arg0, %c0_i32, %c0_i32_0, %c0_i32_1 : i32, i32, i32, i32
  }
}

</mosaic_0001>

<llo_original>
// kernel: residual_block_forward.1
$region0: #{residual_block_forward.1}
  #allocation0 [shape = 'u32[]', space=smem, size = 0x4, offset = 0x4, fixed_abs, tag = 'smem constant byte address 0x4 - core index']
  #allocation1 [shape = 'u32[72,128]{1,0:T(1,128)}', space=vmem, size = 0x9000, scoped, tag = 'internal scratch']
  #allocation2 [shape = 'f32[10,10,256]{2,1,0:T(8,128)}', space=vmem, size = 0x28000, scoped, tag = 'scratch operand']
  #allocation3 [shape = 'f32[10,8,768]{2,1,0:T(8,128)}', space=vmem, size = 0x3c000, scoped, tag = 'scratch operand']
  %s0 = inlined_call_operand.vmem [shape: f32[2,8,8,256], index: 0, kind: input, shape index: {}]
  %s1 = inlined_call_operand.vmem [shape: bf16[3,768,256], index: 1, kind: input, shape index: {}]
  %s2 = inlined_call_operand.vmem [shape: bf16[3,768,256], index: 2, kind: input, shape index: {}]
  %s3 = inlined_call_operand.hbm [shape: f32[2,8,8,256], index: 3, kind: output, shape index: {}]
  %s4 = sld [smem:[#allocation0]]
  $region45: #{residual_block_forward.1} parent=0
    _
  %s6 = ssub.s32 1, %s4
  %s7 = scalar_select 0, %s6, %s4
  $region1: #{residual_block_forward.1} parent=0
    #allocation4 [shape = 'u8[131072]{0}', space=vmem, size = 0x20000, scoped, tag = 'output window, operand 0']
    #allocation5 [shape = 's32[2]{0}', space=sflag, size = 0x8, scoped, tag = 'scoped memory for residual_block_forward.1']
    %8 = vsyncpa [#allocation5], 0
    %s9 = scalar_lea.sflag [#allocation5], 1
    %10 = vsyncpa %s9, 0
    loop: start=0, step=1, limit=4
    $region2: #{residual_block_forward.1} parent=1 // loop_pre_header
      _
    $region3: #{residual_block_forward.1} parent=1 // loop_header
      %s12 = sphi 0, %s16
      %p13 = scmp.ge.s32.totalorder %s12, 4
      %s22 = sphi 0, %s24
      %s25 = sphi 0, %s22
      %s26 = sphi 0, %s25
      %s42 = sphi 0, %s26
      %s46 = sphi 0, %s46
      %s48 = sphi 0, %s46
      %s49 = sphi 0, %s48
      %s63 = sphi 0, %s49
      %s67 = sphi 0, %s67
      %s69 = sphi 0, %s67
      %s70 = sphi 0, %s69
      %s84 = sphi 0, %s70
      %s90 = sphi 0, %s92
      %s93 = sphi 0, %s90
      %s94 = sphi 0, %s93
      %s110 = sphi 0, %s94
    $region4: #{residual_block_forward.1} parent=1 // loop_header_branch
      %15 = sbr.rel (%p13) target = $region8
    $region5: #{residual_block_forward.1} parent=1 // loop_body
      %s17 = ssub.s32 %s12, 1
      %s18 = ssub.s32 %s12, 2
      %s19 = sadd.s32 %s12, 1
      %s20 = ssub.s32 %s12, %s19
      %p21 = scmp.eq.s32.totalorder %s20, 0
      %s23 = sadd.s32 %s22, 1
      %s24 = scalar_select %p21, %s22, %s23
      %p27 = pneg %p21
      %p28 = scmp.eq.s32.totalorder %s12, 1
      %p29 = por %p27, %p28
      %p30 = scmp.ne.s32.totalorder %s22, %s25
      %p31 = scmp.eq.s32.totalorder %s12, 0
      %p32 = por %p30, %p31
      %p33 = scmp.ne.s32.totalorder %s22, %s25
      %p34 = scmp.eq.s32.totalorder %s17, 1
      %p35 = por %p33, %p34
      %p36 = scmp.ne.s32.totalorder %s25, %s26
      %p37 = scmp.eq.s32.totalorder %s17, 0
      %p38 = por %p36, %p37
      %p39 = scmp.ne.s32.totalorder %s25, %s26
      %p40 = scmp.eq.s32.totalorder %s18, 1
      %p41 = por %p39, %p40
      %p43 = scmp.ne.s32.totalorder %s26, %s42
      %p44 = scmp.eq.s32.totalorder %s18, 0
      %p45 = por %p43, %p44
      %s47 = sadd.s32 %s46, 1
      %p50 = scmp.eq.s32.totalorder %s12, 1
      %p51 = scmp.ne.s32.totalorder %s46, %s48
      %p52 = scmp.eq.s32.totalorder %s12, 0
      %p53 = por %p51, %p52
      %p54 = scmp.ne.s32.totalorder %s46, %s48
      %p55 = scmp.eq.s32.totalorder %s17, 1
      %p56 = por %p54, %p55
      %p57 = scmp.ne.s32.totalorder %s48, %s49
      %p58 = scmp.eq.s32.totalorder %s17, 0
      %p59 = por %p57, %p58
      %p60 = scmp.ne.s32.totalorder %s48, %s49
      %p61 = scmp.eq.s32.totalorder %s18, 1
      %p62 = por %p60, %p61
      %p64 = scmp.ne.s32.totalorder %s49, %s63
      %p65 = scmp.eq.s32.totalorder %s18, 0
      %p66 = por %p64, %p65
      %s68 = sadd.s32 %s67, 1
      %p71 = scmp.eq.s32.totalorder %s12, 1
      %p72 = scmp.ne.s32.totalorder %s67, %s69
      %p73 = scmp.eq.s32.totalorder %s12, 0
      %p74 = por %p72, %p73
      %p75 = scmp.ne.s32.totalorder %s67, %s69
      %p76 = scmp.eq.s32.totalorder %s17, 1
      %p77 = por %p75, %p76
      %p78 = scmp.ne.s32.totalorder %s69, %s70
      %p79 = scmp.eq.s32.totalorder %s17, 0
      %p80 = por %p78, %p79
      %p81 = scmp.ne.s32.totalorder %s69, %s70
      %p82 = scmp.eq.s32.totalorder %s18, 1
      %p83 = por %p81, %p82
      %p85 = scmp.ne.s32.totalorder %s70, %s84
      %p86 = scmp.eq.s32.totalorder %s18, 0
      %p87 = por %p85, %p86
      %s88 = ssub.s32 %s12, %s19
      %p89 = scmp.eq.s32.totalorder %s88, 0
      %s91 = sadd.s32 %s90, 1
      %s92 = scalar_select %p89, %s90, %s91
      %p95 = pneg %p89
      %p96 = scmp.eq.s32.totalorder %s12, 1
      %p97 = por %p95, %p96
      %p98 = scmp.ne.s32.totalorder %s90, %s93
      %p99 = scmp.eq.s32.totalorder %s12, 0
      %p100 = por %p98, %p99
      %p101 = scmp.ne.s32.totalorder %s90, %s93
      %p102 = scmp.eq.s32.totalorder %s17, 1
      %p103 = por %p101, %p102
      %p104 = scmp.ne.s32.totalorder %s93, %s94
      %p105 = scmp.eq.s32.totalorder %s17, 0
      %p106 = por %p104, %p105
      %p107 = scmp.ne.s32.totalorder %s93, %s94
      %p108 = scmp.eq.s32.totalorder %s18, 1
      %p109 = por %p107, %p108
      %p111 = scmp.ne.s32.totalorder %s94, %s110
      %p112 = scmp.eq.s32.totalorder %s18, 0
      %p113 = por %p111, %p112
      %p114 = scmp.le.s32.totalorder 1, %s12
      %p115 = scmp.lt.s32.totalorder %s12, 3
      %p116 = pnand %p114, %p115
      %p117 = pneg %p116
      // Predicated region
      $region9: #{residual_block_forward.1} parent=5 // pred_check
        _
      $region10: #{residual_block_forward.1} parent=5 // pred_check_branch
        %119 = sbr.rel (%p116) target = $region12
      $region11: #{residual_block_forward.1} parent=5 // pred_region
        %s120 = ssub.s32 %s12, 1
        // Predicated region
        $region13: #{residual_block_forward.1} parent=11 // pred_check
          %p121 = pneg %p59
        $region14: #{residual_block_forward.1} parent=11 // pred_check_branch
          %123 = sbr.rel (%p121) target = $region16
        $region15: #{residual_block_forward.1} parent=11 // pred_region
          _
        $region16: #{residual_block_forward.1} parent=11 // pred_fallthru
          _
        // Predicated region
        $region17: #{residual_block_forward.1} parent=11 // pred_check
          %p124 = pneg %p80
        $region18: #{residual_block_forward.1} parent=11 // pred_check_branch
          %126 = sbr.rel (%p124) target = $region20
        $region19: #{residual_block_forward.1} parent=11 // pred_region
          _
        $region20: #{residual_block_forward.1} parent=11 // pred_fallthru
          _
      $region12: #{residual_block_forward.1} parent=5 // pred_fallthru
        _
      %p127 = scmp.lt.s32.totalorder %s12, 2
      // Predicated region
      $region21: #{residual_block_forward.1} parent=5 // pred_check
        %p128 = pneg %p127
      $region22: #{residual_block_forward.1} parent=5 // pred_check_branch
        %130 = sbr.rel (%p128) target = $region24
      $region23: #{residual_block_forward.1} parent=5 // pred_region
        // Predicated region
        $region25: #{residual_block_forward.1} parent=23 // pred_check
          %p131 = pneg %p32
        $region26: #{residual_block_forward.1} parent=23 // pred_check_branch
          %133 = sbr.rel (%p131) target = $region28
        $region27: #{residual_block_forward.1} parent=23 // pred_region
          %p134 = scmp.lt.s32.totalorder %s12, 1
          %s135 = scalar_select %p134, %s12, 1
          %s136 = smul.addr %s135, 16
          %s137 = smul.addr %s136, 8
          %s138 = scalar_lea.vmem %s0, %s137
        $region28: #{residual_block_forward.1} parent=23 // pred_fallthru
          _
      $region24: #{residual_block_forward.1} parent=5 // pred_fallthru
        _
      %p139 = scmp.le.s32.totalorder 1, %s12
      %p140 = scmp.lt.s32.totalorder %s12, 3
      %p141 = pnand %p139, %p140
      %p142 = pneg %p141
      // Predicated region
      $region29: #{residual_block_forward.1} parent=5 // pred_check
        _
      $region30: #{residual_block_forward.1} parent=5 // pred_check_branch
        %144 = sbr.rel (%p141) target = $region32
      $region31: #{residual_block_forward.1} parent=5 // pred_region
        %s145 = ssub.s32 %s12, 1
        %p146 = scmp.lt.s32.totalorder %s17, 1
        %s147 = scalar_select %p146, %s17, 1
        %s148 = smul.addr %s147, 16
        %s149 = smul.addr %s148, 8
        %s150 = scalar_lea.vmem %s0, %s149
        %p151 = pneg %p38
        %p152 = pneg %p35
        %p153 = pneg %p59
        %p154 = pneg %p56
        %p155 = pneg %p80
        %p156 = pneg %p77
        %p157 = pneg %p106
        %p158 = pneg %p103
        %s159 = sand.u32 %s93, 1
        %s160 = scalar_lea.sflag [#allocation5], %s159
        %s161 = sand.u32 %s93, 1
        %s162 = smul.addr %s161, 128
        %s163 = scalar_lea.vmem [#allocation4], %s162
        %p164 = scmp.lt.s32.totalorder %s17, 1
        %s165 = scalar_select %p164, %s17, 1
        %s166 = smul.addr %s165, 16
        %s167 = smul.addr %s166, 8
        %s168 = scalar_lea.vmem %s0, %s167
        %169 = vst [vmem:[#allocation2] sm:$0xff] 0.0
        %170 = vst [vmem:[#allocation2 + $0x8] sm:$0xff] 0.0
        %171 = vst [vmem:[#allocation2 + $0x10] sm:$0x3] 0.0
        %172 = vst [vmem:[#allocation2 + $0x18] sm:$0x3] 0.0
        %s173 = scalar_lea.vmem [#allocation2], 288
        %174 = vst [vmem:[%s173] sm:$0xff] 0.0
        %175 = vst [vmem:[%s173 + $0x8] sm:$0xff] 0.0
        %176 = vst [vmem:[%s173 + $0x10] sm:$0x3] 0.0
        %177 = vst [vmem:[%s173 + $0x18] sm:$0x3] 0.0
        %v178 = vlaneseq
        %vm179 = vcmp.ge.s32.totalorder %v178, 0
        %vm180 = vcmp.lt.s32.totalorder %v178, 256
        %vm181 = vmand %vm179, %vm180
        %182 = vst.msk [vmem:[#allocation2] ss:$8 sm:$0x3] %vm181, 0.0
        %183 = vst.msk [vmem:[#allocation2] ss:$8 sm:$0x0] %vm181, 0.0
        %s184 = scalar_lea.vmem [#allocation2], 32
        %185 = vst.msk [vmem:[%s184] ss:$8 sm:$0x3] %vm181, 0.0
        %186 = vst.msk [vmem:[%s184] ss:$8 sm:$0x0] %vm181, 0.0
        %s187 = scalar_lea.vmem [#allocation2], 64
        %188 = vst.msk [vmem:[%s187] ss:$8 sm:$0x3] %vm181, 0.0
        %189 = vst.msk [vmem:[%s187] ss:$8 sm:$0x0] %vm181, 0.0
        %s190 = scalar_lea.vmem [#allocation2], 96
        %191 = vst.msk [vmem:[%s190] ss:$8 sm:$0x3] %vm181, 0.0
        %192 = vst.msk [vmem:[%s190] ss:$8 sm:$0x0] %vm181, 0.0
        %s193 = scalar_lea.vmem [#allocation2], 128
        %194 = vst.msk [vmem:[%s193] ss:$8 sm:$0x3] %vm181, 0.0
        %195 = vst.msk [vmem:[%s193] ss:$8 sm:$0x0] %vm181, 0.0
        %s196 = scalar_lea.vmem [#allocation2], 160
        %197 = vst.msk [vmem:[%s196] ss:$8 sm:$0x3] %vm181, 0.0
        %198 = vst.msk [vmem:[%s196] ss:$8 sm:$0x0] %vm181, 0.0
        %s199 = scalar_lea.vmem [#allocation2], 192
        %200 = vst.msk [vmem:[%s199] ss:$8 sm:$0x3] %vm181, 0.0
        %201 = vst.msk [vmem:[%s199] ss:$8 sm:$0x0] %vm181, 0.0
        %s202 = scalar_lea.vmem [#allocation2], 224
        %203 = vst.msk [vmem:[%s202] ss:$8 sm:$0x3] %vm181, 0.0
        %204 = vst.msk [vmem:[%s202] ss:$8 sm:$0x0] %vm181, 0.0
        %s205 = scalar_lea.vmem [#allocation2], 256
        %206 = vst.msk [vmem:[%s205] ss:$8 sm:$0x3] %vm181, 0.0
        %207 = vst.msk [vmem:[%s205] ss:$8 sm:$0x0] %vm181, 0.0
        %s208 = scalar_lea.vmem [#allocation2], 288
        %209 = vst.msk [vmem:[%s208] ss:$8 sm:$0x3] %vm181, 0.0
        %210 = vst.msk [vmem:[%s208] ss:$8 sm:$0x0] %vm181, 0.0
        %s211 = scalar_lea.vmem [#allocation2], 17
        %212 = vst.msk [vmem:[%s211] ss:$8 sm:$0x3] %vm181, 0.0
        %213 = vst.msk [vmem:[%s211] ss:$8 sm:$0x0] %vm181, 0.0
        %s214 = scalar_lea.vmem [#allocation2], 49
        %215 = vst.msk [vmem:[%s214] ss:$8 sm:$0x3] %vm181, 0.0
        %216 = vst.msk [vmem:[%s214] ss:$8 sm:$0x0] %vm181, 0.0
        %s217 = scalar_lea.vmem [#allocation2], 81
        %218 = vst.msk [vmem:[%s217] ss:$8 sm:$0x3] %vm181, 0.0
        %219 = vst.msk [vmem:[%s217] ss:$8 sm:$0x0] %vm181, 0.0
        %s220 = scalar_lea.vmem [#allocation2], 113
        %221 = vst.msk [vmem:[%s220] ss:$8 sm:$0x3] %vm181, 0.0
        %222 = vst.msk [vmem:[%s220] ss:$8 sm:$0x0] %vm181, 0.0
        %s223 = scalar_lea.vmem [#allocation2], 145
        %224 = vst.msk [vmem:[%s223] ss:$8 sm:$0x3] %vm181, 0.0
        %225 = vst.msk [vmem:[%s223] ss:$8 sm:$0x0] %vm181, 0.0
        %s226 = scalar_lea.vmem [#allocation2], 177
        %227 = vst.msk [vmem:[%s226] ss:$8 sm:$0x3] %vm181, 0.0
        %228 = vst.msk [vmem:[%s226] ss:$8 sm:$0x0] %vm181, 0.0
        %s229 = scalar_lea.vmem [#allocation2], 209
        %230 = vst.msk [vmem:[%s229] ss:$8 sm:$0x3] %vm181, 0.0
        %231 = vst.msk [vmem:[%s229] ss:$8 sm:$0x0] %vm181, 0.0
        %s232 = scalar_lea.vmem [#allocation2], 241
        %233 = vst.msk [vmem:[%s232] ss:$8 sm:$0x3] %vm181, 0.0
        %234 = vst.msk [vmem:[%s232] ss:$8 sm:$0x0] %vm181, 0.0
        %s235 = scalar_lea.vmem [#allocation2], 273
        %236 = vst.msk [vmem:[%s235] ss:$8 sm:$0x3] %vm181, 0.0
        %237 = vst.msk [vmem:[%s235] ss:$8 sm:$0x0] %vm181, 0.0
        %s238 = scalar_lea.vmem [#allocation2], 305
        %239 = vst.msk [vmem:[%s238] ss:$8 sm:$0x3] %vm181, 0.0
        %240 = vst.msk [vmem:[%s238] ss:$8 sm:$0x0] %vm181, 0.0
        %v241 = vld [vmem:[%s168] sm:$0xff]
        %v242 = vld [vmem:[%s168 + $0x8] sm:$0xff]
        %v243 = vld [vmem:[%s168 + $0x10] sm:$0xff]
        %v244 = vld [vmem:[%s168 + $0x18] sm:$0xff]
        %v245 = vld [vmem:[%s168 + $0x20] sm:$0xff]
        %v246 = vld [vmem:[%s168 + $0x28] sm:$0xff]
        %v247 = vld [vmem:[%s168 + $0x30] sm:$0xff]
        %v248 = vld [vmem:[%s168 + $0x38] sm:$0xff]
        %v249 = vld [vmem:[%s168 + $0x40] sm:$0xff]
        %v250 = vld [vmem:[%s168 + $0x48] sm:$0xff]
        %v251 = vld [vmem:[%s168 + $0x50] sm:$0xff]
        %v252 = vld [vmem:[%s168 + $0x58] sm:$0xff]
        %v253 = vld [vmem:[%s168 + $0x60] sm:$0xff]
        %v254 = vld [vmem:[%s168 + $0x68] sm:$0xff]
        %v255 = vld [vmem:[%s168 + $0x70] sm:$0xff]
        %v256 = vld [vmem:[%s168 + $0x78] sm:$0xff]
        %v273 = vrot.slane %v241, 7
        %v274 = vrot.slane %v242, 7
        %v275 = vrot.slane %v243, 7
        %v276 = vrot.slane %v244, 7
        %v277 = vrot.slane %v245, 7
        %v278 = vrot.slane %v246, 7
        %v279 = vrot.slane %v247, 7
        %v280 = vrot.slane %v248, 7
        %v281 = vrot.slane %v249, 7
        %v282 = vrot.slane %v250, 7
        %v283 = vrot.slane %v251, 7
        %v284 = vrot.slane %v252, 7
        %v285 = vrot.slane %v253, 7
        %v286 = vrot.slane %v254, 7
        %v287 = vrot.slane %v255, 7
        %v288 = vrot.slane %v256, 7
        %s305 = scalar_lea.vmem [#allocation2], 32
        %306 = vst [vmem:[%s305] sm:$0xfe] %v273
        %307 = vst [vmem:[%s305 + $0x8] sm:$0xfe] %v274
        %308 = vst [vmem:[%s305 + $0x10] sm:$0x1] %v273
        %309 = vst [vmem:[%s305 + $0x18] sm:$0x1] %v274
        %310 = vst [vmem:[%s305 + $0x20] sm:$0xfe] %v275
        %311 = vst [vmem:[%s305 + $0x28] sm:$0xfe] %v276
        %312 = vst [vmem:[%s305 + $0x30] sm:$0x1] %v275
        %313 = vst [vmem:[%s305 + $0x38] sm:$0x1] %v276
        %314 = vst [vmem:[%s305 + $0x40] sm:$0xfe] %v277
        %315 = vst [vmem:[%s305 + $0x48] sm:$0xfe] %v278
        %316 = vst [vmem:[%s305 + $0x50] sm:$0x1] %v277
        %317 = vst [vmem:[%s305 + $0x58] sm:$0x1] %v278
        %318 = vst [vmem:[%s305 + $0x60] sm:$0xfe] %v279
        %319 = vst [vmem:[%s305 + $0x68] sm:$0xfe] %v280
        %320 = vst [vmem:[%s305 + $0x70] sm:$0x1] %v279
        %321 = vst [vmem:[%s305 + $0x78] sm:$0x1] %v280
        %322 = vst [vmem:[%s305 + $0x80] sm:$0xfe] %v281
        %323 = vst [vmem:[%s305 + $0x88] sm:$0xfe] %v282
        %324 = vst [vmem:[%s305 + $0x90] sm:$0x1] %v281
        %325 = vst [vmem:[%s305 + $0x98] sm:$0x1] %v282
        %326 = vst [vmem:[%s305 + $0xa0] sm:$0xfe] %v283
        %327 = vst [vmem:[%s305 + $0xa8] sm:$0xfe] %v284
        %328 = vst [vmem:[%s305 + $0xb0] sm:$0x1] %v283
        %329 = vst [vmem:[%s305 + $0xb8] sm:$0x1] %v284
        %330 = vst [vmem:[%s305 + $0xc0] sm:$0xfe] %v285
        %331 = vst [vmem:[%s305 + $0xc8] sm:$0xfe] %v286
        %332 = vst [vmem:[%s305 + $0xd0] sm:$0x1] %v285
        %333 = vst [vmem:[%s305 + $0xd8] sm:$0x1] %v286
        %334 = vst [vmem:[%s305 + $0xe0] sm:$0xfe] %v287
        %335 = vst [vmem:[%s305 + $0xe8] sm:$0xfe] %v288
        %336 = vst [vmem:[%s305 + $0xf0] sm:$0x1] %v287
        %337 = vst [vmem:[%s305 + $0xf8] sm:$0x1] %v288
        %v338 = vld [vmem:[#allocation2] sm:$0xff]
        %v339 = vld [vmem:[#allocation2 + $0x8] sm:$0xff]
        %v340 = vld [vmem:[#allocation2 + $0x20] sm:$0xff]
        %v341 = vld [vmem:[#allocation2 + $0x28] sm:$0xff]
        %v342 = vld [vmem:[#allocation2 + $0x40] sm:$0xff]
        %v343 = vld [vmem:[#allocation2 + $0x48] sm:$0xff]
        %v344 = vld [vmem:[#allocation2 + $0x60] sm:$0xff]
        %v345 = vld [vmem:[#allocation2 + $0x68] sm:$0xff]
        %v346 = vld [vmem:[#allocation2 + $0x80] sm:$0xff]
        %v347 = vld [vmem:[#allocation2 + $0x88] sm:$0xff]
        %v348 = vld [vmem:[#allocation2 + $0xa0] sm:$0xff]
        %v349 = vld [vmem:[#allocation2 + $0xa8] sm:$0xff]
        %v350 = vld [vmem:[#allocation2 + $0xc0] sm:$0xff]
        %v351 = vld [vmem:[#allocation2 + $0xc8] sm:$0xff]
        %v352 = vld [vmem:[#allocation2 + $0xe0] sm:$0xff]
        %v353 = vld [vmem:[#allocation2 + $0xe8] sm:$0xff]
        %v354 = vld [vmem:[#allocation2 + $0x100] sm:$0xff]
        %v355 = vld [vmem:[#allocation2 + $0x108] sm:$0xff]
        %v356 = vld [vmem:[#allocation2 + $0x120] sm:$0xff]
        %v357 = vld [vmem:[#allocation2 + $0x128] sm:$0xff]
        %358 = vst [vmem:[#allocation3] sm:$0xff] %v338
        %359 = vst [vmem:[#allocation3 + $0x8] sm:$0xff] %v339
        %360 = vst [vmem:[#allocation3 + $0x30] sm:$0xff] %v340
        %361 = vst [vmem:[#allocation3 + $0x38] sm:$0xff] %v341
        %362 = vst [vmem:[#allocation3 + $0x60] sm:$0xff] %v342
        %363 = vst [vmem:[#allocation3 + $0x68] sm:$0xff] %v343
        %364 = vst [vmem:[#allocation3 + $0x90] sm:$0xff] %v344
        %365 = vst [vmem:[#allocation3 + $0x98] sm:$0xff] %v345
        %366 = vst [vmem:[#allocation3 + $0xc0] sm:$0xff] %v346
        %367 = vst [vmem:[#allocation3 + $0xc8] sm:$0xff] %v347
        %368 = vst [vmem:[#allocation3 + $0xf0] sm:$0xff] %v348
        %369 = vst [vmem:[#allocation3 + $0xf8] sm:$0xff] %v349
        %370 = vst [vmem:[#allocation3 + $0x120] sm:$0xff] %v350
        %371 = vst [vmem:[#allocation3 + $0x128] sm:$0xff] %v351
        %372 = vst [vmem:[#allocation3 + $0x150] sm:$0xff] %v352
        %373 = vst [vmem:[#allocation3 + $0x158] sm:$0xff] %v353
        %374 = vst [vmem:[#allocation3 + $0x180] sm:$0xff] %v354
        %375 = vst [vmem:[#allocation3 + $0x188] sm:$0xff] %v355
        %376 = vst [vmem:[#allocation3 + $0x1b0] sm:$0xff] %v356
        %377 = vst [vmem:[#allocation3 + $0x1b8] sm:$0xff] %v357
        %v378 = vld [vmem:[#allocation2] sm:$0xfe]
        %v379 = vld [vmem:[#allocation2 + $0x8] sm:$0xfe]
        %v380 = vld [vmem:[#allocation2 + $0x10] sm:$0x1]
        %v381 = vld [vmem:[#allocation2 + $0x18] sm:$0x1]
        %v382 = vld [vmem:[#allocation2 + $0x20] sm:$0xfe]
        %v383 = vld [vmem:[#allocation2 + $0x28] sm:$0xfe]
        %v384 = vld [vmem:[#allocation2 + $0x30] sm:$0x1]
        %v385 = vld [vmem:[#allocation2 + $0x38] sm:$0x1]
        %v386 = vld [vmem:[#allocation2 + $0x40] sm:$0xfe]
        %v387 = vld [vmem:[#allocation2 + $0x48] sm:$0xfe]
        %v388 = vld [vmem:[#allocation2 + $0x50] sm:$0x1]
        %v389 = vld [vmem:[#allocation2 + $0x58] sm:$0x1]
        %v390 = vld [vmem:[#allocation2 + $0x60] sm:$0xfe]
        %v391 = vld [vmem:[#allocation2 + $0x68] sm:$0xfe]
        %v392 = vld [vmem:[#allocation2 + $0x70] sm:$0x1]
        %v393 = vld [vmem:[#allocation2 + $0x78] sm:$0x1]
        %v394 = vld [vmem:[#allocation2 + $0x80] sm:$0xfe]
        %v395 = vld [vmem:[#allocation2 + $0x88] sm:$0xfe]
        %v396 = vld [vmem:[#allocation2 + $0x90] sm:$0x1]
        %v397 = vld [vmem:[#allocation2 + $0x98] sm:$0x1]
        %v398 = vld [vmem:[#allocation2 + $0xa0] sm:$0xfe]
        %v399 = vld [vmem:[#allocation2 + $0xa8] sm:$0xfe]
        %v400 = vld [vmem:[#allocation2 + $0xb0] sm:$0x1]
        %v401 = vld [vmem:[#allocation2 + $0xb8] sm:$0x1]
        %v402 = vld [vmem:[#allocation2 + $0xc0] sm:$0xfe]
        %v403 = vld [vmem:[#allocation2 + $0xc8] sm:$0xfe]
        %v404 = vld [vmem:[#allocation2 + $0xd0] sm:$0x1]
        %v405 = vld [vmem:[#allocation2 + $0xd8] sm:$0x1]
        %v406 = vld [vmem:[#allocation2 + $0xe0] sm:$0xfe]
        %v407 = vld [vmem:[#allocation2 + $0xe8] sm:$0xfe]
        %v408 = vld [vmem:[#allocation2 + $0xf0] sm:$0x1]
        %v409 = vld [vmem:[#allocation2 + $0xf8] sm:$0x1]
        %v410 = vld [vmem:[#allocation2 + $0x100] sm:$0xfe]
        %v411 = vld [vmem:[#allocation2 + $0x108] sm:$0xfe]
        %v412 = vld [vmem:[#allocation2 + $0x110] sm:$0x1]
        %v413 = vld [vmem:[#allocation2 + $0x118] sm:$0x1]
        %v414 = vld [vmem:[#allocation2 + $0x120] sm:$0xfe]
        %v415 = vld [vmem:[#allocation2 + $0x128] sm:$0xfe]
        %v416 = vld [vmem:[#allocation2 + $0x130] sm:$0x1]
        %v417 = vld [vmem:[#allocation2 + $0x138] sm:$0x1]
        %vm458 = vcmask 1046528
        %v459 = vrot.slane %v378, 1
        %v460 = vrot.slane %v380, 1
        %v461 = vsel %vm458, %v459, %v460
        %v462 = vrot.slane %v379, 1
        %v463 = vrot.slane %v381, 1
        %v464 = vsel %vm458, %v462, %v463
        %v465 = vrot.slane %v382, 1
        %v466 = vrot.slane %v384, 1
        %v467 = vsel %vm458, %v465, %v466
        %v468 = vrot.slane %v383, 1
        %v469 = vrot.slane %v385, 1
        %v470 = vsel %vm458, %v468, %v469
        %v471 = vrot.slane %v386, 1
        %v472 = vrot.slane %v388, 1
        %v473 = vsel %vm458, %v471, %v472
        %v474 = vrot.slane %v387, 1
        %v475 = vrot.slane %v389, 1
        %v476 = vsel %vm458, %v474, %v475
        %v477 = vrot.slane %v390, 1
        %v478 = vrot.slane %v392, 1
        %v479 = vsel %vm458, %v477, %v478
        %v480 = vrot.slane %v391, 1
        %v481 = vrot.slane %v393, 1
        %v482 = vsel %vm458, %v480, %v481
        %v483 = vrot.slane %v394, 1
        %v484 = vrot.slane %v396, 1
        %v485 = vsel %vm458, %v483, %v484
        %v486 = vrot.slane %v395, 1
        %v487 = vrot.slane %v397, 1
        %v488 = vsel %vm458, %v486, %v487
        %v489 = vrot.slane %v398, 1
        %v490 = vrot.slane %v400, 1
        %v491 = vsel %vm458, %v489, %v490
        %v492 = vrot.slane %v399, 1
        %v493 = vrot.slane %v401, 1
        %v494 = vsel %vm458, %v492, %v493
        %v495 = vrot.slane %v402, 1
        %v496 = vrot.slane %v404, 1
        %v497 = vsel %vm458, %v495, %v496
        %v498 = vrot.slane %v403, 1
        %v499 = vrot.slane %v405, 1
        %v500 = vsel %vm458, %v498, %v499
        %v501 = vrot.slane %v406, 1
        %v502 = vrot.slane %v408, 1
        %v503 = vsel %vm458, %v501, %v502
        %v504 = vrot.slane %v407, 1
        %v505 = vrot.slane %v409, 1
        %v506 = vsel %vm458, %v504, %v505
        %v507 = vrot.slane %v410, 1
        %v508 = vrot.slane %v412, 1
        %v509 = vsel %vm458, %v507, %v508
        %v510 = vrot.slane %v411, 1
        %v511 = vrot.slane %v413, 1
        %v512 = vsel %vm458, %v510, %v511
        %v513 = vrot.slane %v414, 1
        %v514 = vrot.slane %v416, 1
        %v515 = vsel %vm458, %v513, %v514
        %v516 = vrot.slane %v415, 1
        %v517 = vrot.slane %v417, 1
        %v518 = vsel %vm458, %v516, %v517
        %539 = vst [vmem:[#allocation3 + $0x10] sm:$0xff] %v461
        %540 = vst [vmem:[#allocation3 + $0x18] sm:$0xff] %v464
        %541 = vst [vmem:[#allocation3 + $0x40] sm:$0xff] %v467
        %542 = vst [vmem:[#allocation3 + $0x48] sm:$0xff] %v470
        %543 = vst [vmem:[#allocation3 + $0x70] sm:$0xff] %v473
        %544 = vst [vmem:[#allocation3 + $0x78] sm:$0xff] %v476
        %545 = vst [vmem:[#allocation3 + $0xa0] sm:$0xff] %v479
        %546 = vst [vmem:[#allocation3 + $0xa8] sm:$0xff] %v482
        %547 = vst [vmem:[#allocation3 + $0xd0] sm:$0xff] %v485
        %548 = vst [vmem:[#allocation3 + $0xd8] sm:$0xff] %v488
        %549 = vst [vmem:[#allocation3 + $0x100] sm:$0xff] %v491
        %550 = vst [vmem:[#allocation3 + $0x108] sm:$0xff] %v494
        %551 = vst [vmem:[#allocation3 + $0x130] sm:$0xff] %v497
        %552 = vst [vmem:[#allocation3 + $0x138] sm:$0xff] %v500
        %553 = vst [vmem:[#allocation3 + $0x160] sm:$0xff] %v503
        %554 = vst [vmem:[#allocation3 + $0x168] sm:$0xff] %v506
        %555 = vst [vmem:[#allocation3 + $0x190] sm:$0xff] %v509
        %556 = vst [vmem:[#allocation3 + $0x198] sm:$0xff] %v512
        %557 = vst [vmem:[#allocation3 + $0x1c0] sm:$0xff] %v515
        %558 = vst [vmem:[#allocation3 + $0x1c8] sm:$0xff] %v518
        %v559 = vld [vmem:[#allocation2] sm:$0xfc]
        %v560 = vld [vmem:[#allocation2 + $0x8] sm:$0xfc]
        %v561 = vld [vmem:[#allocation2 + $0x10] sm:$0x3]
        %v562 = vld [vmem:[#allocation2 + $0x18] sm:$0x3]
        %v563 = vld [vmem:[#allocation2 + $0x20] sm:$0xfc]
        %v564 = vld [vmem:[#allocation2 + $0x28] sm:$0xfc]
        %v565 = vld [vmem:[#allocation2 + $0x30] sm:$0x3]
        %v566 = vld [vmem:[#allocation2 + $0x38] sm:$0x3]
        %v567 = vld [vmem:[#allocation2 + $0x40] sm:$0xfc]
        %v568 = vld [vmem:[#allocation2 + $0x48] sm:$0xfc]
        %v569 = vld [vmem:[#allocation2 + $0x50] sm:$0x3]
        %v570 = vld [vmem:[#allocation2 + $0x58] sm:$0x3]
        %v571 = vld [vmem:[#allocation2 + $0x60] sm:$0xfc]
        %v572 = vld [vmem:[#allocation2 + $0x68] sm:$0xfc]
        %v573 = vld [vmem:[#allocation2 + $0x70] sm:$0x3]
        %v574 = vld [vmem:[#allocation2 + $0x78] sm:$0x3]
        %v575 = vld [vmem:[#allocation2 + $0x80] sm:$0xfc]
        %v576 = vld [vmem:[#allocation2 + $0x88] sm:$0xfc]
        %v577 = vld [vmem:[#allocation2 + $0x90] sm:$0x3]
        %v578 = vld [vmem:[#allocation2 + $0x98] sm:$0x3]
        %v579 = vld [vmem:[#allocation2 + $0xa0] sm:$0xfc]
        %v580 = vld [vmem:[#allocation2 + $0xa8] sm:$0xfc]
        %v581 = vld [vmem:[#allocation2 + $0xb0] sm:$0x3]
        %v582 = vld [vmem:[#allocation2 + $0xb8] sm:$0x3]
        %v583 = vld [vmem:[#allocation2 + $0xc0] sm:$0xfc]
        %v584 = vld [vmem:[#allocation2 + $0xc8] sm:$0xfc]
        %v585 = vld [vmem:[#allocation2 + $0xd0] sm:$0x3]
        %v586 = vld [vmem:[#allocation2 + $0xd8] sm:$0x3]
        %v587 = vld [vmem:[#allocation2 + $0xe0] sm:$0xfc]
        %v588 = vld [vmem:[#allocation2 + $0xe8] sm:$0xfc]
        %v589 = vld [vmem:[#allocation2 + $0xf0] sm:$0x3]
        %v590 = vld [vmem:[#allocation2 + $0xf8] sm:$0x3]
        %v591 = vld [vmem:[#allocation2 + $0x100] sm:$0xfc]
        %v592 = vld [vmem:[#allocation2 + $0x108] sm:$0xfc]
        %v593 = vld [vmem:[#allocation2 + $0x110] sm:$0x3]
        %v594 = vld [vmem:[#allocation2 + $0x118] sm:$0x3]
        %v595 = vld [vmem:[#allocation2 + $0x120] sm:$0xfc]
        %v596 = vld [vmem:[#allocation2 + $0x128] sm:$0xfc]
        %v597 = vld [vmem:[#allocation2 + $0x130] sm:$0x3]
        %v598 = vld [vmem:[#allocation2 + $0x138] sm:$0x3]
        %vm639 = vcmask 1045504
        %v640 = vrot.slane %v559, 2
        %v641 = vrot.slane %v561, 2
        %v642 = vsel %vm639, %v640, %v641
        %v643 = vrot.slane %v560, 2
        %v644 = vrot.slane %v562, 2
        %v645 = vsel %vm639, %v643, %v644
        %v646 = vrot.slane %v563, 2
        %v647 = vrot.slane %v565, 2
        %v648 = vsel %vm639, %v646, %v647
        %v649 = vrot.slane %v564, 2
        %v650 = vrot.slane %v566, 2
        %v651 = vsel %vm639, %v649, %v650
        %v652 = vrot.slane %v567, 2
        %v653 = vrot.slane %v569, 2
        %v654 = vsel %vm639, %v652, %v653
        %v655 = vrot.slane %v568, 2
        %v656 = vrot.slane %v570, 2
        %v657 = vsel %vm639, %v655, %v656
        %v658 = vrot.slane %v571, 2
        %v659 = vrot.slane %v573, 2
        %v660 = vsel %vm639, %v658, %v659
        %v661 = vrot.slane %v572, 2
        %v662 = vrot.slane %v574, 2
        %v663 = vsel %vm639, %v661, %v662
        %v664 = vrot.slane %v575, 2
        %v665 = vrot.slane %v577, 2
        %v666 = vsel %vm639, %v664, %v665
        %v667 = vrot.slane %v576, 2
        %v668 = vrot.slane %v578, 2
        %v669 = vsel %vm639, %v667, %v668
        %v670 = vrot.slane %v579, 2
        %v671 = vrot.slane %v581, 2
        %v672 = vsel %vm639, %v670, %v671
        %v673 = vrot.slane %v580, 2
        %v674 = vrot.slane %v582, 2
        %v675 = vsel %vm639, %v673, %v674
        %v676 = vrot.slane %v583, 2
        %v677 = vrot.slane %v585, 2
        %v678 = vsel %vm639, %v676, %v677
        %v679 = vrot.slane %v584, 2
        %v680 = vrot.slane %v586, 2
        %v681 = vsel %vm639, %v679, %v680
        %v682 = vrot.slane %v587, 2
        %v683 = vrot.slane %v589, 2
        %v684 = vsel %vm639, %v682, %v683
        %v685 = vrot.slane %v588, 2
        %v686 = vrot.slane %v590, 2
        %v687 = vsel %vm639, %v685, %v686
        %v688 = vrot.slane %v591, 2
        %v689 = vrot.slane %v593, 2
        %v690 = vsel %vm639, %v688, %v689
        %v691 = vrot.slane %v592, 2
        %v692 = vrot.slane %v594, 2
        %v693 = vsel %vm639, %v691, %v692
        %v694 = vrot.slane %v595, 2
        %v695 = vrot.slane %v597, 2
        %v696 = vsel %vm639, %v694, %v695
        %v697 = vrot.slane %v596, 2
        %v698 = vrot.slane %v598, 2
        %v699 = vsel %vm639, %v697, %v698
        %720 = vst [vmem:[#allocation3 + $0x20] sm:$0xff] %v642
        %721 = vst [vmem:[#allocation3 + $0x28] sm:$0xff] %v645
        %722 = vst [vmem:[#allocation3 + $0x50] sm:$0xff] %v648
        %723 = vst [vmem:[#allocation3 + $0x58] sm:$0xff] %v651
        %724 = vst [vmem:[#allocation3 + $0x80] sm:$0xff] %v654
        %725 = vst [vmem:[#allocation3 + $0x88] sm:$0xff] %v657
        %726 = vst [vmem:[#allocation3 + $0xb0] sm:$0xff] %v660
        %727 = vst [vmem:[#allocation3 + $0xb8] sm:$0xff] %v663
        %728 = vst [vmem:[#allocation3 + $0xe0] sm:$0xff] %v666
        %729 = vst [vmem:[#allocation3 + $0xe8] sm:$0xff] %v669
        %730 = vst [vmem:[#allocation3 + $0x110] sm:$0xff] %v672
        %731 = vst [vmem:[#allocation3 + $0x118] sm:$0xff] %v675
        %732 = vst [vmem:[#allocation3 + $0x140] sm:$0xff] %v678
        %733 = vst [vmem:[#allocation3 + $0x148] sm:$0xff] %v681
        %734 = vst [vmem:[#allocation3 + $0x170] sm:$0xff] %v684
        %735 = vst [vmem:[#allocation3 + $0x178] sm:$0xff] %v687
        %736 = vst [vmem:[#allocation3 + $0x1a0] sm:$0xff] %v690
        %737 = vst [vmem:[#allocation3 + $0x1a8] sm:$0xff] %v693
        %738 = vst [vmem:[#allocation3 + $0x1d0] sm:$0xff] %v696
        %739 = vst [vmem:[#allocation3 + $0x1d8] sm:$0xff] %v699
        %v740 = vld [vmem:[#allocation3] sm:$0xff]
        %v741 = vld [vmem:[#allocation3 + $0x8] sm:$0xff]
        %v742 = vld [vmem:[#allocation3 + $0x10] sm:$0xff]
        %v743 = vld [vmem:[#allocation3 + $0x18] sm:$0xff]
        %v744 = vld [vmem:[#allocation3 + $0x20] sm:$0xff]
        %v745 = vld [vmem:[#allocation3 + $0x28] sm:$0xff]
        %v746 = vld [vmem:[#allocation3 + $0x30] sm:$0xff]
        %v747 = vld [vmem:[#allocation3 + $0x38] sm:$0xff]
        %v748 = vld [vmem:[#allocation3 + $0x40] sm:$0xff]
        %v749 = vld [vmem:[#allocation3 + $0x48] sm:$0xff]
        %v750 = vld [vmem:[#allocation3 + $0x50] sm:$0xff]
        %v751 = vld [vmem:[#allocation3 + $0x58] sm:$0xff]
        %v752 = vld [vmem:[#allocation3 + $0x60] sm:$0xff]
        %v753 = vld [vmem:[#allocation3 + $0x68] sm:$0xff]
        %v754 = vld [vmem:[#allocation3 + $0x70] sm:$0xff]
        %v755 = vld [vmem:[#allocation3 + $0x78] sm:$0xff]
        %v756 = vld [vmem:[#allocation3 + $0x80] sm:$0xff]
        %v757 = vld [vmem:[#allocation3 + $0x88] sm:$0xff]
        %v758 = vld [vmem:[#allocation3 + $0x90] sm:$0xff]
        %v759 = vld [vmem:[#allocation3 + $0x98] sm:$0xff]
        %v760 = vld [vmem:[#allocation3 + $0xa0] sm:$0xff]
        %v761 = vld [vmem:[#allocation3 + $0xa8] sm:$0xff]
        %v762 = vld [vmem:[#allocation3 + $0xb0] sm:$0xff]
        %v763 = vld [vmem:[#allocation3 + $0xb8] sm:$0xff]
        %v764 = vld [vmem:[#allocation3 + $0xc0] sm:$0xff]
        %v765 = vld [vmem:[#allocation3 + $0xc8] sm:$0xff]
        %v766 = vld [vmem:[#allocation3 + $0xd0] sm:$0xff]
        %v767 = vld [vmem:[#allocation3 + $0xd8] sm:$0xff]
        %v768 = vld [vmem:[#allocation3 + $0xe0] sm:$0xff]
        %v769 = vld [vmem:[#allocation3 + $0xe8] sm:$0xff]
        %v770 = vld [vmem:[#allocation3 + $0xf0] sm:$0xff]
        %v771 = vld [vmem:[#allocation3 + $0xf8] sm:$0xff]
        %v772 = vld [vmem:[#allocation3 + $0x100] sm:$0xff]
        %v773 = vld [vmem:[#allocation3 + $0x108] sm:$0xff]
        %v774 = vld [vmem:[#allocation3 + $0x110] sm:$0xff]
        %v775 = vld [vmem:[#allocation3 + $0x118] sm:$0xff]
        %v776 = vld [vmem:[#allocation3 + $0x120] sm:$0xff]
        %v777 = vld [vmem:[#allocation3 + $0x128] sm:$0xff]
        %v778 = vld [vmem:[#allocation3 + $0x130] sm:$0xff]
        %v779 = vld [vmem:[#allocation3 + $0x138] sm:$0xff]
        %v780 = vld [vmem:[#allocation3 + $0x140] sm:$0xff]
        %v781 = vld [vmem:[#allocation3 + $0x148] sm:$0xff]
        %v782 = vld [vmem:[#allocation3 + $0x150] sm:$0xff]
        %v783 = vld [vmem:[#allocation3 + $0x158] sm:$0xff]
        %v784 = vld [vmem:[#allocation3 + $0x160] sm:$0xff]
        %v785 = vld [vmem:[#allocation3 + $0x168] sm:$0xff]
        %v786 = vld [vmem:[#allocation3 + $0x170] sm:$0xff]
        %v787 = vld [vmem:[#allocation3 + $0x178] sm:$0xff]
        %v788 = vpack.c.bf16 %v746, %v740
        %v789 = vpack.c.bf16 %v747, %v741
        %v790 = vpack.c.bf16 %v748, %v742
        %v791 = vpack.c.bf16 %v749, %v743
        %v792 = vpack.c.bf16 %v750, %v744
        %v793 = vpack.c.bf16 %v751, %v745
        %v794 = vpack.c.bf16 %v758, %v752
        %v795 = vpack.c.bf16 %v759, %v753
        %v796 = vpack.c.bf16 %v760, %v754
        %v797 = vpack.c.bf16 %v761, %v755
        %v798 = vpack.c.bf16 %v762, %v756
        %v799 = vpack.c.bf16 %v763, %v757
        %v800 = vpack.c.bf16 %v770, %v764
        %v801 = vpack.c.bf16 %v771, %v765
        %v802 = vpack.c.bf16 %v772, %v766
        %v803 = vpack.c.bf16 %v773, %v767
        %v804 = vpack.c.bf16 %v774, %v768
        %v805 = vpack.c.bf16 %v775, %v769
        %v806 = vpack.c.bf16 %v782, %v776
        %v807 = vpack.c.bf16 %v783, %v777
        %v808 = vpack.c.bf16 %v784, %v778
        %v809 = vpack.c.bf16 %v785, %v779
        %v810 = vpack.c.bf16 %v786, %v780
        %v811 = vpack.c.bf16 %v787, %v781
        %v812 = vld [vmem:[%s1] sm:$0xff]
        %v813 = vld [vmem:[%s1 + $0x8] sm:$0xff]
        %v814 = vld [vmem:[%s1 + $0x10] sm:$0xff]
        %v815 = vld [vmem:[%s1 + $0x18] sm:$0xff]
        %v816 = vld [vmem:[%s1 + $0x20] sm:$0xff]
        %v817 = vld [vmem:[%s1 + $0x28] sm:$0xff]
        %v818 = vld [vmem:[%s1 + $0x30] sm:$0xff]
        %v819 = vld [vmem:[%s1 + $0x38] sm:$0xff]
        %v820 = vld [vmem:[%s1 + $0x40] sm:$0xff]
        %v821 = vld [vmem:[%s1 + $0x48] sm:$0xff]
        %v822 = vld [vmem:[%s1 + $0x50] sm:$0xff]
        %v823 = vld [vmem:[%s1 + $0x58] sm:$0xff]
        %v824 = vld [vmem:[%s1 + $0x60] sm:$0xff]
        %v825 = vld [vmem:[%s1 + $0x68] sm:$0xff]
        %v826 = vld [vmem:[%s1 + $0x70] sm:$0xff]
        %v827 = vld [vmem:[%s1 + $0x78] sm:$0xff]
        %v828 = vld [vmem:[%s1 + $0x80] sm:$0xff]
        %v829 = vld [vmem:[%s1 + $0x88] sm:$0xff]
        %v830 = vld [vmem:[%s1 + $0x90] sm:$0xff]
        %v831 = vld [vmem:[%s1 + $0x98] sm:$0xff]
        %v832 = vld [vmem:[%s1 + $0xa0] sm:$0xff]
        %v833 = vld [vmem:[%s1 + $0xa8] sm:$0xff]
        %v834 = vld [vmem:[%s1 + $0xb0] sm:$0xff]
        %v835 = vld [vmem:[%s1 + $0xb8] sm:$0xff]
        %v836 = vld [vmem:[%s1 + $0xc0] sm:$0xff]
        %v837 = vld [vmem:[%s1 + $0xc8] sm:$0xff]
        %v838 = vld [vmem:[%s1 + $0xd0] sm:$0xff]
        %v839 = vld [vmem:[%s1 + $0xd8] sm:$0xff]
        %v840 = vld [vmem:[%s1 + $0xe0] sm:$0xff]
        %v841 = vld [vmem:[%s1 + $0xe8] sm:$0xff]
        %v842 = vld [vmem:[%s1 + $0xf0] sm:$0xff]
        %v843 = vld [vmem:[%s1 + $0xf8] sm:$0xff]
        %v844 = vld [vmem:[%s1 + $0x100] sm:$0xff]
        %v845 = vld [vmem:[%s1 + $0x108] sm:$0xff]
        %v846 = vld [vmem:[%s1 + $0x110] sm:$0xff]
        %v847 = vld [vmem:[%s1 + $0x118] sm:$0xff]
        %v848 = vld [vmem:[%s1 + $0x120] sm:$0xff]
        %v849 = vld [vmem:[%s1 + $0x128] sm:$0xff]
        %v850 = vld [vmem:[%s1 + $0x130] sm:$0xff]
        %v851 = vld [vmem:[%s1 + $0x138] sm:$0xff]
        %v852 = vld [vmem:[%s1 + $0x140] sm:$0xff]
        %v853 = vld [vmem:[%s1 + $0x148] sm:$0xff]
        %v854 = vld [vmem:[%s1 + $0x150] sm:$0xff]
        %v855 = vld [vmem:[%s1 + $0x158] sm:$0xff]
        %v856 = vld [vmem:[%s1 + $0x160] sm:$0xff]
        %v857 = vld [vmem:[%s1 + $0x168] sm:$0xff]
        %v858 = vld [vmem:[%s1 + $0x170] sm:$0xff]
        %v859 = vld [vmem:[%s1 + $0x178] sm:$0xff]
        %v860 = vld [vmem:[%s1 + $0x180] sm:$0xff]
        %v861 = vld [vmem:[%s1 + $0x188] sm:$0xff]
        %v862 = vld [vmem:[%s1 + $0x190] sm:$0xff]
        %v863 = vld [vmem:[%s1 + $0x198] sm:$0xff]
        %v864 = vld [vmem:[%s1 + $0x1a0] sm:$0xff]
        %v865 = vld [vmem:[%s1 + $0x1a8] sm:$0xff]
        %v866 = vld [vmem:[%s1 + $0x1b0] sm:$0xff]
        %v867 = vld [vmem:[%s1 + $0x1b8] sm:$0xff]
        %v868 = vld [vmem:[%s1 + $0x1c0] sm:$0xff]
        %v869 = vld [vmem:[%s1 + $0x1c8] sm:$0xff]
        %v870 = vld [vmem:[%s1 + $0x1d0] sm:$0xff]
        %v871 = vld [vmem:[%s1 + $0x1d8] sm:$0xff]
        %v872 = vld [vmem:[%s1 + $0x1e0] sm:$0xff]
        %v873 = vld [vmem:[%s1 + $0x1e8] sm:$0xff]
        %v874 = vld [vmem:[%s1 + $0x1f0] sm:$0xff]
        %v875 = vld [vmem:[%s1 + $0x1f8] sm:$0xff]
        %v876 = vld [vmem:[%s1 + $0x200] sm:$0xff]
        %v877 = vld [vmem:[%s1 + $0x208] sm:$0xff]
        %v878 = vld [vmem:[%s1 + $0x210] sm:$0xff]
        %v879 = vld [vmem:[%s1 + $0x218] sm:$0xff]
        %v880 = vld [vmem:[%s1 + $0x220] sm:$0xff]
        %v881 = vld [vmem:[%s1 + $0x228] sm:$0xff]
        %v882 = vld [vmem:[%s1 + $0x230] sm:$0xff]
        %v883 = vld [vmem:[%s1 + $0x238] sm:$0xff]
        %v884 = vld [vmem:[%s1 + $0x240] sm:$0xff]
        %v885 = vld [vmem:[%s1 + $0x248] sm:$0xff]
        %v886 = vld [vmem:[%s1 + $0x250] sm:$0xff]
        %v887 = vld [vmem:[%s1 + $0x258] sm:$0xff]
        %v888 = vld [vmem:[%s1 + $0x260] sm:$0xff]
        %v889 = vld [vmem:[%s1 + $0x268] sm:$0xff]
        %v890 = vld [vmem:[%s1 + $0x270] sm:$0xff]
        %v891 = vld [vmem:[%s1 + $0x278] sm:$0xff]
        %v892 = vld [vmem:[%s1 + $0x280] sm:$0xff]
        %v893 = vld [vmem:[%s1 + $0x288] sm:$0xff]
        %v894 = vld [vmem:[%s1 + $0x290] sm:$0xff]
        %v895 = vld [vmem:[%s1 + $0x298] sm:$0xff]
        %v896 = vld [vmem:[%s1 + $0x2a0] sm:$0xff]
        %v897 = vld [vmem:[%s1 + $0x2a8] sm:$0xff]
        %v898 = vld [vmem:[%s1 + $0x2b0] sm:$0xff]
        %v899 = vld [vmem:[%s1 + $0x2b8] sm:$0xff]
        %v900 = vld [vmem:[%s1 + $0x2c0] sm:$0xff]
        %v901 = vld [vmem:[%s1 + $0x2c8] sm:$0xff]
        %v902 = vld [vmem:[%s1 + $0x2d0] sm:$0xff]
        %v903 = vld [vmem:[%s1 + $0x2d8] sm:$0xff]
        %v904 = vld [vmem:[%s1 + $0x2e0] sm:$0xff]
        %v905 = vld [vmem:[%s1 + $0x2e8] sm:$0xff]
        %v906 = vld [vmem:[%s1 + $0x2f0] sm:$0xff]
        %v907 = vld [vmem:[%s1 + $0x2f8] sm:$0xff]
        %s908 = scalar_lea.vmem [#allocation3], 48
        %v909 = vld [vmem:[%s908] sm:$0xff]
        %v910 = vld [vmem:[%s908 + $0x8] sm:$0xff]
        %v911 = vld [vmem:[%s908 + $0x10] sm:$0xff]
        %v912 = vld [vmem:[%s908 + $0x18] sm:$0xff]
        %v913 = vld [vmem:[%s908 + $0x20] sm:$0xff]
        %v914 = vld [vmem:[%s908 + $0x28] sm:$0xff]
        %v915 = vld [vmem:[%s908 + $0x30] sm:$0xff]
        %v916 = vld [vmem:[%s908 + $0x38] sm:$0xff]
        %v917 = vld [vmem:[%s908 + $0x40] sm:$0xff]
        %v918 = vld [vmem:[%s908 + $0x48] sm:$0xff]
        %v919 = vld [vmem:[%s908 + $0x50] sm:$0xff]
        %v920 = vld [vmem:[%s908 + $0x58] sm:$0xff]
        %v921 = vld [vmem:[%s908 + $0x60] sm:$0xff]
        %v922 = vld [vmem:[%s908 + $0x68] sm:$0xff]
        %v923 = vld [vmem:[%s908 + $0x70] sm:$0xff]
        %v924 = vld [vmem:[%s908 + $0x78] sm:$0xff]
        %v925 = vld [vmem:[%s908 + $0x80] sm:$0xff]
        %v926 = vld [vmem:[%s908 + $0x88] sm:$0xff]
        %v927 = vld [vmem:[%s908 + $0x90] sm:$0xff]
        %v928 = vld [vmem:[%s908 + $0x98] sm:$0xff]
        %v929 = vld [vmem:[%s908 + $0xa0] sm:$0xff]
        %v930 = vld [vmem:[%s908 + $0xa8] sm:$0xff]
        %v931 = vld [vmem:[%s908 + $0xb0] sm:$0xff]
        %v932 = vld [vmem:[%s908 + $0xb8] sm:$0xff]
        %v933 = vld [vmem:[%s908 + $0xc0] sm:$0xff]
        %v934 = vld [vmem:[%s908 + $0xc8] sm:$0xff]
        %v935 = vld [vmem:[%s908 + $0xd0] sm:$0xff]
        %v936 = vld [vmem:[%s908 + $0xd8] sm:$0xff]
        %v937 = vld [vmem:[%s908 + $0xe0] sm:$0xff]
        %v938 = vld [vmem:[%s908 + $0xe8] sm:$0xff]
        %v939 = vld [vmem:[%s908 + $0xf0] sm:$0xff]
        %v940 = vld [vmem:[%s908 + $0xf8] sm:$0xff]
        %v941 = vld [vmem:[%s908 + $0x100] sm:$0xff]
        %v942 = vld [vmem:[%s908 + $0x108] sm:$0xff]
        %v943 = vld [vmem:[%s908 + $0x110] sm:$0xff]
        %v944 = vld [vmem:[%s908 + $0x118] sm:$0xff]
        %v945 = vld [vmem:[%s908 + $0x120] sm:$0xff]
        %v946 = vld [vmem:[%s908 + $0x128] sm:$0xff]
        %v947 = vld [vmem:[%s908 + $0x130] sm:$0xff]
        %v948 = vld [vmem:[%s908 + $0x138] sm:$0xff]
        %v949 = vld [vmem:[%s908 + $0x140] sm:$0xff]
        %v950 = vld [vmem:[%s908 + $0x148] sm:$0xff]
        %v951 = vld [vmem:[%s908 + $0x150] sm:$0xff]
        %v952 = vld [vmem:[%s908 + $0x158] sm:$0xff]
        %v953 = vld [vmem:[%s908 + $0x160] sm:$0xff]
        %v954 = vld [vmem:[%s908 + $0x168] sm:$0xff]
        %v955 = vld [vmem:[%s908 + $0x170] sm:$0xff]
        %v956 = vld [vmem:[%s908 + $0x178] sm:$0xff]
        %v957 = vpack.c.bf16 %v915, %v909
        %v958 = vpack.c.bf16 %v916, %v910
        %v959 = vpack.c.bf16 %v917, %v911
        %v960 = vpack.c.bf16 %v918, %v912
        %v961 = vpack.c.bf16 %v919, %v913
        %v962 = vpack.c.bf16 %v920, %v914
        %v963 = vpack.c.bf16 %v927, %v921
        %v964 = vpack.c.bf16 %v928, %v922
        %v965 = vpack.c.bf16 %v929, %v923
        %v966 = vpack.c.bf16 %v930, %v924
        %v967 = vpack.c.bf16 %v931, %v925
        %v968 = vpack.c.bf16 %v932, %v926
        %v969 = vpack.c.bf16 %v939, %v933
        %v970 = vpack.c.bf16 %v940, %v934
        %v971 = vpack.c.bf16 %v941, %v935
        %v972 = vpack.c.bf16 %v942, %v936
        %v973 = vpack.c.bf16 %v943, %v937
        %v974 = vpack.c.bf16 %v944, %v938
        %v975 = vpack.c.bf16 %v951, %v945
        %v976 = vpack.c.bf16 %v952, %v946
        %v977 = vpack.c.bf16 %v953, %v947
        %v978 = vpack.c.bf16 %v954, %v948
        %v979 = vpack.c.bf16 %v955, %v949
        %v980 = vpack.c.bf16 %v956, %v950
        %s981 = scalar_lea.vmem %s1, 768
        %v982 = vld [vmem:[%s981] sm:$0xff]
        %v983 = vld [vmem:[%s981 + $0x8] sm:$0xff]
        %v984 = vld [vmem:[%s981 + $0x10] sm:$0xff]
        %v985 = vld [vmem:[%s981 + $0x18] sm:$0xff]
        %v986 = vld [vmem:[%s981 + $0x20] sm:$0xff]
        %v987 = vld [vmem:[%s981 + $0x28] sm:$0xff]
        %v988 = vld [vmem:[%s981 + $0x30] sm:$0xff]
        %v989 = vld [vmem:[%s981 + $0x38] sm:$0xff]
        %v990 = vld [vmem:[%s981 + $0x40] sm:$0xff]
        %v991 = vld [vmem:[%s981 + $0x48] sm:$0xff]
        %v992 = vld [vmem:[%s981 + $0x50] sm:$0xff]
        %v993 = vld [vmem:[%s981 + $0x58] sm:$0xff]
        %v994 = vld [vmem:[%s981 + $0x60] sm:$0xff]
        %v995 = vld [vmem:[%s981 + $0x68] sm:$0xff]
        %v996 = vld [vmem:[%s981 + $0x70] sm:$0xff]
        %v997 = vld [vmem:[%s981 + $0x78] sm:$0xff]
        %v998 = vld [vmem:[%s981 + $0x80] sm:$0xff]
        %v999 = vld [vmem:[%s981 + $0x88] sm:$0xff]
        %v1000 = vld [vmem:[%s981 + $0x90] sm:$0xff]
        %v1001 = vld [vmem:[%s981 + $0x98] sm:$0xff]
        %v1002 = vld [vmem:[%s981 + $0xa0] sm:$0xff]
        %v1003 = vld [vmem:[%s981 + $0xa8] sm:$0xff]
        %v1004 = vld [vmem:[%s981 + $0xb0] sm:$0xff]
        %v1005 = vld [vmem:[%s981 + $0xb8] sm:$0xff]
        %v1006 = vld [vmem:[%s981 + $0xc0] sm:$0xff]
        %v1007 = vld [vmem:[%s981 + $0xc8] sm:$0xff]
        %v1008 = vld [vmem:[%s981 + $0xd0] sm:$0xff]
        %v1009 = vld [vmem:[%s981 + $0xd8] sm:$0xff]
        %v1010 = vld [vmem:[%s981 + $0xe0] sm:$0xff]
        %v1011 = vld [vmem:[%s981 + $0xe8] sm:$0xff]
        %v1012 = vld [vmem:[%s981 + $0xf0] sm:$0xff]
        %v1013 = vld [vmem:[%s981 + $0xf8] sm:$0xff]
        %v1014 = vld [vmem:[%s981 + $0x100] sm:$0xff]
        %v1015 = vld [vmem:[%s981 + $0x108] sm:$0xff]
        %v1016 = vld [vmem:[%s981 + $0x110] sm:$0xff]
        %v1017 = vld [vmem:[%s981 + $0x118] sm:$0xff]
        %v1018 = vld [vmem:[%s981 + $0x120] sm:$0xff]
        %v1019 = vld [vmem:[%s981 + $0x128] sm:$0xff]
        %v1020 = vld [vmem:[%s981 + $0x130] sm:$0xff]
        %v1021 = vld [vmem:[%s981 + $0x138] sm:$0xff]
        %v1022 = vld [vmem:[%s981 + $0x140] sm:$0xff]
        %v1023 = vld [vmem:[%s981 + $0x148] sm:$0xff]
        %v1024 = vld [vmem:[%s981 + $0x150] sm:$0xff]
        %v1025 = vld [vmem:[%s981 + $0x158] sm:$0xff]
        %v1026 = vld [vmem:[%s981 + $0x160] sm:$0xff]
        %v1027 = vld [vmem:[%s981 + $0x168] sm:$0xff]
        %v1028 = vld [vmem:[%s981 + $0x170] sm:$0xff]
        %v1029 = vld [vmem:[%s981 + $0x178] sm:$0xff]
        %v1030 = vld [vmem:[%s981 + $0x180] sm:$0xff]
        %v1031 = vld [vmem:[%s981 + $0x188] sm:$0xff]
        %v1032 = vld [vmem:[%s981 + $0x190] sm:$0xff]
        %v1033 = vld [vmem:[%s981 + $0x198] sm:$0xff]
        %v1034 = vld [vmem:[%s981 + $0x1a0] sm:$0xff]
        %v1035 = vld [vmem:[%s981 + $0x1a8] sm:$0xff]
        %v1036 = vld [vmem:[%s981 + $0x1b0] sm:$0xff]
        %v1037 = vld [vmem:[%s981 + $0x1b8] sm:$0xff]
        %v1038 = vld [vmem:[%s981 + $0x1c0] sm:$0xff]
        %v1039 = vld [vmem:[%s981 + $0x1c8] sm:$0xff]
        %v1040 = vld [vmem:[%s981 + $0x1d0] sm:$0xff]
        %v1041 = vld [vmem:[%s981 + $0x1d8] sm:$0xff]
        %v1042 = vld [vmem:[%s981 + $0x1e0] sm:$0xff]
        %v1043 = vld [vmem:[%s981 + $0x1e8] sm:$0xff]
        %v1044 = vld [vmem:[%s981 + $0x1f0] sm:$0xff]
        %v1045 = vld [vmem:[%s981 + $0x1f8] sm:$0xff]
        %v1046 = vld [vmem:[%s981 + $0x200] sm:$0xff]
        %v1047 = vld [vmem:[%s981 + $0x208] sm:$0xff]
        %v1048 = vld [vmem:[%s981 + $0x210] sm:$0xff]
        %v1049 = vld [vmem:[%s981 + $0x218] sm:$0xff]
        %v1050 = vld [vmem:[%s981 + $0x220] sm:$0xff]
        %v1051 = vld [vmem:[%s981 + $0x228] sm:$0xff]
        %v1052 = vld [vmem:[%s981 + $0x230] sm:$0xff]
        %v1053 = vld [vmem:[%s981 + $0x238] sm:$0xff]
        %v1054 = vld [vmem:[%s981 + $0x240] sm:$0xff]
        %v1055 = vld [vmem:[%s981 + $0x248] sm:$0xff]
        %v1056 = vld [vmem:[%s981 + $0x250] sm:$0xff]
        %v1057 = vld [vmem:[%s981 + $0x258] sm:$0xff]
        %v1058 = vld [vmem:[%s981 + $0x260] sm:$0xff]
        %v1059 = vld [vmem:[%s981 + $0x268] sm:$0xff]
        %v1060 = vld [vmem:[%s981 + $0x270] sm:$0xff]
        %v1061 = vld [vmem:[%s981 + $0x278] sm:$0xff]
        %v1062 = vld [vmem:[%s981 + $0x280] sm:$0xff]
        %v1063 = vld [vmem:[%s981 + $0x288] sm:$0xff]
        %v1064 = vld [vmem:[%s981 + $0x290] sm:$0xff]
        %v1065 = vld [vmem:[%s981 + $0x298] sm:$0xff]
        %v1066 = vld [vmem:[%s981 + $0x2a0] sm:$0xff]
        %v1067 = vld [vmem:[%s981 + $0x2a8] sm:$0xff]
        %v1068 = vld [vmem:[%s981 + $0x2b0] sm:$0xff]
        %v1069 = vld [vmem:[%s981 + $0x2b8] sm:$0xff]
        %v1070 = vld [vmem:[%s981 + $0x2c0] sm:$0xff]
        %v1071 = vld [vmem:[%s981 + $0x2c8] sm:$0xff]
        %v1072 = vld [vmem:[%s981 + $0x2d0] sm:$0xff]
        %v1073 = vld [vmem:[%s981 + $0x2d8] sm:$0xff]
        %v1074 = vld [vmem:[%s981 + $0x2e0] sm:$0xff]
        %v1075 = vld [vmem:[%s981 + $0x2e8] sm:$0xff]
        %v1076 = vld [vmem:[%s981 + $0x2f0] sm:$0xff]
        %v1077 = vld [vmem:[%s981 + $0x2f8] sm:$0xff]
        %v1174 = vunpack.c.l.b16 %v982
        %v1175 = vunpack.c.h.b16 %v982
        %v1176 = vunpack.c.l.b16 %v983
        %v1177 = vunpack.c.h.b16 %v983
        %v1178 = vunpack.c.l.b16 %v984
        %v1179 = vunpack.c.h.b16 %v984
        %v1180 = vunpack.c.l.b16 %v985
        %v1181 = vunpack.c.h.b16 %v985
        %v1182 = vunpack.c.l.b16 %v986
        %v1183 = vunpack.c.h.b16 %v986
        %v1184 = vunpack.c.l.b16 %v987
        %v1185 = vunpack.c.h.b16 %v987
        %v1186 = vunpack.c.l.b16 %v988
        %v1187 = vunpack.c.h.b16 %v988
        %v1188 = vunpack.c.l.b16 %v989
        %v1189 = vunpack.c.h.b16 %v989
        %v1190 = vunpack.c.l.b16 %v990
        %v1191 = vunpack.c.h.b16 %v990
        %v1192 = vunpack.c.l.b16 %v991
        %v1193 = vunpack.c.h.b16 %v991
        %v1194 = vunpack.c.l.b16 %v992
        %v1195 = vunpack.c.h.b16 %v992
        %v1196 = vunpack.c.l.b16 %v993
        %v1197 = vunpack.c.h.b16 %v993
        %v1198 = vunpack.c.l.b16 %v994
        %v1199 = vunpack.c.h.b16 %v994
        %v1200 = vunpack.c.l.b16 %v995
        %v1201 = vunpack.c.h.b16 %v995
        %v1202 = vunpack.c.l.b16 %v996
        %v1203 = vunpack.c.h.b16 %v996
        %v1204 = vunpack.c.l.b16 %v997
        %v1205 = vunpack.c.h.b16 %v997
        %v1206 = vunpack.c.l.b16 %v998
        %v1207 = vunpack.c.h.b16 %v998
        %v1208 = vunpack.c.l.b16 %v999
        %v1209 = vunpack.c.h.b16 %v999
        %v1210 = vunpack.c.l.b16 %v1000
        %v1211 = vunpack.c.h.b16 %v1000
        %v1212 = vunpack.c.l.b16 %v1001
        %v1213 = vunpack.c.h.b16 %v1001
        %v1214 = vunpack.c.l.b16 %v1002
        %v1215 = vunpack.c.h.b16 %v1002
        %v1216 = vunpack.c.l.b16 %v1003
        %v1217 = vunpack.c.h.b16 %v1003
        %v1218 = vunpack.c.l.b16 %v1004
        %v1219 = vunpack.c.h.b16 %v1004
        %v1220 = vunpack.c.l.b16 %v1005
        %v1221 = vunpack.c.h.b16 %v1005
        %v1222 = vunpack.c.l.b16 %v1006
        %v1223 = vunpack.c.h.b16 %v1006
        %v1224 = vunpack.c.l.b16 %v1007
        %v1225 = vunpack.c.h.b16 %v1007
        %v1226 = vunpack.c.l.b16 %v1008
        %v1227 = vunpack.c.h.b16 %v1008
        %v1228 = vunpack.c.l.b16 %v1009
        %v1229 = vunpack.c.h.b16 %v1009
        %v1230 = vunpack.c.l.b16 %v1010
        %v1231 = vunpack.c.h.b16 %v1010
        %v1232 = vunpack.c.l.b16 %v1011
        %v1233 = vunpack.c.h.b16 %v1011
        %v1234 = vunpack.c.l.b16 %v1012
        %v1235 = vunpack.c.h.b16 %v1012
        %v1236 = vunpack.c.l.b16 %v1013
        %v1237 = vunpack.c.h.b16 %v1013
        %v1238 = vunpack.c.l.b16 %v1014
        %v1239 = vunpack.c.h.b16 %v1014
        %v1240 = vunpack.c.l.b16 %v1015
        %v1241 = vunpack.c.h.b16 %v1015
        %v1242 = vunpack.c.l.b16 %v1016
        %v1243 = vunpack.c.h.b16 %v1016
        %v1244 = vunpack.c.l.b16 %v1017
        %v1245 = vunpack.c.h.b16 %v1017
        %v1246 = vunpack.c.l.b16 %v1018
        %v1247 = vunpack.c.h.b16 %v1018
        %v1248 = vunpack.c.l.b16 %v1019
        %v1249 = vunpack.c.h.b16 %v1019
        %v1250 = vunpack.c.l.b16 %v1020
        %v1251 = vunpack.c.h.b16 %v1020
        %v1252 = vunpack.c.l.b16 %v1021
        %v1253 = vunpack.c.h.b16 %v1021
        %v1254 = vunpack.c.l.b16 %v1022
        %v1255 = vunpack.c.h.b16 %v1022
        %v1256 = vunpack.c.l.b16 %v1023
        %v1257 = vunpack.c.h.b16 %v1023
        %v1258 = vunpack.c.l.b16 %v1024
        %v1259 = vunpack.c.h.b16 %v1024
        %v1260 = vunpack.c.l.b16 %v1025
        %v1261 = vunpack.c.h.b16 %v1025
        %v1262 = vunpack.c.l.b16 %v1026
        %v1263 = vunpack.c.h.b16 %v1026
        %v1264 = vunpack.c.l.b16 %v1027
        %v1265 = vunpack.c.h.b16 %v1027
        %v1266 = vunpack.c.l.b16 %v1028
        %v1267 = vunpack.c.h.b16 %v1028
        %v1268 = vunpack.c.l.b16 %v1029
        %v1269 = vunpack.c.h.b16 %v1029
        %v1270 = vunpack.c.l.b16 %v1030
        %v1271 = vunpack.c.h.b16 %v1030
        %v1272 = vunpack.c.l.b16 %v1031
        %v1273 = vunpack.c.h.b16 %v1031
        %v1274 = vunpack.c.l.b16 %v1032
        %v1275 = vunpack.c.h.b16 %v1032
        %v1276 = vunpack.c.l.b16 %v1033
        %v1277 = vunpack.c.h.b16 %v1033
        %v1278 = vunpack.c.l.b16 %v1034
        %v1279 = vunpack.c.h.b16 %v1034
        %v1280 = vunpack.c.l.b16 %v1035
        %v1281 = vunpack.c.h.b16 %v1035
        %v1282 = vunpack.c.l.b16 %v1036
        %v1283 = vunpack.c.h.b16 %v1036
        %v1284 = vunpack.c.l.b16 %v1037
        %v1285 = vunpack.c.h.b16 %v1037
        %v1286 = vunpack.c.l.b16 %v1038
        %v1287 = vunpack.c.h.b16 %v1038
        %v1288 = vunpack.c.l.b16 %v1039
        %v1289 = vunpack.c.h.b16 %v1039
        %v1290 = vunpack.c.l.b16 %v1040
        %v1291 = vunpack.c.h.b16 %v1040
        %v1292 = vunpack.c.l.b16 %v1041
        %v1293 = vunpack.c.h.b16 %v1041
        %v1294 = vunpack.c.l.b16 %v1042
        %v1295 = vunpack.c.h.b16 %v1042
        %v1296 = vunpack.c.l.b16 %v1043
        %v1297 = vunpack.c.h.b16 %v1043
        %v1298 = vunpack.c.l.b16 %v1044
        %v1299 = vunpack.c.h.b16 %v1044
        %v1300 = vunpack.c.l.b16 %v1045
        %v1301 = vunpack.c.h.b16 %v1045
        %v1302 = vunpack.c.l.b16 %v1046
        %v1303 = vunpack.c.h.b16 %v1046
        %v1304 = vunpack.c.l.b16 %v1047
        %v1305 = vunpack.c.h.b16 %v1047
        %v1306 = vunpack.c.l.b16 %v1048
        %v1307 = vunpack.c.h.b16 %v1048
        %v1308 = vunpack.c.l.b16 %v1049
        %v1309 = vunpack.c.h.b16 %v1049
        %v1310 = vunpack.c.l.b16 %v1050
        %v1311 = vunpack.c.h.b16 %v1050
        %v1312 = vunpack.c.l.b16 %v1051
        %v1313 = vunpack.c.h.b16 %v1051
        %v1314 = vunpack.c.l.b16 %v1052
        %v1315 = vunpack.c.h.b16 %v1052
        %v1316 = vunpack.c.l.b16 %v1053
        %v1317 = vunpack.c.h.b16 %v1053
        %v1318 = vunpack.c.l.b16 %v1054
        %v1319 = vunpack.c.h.b16 %v1054
        %v1320 = vunpack.c.l.b16 %v1055
        %v1321 = vunpack.c.h.b16 %v1055
        %v1322 = vunpack.c.l.b16 %v1056
        %v1323 = vunpack.c.h.b16 %v1056
        %v1324 = vunpack.c.l.b16 %v1057
        %v1325 = vunpack.c.h.b16 %v1057
        %v1326 = vunpack.c.l.b16 %v1058
        %v1327 = vunpack.c.h.b16 %v1058
        %v1328 = vunpack.c.l.b16 %v1059
        %v1329 = vunpack.c.h.b16 %v1059
        %v1330 = vunpack.c.l.b16 %v1060
        %v1331 = vunpack.c.h.b16 %v1060
        %v1332 = vunpack.c.l.b16 %v1061
        %v1333 = vunpack.c.h.b16 %v1061
        %v1334 = vunpack.c.l.b16 %v1062
        %v1335 = vunpack.c.h.b16 %v1062
        %v1336 = vunpack.c.l.b16 %v1063
        %v1337 = vunpack.c.h.b16 %v1063
        %v1338 = vunpack.c.l.b16 %v1064
        %v1339 = vunpack.c.h.b16 %v1064
        %v1340 = vunpack.c.l.b16 %v1065
        %v1341 = vunpack.c.h.b16 %v1065
        %v1342 = vunpack.c.l.b16 %v1066
        %v1343 = vunpack.c.h.b16 %v1066
        %v1344 = vunpack.c.l.b16 %v1067
        %v1345 = vunpack.c.h.b16 %v1067
        %v1346 = vunpack.c.l.b16 %v1068
        %v1347 = vunpack.c.h.b16 %v1068
        %v1348 = vunpack.c.l.b16 %v1069
        %v1349 = vunpack.c.h.b16 %v1069
        %v1350 = vunpack.c.l.b16 %v1070
        %v1351 = vunpack.c.h.b16 %v1070
        %v1352 = vunpack.c.l.b16 %v1071
        %v1353 = vunpack.c.h.b16 %v1071
        %v1354 = vunpack.c.l.b16 %v1072
        %v1355 = vunpack.c.h.b16 %v1072
        %v1356 = vunpack.c.l.b16 %v1073
        %v1357 = vunpack.c.h.b16 %v1073
        %v1358 = vunpack.c.l.b16 %v1074
        %v1359 = vunpack.c.h.b16 %v1074
        %v1360 = vunpack.c.l.b16 %v1075
        %v1361 = vunpack.c.h.b16 %v1075
        %v1362 = vunpack.c.l.b16 %v1076
        %v1363 = vunpack.c.h.b16 %v1076
        %v1364 = vunpack.c.l.b16 %v1077
        %v1365 = vunpack.c.h.b16 %v1077
        %v1366 = vpack.c.b16 %v1176, %v1174
        %v1367 = vpack.c.b16 %v1177, %v1175
        %v1368 = vpack.c.b16 %v1180, %v1178
        %v1369 = vpack.c.b16 %v1181, %v1179
        %v1370 = vpack.c.b16 %v1184, %v1182
        %v1371 = vpack.c.b16 %v1185, %v1183
        %v1372 = vpack.c.b16 %v1188, %v1186
        %v1373 = vpack.c.b16 %v1189, %v1187
        %v1374 = vpack.c.b16 %v1192, %v1190
        %v1375 = vpack.c.b16 %v1193, %v1191
        %v1376 = vpack.c.b16 %v1196, %v1194
        %v1377 = vpack.c.b16 %v1197, %v1195
        %v1378 = vpack.c.b16 %v1200, %v1198
        %v1379 = vpack.c.b16 %v1201, %v1199
        %v1380 = vpack.c.b16 %v1204, %v1202
        %v1381 = vpack.c.b16 %v1205, %v1203
        %v1382 = vpack.c.b16 %v1208, %v1206
        %v1383 = vpack.c.b16 %v1209, %v1207
        %v1384 = vpack.c.b16 %v1212, %v1210
        %v1385 = vpack.c.b16 %v1213, %v1211
        %v1386 = vpack.c.b16 %v1216, %v1214
        %v1387 = vpack.c.b16 %v1217, %v1215
        %v1388 = vpack.c.b16 %v1220, %v1218
        %v1389 = vpack.c.b16 %v1221, %v1219
        %v1390 = vpack.c.b16 %v1224, %v1222
        %v1391 = vpack.c.b16 %v1225, %v1223
        %v1392 = vpack.c.b16 %v1228, %v1226
        %v1393 = vpack.c.b16 %v1229, %v1227
        %v1394 = vpack.c.b16 %v1232, %v1230
        %v1395 = vpack.c.b16 %v1233, %v1231
        %v1396 = vpack.c.b16 %v1236, %v1234
        %v1397 = vpack.c.b16 %v1237, %v1235
        %v1398 = vpack.c.b16 %v1240, %v1238
        %v1399 = vpack.c.b16 %v1241, %v1239
        %v1400 = vpack.c.b16 %v1244, %v1242
        %v1401 = vpack.c.b16 %v1245, %v1243
        %v1402 = vpack.c.b16 %v1248, %v1246
        %v1403 = vpack.c.b16 %v1249, %v1247
        %v1404 = vpack.c.b16 %v1252, %v1250
        %v1405 = vpack.c.b16 %v1253, %v1251
        %v1406 = vpack.c.b16 %v1256, %v1254
        %v1407 = vpack.c.b16 %v1257, %v1255
        %v1408 = vpack.c.b16 %v1260, %v1258
        %v1409 = vpack.c.b16 %v1261, %v1259
        %v1410 = vpack.c.b16 %v1264, %v1262
        %v1411 = vpack.c.b16 %v1265, %v1263
        %v1412 = vpack.c.b16 %v1268, %v1266
        %v1413 = vpack.c.b16 %v1269, %v1267
        %v1414 = vpack.c.b16 %v1272, %v1270
        %v1415 = vpack.c.b16 %v1273, %v1271
        %v1416 = vpack.c.b16 %v1276, %v1274
        %v1417 = vpack.c.b16 %v1277, %v1275
        %v1418 = vpack.c.b16 %v1280, %v1278
        %v1419 = vpack.c.b16 %v1281, %v1279
        %v1420 = vpack.c.b16 %v1284, %v1282
        %v1421 = vpack.c.b16 %v1285, %v1283
        %v1422 = vpack.c.b16 %v1288, %v1286
        %v1423 = vpack.c.b16 %v1289, %v1287
        %v1424 = vpack.c.b16 %v1292, %v1290
        %v1425 = vpack.c.b16 %v1293, %v1291
        %v1426 = vpack.c.b16 %v1296, %v1294
        %v1427 = vpack.c.b16 %v1297, %v1295
        %v1428 = vpack.c.b16 %v1300, %v1298
        %v1429 = vpack.c.b16 %v1301, %v1299
        %v1430 = vpack.c.b16 %v1304, %v1302
        %v1431 = vpack.c.b16 %v1305, %v1303
        %v1432 = vpack.c.b16 %v1308, %v1306
        %v1433 = vpack.c.b16 %v1309, %v1307
        %v1434 = vpack.c.b16 %v1312, %v1310
        %v1435 = vpack.c.b16 %v1313, %v1311
        %v1436 = vpack.c.b16 %v1316, %v1314
        %v1437 = vpack.c.b16 %v1317, %v1315
        %v1438 = vpack.c.b16 %v1320, %v1318
        %v1439 = vpack.c.b16 %v1321, %v1319
        %v1440 = vpack.c.b16 %v1324, %v1322
        %v1441 = vpack.c.b16 %v1325, %v1323
        %v1442 = vpack.c.b16 %v1328, %v1326
        %v1443 = vpack.c.b16 %v1329, %v1327
        %v1444 = vpack.c.b16 %v1332, %v1330
        %v1445 = vpack.c.b16 %v1333, %v1331
        %v1446 = vpack.c.b16 %v1336, %v1334
        %v1447 = vpack.c.b16 %v1337, %v1335
        %v1448 = vpack.c.b16 %v1340, %v1338
        %v1449 = vpack.c.b16 %v1341, %v1339
        %v1450 = vpack.c.b16 %v1344, %v1342
        %v1451 = vpack.c.b16 %v1345, %v1343
        %v1452 = vpack.c.b16 %v1348, %v1346
        %v1453 = vpack.c.b16 %v1349, %v1347
        %v1454 = vpack.c.b16 %v1352, %v1350
        %v1455 = vpack.c.b16 %v1353, %v1351
        %v1456 = vpack.c.b16 %v1356, %v1354
        %v1457 = vpack.c.b16 %v1357, %v1355
        %v1458 = vpack.c.b16 %v1360, %v1358
        %v1459 = vpack.c.b16 %v1361, %v1359
        %v1460 = vpack.c.b16 %v1364, %v1362
        %v1461 = vpack.c.b16 %v1365, %v1363
        %1558 = vmatpush.bf16.msra.mxu0 %v1380
        %1559 = vmatpush.bf16.msra.mxu0 %v1378
        %1560 = vmatpush.bf16.msra.mxu0 %v1376
        %1561 = vmatpush.bf16.msra.mxu0 %v1374
        %1562 = vmatpush.bf16.msra.mxu0 %v1372
        %1563 = vmatpush.bf16.msra.mxu0 %v1370
        %1564 = vmatpush.bf16.msra.mxu0 %v1368
        %1565 = vmatpush.bf16.msra.mxu0 %v1366
        %1566 = vmatmul.bf16.gmra.mxu0 %v957
        %v1567 = vpop.f32.mrf.mxu0
        %v1568 = vadd.f32 0.0, %v1567
        %v1569 = vpop.f32.mrf.mxu0
        %v1570 = vadd.f32 0.0, %v1569
        %1571 = vmatmul.bf16.gmra.mxu0 %v963
        %v1572 = vpop.f32.mrf.mxu0
        %v1573 = vadd.f32 0.0, %v1572
        %v1574 = vpop.f32.mrf.mxu0
        %v1575 = vadd.f32 0.0, %v1574
        %1576 = vmatmul.bf16.gmra.mxu0 %v969
        %v1577 = vpop.f32.mrf.mxu0
        %v1578 = vadd.f32 0.0, %v1577
        %v1579 = vpop.f32.mrf.mxu0
        %v1580 = vadd.f32 0.0, %v1579
        %1581 = vmatmul.bf16.gmra.mxu0 %v975
        %v1582 = vpop.f32.mrf.mxu0
        %v1583 = vadd.f32 0.0, %v1582
        %v1584 = vpop.f32.mrf.mxu0
        %v1585 = vadd.f32 0.0, %v1584
        %1586 = vdwg.mxu0
        %1587 = vmatpush.bf16.msra.mxu0 %v1396
        %1588 = vmatpush.bf16.msra.mxu0 %v1394
        %1589 = vmatpush.bf16.msra.mxu0 %v1392
        %1590 = vmatpush.bf16.msra.mxu0 %v1390
        %1591 = vmatpush.bf16.msra.mxu0 %v1388
        %1592 = vmatpush.bf16.msra.mxu0 %v1386
        %1593 = vmatpush.bf16.msra.mxu0 %v1384
        %1594 = vmatpush.bf16.msra.mxu0 %v1382
        %1595 = vmatmul.bf16.gmra.mxu0 %v958
        %v1596 = vpop.f32.mrf.mxu0
        %v1597 = vadd.f32 %v1568, %v1596
        %v1598 = vpop.f32.mrf.mxu0
        %v1599 = vadd.f32 %v1570, %v1598
        %1600 = vmatmul.bf16.gmra.mxu0 %v964
        %v1601 = vpop.f32.mrf.mxu0
        %v1602 = vadd.f32 %v1573, %v1601
        %v1603 = vpop.f32.mrf.mxu0
        %v1604 = vadd.f32 %v1575, %v1603
        %1605 = vmatmul.bf16.gmra.mxu0 %v970
        %v1606 = vpop.f32.mrf.mxu0
        %v1607 = vadd.f32 %v1578, %v1606
        %v1608 = vpop.f32.mrf.mxu0
        %v1609 = vadd.f32 %v1580, %v1608
        %1610 = vmatmul.bf16.gmra.mxu0 %v976
        %v1611 = vpop.f32.mrf.mxu0
        %v1612 = vadd.f32 %v1583, %v1611
        %v1613 = vpop.f32.mrf.mxu0
        %v1614 = vadd.f32 %v1585, %v1613
        %1615 = vdwg.mxu0
        %1616 = vmatpush.bf16.msra.mxu0 %v1412
        %1617 = vmatpush.bf16.msra.mxu0 %v1410
        %1618 = vmatpush.bf16.msra.mxu0 %v1408
        %1619 = vmatpush.bf16.msra.mxu0 %v1406
        %1620 = vmatpush.bf16.msra.mxu0 %v1404
        %1621 = vmatpush.bf16.msra.mxu0 %v1402
        %1622 = vmatpush.bf16.msra.mxu0 %v1400
        %1623 = vmatpush.bf16.msra.mxu0 %v1398
        %1624 = vmatmul.bf16.gmra.mxu0 %v959
        %v1625 = vpop.f32.mrf.mxu0
        %v1626 = vadd.f32 %v1597, %v1625
        %v1627 = vpop.f32.mrf.mxu0
        %v1628 = vadd.f32 %v1599, %v1627
        %1629 = vmatmul.bf16.gmra.mxu0 %v965
        %v1630 = vpop.f32.mrf.mxu0
        %v1631 = vadd.f32 %v1602, %v1630
        %v1632 = vpop.f32.mrf.mxu0
        %v1633 = vadd.f32 %v1604, %v1632
        %1634 = vmatmul.bf16.gmra.mxu0 %v971
        %v1635 = vpop.f32.mrf.mxu0
        %v1636 = vadd.f32 %v1607, %v1635
        %v1637 = vpop.f32.mrf.mxu0
        %v1638 = vadd.f32 %v1609, %v1637
        %1639 = vmatmul.bf16.gmra.mxu0 %v977
        %v1640 = vpop.f32.mrf.mxu0
        %v1641 = vadd.f32 %v1612, %v1640
        %v1642 = vpop.f32.mrf.mxu0
        %v1643 = vadd.f32 %v1614, %v1642
        %1644 = vdwg.mxu0
        %1645 = vmatpush.bf16.msra.mxu0 %v1428
        %1646 = vmatpush.bf16.msra.mxu0 %v1426
        %1647 = vmatpush.bf16.msra.mxu0 %v1424
        %1648 = vmatpush.bf16.msra.mxu0 %v1422
        %1649 = vmatpush.bf16.msra.mxu0 %v1420
        %1650 = vmatpush.bf16.msra.mxu0 %v1418
        %1651 = vmatpush.bf16.msra.mxu0 %v1416
        %1652 = vmatpush.bf16.msra.mxu0 %v1414
        %1653 = vmatmul.bf16.gmra.mxu0 %v960
        %v1654 = vpop.f32.mrf.mxu0
        %v1655 = vadd.f32 %v1626, %v1654
        %v1656 = vpop.f32.mrf.mxu0
        %v1657 = vadd.f32 %v1628, %v1656
        %1658 = vmatmul.bf16.gmra.mxu0 %v966
        %v1659 = vpop.f32.mrf.mxu0
        %v1660 = vadd.f32 %v1631, %v1659
        %v1661 = vpop.f32.mrf.mxu0
        %v1662 = vadd.f32 %v1633, %v1661
        %1663 = vmatmul.bf16.gmra.mxu0 %v972
        %v1664 = vpop.f32.mrf.mxu0
        %v1665 = vadd.f32 %v1636, %v1664
        %v1666 = vpop.f32.mrf.mxu0
        %v1667 = vadd.f32 %v1638, %v1666
        %1668 = vmatmul.bf16.gmra.mxu0 %v978
        %v1669 = vpop.f32.mrf.mxu0
        %v1670 = vadd.f32 %v1641, %v1669
        %v1671 = vpop.f32.mrf.mxu0
        %v1672 = vadd.f32 %v1643, %v1671
        %1673 = vdwg.mxu0
        %1674 = vmatpush.bf16.msra.mxu0 %v1444
        %1675 = vmatpush.bf16.msra.mxu0 %v1442
        %1676 = vmatpush.bf16.msra.mxu0 %v1440
        %1677 = vmatpush.bf16.msra.mxu0 %v1438
        %1678 = vmatpush.bf16.msra.mxu0 %v1436
        %1679 = vmatpush.bf16.msra.mxu0 %v1434
        %1680 = vmatpush.bf16.msra.mxu0 %v1432
        %1681 = vmatpush.bf16.msra.mxu0 %v1430
        %1682 = vmatmul.bf16.gmra.mxu0 %v961
        %v1683 = vpop.f32.mrf.mxu0
        %v1684 = vadd.f32 %v1655, %v1683
        %v1685 = vpop.f32.mrf.mxu0
        %v1686 = vadd.f32 %v1657, %v1685
        %1687 = vmatmul.bf16.gmra.mxu0 %v967
        %v1688 = vpop.f32.mrf.mxu0
        %v1689 = vadd.f32 %v1660, %v1688
        %v1690 = vpop.f32.mrf.mxu0
        %v1691 = vadd.f32 %v1662, %v1690
        %1692 = vmatmul.bf16.gmra.mxu0 %v973
        %v1693 = vpop.f32.mrf.mxu0
        %v1694 = vadd.f32 %v1665, %v1693
        %v1695 = vpop.f32.mrf.mxu0
        %v1696 = vadd.f32 %v1667, %v1695
        %1697 = vmatmul.bf16.gmra.mxu0 %v979
        %v1698 = vpop.f32.mrf.mxu0
        %v1699 = vadd.f32 %v1670, %v1698
        %v1700 = vpop.f32.mrf.mxu0
        %v1701 = vadd.f32 %v1672, %v1700
        %1702 = vdwg.mxu0
        %1703 = vmatpush.bf16.msra.mxu0 %v1460
        %1704 = vmatpush.bf16.msra.mxu0 %v1458
        %1705 = vmatpush.bf16.msra.mxu0 %v1456
        %1706 = vmatpush.bf16.msra.mxu0 %v1454
        %1707 = vmatpush.bf16.msra.mxu0 %v1452
        %1708 = vmatpush.bf16.msra.mxu0 %v1450
        %1709 = vmatpush.bf16.msra.mxu0 %v1448
        %1710 = vmatpush.bf16.msra.mxu0 %v1446
        %1711 = vmatmul.bf16.gmra.mxu0 %v962
        %v1712 = vpop.f32.mrf.mxu0
        %v1713 = vadd.f32 %v1684, %v1712
        %v1714 = vpop.f32.mrf.mxu0
        %v1715 = vadd.f32 %v1686, %v1714
        %1716 = vmatmul.bf16.gmra.mxu0 %v968
        %v1717 = vpop.f32.mrf.mxu0
        %v1718 = vadd.f32 %v1689, %v1717
        %v1719 = vpop.f32.mrf.mxu0
        %v1720 = vadd.f32 %v1691, %v1719
        %1721 = vmatmul.bf16.gmra.mxu0 %v974
        %v1722 = vpop.f32.mrf.mxu0
        %v1723 = vadd.f32 %v1694, %v1722
        %v1724 = vpop.f32.mrf.mxu0
        %v1725 = vadd.f32 %v1696, %v1724
        %1726 = vmatmul.bf16.gmra.mxu0 %v980
        %v1727 = vpop.f32.mrf.mxu0
        %v1728 = vadd.f32 %v1699, %v1727
        %v1729 = vpop.f32.mrf.mxu0
        %v1730 = vadd.f32 %v1701, %v1729
        %1731 = vdwg.mxu0
        %1732 = vmatpush.bf16.msra.mxu0 %v1381
        %1733 = vmatpush.bf16.msra.mxu0 %v1379
        %1734 = vmatpush.bf16.msra.mxu0 %v1377
        %1735 = vmatpush.bf16.msra.mxu0 %v1375
        %1736 = vmatpush.bf16.msra.mxu0 %v1373
        %1737 = vmatpush.bf16.msra.mxu0 %v1371
        %1738 = vmatpush.bf16.msra.mxu0 %v1369
        %1739 = vmatpush.bf16.msra.mxu0 %v1367
        %1740 = vmatmul.bf16.gmra.mxu0 %v957
        %v1741 = vpop.f32.mrf.mxu0
        %v1742 = vadd.f32 0.0, %v1741
        %v1743 = vpop.f32.mrf.mxu0
        %v1744 = vadd.f32 0.0, %v1743
        %1745 = vmatmul.bf16.gmra.mxu0 %v963
        %v1746 = vpop.f32.mrf.mxu0
        %v1747 = vadd.f32 0.0, %v1746
        %v1748 = vpop.f32.mrf.mxu0
        %v1749 = vadd.f32 0.0, %v1748
        %1750 = vmatmul.bf16.gmra.mxu0 %v969
        %v1751 = vpop.f32.mrf.mxu0
        %v1752 = vadd.f32 0.0, %v1751
        %v1753 = vpop.f32.mrf.mxu0
        %v1754 = vadd.f32 0.0, %v1753
        %1755 = vmatmul.bf16.gmra.mxu0 %v975
        %v1756 = vpop.f32.mrf.mxu0
        %v1757 = vadd.f32 0.0, %v1756
        %v1758 = vpop.f32.mrf.mxu0
        %v1759 = vadd.f32 0.0, %v1758
        %1760 = vdwg.mxu0
        %1761 = vmatpush.bf16.msra.mxu0 %v1397
        %1762 = vmatpush.bf16.msra.mxu0 %v1395
        %1763 = vmatpush.bf16.msra.mxu0 %v1393
        %1764 = vmatpush.bf16.msra.mxu0 %v1391
        %1765 = vmatpush.bf16.msra.mxu0 %v1389
        %1766 = vmatpush.bf16.msra.mxu0 %v1387
        %1767 = vmatpush.bf16.msra.mxu0 %v1385
        %1768 = vmatpush.bf16.msra.mxu0 %v1383
        %1769 = vmatmul.bf16.gmra.mxu0 %v958
        %v1770 = vpop.f32.mrf.mxu0
        %v1771 = vadd.f32 %v1742, %v1770
        %v1772 = vpop.f32.mrf.mxu0
        %v1773 = vadd.f32 %v1744, %v1772
        %1774 = vmatmul.bf16.gmra.mxu0 %v964
        %v1775 = vpop.f32.mrf.mxu0
        %v1776 = vadd.f32 %v1747, %v1775
        %v1777 = vpop.f32.mrf.mxu0
        %v1778 = vadd.f32 %v1749, %v1777
        %1779 = vmatmul.bf16.gmra.mxu0 %v970
        %v1780 = vpop.f32.mrf.mxu0
        %v1781 = vadd.f32 %v1752, %v1780
        %v1782 = vpop.f32.mrf.mxu0
        %v1783 = vadd.f32 %v1754, %v1782
        %1784 = vmatmul.bf16.gmra.mxu0 %v976
        %v1785 = vpop.f32.mrf.mxu0
        %v1786 = vadd.f32 %v1757, %v1785
        %v1787 = vpop.f32.mrf.mxu0
        %v1788 = vadd.f32 %v1759, %v1787
        %1789 = vdwg.mxu0
        %1790 = vmatpush.bf16.msra.mxu0 %v1413
        %1791 = vmatpush.bf16.msra.mxu0 %v1411
        %1792 = vmatpush.bf16.msra.mxu0 %v1409
        %1793 = vmatpush.bf16.msra.mxu0 %v1407
        %1794 = vmatpush.bf16.msra.mxu0 %v1405
        %1795 = vmatpush.bf16.msra.mxu0 %v1403
        %1796 = vmatpush.bf16.msra.mxu0 %v1401
        %1797 = vmatpush.bf16.msra.mxu0 %v1399
        %1798 = vmatmul.bf16.gmra.mxu0 %v959
        %v1799 = vpop.f32.mrf.mxu0
        %v1800 = vadd.f32 %v1771, %v1799
        %v1801 = vpop.f32.mrf.mxu0
        %v1802 = vadd.f32 %v1773, %v1801
        %1803 = vmatmul.bf16.gmra.mxu0 %v965
        %v1804 = vpop.f32.mrf.mxu0
        %v1805 = vadd.f32 %v1776, %v1804
        %v1806 = vpop.f32.mrf.mxu0
        %v1807 = vadd.f32 %v1778, %v1806
        %1808 = vmatmul.bf16.gmra.mxu0 %v971
        %v1809 = vpop.f32.mrf.mxu0
        %v1810 = vadd.f32 %v1781, %v1809
        %v1811 = vpop.f32.mrf.mxu0
        %v1812 = vadd.f32 %v1783, %v1811
        %1813 = vmatmul.bf16.gmra.mxu0 %v977
        %v1814 = vpop.f32.mrf.mxu0
        %v1815 = vadd.f32 %v1786, %v1814
        %v1816 = vpop.f32.mrf.mxu0
        %v1817 = vadd.f32 %v1788, %v1816
        %1818 = vdwg.mxu0
        %1819 = vmatpush.bf16.msra.mxu0 %v1429
        %1820 = vmatpush.bf16.msra.mxu0 %v1427
        %1821 = vmatpush.bf16.msra.mxu0 %v1425
        %1822 = vmatpush.bf16.msra.mxu0 %v1423
        %1823 = vmatpush.bf16.msra.mxu0 %v1421
        %1824 = vmatpush.bf16.msra.mxu0 %v1419
        %1825 = vmatpush.bf16.msra.mxu0 %v1417
        %1826 = vmatpush.bf16.msra.mxu0 %v1415
        %1827 = vmatmul.bf16.gmra.mxu0 %v960
        %v1828 = vpop.f32.mrf.mxu0
        %v1829 = vadd.f32 %v1800, %v1828
        %v1830 = vpop.f32.mrf.mxu0
        %v1831 = vadd.f32 %v1802, %v1830
        %1832 = vmatmul.bf16.gmra.mxu0 %v966
        %v1833 = vpop.f32.mrf.mxu0
        %v1834 = vadd.f32 %v1805, %v1833
        %v1835 = vpop.f32.mrf.mxu0
        %v1836 = vadd.f32 %v1807, %v1835
        %1837 = vmatmul.bf16.gmra.mxu0 %v972
        %v1838 = vpop.f32.mrf.mxu0
        %v1839 = vadd.f32 %v1810, %v1838
        %v1840 = vpop.f32.mrf.mxu0
        %v1841 = vadd.f32 %v1812, %v1840
        %1842 = vmatmul.bf16.gmra.mxu0 %v978
        %v1843 = vpop.f32.mrf.mxu0
        %v1844 = vadd.f32 %v1815, %v1843
        %v1845 = vpop.f32.mrf.mxu0
        %v1846 = vadd.f32 %v1817, %v1845
        %1847 = vdwg.mxu0
        %1848 = vmatpush.bf16.msra.mxu0 %v1445
        %1849 = vmatpush.bf16.msra.mxu0 %v1443
        %1850 = vmatpush.bf16.msra.mxu0 %v1441
        %1851 = vmatpush.bf16.msra.mxu0 %v1439
        %1852 = vmatpush.bf16.msra.mxu0 %v1437
        %1853 = vmatpush.bf16.msra.mxu0 %v1435
        %1854 = vmatpush.bf16.msra.mxu0 %v1433
        %1855 = vmatpush.bf16.msra.mxu0 %v1431
        %1856 = vmatmul.bf16.gmra.mxu0 %v961
        %v1857 = vpop.f32.mrf.mxu0
        %v1858 = vadd.f32 %v1829, %v1857
        %v1859 = vpop.f32.mrf.mxu0
        %v1860 = vadd.f32 %v1831, %v1859
        %1861 = vmatmul.bf16.gmra.mxu0 %v967
        %v1862 = vpop.f32.mrf.mxu0
        %v1863 = vadd.f32 %v1834, %v1862
        %v1864 = vpop.f32.mrf.mxu0
        %v1865 = vadd.f32 %v1836, %v1864
        %1866 = vmatmul.bf16.gmra.mxu0 %v973
        %v1867 = vpop.f32.mrf.mxu0
        %v1868 = vadd.f32 %v1839, %v1867
        %v1869 = vpop.f32.mrf.mxu0
        %v1870 = vadd.f32 %v1841, %v1869
        %1871 = vmatmul.bf16.gmra.mxu0 %v979
        %v1872 = vpop.f32.mrf.mxu0
        %v1873 = vadd.f32 %v1844, %v1872
        %v1874 = vpop.f32.mrf.mxu0
        %v1875 = vadd.f32 %v1846, %v1874
        %1876 = vdwg.mxu0
        %1877 = vmatpush.bf16.msra.mxu0 %v1461
        %1878 = vmatpush.bf16.msra.mxu0 %v1459
        %1879 = vmatpush.bf16.msra.mxu0 %v1457
        %1880 = vmatpush.bf16.msra.mxu0 %v1455
        %1881 = vmatpush.bf16.msra.mxu0 %v1453
        %1882 = vmatpush.bf16.msra.mxu0 %v1451
        %1883 = vmatpush.bf16.msra.mxu0 %v1449
        %1884 = vmatpush.bf16.msra.mxu0 %v1447
        %1885 = vmatmul.bf16.gmra.mxu0 %v962
        %v1886 = vpop.f32.mrf.mxu0
        %v1887 = vadd.f32 %v1858, %v1886
        %v1888 = vpop.f32.mrf.mxu0
        %v1889 = vadd.f32 %v1860, %v1888
        %1890 = vmatmul.bf16.gmra.mxu0 %v968
        %v1891 = vpop.f32.mrf.mxu0
        %v1892 = vadd.f32 %v1863, %v1891
        %v1893 = vpop.f32.mrf.mxu0
        %v1894 = vadd.f32 %v1865, %v1893
        %1895 = vmatmul.bf16.gmra.mxu0 %v974
        %v1896 = vpop.f32.mrf.mxu0
        %v1897 = vadd.f32 %v1868, %v1896
        %v1898 = vpop.f32.mrf.mxu0
        %v1899 = vadd.f32 %v1870, %v1898
        %1900 = vmatmul.bf16.gmra.mxu0 %v980
        %v1901 = vpop.f32.mrf.mxu0
        %v1902 = vadd.f32 %v1873, %v1901
        %v1903 = vpop.f32.mrf.mxu0
        %v1904 = vadd.f32 %v1875, %v1903
        %1905 = vdwg.mxu0
        %v2002 = vunpack.c.l.b16 %v812
        %v2003 = vunpack.c.h.b16 %v812
        %v2004 = vunpack.c.l.b16 %v813
        %v2005 = vunpack.c.h.b16 %v813
        %v2006 = vunpack.c.l.b16 %v814
        %v2007 = vunpack.c.h.b16 %v814
        %v2008 = vunpack.c.l.b16 %v815
        %v2009 = vunpack.c.h.b16 %v815
        %v2010 = vunpack.c.l.b16 %v816
        %v2011 = vunpack.c.h.b16 %v816
        %v2012 = vunpack.c.l.b16 %v817
        %v2013 = vunpack.c.h.b16 %v817
        %v2014 = vunpack.c.l.b16 %v818
        %v2015 = vunpack.c.h.b16 %v818
        %v2016 = vunpack.c.l.b16 %v819
        %v2017 = vunpack.c.h.b16 %v819
        %v2018 = vunpack.c.l.b16 %v820
        %v2019 = vunpack.c.h.b16 %v820
        %v2020 = vunpack.c.l.b16 %v821
        %v2021 = vunpack.c.h.b16 %v821
        %v2022 = vunpack.c.l.b16 %v822
        %v2023 = vunpack.c.h.b16 %v822
        %v2024 = vunpack.c.l.b16 %v823
        %v2025 = vunpack.c.h.b16 %v823
        %v2026 = vunpack.c.l.b16 %v824
        %v2027 = vunpack.c.h.b16 %v824
        %v2028 = vunpack.c.l.b16 %v825
        %v2029 = vunpack.c.h.b16 %v825
        %v2030 = vunpack.c.l.b16 %v826
        %v2031 = vunpack.c.h.b16 %v826
        %v2032 = vunpack.c.l.b16 %v827
        %v2033 = vunpack.c.h.b16 %v827
        %v2034 = vunpack.c.l.b16 %v828
        %v2035 = vunpack.c.h.b16 %v828
        %v2036 = vunpack.c.l.b16 %v829
        %v2037 = vunpack.c.h.b16 %v829
        %v2038 = vunpack.c.l.b16 %v830
        %v2039 = vunpack.c.h.b16 %v830
        %v2040 = vunpack.c.l.b16 %v831
        %v2041 = vunpack.c.h.b16 %v831
        %v2042 = vunpack.c.l.b16 %v832
        %v2043 = vunpack.c.h.b16 %v832
        %v2044 = vunpack.c.l.b16 %v833
        %v2045 = vunpack.c.h.b16 %v833
        %v2046 = vunpack.c.l.b16 %v834
        %v2047 = vunpack.c.h.b16 %v834
        %v2048 = vunpack.c.l.b16 %v835
        %v2049 = vunpack.c.h.b16 %v835
        %v2050 = vunpack.c.l.b16 %v836
        %v2051 = vunpack.c.h.b16 %v836
        %v2052 = vunpack.c.l.b16 %v837
        %v2053 = vunpack.c.h.b16 %v837
        %v2054 = vunpack.c.l.b16 %v838
        %v2055 = vunpack.c.h.b16 %v838
        %v2056 = vunpack.c.l.b16 %v839
        %v2057 = vunpack.c.h.b16 %v839
        %v2058 = vunpack.c.l.b16 %v840
        %v2059 = vunpack.c.h.b16 %v840
        %v2060 = vunpack.c.l.b16 %v841
        %v2061 = vunpack.c.h.b16 %v841
        %v2062 = vunpack.c.l.b16 %v842
        %v2063 = vunpack.c.h.b16 %v842
        %v2064 = vunpack.c.l.b16 %v843
        %v2065 = vunpack.c.h.b16 %v843
        %v2066 = vunpack.c.l.b16 %v844
        %v2067 = vunpack.c.h.b16 %v844
        %v2068 = vunpack.c.l.b16 %v845
        %v2069 = vunpack.c.h.b16 %v845
        %v2070 = vunpack.c.l.b16 %v846
        %v2071 = vunpack.c.h.b16 %v846
        %v2072 = vunpack.c.l.b16 %v847
        %v2073 = vunpack.c.h.b16 %v847
        %v2074 = vunpack.c.l.b16 %v848
        %v2075 = vunpack.c.h.b16 %v848
        %v2076 = vunpack.c.l.b16 %v849
        %v2077 = vunpack.c.h.b16 %v849
        %v2078 = vunpack.c.l.b16 %v850
        %v2079 = vunpack.c.h.b16 %v850
        %v2080 = vunpack.c.l.b16 %v851
        %v2081 = vunpack.c.h.b16 %v851
        %v2082 = vunpack.c.l.b16 %v852
        %v2083 = vunpack.c.h.b16 %v852
        %v2084 = vunpack.c.l.b16 %v853
        %v2085 = vunpack.c.h.b16 %v853
        %v2086 = vunpack.c.l.b16 %v854
        %v2087 = vunpack.c.h.b16 %v854
        %v2088 = vunpack.c.l.b16 %v855
        %v2089 = vunpack.c.h.b16 %v855
        %v2090 = vunpack.c.l.b16 %v856
        %v2091 = vunpack.c.h.b16 %v856
        %v2092 = vunpack.c.l.b16 %v857
        %v2093 = vunpack.c.h.b16 %v857
        %v2094 = vunpack.c.l.b16 %v858
        %v2095 = vunpack.c.h.b16 %v858
        %v2096 = vunpack.c.l.b16 %v859
        %v2097 = vunpack.c.h.b16 %v859
        %v2098 = vunpack.c.l.b16 %v860
        %v2099 = vunpack.c.h.b16 %v860
        %v2100 = vunpack.c.l.b16 %v861
        %v2101 = vunpack.c.h.b16 %v861
        %v2102 = vunpack.c.l.b16 %v862
        %v2103 = vunpack.c.h.b16 %v862
        %v2104 = vunpack.c.l.b16 %v863
        %v2105 = vunpack.c.h.b16 %v863
        %v2106 = vunpack.c.l.b16 %v864
        %v2107 = vunpack.c.h.b16 %v864
        %v2108 = vunpack.c.l.b16 %v865
        %v2109 = vunpack.c.h.b16 %v865
        %v2110 = vunpack.c.l.b16 %v866
        %v2111 = vunpack.c.h.b16 %v866
        %v2112 = vunpack.c.l.b16 %v867
        %v2113 = vunpack.c.h.b16 %v867
        %v2114 = vunpack.c.l.b16 %v868
        %v2115 = vunpack.c.h.b16 %v868
        %v2116 = vunpack.c.l.b16 %v869
        %v2117 = vunpack.c.h.b16 %v869
        %v2118 = vunpack.c.l.b16 %v870
        %v2119 = vunpack.c.h.b16 %v870
        %v2120 = vunpack.c.l.b16 %v871
        %v2121 = vunpack.c.h.b16 %v871
        %v2122 = vunpack.c.l.b16 %v872
        %v2123 = vunpack.c.h.b16 %v872
        %v2124 = vunpack.c.l.b16 %v873
        %v2125 = vunpack.c.h.b16 %v873
        %v2126 = vunpack.c.l.b16 %v874
        %v2127 = vunpack.c.h.b16 %v874
        %v2128 = vunpack.c.l.b16 %v875
        %v2129 = vunpack.c.h.b16 %v875
        %v2130 = vunpack.c.l.b16 %v876
        %v2131 = vunpack.c.h.b16 %v876
        %v2132 = vunpack.c.l.b16 %v877
        %v2133 = vunpack.c.h.b16 %v877
        %v2134 = vunpack.c.l.b16 %v878
        %v2135 = vunpack.c.h.b16 %v878
        %v2136 = vunpack.c.l.b16 %v879
        %v2137 = vunpack.c.h.b16 %v879
        %v2138 = vunpack.c.l.b16 %v880
        %v2139 = vunpack.c.h.b16 %v880
        %v2140 = vunpack.c.l.b16 %v881
        %v2141 = vunpack.c.h.b16 %v881
        %v2142 = vunpack.c.l.b16 %v882
        %v2143 = vunpack.c.h.b16 %v882
        %v2144 = vunpack.c.l.b16 %v883
        %v2145 = vunpack.c.h.b16 %v883
        %v2146 = vunpack.c.l.b16 %v884
        %v2147 = vunpack.c.h.b16 %v884
        %v2148 = vunpack.c.l.b16 %v885
        %v2149 = vunpack.c.h.b16 %v885
        %v2150 = vunpack.c.l.b16 %v886
        %v2151 = vunpack.c.h.b16 %v886
        %v2152 = vunpack.c.l.b16 %v887
        %v2153 = vunpack.c.h.b16 %v887
        %v2154 = vunpack.c.l.b16 %v888
        %v2155 = vunpack.c.h.b16 %v888
        %v2156 = vunpack.c.l.b16 %v889
        %v2157 = vunpack.c.h.b16 %v889
        %v2158 = vunpack.c.l.b16 %v890
        %v2159 = vunpack.c.h.b16 %v890
        %v2160 = vunpack.c.l.b16 %v891
        %v2161 = vunpack.c.h.b16 %v891
        %v2162 = vunpack.c.l.b16 %v892
        %v2163 = vunpack.c.h.b16 %v892
        %v2164 = vunpack.c.l.b16 %v893
        %v2165 = vunpack.c.h.b16 %v893
        %v2166 = vunpack.c.l.b16 %v894
        %v2167 = vunpack.c.h.b16 %v894
        %v2168 = vunpack.c.l.b16 %v895
        %v2169 = vunpack.c.h.b16 %v895
        %v2170 = vunpack.c.l.b16 %v896
        %v2171 = vunpack.c.h.b16 %v896
        %v2172 = vunpack.c.l.b16 %v897
        %v2173 = vunpack.c.h.b16 %v897
        %v2174 = vunpack.c.l.b16 %v898
        %v2175 = vunpack.c.h.b16 %v898
        %v2176 = vunpack.c.l.b16 %v899
        %v2177 = vunpack.c.h.b16 %v899
        %v2178 = vunpack.c.l.b16 %v900
        %v2179 = vunpack.c.h.b16 %v900
        %v2180 = vunpack.c.l.b16 %v901
        %v2181 = vunpack.c.h.b16 %v901
        %v2182 = vunpack.c.l.b16 %v902
        %v2183 = vunpack.c.h.b16 %v902
        %v2184 = vunpack.c.l.b16 %v903
        %v2185 = vunpack.c.h.b16 %v903
        %v2186 = vunpack.c.l.b16 %v904
        %v2187 = vunpack.c.h.b16 %v904
        %v2188 = vunpack.c.l.b16 %v905
        %v2189 = vunpack.c.h.b16 %v905
        %v2190 = vunpack.c.l.b16 %v906
        %v2191 = vunpack.c.h.b16 %v906
        %v2192 = vunpack.c.l.b16 %v907
        %v2193 = vunpack.c.h.b16 %v907
        %v2194 = vpack.c.b16 %v2004, %v2002
        %v2195 = vpack.c.b16 %v2005, %v2003
        %v2196 = vpack.c.b16 %v2008, %v2006
        %v2197 = vpack.c.b16 %v2009, %v2007
        %v2198 = vpack.c.b16 %v2012, %v2010
        %v2199 = vpack.c.b16 %v2013, %v2011
        %v2200 = vpack.c.b16 %v2016, %v2014
        %v2201 = vpack.c.b16 %v2017, %v2015
        %v2202 = vpack.c.b16 %v2020, %v2018
        %v2203 = vpack.c.b16 %v2021, %v2019
        %v2204 = vpack.c.b16 %v2024, %v2022
        %v2205 = vpack.c.b16 %v2025, %v2023
        %v2206 = vpack.c.b16 %v2028, %v2026
        %v2207 = vpack.c.b16 %v2029, %v2027
        %v2208 = vpack.c.b16 %v2032, %v2030
        %v2209 = vpack.c.b16 %v2033, %v2031
        %v2210 = vpack.c.b16 %v2036, %v2034
        %v2211 = vpack.c.b16 %v2037, %v2035
        %v2212 = vpack.c.b16 %v2040, %v2038
        %v2213 = vpack.c.b16 %v2041, %v2039
        %v2214 = vpack.c.b16 %v2044, %v2042
        %v2215 = vpack.c.b16 %v2045, %v2043
        %v2216 = vpack.c.b16 %v2048, %v2046
        %v2217 = vpack.c.b16 %v2049, %v2047
        %v2218 = vpack.c.b16 %v2052, %v2050
        %v2219 = vpack.c.b16 %v2053, %v2051
        %v2220 = vpack.c.b16 %v2056, %v2054
        %v2221 = vpack.c.b16 %v2057, %v2055
        %v2222 = vpack.c.b16 %v2060, %v2058
        %v2223 = vpack.c.b16 %v2061, %v2059
        %v2224 = vpack.c.b16 %v2064, %v2062
        %v2225 = vpack.c.b16 %v2065, %v2063
        %v2226 = vpack.c.b16 %v2068, %v2066
        %v2227 = vpack.c.b16 %v2069, %v2067
        %v2228 = vpack.c.b16 %v2072, %v2070
        %v2229 = vpack.c.b16 %v2073, %v2071
        %v2230 = vpack.c.b16 %v2076, %v2074
        %v2231 = vpack.c.b16 %v2077, %v2075
        %v2232 = vpack.c.b16 %v2080, %v2078
        %v2233 = vpack.c.b16 %v2081, %v2079
        %v2234 = vpack.c.b16 %v2084, %v2082
        %v2235 = vpack.c.b16 %v2085, %v2083
        %v2236 = vpack.c.b16 %v2088, %v2086
        %v2237 = vpack.c.b16 %v2089, %v2087
        %v2238 = vpack.c.b16 %v2092, %v2090
        %v2239 = vpack.c.b16 %v2093, %v2091
        %v2240 = vpack.c.b16 %v2096, %v2094
        %v2241 = vpack.c.b16 %v2097, %v2095
        %v2242 = vpack.c.b16 %v2100, %v2098
        %v2243 = vpack.c.b16 %v2101, %v2099
        %v2244 = vpack.c.b16 %v2104, %v2102
        %v2245 = vpack.c.b16 %v2105, %v2103
        %v2246 = vpack.c.b16 %v2108, %v2106
        %v2247 = vpack.c.b16 %v2109, %v2107
        %v2248 = vpack.c.b16 %v2112, %v2110
        %v2249 = vpack.c.b16 %v2113, %v2111
        %v2250 = vpack.c.b16 %v2116, %v2114
        %v2251 = vpack.c.b16 %v2117, %v2115
        %v2252 = vpack.c.b16 %v2120, %v2118
        %v2253 = vpack.c.b16 %v2121, %v2119
        %v2254 = vpack.c.b16 %v2124, %v2122
        %v2255 = vpack.c.b16 %v2125, %v2123
        %v2256 = vpack.c.b16 %v2128, %v2126
        %v2257 = vpack.c.b16 %v2129, %v2127
        %v2258 = vpack.c.b16 %v2132, %v2130
        %v2259 = vpack.c.b16 %v2133, %v2131
        %v2260 = vpack.c.b16 %v2136, %v2134
        %v2261 = vpack.c.b16 %v2137, %v2135
        %v2262 = vpack.c.b16 %v2140, %v2138
        %v2263 = vpack.c.b16 %v2141, %v2139
        %v2264 = vpack.c.b16 %v2144, %v2142
        %v2265 = vpack.c.b16 %v2145, %v2143
        %v2266 = vpack.c.b16 %v2148, %v2146
        %v2267 = vpack.c.b16 %v2149, %v2147
        %v2268 = vpack.c.b16 %v2152, %v2150
        %v2269 = vpack.c.b16 %v2153, %v2151
        %v2270 = vpack.c.b16 %v2156, %v2154
        %v2271 = vpack.c.b16 %v2157, %v2155
        %v2272 = vpack.c.b16 %v2160, %v2158
        %v2273 = vpack.c.b16 %v2161, %v2159
        %v2274 = vpack.c.b16 %v2164, %v2162
        %v2275 = vpack.c.b16 %v2165, %v2163
        %v2276 = vpack.c.b16 %v2168, %v2166
        %v2277 = vpack.c.b16 %v2169, %v2167
        %v2278 = vpack.c.b16 %v2172, %v2170
        %v2279 = vpack.c.b16 %v2173, %v2171
        %v2280 = vpack.c.b16 %v2176, %v2174
        %v2281 = vpack.c.b16 %v2177, %v2175
        %v2282 = vpack.c.b16 %v2180, %v2178
        %v2283 = vpack.c.b16 %v2181, %v2179
        %v2284 = vpack.c.b16 %v2184, %v2182
        %v2285 = vpack.c.b16 %v2185, %v2183
        %v2286 = vpack.c.b16 %v2188, %v2186
        %v2287 = vpack.c.b16 %v2189, %v2187
        %v2288 = vpack.c.b16 %v2192, %v2190
        %v2289 = vpack.c.b16 %v2193, %v2191
        %2386 = vmatpush.bf16.msra.mxu0 %v2208
        %2387 = vmatpush.bf16.msra.mxu0 %v2206
        %2388 = vmatpush.bf16.msra.mxu0 %v2204
        %2389 = vmatpush.bf16.msra.mxu0 %v2202
        %2390 = vmatpush.bf16.msra.mxu0 %v2200
        %2391 = vmatpush.bf16.msra.mxu0 %v2198
        %2392 = vmatpush.bf16.msra.mxu0 %v2196
        %2393 = vmatpush.bf16.msra.mxu0 %v2194
        %2394 = vmatmul.bf16.gmra.mxu0 %v788
        %v2395 = vpop.f32.mrf.mxu0
        %v2396 = vadd.f32 %v1713, %v2395
        %v2397 = vpop.f32.mrf.mxu0
        %v2398 = vadd.f32 %v1715, %v2397
        %2399 = vmatmul.bf16.gmra.mxu0 %v794
        %v2400 = vpop.f32.mrf.mxu0
        %v2401 = vadd.f32 %v1718, %v2400
        %v2402 = vpop.f32.mrf.mxu0
        %v2403 = vadd.f32 %v1720, %v2402
        %2404 = vmatmul.bf16.gmra.mxu0 %v800
        %v2405 = vpop.f32.mrf.mxu0
        %v2406 = vadd.f32 %v1723, %v2405
        %v2407 = vpop.f32.mrf.mxu0
        %v2408 = vadd.f32 %v1725, %v2407
        %2409 = vmatmul.bf16.gmra.mxu0 %v806
        %v2410 = vpop.f32.mrf.mxu0
        %v2411 = vadd.f32 %v1728, %v2410
        %v2412 = vpop.f32.mrf.mxu0
        %v2413 = vadd.f32 %v1730, %v2412
        %2414 = vdwg.mxu0
        %2415 = vmatpush.bf16.msra.mxu0 %v2224
        %2416 = vmatpush.bf16.msra.mxu0 %v2222
        %2417 = vmatpush.bf16.msra.mxu0 %v2220
        %2418 = vmatpush.bf16.msra.mxu0 %v2218
        %2419 = vmatpush.bf16.msra.mxu0 %v2216
        %2420 = vmatpush.bf16.msra.mxu0 %v2214
        %2421 = vmatpush.bf16.msra.mxu0 %v2212
        %2422 = vmatpush.bf16.msra.mxu0 %v2210
        %2423 = vmatmul.bf16.gmra.mxu0 %v789
        %v2424 = vpop.f32.mrf.mxu0
        %v2425 = vadd.f32 %v2396, %v2424
        %v2426 = vpop.f32.mrf.mxu0
        %v2427 = vadd.f32 %v2398, %v2426
        %2428 = vmatmul.bf16.gmra.mxu0 %v795
        %v2429 = vpop.f32.mrf.mxu0
        %v2430 = vadd.f32 %v2401, %v2429
        %v2431 = vpop.f32.mrf.mxu0
        %v2432 = vadd.f32 %v2403, %v2431
        %2433 = vmatmul.bf16.gmra.mxu0 %v801
        %v2434 = vpop.f32.mrf.mxu0
        %v2435 = vadd.f32 %v2406, %v2434
        %v2436 = vpop.f32.mrf.mxu0
        %v2437 = vadd.f32 %v2408, %v2436
        %2438 = vmatmul.bf16.gmra.mxu0 %v807
        %v2439 = vpop.f32.mrf.mxu0
        %v2440 = vadd.f32 %v2411, %v2439
        %v2441 = vpop.f32.mrf.mxu0
        %v2442 = vadd.f32 %v2413, %v2441
        %2443 = vdwg.mxu0
        %2444 = vmatpush.bf16.msra.mxu0 %v2240
        %2445 = vmatpush.bf16.msra.mxu0 %v2238
        %2446 = vmatpush.bf16.msra.mxu0 %v2236
        %2447 = vmatpush.bf16.msra.mxu0 %v2234
        %2448 = vmatpush.bf16.msra.mxu0 %v2232
        %2449 = vmatpush.bf16.msra.mxu0 %v2230
        %2450 = vmatpush.bf16.msra.mxu0 %v2228
        %2451 = vmatpush.bf16.msra.mxu0 %v2226
        %2452 = vmatmul.bf16.gmra.mxu0 %v790
        %v2453 = vpop.f32.mrf.mxu0
        %v2454 = vadd.f32 %v2425, %v2453
        %v2455 = vpop.f32.mrf.mxu0
        %v2456 = vadd.f32 %v2427, %v2455
        %2457 = vmatmul.bf16.gmra.mxu0 %v796
        %v2458 = vpop.f32.mrf.mxu0
        %v2459 = vadd.f32 %v2430, %v2458
        %v2460 = vpop.f32.mrf.mxu0
        %v2461 = vadd.f32 %v2432, %v2460
        %2462 = vmatmul.bf16.gmra.mxu0 %v802
        %v2463 = vpop.f32.mrf.mxu0
        %v2464 = vadd.f32 %v2435, %v2463
        %v2465 = vpop.f32.mrf.mxu0
        %v2466 = vadd.f32 %v2437, %v2465
        %2467 = vmatmul.bf16.gmra.mxu0 %v808
        %v2468 = vpop.f32.mrf.mxu0
        %v2469 = vadd.f32 %v2440, %v2468
        %v2470 = vpop.f32.mrf.mxu0
        %v2471 = vadd.f32 %v2442, %v2470
        %2472 = vdwg.mxu0
        %2473 = vmatpush.bf16.msra.mxu0 %v2256
        %2474 = vmatpush.bf16.msra.mxu0 %v2254
        %2475 = vmatpush.bf16.msra.mxu0 %v2252
        %2476 = vmatpush.bf16.msra.mxu0 %v2250
        %2477 = vmatpush.bf16.msra.mxu0 %v2248
        %2478 = vmatpush.bf16.msra.mxu0 %v2246
        %2479 = vmatpush.bf16.msra.mxu0 %v2244
        %2480 = vmatpush.bf16.msra.mxu0 %v2242
        %2481 = vmatmul.bf16.gmra.mxu0 %v791
        %v2482 = vpop.f32.mrf.mxu0
        %v2483 = vadd.f32 %v2454, %v2482
        %v2484 = vpop.f32.mrf.mxu0
        %v2485 = vadd.f32 %v2456, %v2484
        %2486 = vmatmul.bf16.gmra.mxu0 %v797
        %v2487 = vpop.f32.mrf.mxu0
        %v2488 = vadd.f32 %v2459, %v2487
        %v2489 = vpop.f32.mrf.mxu0
        %v2490 = vadd.f32 %v2461, %v2489
        %2491 = vmatmul.bf16.gmra.mxu0 %v803
        %v2492 = vpop.f32.mrf.mxu0
        %v2493 = vadd.f32 %v2464, %v2492
        %v2494 = vpop.f32.mrf.mxu0
        %v2495 = vadd.f32 %v2466, %v2494
        %2496 = vmatmul.bf16.gmra.mxu0 %v809
        %v2497 = vpop.f32.mrf.mxu0
        %v2498 = vadd.f32 %v2469, %v2497
        %v2499 = vpop.f32.mrf.mxu0
        %v2500 = vadd.f32 %v2471, %v2499
        %2501 = vdwg.mxu0
        %2502 = vmatpush.bf16.msra.mxu0 %v2272
        %2503 = vmatpush.bf16.msra.mxu0 %v2270
        %2504 = vmatpush.bf16.msra.mxu0 %v2268
        %2505 = vmatpush.bf16.msra.mxu0 %v2266
        %2506 = vmatpush.bf16.msra.mxu0 %v2264
        %2507 = vmatpush.bf16.msra.mxu0 %v2262
        %2508 = vmatpush.bf16.msra.mxu0 %v2260
        %2509 = vmatpush.bf16.msra.mxu0 %v2258
        %2510 = vmatmul.bf16.gmra.mxu0 %v792
        %v2511 = vpop.f32.mrf.mxu0
        %v2512 = vadd.f32 %v2483, %v2511
        %v2513 = vpop.f32.mrf.mxu0
        %v2514 = vadd.f32 %v2485, %v2513
        %2515 = vmatmul.bf16.gmra.mxu0 %v798
        %v2516 = vpop.f32.mrf.mxu0
        %v2517 = vadd.f32 %v2488, %v2516
        %v2518 = vpop.f32.mrf.mxu0
        %v2519 = vadd.f32 %v2490, %v2518
        %2520 = vmatmul.bf16.gmra.mxu0 %v804
        %v2521 = vpop.f32.mrf.mxu0
        %v2522 = vadd.f32 %v2493, %v2521
        %v2523 = vpop.f32.mrf.mxu0
        %v2524 = vadd.f32 %v2495, %v2523
        %2525 = vmatmul.bf16.gmra.mxu0 %v810
        %v2526 = vpop.f32.mrf.mxu0
        %v2527 = vadd.f32 %v2498, %v2526
        %v2528 = vpop.f32.mrf.mxu0
        %v2529 = vadd.f32 %v2500, %v2528
        %2530 = vdwg.mxu0
        %2531 = vmatpush.bf16.msra.mxu0 %v2288
        %2532 = vmatpush.bf16.msra.mxu0 %v2286
        %2533 = vmatpush.bf16.msra.mxu0 %v2284
        %2534 = vmatpush.bf16.msra.mxu0 %v2282
        %2535 = vmatpush.bf16.msra.mxu0 %v2280
        %2536 = vmatpush.bf16.msra.mxu0 %v2278
        %2537 = vmatpush.bf16.msra.mxu0 %v2276
        %2538 = vmatpush.bf16.msra.mxu0 %v2274
        %2539 = vmatmul.bf16.gmra.mxu0 %v793
        %v2540 = vpop.f32.mrf.mxu0
        %v2541 = vadd.f32 %v2512, %v2540
        %v2542 = vpop.f32.mrf.mxu0
        %v2543 = vadd.f32 %v2514, %v2542
        %2544 = vmatmul.bf16.gmra.mxu0 %v799
        %v2545 = vpop.f32.mrf.mxu0
        %v2546 = vadd.f32 %v2517, %v2545
        %v2547 = vpop.f32.mrf.mxu0
        %v2548 = vadd.f32 %v2519, %v2547
        %2549 = vmatmul.bf16.gmra.mxu0 %v805
        %v2550 = vpop.f32.mrf.mxu0
        %v2551 = vadd.f32 %v2522, %v2550
        %v2552 = vpop.f32.mrf.mxu0
        %v2553 = vadd.f32 %v2524, %v2552
        %2554 = vmatmul.bf16.gmra.mxu0 %v811
        %v2555 = vpop.f32.mrf.mxu0
        %v2556 = vadd.f32 %v2527, %v2555
        %v2557 = vpop.f32.mrf.mxu0
        %v2558 = vadd.f32 %v2529, %v2557
        %2559 = vdwg.mxu0
        %2560 = vmatpush.bf16.msra.mxu0 %v2209
        %2561 = vmatpush.bf16.msra.mxu0 %v2207
        %2562 = vmatpush.bf16.msra.mxu0 %v2205
        %2563 = vmatpush.bf16.msra.mxu0 %v2203
        %2564 = vmatpush.bf16.msra.mxu0 %v2201
        %2565 = vmatpush.bf16.msra.mxu0 %v2199
        %2566 = vmatpush.bf16.msra.mxu0 %v2197
        %2567 = vmatpush.bf16.msra.mxu0 %v2195
        %2568 = vmatmul.bf16.gmra.mxu0 %v788
        %v2569 = vpop.f32.mrf.mxu0
        %v2570 = vadd.f32 %v1887, %v2569
        %v2571 = vpop.f32.mrf.mxu0
        %v2572 = vadd.f32 %v1889, %v2571
        %2573 = vmatmul.bf16.gmra.mxu0 %v794
        %v2574 = vpop.f32.mrf.mxu0
        %v2575 = vadd.f32 %v1892, %v2574
        %v2576 = vpop.f32.mrf.mxu0
        %v2577 = vadd.f32 %v1894, %v2576
        %2578 = vmatmul.bf16.gmra.mxu0 %v800
        %v2579 = vpop.f32.mrf.mxu0
        %v2580 = vadd.f32 %v1897, %v2579
        %v2581 = vpop.f32.mrf.mxu0
        %v2582 = vadd.f32 %v1899, %v2581
        %2583 = vmatmul.bf16.gmra.mxu0 %v806
        %v2584 = vpop.f32.mrf.mxu0
        %v2585 = vadd.f32 %v1902, %v2584
        %v2586 = vpop.f32.mrf.mxu0
        %v2587 = vadd.f32 %v1904, %v2586
        %2588 = vdwg.mxu0
        %2589 = vmatpush.bf16.msra.mxu0 %v2225
        %2590 = vmatpush.bf16.msra.mxu0 %v2223
        %2591 = vmatpush.bf16.msra.mxu0 %v2221
        %2592 = vmatpush.bf16.msra.mxu0 %v2219
        %2593 = vmatpush.bf16.msra.mxu0 %v2217
        %2594 = vmatpush.bf16.msra.mxu0 %v2215
        %2595 = vmatpush.bf16.msra.mxu0 %v2213
        %2596 = vmatpush.bf16.msra.mxu0 %v2211
        %2597 = vmatmul.bf16.gmra.mxu0 %v789
        %v2598 = vpop.f32.mrf.mxu0
        %v2599 = vadd.f32 %v2570, %v2598
        %v2600 = vpop.f32.mrf.mxu0
        %v2601 = vadd.f32 %v2572, %v2600
        %2602 = vmatmul.bf16.gmra.mxu0 %v795
        %v2603 = vpop.f32.mrf.mxu0
        %v2604 = vadd.f32 %v2575, %v2603
        %v2605 = vpop.f32.mrf.mxu0
        %v2606 = vadd.f32 %v2577, %v2605
        %2607 = vmatmul.bf16.gmra.mxu0 %v801
        %v2608 = vpop.f32.mrf.mxu0
        %v2609 = vadd.f32 %v2580, %v2608
        %v2610 = vpop.f32.mrf.mxu0
        %v2611 = vadd.f32 %v2582, %v2610
        %2612 = vmatmul.bf16.gmra.mxu0 %v807
        %v2613 = vpop.f32.mrf.mxu0
        %v2614 = vadd.f32 %v2585, %v2613
        %v2615 = vpop.f32.mrf.mxu0
        %v2616 = vadd.f32 %v2587, %v2615
        %2617 = vdwg.mxu0
        %2618 = vmatpush.bf16.msra.mxu0 %v2241
        %2619 = vmatpush.bf16.msra.mxu0 %v2239
        %2620 = vmatpush.bf16.msra.mxu0 %v2237
        %2621 = vmatpush.bf16.msra.mxu0 %v2235
        %2622 = vmatpush.bf16.msra.mxu0 %v2233
        %2623 = vmatpush.bf16.msra.mxu0 %v2231
        %2624 = vmatpush.bf16.msra.mxu0 %v2229
        %2625 = vmatpush.bf16.msra.mxu0 %v2227
        %2626 = vmatmul.bf16.gmra.mxu0 %v790
        %v2627 = vpop.f32.mrf.mxu0
        %v2628 = vadd.f32 %v2599, %v2627
        %v2629 = vpop.f32.mrf.mxu0
        %v2630 = vadd.f32 %v2601, %v2629
        %2631 = vmatmul.bf16.gmra.mxu0 %v796
        %v2632 = vpop.f32.mrf.mxu0
        %v2633 = vadd.f32 %v2604, %v2632
        %v2634 = vpop.f32.mrf.mxu0
        %v2635 = vadd.f32 %v2606, %v2634
        %2636 = vmatmul.bf16.gmra.mxu0 %v802
        %v2637 = vpop.f32.mrf.mxu0
        %v2638 = vadd.f32 %v2609, %v2637
        %v2639 = vpop.f32.mrf.mxu0
        %v2640 = vadd.f32 %v2611, %v2639
        %2641 = vmatmul.bf16.gmra.mxu0 %v808
        %v2642 = vpop.f32.mrf.mxu0
        %v2643 = vadd.f32 %v2614, %v2642
        %v2644 = vpop.f32.mrf.mxu0
        %v2645 = vadd.f32 %v2616, %v2644
        %2646 = vdwg.mxu0
        %2647 = vmatpush.bf16.msra.mxu0 %v2257
        %2648 = vmatpush.bf16.msra.mxu0 %v2255
        %2649 = vmatpush.bf16.msra.mxu0 %v2253
        %2650 = vmatpush.bf16.msra.mxu0 %v2251
        %2651 = vmatpush.bf16.msra.mxu0 %v2249
        %2652 = vmatpush.bf16.msra.mxu0 %v2247
        %2653 = vmatpush.bf16.msra.mxu0 %v2245
        %2654 = vmatpush.bf16.msra.mxu0 %v2243
        %2655 = vmatmul.bf16.gmra.mxu0 %v791
        %v2656 = vpop.f32.mrf.mxu0
        %v2657 = vadd.f32 %v2628, %v2656
        %v2658 = vpop.f32.mrf.mxu0
        %v2659 = vadd.f32 %v2630, %v2658
        %2660 = vmatmul.bf16.gmra.mxu0 %v797
        %v2661 = vpop.f32.mrf.mxu0
        %v2662 = vadd.f32 %v2633, %v2661
        %v2663 = vpop.f32.mrf.mxu0
        %v2664 = vadd.f32 %v2635, %v2663
        %2665 = vmatmul.bf16.gmra.mxu0 %v803
        %v2666 = vpop.f32.mrf.mxu0
        %v2667 = vadd.f32 %v2638, %v2666
        %v2668 = vpop.f32.mrf.mxu0
        %v2669 = vadd.f32 %v2640, %v2668
        %2670 = vmatmul.bf16.gmra.mxu0 %v809
        %v2671 = vpop.f32.mrf.mxu0
        %v2672 = vadd.f32 %v2643, %v2671
        %v2673 = vpop.f32.mrf.mxu0
        %v2674 = vadd.f32 %v2645, %v2673
        %2675 = vdwg.mxu0
        %2676 = vmatpush.bf16.msra.mxu0 %v2273
        %2677 = vmatpush.bf16.msra.mxu0 %v2271
        %2678 = vmatpush.bf16.msra.mxu0 %v2269
        %2679 = vmatpush.bf16.msra.mxu0 %v2267
        %2680 = vmatpush.bf16.msra.mxu0 %v2265
        %2681 = vmatpush.bf16.msra.mxu0 %v2263
        %2682 = vmatpush.bf16.msra.mxu0 %v2261
        %2683 = vmatpush.bf16.msra.mxu0 %v2259
        %2684 = vmatmul.bf16.gmra.mxu0 %v792
        %v2685 = vpop.f32.mrf.mxu0
        %v2686 = vadd.f32 %v2657, %v2685
        %v2687 = vpop.f32.mrf.mxu0
        %v2688 = vadd.f32 %v2659, %v2687
        %2689 = vmatmul.bf16.gmra.mxu0 %v798
        %v2690 = vpop.f32.mrf.mxu0
        %v2691 = vadd.f32 %v2662, %v2690
        %v2692 = vpop.f32.mrf.mxu0
        %v2693 = vadd.f32 %v2664, %v2692
        %2694 = vmatmul.bf16.gmra.mxu0 %v804
        %v2695 = vpop.f32.mrf.mxu0
        %v2696 = vadd.f32 %v2667, %v2695
        %v2697 = vpop.f32.mrf.mxu0
        %v2698 = vadd.f32 %v2669, %v2697
        %2699 = vmatmul.bf16.gmra.mxu0 %v810
        %v2700 = vpop.f32.mrf.mxu0
        %v2701 = vadd.f32 %v2672, %v2700
        %v2702 = vpop.f32.mrf.mxu0
        %v2703 = vadd.f32 %v2674, %v2702
        %2704 = vdwg.mxu0
        %2705 = vmatpush.bf16.msra.mxu0 %v2289
        %2706 = vmatpush.bf16.msra.mxu0 %v2287
        %2707 = vmatpush.bf16.msra.mxu0 %v2285
        %2708 = vmatpush.bf16.msra.mxu0 %v2283
        %2709 = vmatpush.bf16.msra.mxu0 %v2281
        %2710 = vmatpush.bf16.msra.mxu0 %v2279
        %2711 = vmatpush.bf16.msra.mxu0 %v2277
        %2712 = vmatpush.bf16.msra.mxu0 %v2275
        %2713 = vmatmul.bf16.gmra.mxu0 %v793
        %v2714 = vpop.f32.mrf.mxu0
        %v2715 = vadd.f32 %v2686, %v2714
        %v2716 = vpop.f32.mrf.mxu0
        %v2717 = vadd.f32 %v2688, %v2716
        %2718 = vmatmul.bf16.gmra.mxu0 %v799
        %v2719 = vpop.f32.mrf.mxu0
        %v2720 = vadd.f32 %v2691, %v2719
        %v2721 = vpop.f32.mrf.mxu0
        %v2722 = vadd.f32 %v2693, %v2721
        %2723 = vmatmul.bf16.gmra.mxu0 %v805
        %v2724 = vpop.f32.mrf.mxu0
        %v2725 = vadd.f32 %v2696, %v2724
        %v2726 = vpop.f32.mrf.mxu0
        %v2727 = vadd.f32 %v2698, %v2726
        %2728 = vmatmul.bf16.gmra.mxu0 %v811
        %v2729 = vpop.f32.mrf.mxu0
        %v2730 = vadd.f32 %v2701, %v2729
        %v2731 = vpop.f32.mrf.mxu0
        %v2732 = vadd.f32 %v2703, %v2731
        %2733 = vdwg.mxu0
        %s2734 = scalar_lea.vmem [#allocation3], 96
        %v2735 = vld [vmem:[%s2734] sm:$0xff]
        %v2736 = vld [vmem:[%s2734 + $0x8] sm:$0xff]
        %v2737 = vld [vmem:[%s2734 + $0x10] sm:$0xff]
        %v2738 = vld [vmem:[%s2734 + $0x18] sm:$0xff]
        %v2739 = vld [vmem:[%s2734 + $0x20] sm:$0xff]
        %v2740 = vld [vmem:[%s2734 + $0x28] sm:$0xff]
        %v2741 = vld [vmem:[%s2734 + $0x30] sm:$0xff]
        %v2742 = vld [vmem:[%s2734 + $0x38] sm:$0xff]
        %v2743 = vld [vmem:[%s2734 + $0x40] sm:$0xff]
        %v2744 = vld [vmem:[%s2734 + $0x48] sm:$0xff]
        %v2745 = vld [vmem:[%s2734 + $0x50] sm:$0xff]
        %v2746 = vld [vmem:[%s2734 + $0x58] sm:$0xff]
        %v2747 = vld [vmem:[%s2734 + $0x60] sm:$0xff]
        %v2748 = vld [vmem:[%s2734 + $0x68] sm:$0xff]
        %v2749 = vld [vmem:[%s2734 + $0x70] sm:$0xff]
        %v2750 = vld [vmem:[%s2734 + $0x78] sm:$0xff]
        %v2751 = vld [vmem:[%s2734 + $0x80] sm:$0xff]
        %v2752 = vld [vmem:[%s2734 + $0x88] sm:$0xff]
        %v2753 = vld [vmem:[%s2734 + $0x90] sm:$0xff]
        %v2754 = vld [vmem:[%s2734 + $0x98] sm:$0xff]
        %v2755 = vld [vmem:[%s2734 + $0xa0] sm:$0xff]
        %v2756 = vld [vmem:[%s2734 + $0xa8] sm:$0xff]
        %v2757 = vld [vmem:[%s2734 + $0xb0] sm:$0xff]
        %v2758 = vld [vmem:[%s2734 + $0xb8] sm:$0xff]
        %v2759 = vld [vmem:[%s2734 + $0xc0] sm:$0xff]
        %v2760 = vld [vmem:[%s2734 + $0xc8] sm:$0xff]
        %v2761 = vld [vmem:[%s2734 + $0xd0] sm:$0xff]
        %v2762 = vld [vmem:[%s2734 + $0xd8] sm:$0xff]
        %v2763 = vld [vmem:[%s2734 + $0xe0] sm:$0xff]
        %v2764 = vld [vmem:[%s2734 + $0xe8] sm:$0xff]
        %v2765 = vld [vmem:[%s2734 + $0xf0] sm:$0xff]
        %v2766 = vld [vmem:[%s2734 + $0xf8] sm:$0xff]
        %v2767 = vld [vmem:[%s2734 + $0x100] sm:$0xff]
        %v2768 = vld [vmem:[%s2734 + $0x108] sm:$0xff]
        %v2769 = vld [vmem:[%s2734 + $0x110] sm:$0xff]
        %v2770 = vld [vmem:[%s2734 + $0x118] sm:$0xff]
        %v2771 = vld [vmem:[%s2734 + $0x120] sm:$0xff]
        %v2772 = vld [vmem:[%s2734 + $0x128] sm:$0xff]
        %v2773 = vld [vmem:[%s2734 + $0x130] sm:$0xff]
        %v2774 = vld [vmem:[%s2734 + $0x138] sm:$0xff]
        %v2775 = vld [vmem:[%s2734 + $0x140] sm:$0xff]
        %v2776 = vld [vmem:[%s2734 + $0x148] sm:$0xff]
        %v2777 = vld [vmem:[%s2734 + $0x150] sm:$0xff]
        %v2778 = vld [vmem:[%s2734 + $0x158] sm:$0xff]
        %v2779 = vld [vmem:[%s2734 + $0x160] sm:$0xff]
        %v2780 = vld [vmem:[%s2734 + $0x168] sm:$0xff]
        %v2781 = vld [vmem:[%s2734 + $0x170] sm:$0xff]
        %v2782 = vld [vmem:[%s2734 + $0x178] sm:$0xff]
        %v2783 = vpack.c.bf16 %v2741, %v2735
        %v2784 = vpack.c.bf16 %v2742, %v2736
        %v2785 = vpack.c.bf16 %v2743, %v2737
        %v2786 = vpack.c.bf16 %v2744, %v2738
        %v2787 = vpack.c.bf16 %v2745, %v2739
        %v2788 = vpack.c.bf16 %v2746, %v2740
        %v2789 = vpack.c.bf16 %v2753, %v2747
        %v2790 = vpack.c.bf16 %v2754, %v2748
        %v2791 = vpack.c.bf16 %v2755, %v2749
        %v2792 = vpack.c.bf16 %v2756, %v2750
        %v2793 = vpack.c.bf16 %v2757, %v2751
        %v2794 = vpack.c.bf16 %v2758, %v2752
        %v2795 = vpack.c.bf16 %v2765, %v2759
        %v2796 = vpack.c.bf16 %v2766, %v2760
        %v2797 = vpack.c.bf16 %v2767, %v2761
        %v2798 = vpack.c.bf16 %v2768, %v2762
        %v2799 = vpack.c.bf16 %v2769, %v2763
        %v2800 = vpack.c.bf16 %v2770, %v2764
        %v2801 = vpack.c.bf16 %v2777, %v2771
        %v2802 = vpack.c.bf16 %v2778, %v2772
        %v2803 = vpack.c.bf16 %v2779, %v2773
        %v2804 = vpack.c.bf16 %v2780, %v2774
        %v2805 = vpack.c.bf16 %v2781, %v2775
        %v2806 = vpack.c.bf16 %v2782, %v2776
        %s2807 = scalar_lea.vmem %s1, 1536
        %v2808 = vld [vmem:[%s2807] sm:$0xff]
        %v2809 = vld [vmem:[%s2807 + $0x8] sm:$0xff]
        %v2810 = vld [vmem:[%s2807 + $0x10] sm:$0xff]
        %v2811 = vld [vmem:[%s2807 + $0x18] sm:$0xff]
        %v2812 = vld [vmem:[%s2807 + $0x20] sm:$0xff]
        %v2813 = vld [vmem:[%s2807 + $0x28] sm:$0xff]
        %v2814 = vld [vmem:[%s2807 + $0x30] sm:$0xff]
        %v2815 = vld [vmem:[%s2807 + $0x38] sm:$0xff]
        %v2816 = vld [vmem:[%s2807 + $0x40] sm:$0xff]
        %v2817 = vld [vmem:[%s2807 + $0x48] sm:$0xff]
        %v2818 = vld [vmem:[%s2807 + $0x50] sm:$0xff]
        %v2819 = vld [vmem:[%s2807 + $0x58] sm:$0xff]
        %v2820 = vld [vmem:[%s2807 + $0x60] sm:$0xff]
        %v2821 = vld [vmem:[%s2807 + $0x68] sm:$0xff]
        %v2822 = vld [vmem:[%s2807 + $0x70] sm:$0xff]
        %v2823 = vld [vmem:[%s2807 + $0x78] sm:$0xff]
        %v2824 = vld [vmem:[%s2807 + $0x80] sm:$0xff]
        %v2825 = vld [vmem:[%s2807 + $0x88] sm:$0xff]
        %v2826 = vld [vmem:[%s2807 + $0x90] sm:$0xff]
        %v2827 = vld [vmem:[%s2807 + $0x98] sm:$0xff]
        %v2828 = vld [vmem:[%s2807 + $0xa0] sm:$0xff]
        %v2829 = vld [vmem:[%s2807 + $0xa8] sm:$0xff]
        %v2830 = vld [vmem:[%s2807 + $0xb0] sm:$0xff]
        %v2831 = vld [vmem:[%s2807 + $0xb8] sm:$0xff]
        %v2832 = vld [vmem:[%s2807 + $0xc0] sm:$0xff]
        %v2833 = vld [vmem:[%s2807 + $0xc8] sm:$0xff]
        %v2834 = vld [vmem:[%s2807 + $0xd0] sm:$0xff]
        %v2835 = vld [vmem:[%s2807 + $0xd8] sm:$0xff]
        %v2836 = vld [vmem:[%s2807 + $0xe0] sm:$0xff]
        %v2837 = vld [vmem:[%s2807 + $0xe8] sm:$0xff]
        %v2838 = vld [vmem:[%s2807 + $0xf0] sm:$0xff]
        %v2839 = vld [vmem:[%s2807 + $0xf8] sm:$0xff]
        %v2840 = vld [vmem:[%s2807 + $0x100] sm:$0xff]
        %v2841 = vld [vmem:[%s2807 + $0x108] sm:$0xff]
        %v2842 = vld [vmem:[%s2807 + $0x110] sm:$0xff]
        %v2843 = vld [vmem:[%s2807 + $0x118] sm:$0xff]
        %v2844 = vld [vmem:[%s2807 + $0x120] sm:$0xff]
        %v2845 = vld [vmem:[%s2807 + $0x128] sm:$0xff]
        %v2846 = vld [vmem:[%s2807 + $0x130] sm:$0xff]
        %v2847 = vld [vmem:[%s2807 + $0x138] sm:$0xff]
        %v2848 = vld [vmem:[%s2807 + $0x140] sm:$0xff]
        %v2849 = vld [vmem:[%s2807 + $0x148] sm:$0xff]
        %v2850 = vld [vmem:[%s2807 + $0x150] sm:$0xff]
        %v2851 = vld [vmem:[%s2807 + $0x158] sm:$0xff]
        %v2852 = vld [vmem:[%s2807 + $0x160] sm:$0xff]
        %v2853 = vld [vmem:[%s2807 + $0x168] sm:$0xff]
        %v2854 = vld [vmem:[%s2807 + $0x170] sm:$0xff]
        %v2855 = vld [vmem:[%s2807 + $0x178] sm:$0xff]
        %v2856 = vld [vmem:[%s2807 + $0x180] sm:$0xff]
        %v2857 = vld [vmem:[%s2807 + $0x188] sm:$0xff]
        %v2858 = vld [vmem:[%s2807 + $0x190] sm:$0xff]
        %v2859 = vld [vmem:[%s2807 + $0x198] sm:$0xff]
        %v2860 = vld [vmem:[%s2807 + $0x1a0] sm:$0xff]
        %v2861 = vld [vmem:[%s2807 + $0x1a8] sm:$0xff]
        %v2862 = vld [vmem:[%s2807 + $0x1b0] sm:$0xff]
        %v2863 = vld [vmem:[%s2807 + $0x1b8] sm:$0xff]
        %v2864 = vld [vmem:[%s2807 + $0x1c0] sm:$0xff]
        %v2865 = vld [vmem:[%s2807 + $0x1c8] sm:$0xff]
        %v2866 = vld [vmem:[%s2807 + $0x1d0] sm:$0xff]
        %v2867 = vld [vmem:[%s2807 + $0x1d8] sm:$0xff]
        %v2868 = vld [vmem:[%s2807 + $0x1e0] sm:$0xff]
        %v2869 = vld [vmem:[%s2807 + $0x1e8] sm:$0xff]
        %v2870 = vld [vmem:[%s2807 + $0x1f0] sm:$0xff]
        %v2871 = vld [vmem:[%s2807 + $0x1f8] sm:$0xff]
        %v2872 = vld [vmem:[%s2807 + $0x200] sm:$0xff]
        %v2873 = vld [vmem:[%s2807 + $0x208] sm:$0xff]
        %v2874 = vld [vmem:[%s2807 + $0x210] sm:$0xff]
        %v2875 = vld [vmem:[%s2807 + $0x218] sm:$0xff]
        %v2876 = vld [vmem:[%s2807 + $0x220] sm:$0xff]
        %v2877 = vld [vmem:[%s2807 + $0x228] sm:$0xff]
        %v2878 = vld [vmem:[%s2807 + $0x230] sm:$0xff]
        %v2879 = vld [vmem:[%s2807 + $0x238] sm:$0xff]
        %v2880 = vld [vmem:[%s2807 + $0x240] sm:$0xff]
        %v2881 = vld [vmem:[%s2807 + $0x248] sm:$0xff]
        %v2882 = vld [vmem:[%s2807 + $0x250] sm:$0xff]
        %v2883 = vld [vmem:[%s2807 + $0x258] sm:$0xff]
        %v2884 = vld [vmem:[%s2807 + $0x260] sm:$0xff]
        %v2885 = vld [vmem:[%s2807 + $0x268] sm:$0xff]
        %v2886 = vld [vmem:[%s2807 + $0x270] sm:$0xff]
        %v2887 = vld [vmem:[%s2807 + $0x278] sm:$0xff]
        %v2888 = vld [vmem:[%s2807 + $0x280] sm:$0xff]
        %v2889 = vld [vmem:[%s2807 + $0x288] sm:$0xff]
        %v2890 = vld [vmem:[%s2807 + $0x290] sm:$0xff]
        %v2891 = vld [vmem:[%s2807 + $0x298] sm:$0xff]
        %v2892 = vld [vmem:[%s2807 + $0x2a0] sm:$0xff]
        %v2893 = vld [vmem:[%s2807 + $0x2a8] sm:$0xff]
        %v2894 = vld [vmem:[%s2807 + $0x2b0] sm:$0xff]
        %v2895 = vld [vmem:[%s2807 + $0x2b8] sm:$0xff]
        %v2896 = vld [vmem:[%s2807 + $0x2c0] sm:$0xff]
        %v2897 = vld [vmem:[%s2807 + $0x2c8] sm:$0xff]
        %v2898 = vld [vmem:[%s2807 + $0x2d0] sm:$0xff]
        %v2899 = vld [vmem:[%s2807 + $0x2d8] sm:$0xff]
        %v2900 = vld [vmem:[%s2807 + $0x2e0] sm:$0xff]
        %v2901 = vld [vmem:[%s2807 + $0x2e8] sm:$0xff]
        %v2902 = vld [vmem:[%s2807 + $0x2f0] sm:$0xff]
        %v2903 = vld [vmem:[%s2807 + $0x2f8] sm:$0xff]
        %v3000 = vunpack.c.l.b16 %v2808
        %v3001 = vunpack.c.h.b16 %v2808
        %v3002 = vunpack.c.l.b16 %v2809
        %v3003 = vunpack.c.h.b16 %v2809
        %v3004 = vunpack.c.l.b16 %v2810
        %v3005 = vunpack.c.h.b16 %v2810
        %v3006 = vunpack.c.l.b16 %v2811
        %v3007 = vunpack.c.h.b16 %v2811
        %v3008 = vunpack.c.l.b16 %v2812
        %v3009 = vunpack.c.h.b16 %v2812
        %v3010 = vunpack.c.l.b16 %v2813
        %v3011 = vunpack.c.h.b16 %v2813
        %v3012 = vunpack.c.l.b16 %v2814
        %v3013 = vunpack.c.h.b16 %v2814
        %v3014 = vunpack.c.l.b16 %v2815
        %v3015 = vunpack.c.h.b16 %v2815
        %v3016 = vunpack.c.l.b16 %v2816
        %v3017 = vunpack.c.h.b16 %v2816
        %v3018 = vunpack.c.l.b16 %v2817
        %v3019 = vunpack.c.h.b16 %v2817
        %v3020 = vunpack.c.l.b16 %v2818
        %v3021 = vunpack.c.h.b16 %v2818
        %v3022 = vunpack.c.l.b16 %v2819
        %v3023 = vunpack.c.h.b16 %v2819
        %v3024 = vunpack.c.l.b16 %v2820
        %v3025 = vunpack.c.h.b16 %v2820
        %v3026 = vunpack.c.l.b16 %v2821
        %v3027 = vunpack.c.h.b16 %v2821
        %v3028 = vunpack.c.l.b16 %v2822
        %v3029 = vunpack.c.h.b16 %v2822
        %v3030 = vunpack.c.l.b16 %v2823
        %v3031 = vunpack.c.h.b16 %v2823
        %v3032 = vunpack.c.l.b16 %v2824
        %v3033 = vunpack.c.h.b16 %v2824
        %v3034 = vunpack.c.l.b16 %v2825
        %v3035 = vunpack.c.h.b16 %v2825
        %v3036 = vunpack.c.l.b16 %v2826
        %v3037 = vunpack.c.h.b16 %v2826
        %v3038 = vunpack.c.l.b16 %v2827
        %v3039 = vunpack.c.h.b16 %v2827
        %v3040 = vunpack.c.l.b16 %v2828
        %v3041 = vunpack.c.h.b16 %v2828
        %v3042 = vunpack.c.l.b16 %v2829
        %v3043 = vunpack.c.h.b16 %v2829
        %v3044 = vunpack.c.l.b16 %v2830
        %v3045 = vunpack.c.h.b16 %v2830
        %v3046 = vunpack.c.l.b16 %v2831
        %v3047 = vunpack.c.h.b16 %v2831
        %v3048 = vunpack.c.l.b16 %v2832
        %v3049 = vunpack.c.h.b16 %v2832
        %v3050 = vunpack.c.l.b16 %v2833
        %v3051 = vunpack.c.h.b16 %v2833
        %v3052 = vunpack.c.l.b16 %v2834
        %v3053 = vunpack.c.h.b16 %v2834
        %v3054 = vunpack.c.l.b16 %v2835
        %v3055 = vunpack.c.h.b16 %v2835
        %v3056 = vunpack.c.l.b16 %v2836
        %v3057 = vunpack.c.h.b16 %v2836
        %v3058 = vunpack.c.l.b16 %v2837
        %v3059 = vunpack.c.h.b16 %v2837
        %v3060 = vunpack.c.l.b16 %v2838
        %v3061 = vunpack.c.h.b16 %v2838
        %v3062 = vunpack.c.l.b16 %v2839
        %v3063 = vunpack.c.h.b16 %v2839
        %v3064 = vunpack.c.l.b16 %v2840
        %v3065 = vunpack.c.h.b16 %v2840
        %v3066 = vunpack.c.l.b16 %v2841
        %v3067 = vunpack.c.h.b16 %v2841
        %v3068 = vunpack.c.l.b16 %v2842
        %v3069 = vunpack.c.h.b16 %v2842
        %v3070 = vunpack.c.l.b16 %v2843
        %v3071 = vunpack.c.h.b16 %v2843
        %v3072 = vunpack.c.l.b16 %v2844
        %v3073 = vunpack.c.h.b16 %v2844
        %v3074 = vunpack.c.l.b16 %v2845
        %v3075 = vunpack.c.h.b16 %v2845
        %v3076 = vunpack.c.l.b16 %v2846
        %v3077 = vunpack.c.h.b16 %v2846
        %v3078 = vunpack.c.l.b16 %v2847
        %v3079 = vunpack.c.h.b16 %v2847
        %v3080 = vunpack.c.l.b16 %v2848
        %v3081 = vunpack.c.h.b16 %v2848
        %v3082 = vunpack.c.l.b16 %v2849
        %v3083 = vunpack.c.h.b16 %v2849
        %v3084 = vunpack.c.l.b16 %v2850
        %v3085 = vunpack.c.h.b16 %v2850
        %v3086 = vunpack.c.l.b16 %v2851
        %v3087 = vunpack.c.h.b16 %v2851
        %v3088 = vunpack.c.l.b16 %v2852
        %v3089 = vunpack.c.h.b16 %v2852
        %v3090 = vunpack.c.l.b16 %v2853
        %v3091 = vunpack.c.h.b16 %v2853
        %v3092 = vunpack.c.l.b16 %v2854
        %v3093 = vunpack.c.h.b16 %v2854
        %v3094 = vunpack.c.l.b16 %v2855
        %v3095 = vunpack.c.h.b16 %v2855
        %v3096 = vunpack.c.l.b16 %v2856
        %v3097 = vunpack.c.h.b16 %v2856
        %v3098 = vunpack.c.l.b16 %v2857
        %v3099 = vunpack.c.h.b16 %v2857
        %v3100 = vunpack.c.l.b16 %v2858
        %v3101 = vunpack.c.h.b16 %v2858
        %v3102 = vunpack.c.l.b16 %v2859
        %v3103 = vunpack.c.h.b16 %v2859
        %v3104 = vunpack.c.l.b16 %v2860
        %v3105 = vunpack.c.h.b16 %v2860
        %v3106 = vunpack.c.l.b16 %v2861
        %v3107 = vunpack.c.h.b16 %v2861
        %v3108 = vunpack.c.l.b16 %v2862
        %v3109 = vunpack.c.h.b16 %v2862
        %v3110 = vunpack.c.l.b16 %v2863
        %v3111 = vunpack.c.h.b16 %v2863
        %v3112 = vunpack.c.l.b16 %v2864
        %v3113 = vunpack.c.h.b16 %v2864
        %v3114 = vunpack.c.l.b16 %v2865
        %v3115 = vunpack.c.h.b16 %v2865
        %v3116 = vunpack.c.l.b16 %v2866
        %v3117 = vunpack.c.h.b16 %v2866
        %v3118 = vunpack.c.l.b16 %v2867
        %v3119 = vunpack.c.h.b16 %v2867
        %v3120 = vunpack.c.l.b16 %v2868
        %v3121 = vunpack.c.h.b16 %v2868
        %v3122 = vunpack.c.l.b16 %v2869
        %v3123 = vunpack.c.h.b16 %v2869
        %v3124 = vunpack.c.l.b16 %v2870
        %v3125 = vunpack.c.h.b16 %v2870
        %v3126 = vunpack.c.l.b16 %v2871
        %v3127 = vunpack.c.h.b16 %v2871
        %v3128 = vunpack.c.l.b16 %v2872
        %v3129 = vunpack.c.h.b16 %v2872
        %v3130 = vunpack.c.l.b16 %v2873
        %v3131 = vunpack.c.h.b16 %v2873
        %v3132 = vunpack.c.l.b16 %v2874
        %v3133 = vunpack.c.h.b16 %v2874
        %v3134 = vunpack.c.l.b16 %v2875
        %v3135 = vunpack.c.h.b16 %v2875
        %v3136 = vunpack.c.l.b16 %v2876
        %v3137 = vunpack.c.h.b16 %v2876
        %v3138 = vunpack.c.l.b16 %v2877
        %v3139 = vunpack.c.h.b16 %v2877
        %v3140 = vunpack.c.l.b16 %v2878
        %v3141 = vunpack.c.h.b16 %v2878
        %v3142 = vunpack.c.l.b16 %v2879
        %v3143 = vunpack.c.h.b16 %v2879
        %v3144 = vunpack.c.l.b16 %v2880
        %v3145 = vunpack.c.h.b16 %v2880
        %v3146 = vunpack.c.l.b16 %v2881
        %v3147 = vunpack.c.h.b16 %v2881
        %v3148 = vunpack.c.l.b16 %v2882
        %v3149 = vunpack.c.h.b16 %v2882
        %v3150 = vunpack.c.l.b16 %v2883
        %v3151 = vunpack.c.h.b16 %v2883
        %v3152 = vunpack.c.l.b16 %v2884
        %v3153 = vunpack.c.h.b16 %v2884
        %v3154 = vunpack.c.l.b16 %v2885
        %v3155 = vunpack.c.h.b16 %v2885
        %v3156 = vunpack.c.l.b16 %v2886
        %v3157 = vunpack.c.h.b16 %v2886
        %v3158 = vunpack.c.l.b16 %v2887
        %v3159 = vunpack.c.h.b16 %v2887
        %v3160 = vunpack.c.l.b16 %v2888
        %v3161 = vunpack.c.h.b16 %v2888
        %v3162 = vunpack.c.l.b16 %v2889
        %v3163 = vunpack.c.h.b16 %v2889
        %v3164 = vunpack.c.l.b16 %v2890
        %v3165 = vunpack.c.h.b16 %v2890
        %v3166 = vunpack.c.l.b16 %v2891
        %v3167 = vunpack.c.h.b16 %v2891
        %v3168 = vunpack.c.l.b16 %v2892
        %v3169 = vunpack.c.h.b16 %v2892
        %v3170 = vunpack.c.l.b16 %v2893
        %v3171 = vunpack.c.h.b16 %v2893
        %v3172 = vunpack.c.l.b16 %v2894
        %v3173 = vunpack.c.h.b16 %v2894
        %v3174 = vunpack.c.l.b16 %v2895
        %v3175 = vunpack.c.h.b16 %v2895
        %v3176 = vunpack.c.l.b16 %v2896
        %v3177 = vunpack.c.h.b16 %v2896
        %v3178 = vunpack.c.l.b16 %v2897
        %v3179 = vunpack.c.h.b16 %v2897
        %v3180 = vunpack.c.l.b16 %v2898
        %v3181 = vunpack.c.h.b16 %v2898
        %v3182 = vunpack.c.l.b16 %v2899
        %v3183 = vunpack.c.h.b16 %v2899
        %v3184 = vunpack.c.l.b16 %v2900
        %v3185 = vunpack.c.h.b16 %v2900
        %v3186 = vunpack.c.l.b16 %v2901
        %v3187 = vunpack.c.h.b16 %v2901
        %v3188 = vunpack.c.l.b16 %v2902
        %v3189 = vunpack.c.h.b16 %v2902
        %v3190 = vunpack.c.l.b16 %v2903
        %v3191 = vunpack.c.h.b16 %v2903
        %v3192 = vpack.c.b16 %v3002, %v3000
        %v3193 = vpack.c.b16 %v3003, %v3001
        %v3194 = vpack.c.b16 %v3006, %v3004
        %v3195 = vpack.c.b16 %v3007, %v3005
        %v3196 = vpack.c.b16 %v3010, %v3008
        %v3197 = vpack.c.b16 %v3011, %v3009
        %v3198 = vpack.c.b16 %v3014, %v3012
        %v3199 = vpack.c.b16 %v3015, %v3013
        %v3200 = vpack.c.b16 %v3018, %v3016
        %v3201 = vpack.c.b16 %v3019, %v3017
        %v3202 = vpack.c.b16 %v3022, %v3020
        %v3203 = vpack.c.b16 %v3023, %v3021
        %v3204 = vpack.c.b16 %v3026, %v3024
        %v3205 = vpack.c.b16 %v3027, %v3025
        %v3206 = vpack.c.b16 %v3030, %v3028
        %v3207 = vpack.c.b16 %v3031, %v3029
        %v3208 = vpack.c.b16 %v3034, %v3032
        %v3209 = vpack.c.b16 %v3035, %v3033
        %v3210 = vpack.c.b16 %v3038, %v3036
        %v3211 = vpack.c.b16 %v3039, %v3037
        %v3212 = vpack.c.b16 %v3042, %v3040
        %v3213 = vpack.c.b16 %v3043, %v3041
        %v3214 = vpack.c.b16 %v3046, %v3044
        %v3215 = vpack.c.b16 %v3047, %v3045
        %v3216 = vpack.c.b16 %v3050, %v3048
        %v3217 = vpack.c.b16 %v3051, %v3049
        %v3218 = vpack.c.b16 %v3054, %v3052
        %v3219 = vpack.c.b16 %v3055, %v3053
        %v3220 = vpack.c.b16 %v3058, %v3056
        %v3221 = vpack.c.b16 %v3059, %v3057
        %v3222 = vpack.c.b16 %v3062, %v3060
        %v3223 = vpack.c.b16 %v3063, %v3061
        %v3224 = vpack.c.b16 %v3066, %v3064
        %v3225 = vpack.c.b16 %v3067, %v3065
        %v3226 = vpack.c.b16 %v3070, %v3068
        %v3227 = vpack.c.b16 %v3071, %v3069
        %v3228 = vpack.c.b16 %v3074, %v3072
        %v3229 = vpack.c.b16 %v3075, %v3073
        %v3230 = vpack.c.b16 %v3078, %v3076
        %v3231 = vpack.c.b16 %v3079, %v3077
        %v3232 = vpack.c.b16 %v3082, %v3080
        %v3233 = vpack.c.b16 %v3083, %v3081
        %v3234 = vpack.c.b16 %v3086, %v3084
        %v3235 = vpack.c.b16 %v3087, %v3085
        %v3236 = vpack.c.b16 %v3090, %v3088
        %v3237 = vpack.c.b16 %v3091, %v3089
        %v3238 = vpack.c.b16 %v3094, %v3092
        %v3239 = vpack.c.b16 %v3095, %v3093
        %v3240 = vpack.c.b16 %v3098, %v3096
        %v3241 = vpack.c.b16 %v3099, %v3097
        %v3242 = vpack.c.b16 %v3102, %v3100
        %v3243 = vpack.c.b16 %v3103, %v3101
        %v3244 = vpack.c.b16 %v3106, %v3104
        %v3245 = vpack.c.b16 %v3107, %v3105
        %v3246 = vpack.c.b16 %v3110, %v3108
        %v3247 = vpack.c.b16 %v3111, %v3109
        %v3248 = vpack.c.b16 %v3114, %v3112
        %v3249 = vpack.c.b16 %v3115, %v3113
        %v3250 = vpack.c.b16 %v3118, %v3116
        %v3251 = vpack.c.b16 %v3119, %v3117
        %v3252 = vpack.c.b16 %v3122, %v3120
        %v3253 = vpack.c.b16 %v3123, %v3121
        %v3254 = vpack.c.b16 %v3126, %v3124
        %v3255 = vpack.c.b16 %v3127, %v3125
        %v3256 = vpack.c.b16 %v3130, %v3128
        %v3257 = vpack.c.b16 %v3131, %v3129
        %v3258 = vpack.c.b16 %v3134, %v3132
        %v3259 = vpack.c.b16 %v3135, %v3133
        %v3260 = vpack.c.b16 %v3138, %v3136
        %v3261 = vpack.c.b16 %v3139, %v3137
        %v3262 = vpack.c.b16 %v3142, %v3140
        %v3263 = vpack.c.b16 %v3143, %v3141
        %v3264 = vpack.c.b16 %v3146, %v3144
        %v3265 = vpack.c.b16 %v3147, %v3145
        %v3266 = vpack.c.b16 %v3150, %v3148
        %v3267 = vpack.c.b16 %v3151, %v3149
        %v3268 = vpack.c.b16 %v3154, %v3152
        %v3269 = vpack.c.b16 %v3155, %v3153
        %v3270 = vpack.c.b16 %v3158, %v3156
        %v3271 = vpack.c.b16 %v3159, %v3157
        %v3272 = vpack.c.b16 %v3162, %v3160
        %v3273 = vpack.c.b16 %v3163, %v3161
        %v3274 = vpack.c.b16 %v3166, %v3164
        %v3275 = vpack.c.b16 %v3167, %v3165
        %v3276 = vpack.c.b16 %v3170, %v3168
        %v3277 = vpack.c.b16 %v3171, %v3169
        %v3278 = vpack.c.b16 %v3174, %v3172
        %v3279 = vpack.c.b16 %v3175, %v3173
        %v3280 = vpack.c.b16 %v3178, %v3176
        %v3281 = vpack.c.b16 %v3179, %v3177
        %v3282 = vpack.c.b16 %v3182, %v3180
        %v3283 = vpack.c.b16 %v3183, %v3181
        %v3284 = vpack.c.b16 %v3186, %v3184
        %v3285 = vpack.c.b16 %v3187, %v3185
        %v3286 = vpack.c.b16 %v3190, %v3188
        %v3287 = vpack.c.b16 %v3191, %v3189
        %3384 = vmatpush.bf16.msra.mxu0 %v3206
        %3385 = vmatpush.bf16.msra.mxu0 %v3204
        %3386 = vmatpush.bf16.msra.mxu0 %v3202
        %3387 = vmatpush.bf16.msra.mxu0 %v3200
        %3388 = vmatpush.bf16.msra.mxu0 %v3198
        %3389 = vmatpush.bf16.msra.mxu0 %v3196
        %3390 = vmatpush.bf16.msra.mxu0 %v3194
        %3391 = vmatpush.bf16.msra.mxu0 %v3192
        %3392 = vmatmul.bf16.gmra.mxu0 %v2783
        %v3393 = vpop.f32.mrf.mxu0
        %v3394 = vadd.f32 0.0, %v3393
        %v3395 = vpop.f32.mrf.mxu0
        %v3396 = vadd.f32 0.0, %v3395
        %3397 = vmatmul.bf16.gmra.mxu0 %v2789
        %v3398 = vpop.f32.mrf.mxu0
        %v3399 = vadd.f32 0.0, %v3398
        %v3400 = vpop.f32.mrf.mxu0
        %v3401 = vadd.f32 0.0, %v3400
        %3402 = vmatmul.bf16.gmra.mxu0 %v2795
        %v3403 = vpop.f32.mrf.mxu0
        %v3404 = vadd.f32 0.0, %v3403
        %v3405 = vpop.f32.mrf.mxu0
        %v3406 = vadd.f32 0.0, %v3405
        %3407 = vmatmul.bf16.gmra.mxu0 %v2801
        %v3408 = vpop.f32.mrf.mxu0
        %v3409 = vadd.f32 0.0, %v3408
        %v3410 = vpop.f32.mrf.mxu0
        %v3411 = vadd.f32 0.0, %v3410
        %3412 = vdwg.mxu0
        %3413 = vmatpush.bf16.msra.mxu0 %v3222
        %3414 = vmatpush.bf16.msra.mxu0 %v3220
        %3415 = vmatpush.bf16.msra.mxu0 %v3218
        %3416 = vmatpush.bf16.msra.mxu0 %v3216
        %3417 = vmatpush.bf16.msra.mxu0 %v3214
        %3418 = vmatpush.bf16.msra.mxu0 %v3212
        %3419 = vmatpush.bf16.msra.mxu0 %v3210
        %3420 = vmatpush.bf16.msra.mxu0 %v3208
        %3421 = vmatmul.bf16.gmra.mxu0 %v2784
        %v3422 = vpop.f32.mrf.mxu0
        %v3423 = vadd.f32 %v3394, %v3422
        %v3424 = vpop.f32.mrf.mxu0
        %v3425 = vadd.f32 %v3396, %v3424
        %3426 = vmatmul.bf16.gmra.mxu0 %v2790
        %v3427 = vpop.f32.mrf.mxu0
        %v3428 = vadd.f32 %v3399, %v3427
        %v3429 = vpop.f32.mrf.mxu0
        %v3430 = vadd.f32 %v3401, %v3429
        %3431 = vmatmul.bf16.gmra.mxu0 %v2796
        %v3432 = vpop.f32.mrf.mxu0
        %v3433 = vadd.f32 %v3404, %v3432
        %v3434 = vpop.f32.mrf.mxu0
        %v3435 = vadd.f32 %v3406, %v3434
        %3436 = vmatmul.bf16.gmra.mxu0 %v2802
        %v3437 = vpop.f32.mrf.mxu0
        %v3438 = vadd.f32 %v3409, %v3437
        %v3439 = vpop.f32.mrf.mxu0
        %v3440 = vadd.f32 %v3411, %v3439
        %3441 = vdwg.mxu0
        %3442 = vmatpush.bf16.msra.mxu0 %v3238
        %3443 = vmatpush.bf16.msra.mxu0 %v3236
        %3444 = vmatpush.bf16.msra.mxu0 %v3234
        %3445 = vmatpush.bf16.msra.mxu0 %v3232
        %3446 = vmatpush.bf16.msra.mxu0 %v3230
        %3447 = vmatpush.bf16.msra.mxu0 %v3228
        %3448 = vmatpush.bf16.msra.mxu0 %v3226
        %3449 = vmatpush.bf16.msra.mxu0 %v3224
        %3450 = vmatmul.bf16.gmra.mxu0 %v2785
        %v3451 = vpop.f32.mrf.mxu0
        %v3452 = vadd.f32 %v3423, %v3451
        %v3453 = vpop.f32.mrf.mxu0
        %v3454 = vadd.f32 %v3425, %v3453
        %3455 = vmatmul.bf16.gmra.mxu0 %v2791
        %v3456 = vpop.f32.mrf.mxu0
        %v3457 = vadd.f32 %v3428, %v3456
        %v3458 = vpop.f32.mrf.mxu0
        %v3459 = vadd.f32 %v3430, %v3458
        %3460 = vmatmul.bf16.gmra.mxu0 %v2797
        %v3461 = vpop.f32.mrf.mxu0
        %v3462 = vadd.f32 %v3433, %v3461
        %v3463 = vpop.f32.mrf.mxu0
        %v3464 = vadd.f32 %v3435, %v3463
        %3465 = vmatmul.bf16.gmra.mxu0 %v2803
        %v3466 = vpop.f32.mrf.mxu0
        %v3467 = vadd.f32 %v3438, %v3466
        %v3468 = vpop.f32.mrf.mxu0
        %v3469 = vadd.f32 %v3440, %v3468
        %3470 = vdwg.mxu0
        %3471 = vmatpush.bf16.msra.mxu0 %v3254
        %3472 = vmatpush.bf16.msra.mxu0 %v3252
        %3473 = vmatpush.bf16.msra.mxu0 %v3250
        %3474 = vmatpush.bf16.msra.mxu0 %v3248
        %3475 = vmatpush.bf16.msra.mxu0 %v3246
        %3476 = vmatpush.bf16.msra.mxu0 %v3244
        %3477 = vmatpush.bf16.msra.mxu0 %v3242
        %3478 = vmatpush.bf16.msra.mxu0 %v3240
        %3479 = vmatmul.bf16.gmra.mxu0 %v2786
        %v3480 = vpop.f32.mrf.mxu0
        %v3481 = vadd.f32 %v3452, %v3480
        %v3482 = vpop.f32.mrf.mxu0
        %v3483 = vadd.f32 %v3454, %v3482
        %3484 = vmatmul.bf16.gmra.mxu0 %v2792
        %v3485 = vpop.f32.mrf.mxu0
        %v3486 = vadd.f32 %v3457, %v3485
        %v3487 = vpop.f32.mrf.mxu0
        %v3488 = vadd.f32 %v3459, %v3487
        %3489 = vmatmul.bf16.gmra.mxu0 %v2798
        %v3490 = vpop.f32.mrf.mxu0
        %v3491 = vadd.f32 %v3462, %v3490
        %v3492 = vpop.f32.mrf.mxu0
        %v3493 = vadd.f32 %v3464, %v3492
        %3494 = vmatmul.bf16.gmra.mxu0 %v2804
        %v3495 = vpop.f32.mrf.mxu0
        %v3496 = vadd.f32 %v3467, %v3495
        %v3497 = vpop.f32.mrf.mxu0
        %v3498 = vadd.f32 %v3469, %v3497
        %3499 = vdwg.mxu0
        %3500 = vmatpush.bf16.msra.mxu0 %v3270
        %3501 = vmatpush.bf16.msra.mxu0 %v3268
        %3502 = vmatpush.bf16.msra.mxu0 %v3266
        %3503 = vmatpush.bf16.msra.mxu0 %v3264
        %3504 = vmatpush.bf16.msra.mxu0 %v3262
        %3505 = vmatpush.bf16.msra.mxu0 %v3260
        %3506 = vmatpush.bf16.msra.mxu0 %v3258
        %3507 = vmatpush.bf16.msra.mxu0 %v3256
        %3508 = vmatmul.bf16.gmra.mxu0 %v2787
        %v3509 = vpop.f32.mrf.mxu0
        %v3510 = vadd.f32 %v3481, %v3509
        %v3511 = vpop.f32.mrf.mxu0
        %v3512 = vadd.f32 %v3483, %v3511
        %3513 = vmatmul.bf16.gmra.mxu0 %v2793
        %v3514 = vpop.f32.mrf.mxu0
        %v3515 = vadd.f32 %v3486, %v3514
        %v3516 = vpop.f32.mrf.mxu0
        %v3517 = vadd.f32 %v3488, %v3516
        %3518 = vmatmul.bf16.gmra.mxu0 %v2799
        %v3519 = vpop.f32.mrf.mxu0
        %v3520 = vadd.f32 %v3491, %v3519
        %v3521 = vpop.f32.mrf.mxu0
        %v3522 = vadd.f32 %v3493, %v3521
        %3523 = vmatmul.bf16.gmra.mxu0 %v2805
        %v3524 = vpop.f32.mrf.mxu0
        %v3525 = vadd.f32 %v3496, %v3524
        %v3526 = vpop.f32.mrf.mxu0
        %v3527 = vadd.f32 %v3498, %v3526
        %3528 = vdwg.mxu0
        %3529 = vmatpush.bf16.msra.mxu0 %v3286
        %3530 = vmatpush.bf16.msra.mxu0 %v3284
        %3531 = vmatpush.bf16.msra.mxu0 %v3282
        %3532 = vmatpush.bf16.msra.mxu0 %v3280
        %3533 = vmatpush.bf16.msra.mxu0 %v3278
        %3534 = vmatpush.bf16.msra.mxu0 %v3276
        %3535 = vmatpush.bf16.msra.mxu0 %v3274
        %3536 = vmatpush.bf16.msra.mxu0 %v3272
        %3537 = vmatmul.bf16.gmra.mxu0 %v2788
        %v3538 = vpop.f32.mrf.mxu0
        %v3539 = vadd.f32 %v3510, %v3538
        %v3540 = vpop.f32.mrf.mxu0
        %v3541 = vadd.f32 %v3512, %v3540
        %3542 = vmatmul.bf16.gmra.mxu0 %v2794
        %v3543 = vpop.f32.mrf.mxu0
        %v3544 = vadd.f32 %v3515, %v3543
        %v3545 = vpop.f32.mrf.mxu0
        %v3546 = vadd.f32 %v3517, %v3545
        %3547 = vmatmul.bf16.gmra.mxu0 %v2800
        %v3548 = vpop.f32.mrf.mxu0
        %v3549 = vadd.f32 %v3520, %v3548
        %v3550 = vpop.f32.mrf.mxu0
        %v3551 = vadd.f32 %v3522, %v3550
        %3552 = vmatmul.bf16.gmra.mxu0 %v2806
        %v3553 = vpop.f32.mrf.mxu0
        %v3554 = vadd.f32 %v3525, %v3553
        %v3555 = vpop.f32.mrf.mxu0
        %v3556 = vadd.f32 %v3527, %v3555
        %3557 = vdwg.mxu0
        %3558 = vmatpush.bf16.msra.mxu0 %v3207
        %3559 = vmatpush.bf16.msra.mxu0 %v3205
        %3560 = vmatpush.bf16.msra.mxu0 %v3203
        %3561 = vmatpush.bf16.msra.mxu0 %v3201
        %3562 = vmatpush.bf16.msra.mxu0 %v3199
        %3563 = vmatpush.bf16.msra.mxu0 %v3197
        %3564 = vmatpush.bf16.msra.mxu0 %v3195
        %3565 = vmatpush.bf16.msra.mxu0 %v3193
        %3566 = vmatmul.bf16.gmra.mxu0 %v2783
        %v3567 = vpop.f32.mrf.mxu0
        %v3568 = vadd.f32 0.0, %v3567
        %v3569 = vpop.f32.mrf.mxu0
        %v3570 = vadd.f32 0.0, %v3569
        %3571 = vmatmul.bf16.gmra.mxu0 %v2789
        %v3572 = vpop.f32.mrf.mxu0
        %v3573 = vadd.f32 0.0, %v3572
        %v3574 = vpop.f32.mrf.mxu0
        %v3575 = vadd.f32 0.0, %v3574
        %3576 = vmatmul.bf16.gmra.mxu0 %v2795
        %v3577 = vpop.f32.mrf.mxu0
        %v3578 = vadd.f32 0.0, %v3577
        %v3579 = vpop.f32.mrf.mxu0
        %v3580 = vadd.f32 0.0, %v3579
        %3581 = vmatmul.bf16.gmra.mxu0 %v2801
        %v3582 = vpop.f32.mrf.mxu0
        %v3583 = vadd.f32 0.0, %v3582
        %v3584 = vpop.f32.mrf.mxu0
        %v3585 = vadd.f32 0.0, %v3584
        %3586 = vdwg.mxu0
        %3587 = vmatpush.bf16.msra.mxu0 %v3223
        %3588 = vmatpush.bf16.msra.mxu0 %v3221
        %3589 = vmatpush.bf16.msra.mxu0 %v3219
        %3590 = vmatpush.bf16.msra.mxu0 %v3217
        %3591 = vmatpush.bf16.msra.mxu0 %v3215
        %3592 = vmatpush.bf16.msra.mxu0 %v3213
        %3593 = vmatpush.bf16.msra.mxu0 %v3211
        %3594 = vmatpush.bf16.msra.mxu0 %v3209
        %3595 = vmatmul.bf16.gmra.mxu0 %v2784
        %v3596 = vpop.f32.mrf.mxu0
        %v3597 = vadd.f32 %v3568, %v3596
        %v3598 = vpop.f32.mrf.mxu0
        %v3599 = vadd.f32 %v3570, %v3598
        %3600 = vmatmul.bf16.gmra.mxu0 %v2790
        %v3601 = vpop.f32.mrf.mxu0
        %v3602 = vadd.f32 %v3573, %v3601
        %v3603 = vpop.f32.mrf.mxu0
        %v3604 = vadd.f32 %v3575, %v3603
        %3605 = vmatmul.bf16.gmra.mxu0 %v2796
        %v3606 = vpop.f32.mrf.mxu0
        %v3607 = vadd.f32 %v3578, %v3606
        %v3608 = vpop.f32.mrf.mxu0
        %v3609 = vadd.f32 %v3580, %v3608
        %3610 = vmatmul.bf16.gmra.mxu0 %v2802
        %v3611 = vpop.f32.mrf.mxu0
        %v3612 = vadd.f32 %v3583, %v3611
        %v3613 = vpop.f32.mrf.mxu0
        %v3614 = vadd.f32 %v3585, %v3613
        %3615 = vdwg.mxu0
        %3616 = vmatpush.bf16.msra.mxu0 %v3239
        %3617 = vmatpush.bf16.msra.mxu0 %v3237
        %3618 = vmatpush.bf16.msra.mxu0 %v3235
        %3619 = vmatpush.bf16.msra.mxu0 %v3233
        %3620 = vmatpush.bf16.msra.mxu0 %v3231
        %3621 = vmatpush.bf16.msra.mxu0 %v3229
        %3622 = vmatpush.bf16.msra.mxu0 %v3227
        %3623 = vmatpush.bf16.msra.mxu0 %v3225
        %3624 = vmatmul.bf16.gmra.mxu0 %v2785
        %v3625 = vpop.f32.mrf.mxu0
        %v3626 = vadd.f32 %v3597, %v3625
        %v3627 = vpop.f32.mrf.mxu0
        %v3628 = vadd.f32 %v3599, %v3627
        %3629 = vmatmul.bf16.gmra.mxu0 %v2791
        %v3630 = vpop.f32.mrf.mxu0
        %v3631 = vadd.f32 %v3602, %v3630
        %v3632 = vpop.f32.mrf.mxu0
        %v3633 = vadd.f32 %v3604, %v3632
        %3634 = vmatmul.bf16.gmra.mxu0 %v2797
        %v3635 = vpop.f32.mrf.mxu0
        %v3636 = vadd.f32 %v3607, %v3635
        %v3637 = vpop.f32.mrf.mxu0
        %v3638 = vadd.f32 %v3609, %v3637
        %3639 = vmatmul.bf16.gmra.mxu0 %v2803
        %v3640 = vpop.f32.mrf.mxu0
        %v3641 = vadd.f32 %v3612, %v3640
        %v3642 = vpop.f32.mrf.mxu0
        %v3643 = vadd.f32 %v3614, %v3642
        %3644 = vdwg.mxu0
        %3645 = vmatpush.bf16.msra.mxu0 %v3255
        %3646 = vmatpush.bf16.msra.mxu0 %v3253
        %3647 = vmatpush.bf16.msra.mxu0 %v3251
        %3648 = vmatpush.bf16.msra.mxu0 %v3249
        %3649 = vmatpush.bf16.msra.mxu0 %v3247
        %3650 = vmatpush.bf16.msra.mxu0 %v3245
        %3651 = vmatpush.bf16.msra.mxu0 %v3243
        %3652 = vmatpush.bf16.msra.mxu0 %v3241
        %3653 = vmatmul.bf16.gmra.mxu0 %v2786
        %v3654 = vpop.f32.mrf.mxu0
        %v3655 = vadd.f32 %v3626, %v3654
        %v3656 = vpop.f32.mrf.mxu0
        %v3657 = vadd.f32 %v3628, %v3656
        %3658 = vmatmul.bf16.gmra.mxu0 %v2792
        %v3659 = vpop.f32.mrf.mxu0
        %v3660 = vadd.f32 %v3631, %v3659
        %v3661 = vpop.f32.mrf.mxu0
        %v3662 = vadd.f32 %v3633, %v3661
        %3663 = vmatmul.bf16.gmra.mxu0 %v2798
        %v3664 = vpop.f32.mrf.mxu0
        %v3665 = vadd.f32 %v3636, %v3664
        %v3666 = vpop.f32.mrf.mxu0
        %v3667 = vadd.f32 %v3638, %v3666
        %3668 = vmatmul.bf16.gmra.mxu0 %v2804
        %v3669 = vpop.f32.mrf.mxu0
        %v3670 = vadd.f32 %v3641, %v3669
        %v3671 = vpop.f32.mrf.mxu0
        %v3672 = vadd.f32 %v3643, %v3671
        %3673 = vdwg.mxu0
        %3674 = vmatpush.bf16.msra.mxu0 %v3271
        %3675 = vmatpush.bf16.msra.mxu0 %v3269
        %3676 = vmatpush.bf16.msra.mxu0 %v3267
        %3677 = vmatpush.bf16.msra.mxu0 %v3265
        %3678 = vmatpush.bf16.msra.mxu0 %v3263
        %3679 = vmatpush.bf16.msra.mxu0 %v3261
        %3680 = vmatpush.bf16.msra.mxu0 %v3259
        %3681 = vmatpush.bf16.msra.mxu0 %v3257
        %3682 = vmatmul.bf16.gmra.mxu0 %v2787
        %v3683 = vpop.f32.mrf.mxu0
        %v3684 = vadd.f32 %v3655, %v3683
        %v3685 = vpop.f32.mrf.mxu0
        %v3686 = vadd.f32 %v3657, %v3685
        %3687 = vmatmul.bf16.gmra.mxu0 %v2793
        %v3688 = vpop.f32.mrf.mxu0
        %v3689 = vadd.f32 %v3660, %v3688
        %v3690 = vpop.f32.mrf.mxu0
        %v3691 = vadd.f32 %v3662, %v3690
        %3692 = vmatmul.bf16.gmra.mxu0 %v2799
        %v3693 = vpop.f32.mrf.mxu0
        %v3694 = vadd.f32 %v3665, %v3693
        %v3695 = vpop.f32.mrf.mxu0
        %v3696 = vadd.f32 %v3667, %v3695
        %3697 = vmatmul.bf16.gmra.mxu0 %v2805
        %v3698 = vpop.f32.mrf.mxu0
        %v3699 = vadd.f32 %v3670, %v3698
        %v3700 = vpop.f32.mrf.mxu0
        %v3701 = vadd.f32 %v3672, %v3700
        %3702 = vdwg.mxu0
        %3703 = vmatpush.bf16.msra.mxu0 %v3287
        %3704 = vmatpush.bf16.msra.mxu0 %v3285
        %3705 = vmatpush.bf16.msra.mxu0 %v3283
        %3706 = vmatpush.bf16.msra.mxu0 %v3281
        %3707 = vmatpush.bf16.msra.mxu0 %v3279
        %3708 = vmatpush.bf16.msra.mxu0 %v3277
        %3709 = vmatpush.bf16.msra.mxu0 %v3275
        %3710 = vmatpush.bf16.msra.mxu0 %v3273
        %3711 = vmatmul.bf16.gmra.mxu0 %v2788
        %v3712 = vpop.f32.mrf.mxu0
        %v3713 = vadd.f32 %v3684, %v3712
        %v3714 = vpop.f32.mrf.mxu0
        %v3715 = vadd.f32 %v3686, %v3714
        %3716 = vmatmul.bf16.gmra.mxu0 %v2794
        %v3717 = vpop.f32.mrf.mxu0
        %v3718 = vadd.f32 %v3689, %v3717
        %v3719 = vpop.f32.mrf.mxu0
        %v3720 = vadd.f32 %v3691, %v3719
        %3721 = vmatmul.bf16.gmra.mxu0 %v2800
        %v3722 = vpop.f32.mrf.mxu0
        %v3723 = vadd.f32 %v3694, %v3722
        %v3724 = vpop.f32.mrf.mxu0
        %v3725 = vadd.f32 %v3696, %v3724
        %3726 = vmatmul.bf16.gmra.mxu0 %v2806
        %v3727 = vpop.f32.mrf.mxu0
        %v3728 = vadd.f32 %v3699, %v3727
        %v3729 = vpop.f32.mrf.mxu0
        %v3730 = vadd.f32 %v3701, %v3729
        %3731 = vdwg.mxu0
        %v3732 = vadd.f32 %v2541, %v3539
        %v3733 = vadd.f32 %v2715, %v3713
        %v3734 = vadd.f32 %v2543, %v3541
        %v3735 = vadd.f32 %v2717, %v3715
        %v3736 = vadd.f32 %v2546, %v3544
        %v3737 = vadd.f32 %v2720, %v3718
        %v3738 = vadd.f32 %v2548, %v3546
        %v3739 = vadd.f32 %v2722, %v3720
        %v3740 = vadd.f32 %v2551, %v3549
        %v3741 = vadd.f32 %v2725, %v3723
        %v3742 = vadd.f32 %v2553, %v3551
        %v3743 = vadd.f32 %v2727, %v3725
        %v3744 = vadd.f32 %v2556, %v3554
        %v3745 = vadd.f32 %v2730, %v3728
        %v3746 = vadd.f32 %v2558, %v3556
        %v3747 = vadd.f32 %v2732, %v3730
        %v3748 = vmax.f32 %v3732, 0.0
        %v3749 = vmax.f32 %v3733, 0.0
        %v3750 = vmax.f32 %v3734, 0.0
        %v3751 = vmax.f32 %v3735, 0.0
        %v3752 = vmax.f32 %v3736, 0.0
        %v3753 = vmax.f32 %v3737, 0.0
        %v3754 = vmax.f32 %v3738, 0.0
        %v3755 = vmax.f32 %v3739, 0.0
        %v3756 = vmax.f32 %v3740, 0.0
        %v3757 = vmax.f32 %v3741, 0.0
        %v3758 = vmax.f32 %v3742, 0.0
        %v3759 = vmax.f32 %v3743, 0.0
        %v3760 = vmax.f32 %v3744, 0.0
        %v3761 = vmax.f32 %v3745, 0.0
        %v3762 = vmax.f32 %v3746, 0.0
        %v3763 = vmax.f32 %v3747, 0.0
        %v3780 = vrot.slane %v3748, 7
        %v3781 = vrot.slane %v3749, 7
        %v3782 = vrot.slane %v3750, 7
        %v3783 = vrot.slane %v3751, 7
        %v3784 = vrot.slane %v3752, 7
        %v3785 = vrot.slane %v3753, 7
        %v3786 = vrot.slane %v3754, 7
        %v3787 = vrot.slane %v3755, 7
        %v3788 = vrot.slane %v3756, 7
        %v3789 = vrot.slane %v3757, 7
        %v3790 = vrot.slane %v3758, 7
        %v3791 = vrot.slane %v3759, 7
        %v3792 = vrot.slane %v3760, 7
        %v3793 = vrot.slane %v3761, 7
        %v3794 = vrot.slane %v3762, 7
        %v3795 = vrot.slane %v3763, 7
        %3812 = vst [vmem:[%s305] sm:$0xfe] %v3780
        %3813 = vst [vmem:[%s305 + $0x8] sm:$0xfe] %v3781
        %3814 = vst [vmem:[%s305 + $0x10] sm:$0x1] %v3780
        %3815 = vst [vmem:[%s305 + $0x18] sm:$0x1] %v3781
        %3816 = vst [vmem:[%s305 + $0x20] sm:$0xfe] %v3782
        %3817 = vst [vmem:[%s305 + $0x28] sm:$0xfe] %v3783
        %3818 = vst [vmem:[%s305 + $0x30] sm:$0x1] %v3782
        %3819 = vst [vmem:[%s305 + $0x38] sm:$0x1] %v3783
        %3820 = vst [vmem:[%s305 + $0x40] sm:$0xfe] %v3784
        %3821 = vst [vmem:[%s305 + $0x48] sm:$0xfe] %v3785
        %3822 = vst [vmem:[%s305 + $0x50] sm:$0x1] %v3784
        %3823 = vst [vmem:[%s305 + $0x58] sm:$0x1] %v3785
        %3824 = vst [vmem:[%s305 + $0x60] sm:$0xfe] %v3786
        %3825 = vst [vmem:[%s305 + $0x68] sm:$0xfe] %v3787
        %3826 = vst [vmem:[%s305 + $0x70] sm:$0x1] %v3786
        %3827 = vst [vmem:[%s305 + $0x78] sm:$0x1] %v3787
        %3828 = vst [vmem:[%s305 + $0x80] sm:$0xfe] %v3788
        %3829 = vst [vmem:[%s305 + $0x88] sm:$0xfe] %v3789
        %3830 = vst [vmem:[%s305 + $0x90] sm:$0x1] %v3788
        %3831 = vst [vmem:[%s305 + $0x98] sm:$0x1] %v3789
        %3832 = vst [vmem:[%s305 + $0xa0] sm:$0xfe] %v3790
        %3833 = vst [vmem:[%s305 + $0xa8] sm:$0xfe] %v3791
        %3834 = vst [vmem:[%s305 + $0xb0] sm:$0x1] %v3790
        %3835 = vst [vmem:[%s305 + $0xb8] sm:$0x1] %v3791
        %3836 = vst [vmem:[%s305 + $0xc0] sm:$0xfe] %v3792
        %3837 = vst [vmem:[%s305 + $0xc8] sm:$0xfe] %v3793
        %3838 = vst [vmem:[%s305 + $0xd0] sm:$0x1] %v3792
        %3839 = vst [vmem:[%s305 + $0xd8] sm:$0x1] %v3793
        %3840 = vst [vmem:[%s305 + $0xe0] sm:$0xfe] %v3794
        %3841 = vst [vmem:[%s305 + $0xe8] sm:$0xfe] %v3795
        %3842 = vst [vmem:[%s305 + $0xf0] sm:$0x1] %v3794
        %3843 = vst [vmem:[%s305 + $0xf8] sm:$0x1] %v3795
        %v3844 = vld [vmem:[#allocation2] sm:$0xff]
        %v3845 = vld [vmem:[#allocation2 + $0x8] sm:$0xff]
        %v3846 = vld [vmem:[#allocation2 + $0x20] sm:$0xff]
        %v3847 = vld [vmem:[#allocation2 + $0x28] sm:$0xff]
        %v3848 = vld [vmem:[#allocation2 + $0x40] sm:$0xff]
        %v3849 = vld [vmem:[#allocation2 + $0x48] sm:$0xff]
        %v3850 = vld [vmem:[#allocation2 + $0x60] sm:$0xff]
        %v3851 = vld [vmem:[#allocation2 + $0x68] sm:$0xff]
        %v3852 = vld [vmem:[#allocation2 + $0x80] sm:$0xff]
        %v3853 = vld [vmem:[#allocation2 + $0x88] sm:$0xff]
        %v3854 = vld [vmem:[#allocation2 + $0xa0] sm:$0xff]
        %v3855 = vld [vmem:[#allocation2 + $0xa8] sm:$0xff]
        %v3856 = vld [vmem:[#allocation2 + $0xc0] sm:$0xff]
        %v3857 = vld [vmem:[#allocation2 + $0xc8] sm:$0xff]
        %v3858 = vld [vmem:[#allocation2 + $0xe0] sm:$0xff]
        %v3859 = vld [vmem:[#allocation2 + $0xe8] sm:$0xff]
        %v3860 = vld [vmem:[#allocation2 + $0x100] sm:$0xff]
        %v3861 = vld [vmem:[#allocation2 + $0x108] sm:$0xff]
        %v3862 = vld [vmem:[#allocation2 + $0x120] sm:$0xff]
        %v3863 = vld [vmem:[#allocation2 + $0x128] sm:$0xff]
        %3864 = vst [vmem:[#allocation3] sm:$0xff] %v3844
        %3865 = vst [vmem:[#allocation3 + $0x8] sm:$0xff] %v3845
        %3866 = vst [vmem:[#allocation3 + $0x30] sm:$0xff] %v3846
        %3867 = vst [vmem:[#allocation3 + $0x38] sm:$0xff] %v3847
        %3868 = vst [vmem:[#allocation3 + $0x60] sm:$0xff] %v3848
        %3869 = vst [vmem:[#allocation3 + $0x68] sm:$0xff] %v3849
        %3870 = vst [vmem:[#allocation3 + $0x90] sm:$0xff] %v3850
        %3871 = vst [vmem:[#allocation3 + $0x98] sm:$0xff] %v3851
        %3872 = vst [vmem:[#allocation3 + $0xc0] sm:$0xff] %v3852
        %3873 = vst [vmem:[#allocation3 + $0xc8] sm:$0xff] %v3853
        %3874 = vst [vmem:[#allocation3 + $0xf0] sm:$0xff] %v3854
        %3875 = vst [vmem:[#allocation3 + $0xf8] sm:$0xff] %v3855
        %3876 = vst [vmem:[#allocation3 + $0x120] sm:$0xff] %v3856
        %3877 = vst [vmem:[#allocation3 + $0x128] sm:$0xff] %v3857
        %3878 = vst [vmem:[#allocation3 + $0x150] sm:$0xff] %v3858
        %3879 = vst [vmem:[#allocation3 + $0x158] sm:$0xff] %v3859
        %3880 = vst [vmem:[#allocation3 + $0x180] sm:$0xff] %v3860
        %3881 = vst [vmem:[#allocation3 + $0x188] sm:$0xff] %v3861
        %3882 = vst [vmem:[#allocation3 + $0x1b0] sm:$0xff] %v3862
        %3883 = vst [vmem:[#allocation3 + $0x1b8] sm:$0xff] %v3863
        %v3884 = vld [vmem:[#allocation2] sm:$0xfe]
        %v3885 = vld [vmem:[#allocation2 + $0x8] sm:$0xfe]
        %v3886 = vld [vmem:[#allocation2 + $0x10] sm:$0x1]
        %v3887 = vld [vmem:[#allocation2 + $0x18] sm:$0x1]
        %v3888 = vld [vmem:[#allocation2 + $0x20] sm:$0xfe]
        %v3889 = vld [vmem:[#allocation2 + $0x28] sm:$0xfe]
        %v3890 = vld [vmem:[#allocation2 + $0x30] sm:$0x1]
        %v3891 = vld [vmem:[#allocation2 + $0x38] sm:$0x1]
        %v3892 = vld [vmem:[#allocation2 + $0x40] sm:$0xfe]
        %v3893 = vld [vmem:[#allocation2 + $0x48] sm:$0xfe]
        %v3894 = vld [vmem:[#allocation2 + $0x50] sm:$0x1]
        %v3895 = vld [vmem:[#allocation2 + $0x58] sm:$0x1]
        %v3896 = vld [vmem:[#allocation2 + $0x60] sm:$0xfe]
        %v3897 = vld [vmem:[#allocation2 + $0x68] sm:$0xfe]
        %v3898 = vld [vmem:[#allocation2 + $0x70] sm:$0x1]
        %v3899 = vld [vmem:[#allocation2 + $0x78] sm:$0x1]
        %v3900 = vld [vmem:[#allocation2 + $0x80] sm:$0xfe]
        %v3901 = vld [vmem:[#allocation2 + $0x88] sm:$0xfe]
        %v3902 = vld [vmem:[#allocation2 + $0x90] sm:$0x1]
        %v3903 = vld [vmem:[#allocation2 + $0x98] sm:$0x1]
        %v3904 = vld [vmem:[#allocation2 + $0xa0] sm:$0xfe]
        %v3905 = vld [vmem:[#allocation2 + $0xa8] sm:$0xfe]
        %v3906 = vld [vmem:[#allocation2 + $0xb0] sm:$0x1]
        %v3907 = vld [vmem:[#allocation2 + $0xb8] sm:$0x1]
        %v3908 = vld [vmem:[#allocation2 + $0xc0] sm:$0xfe]
        %v3909 = vld [vmem:[#allocation2 + $0xc8] sm:$0xfe]
        %v3910 = vld [vmem:[#allocation2 + $0xd0] sm:$0x1]
        %v3911 = vld [vmem:[#allocation2 + $0xd8] sm:$0x1]
        %v3912 = vld [vmem:[#allocation2 + $0xe0] sm:$0xfe]
        %v3913 = vld [vmem:[#allocation2 + $0xe8] sm:$0xfe]
        %v3914 = vld [vmem:[#allocation2 + $0xf0] sm:$0x1]
        %v3915 = vld [vmem:[#allocation2 + $0xf8] sm:$0x1]
        %v3916 = vld [vmem:[#allocation2 + $0x100] sm:$0xfe]
        %v3917 = vld [vmem:[#allocation2 + $0x108] sm:$0xfe]
        %v3918 = vld [vmem:[#allocation2 + $0x110] sm:$0x1]
        %v3919 = vld [vmem:[#allocation2 + $0x118] sm:$0x1]
        %v3920 = vld [vmem:[#allocation2 + $0x120] sm:$0xfe]
        %v3921 = vld [vmem:[#allocation2 + $0x128] sm:$0xfe]
        %v3922 = vld [vmem:[#allocation2 + $0x130] sm:$0x1]
        %v3923 = vld [vmem:[#allocation2 + $0x138] sm:$0x1]
        %v3964 = vrot.slane %v3884, 1
        %v3965 = vrot.slane %v3886, 1
        %v3966 = vsel %vm458, %v3964, %v3965
        %v3967 = vrot.slane %v3885, 1
        %v3968 = vrot.slane %v3887, 1
        %v3969 = vsel %vm458, %v3967, %v3968
        %v3970 = vrot.slane %v3888, 1
        %v3971 = vrot.slane %v3890, 1
        %v3972 = vsel %vm458, %v3970, %v3971
        %v3973 = vrot.slane %v3889, 1
        %v3974 = vrot.slane %v3891, 1
        %v3975 = vsel %vm458, %v3973, %v3974
        %v3976 = vrot.slane %v3892, 1
        %v3977 = vrot.slane %v3894, 1
        %v3978 = vsel %vm458, %v3976, %v3977
        %v3979 = vrot.slane %v3893, 1
        %v3980 = vrot.slane %v3895, 1
        %v3981 = vsel %vm458, %v3979, %v3980
        %v3982 = vrot.slane %v3896, 1
        %v3983 = vrot.slane %v3898, 1
        %v3984 = vsel %vm458, %v3982, %v3983
        %v3985 = vrot.slane %v3897, 1
        %v3986 = vrot.slane %v3899, 1
        %v3987 = vsel %vm458, %v3985, %v3986
        %v3988 = vrot.slane %v3900, 1
        %v3989 = vrot.slane %v3902, 1
        %v3990 = vsel %vm458, %v3988, %v3989
        %v3991 = vrot.slane %v3901, 1
        %v3992 = vrot.slane %v3903, 1
        %v3993 = vsel %vm458, %v3991, %v3992
        %v3994 = vrot.slane %v3904, 1
        %v3995 = vrot.slane %v3906, 1
        %v3996 = vsel %vm458, %v3994, %v3995
        %v3997 = vrot.slane %v3905, 1
        %v3998 = vrot.slane %v3907, 1
        %v3999 = vsel %vm458, %v3997, %v3998
        %v4000 = vrot.slane %v3908, 1
        %v4001 = vrot.slane %v3910, 1
        %v4002 = vsel %vm458, %v4000, %v4001
        %v4003 = vrot.slane %v3909, 1
        %v4004 = vrot.slane %v3911, 1
        %v4005 = vsel %vm458, %v4003, %v4004
        %v4006 = vrot.slane %v3912, 1
        %v4007 = vrot.slane %v3914, 1
        %v4008 = vsel %vm458, %v4006, %v4007
        %v4009 = vrot.slane %v3913, 1
        %v4010 = vrot.slane %v3915, 1
        %v4011 = vsel %vm458, %v4009, %v4010
        %v4012 = vrot.slane %v3916, 1
        %v4013 = vrot.slane %v3918, 1
        %v4014 = vsel %vm458, %v4012, %v4013
        %v4015 = vrot.slane %v3917, 1
        %v4016 = vrot.slane %v3919, 1
        %v4017 = vsel %vm458, %v4015, %v4016
        %v4018 = vrot.slane %v3920, 1
        %v4019 = vrot.slane %v3922, 1
        %v4020 = vsel %vm458, %v4018, %v4019
        %v4021 = vrot.slane %v3921, 1
        %v4022 = vrot.slane %v3923, 1
        %v4023 = vsel %vm458, %v4021, %v4022
        %4044 = vst [vmem:[#allocation3 + $0x10] sm:$0xff] %v3966
        %4045 = vst [vmem:[#allocation3 + $0x18] sm:$0xff] %v3969
        %4046 = vst [vmem:[#allocation3 + $0x40] sm:$0xff] %v3972
        %4047 = vst [vmem:[#allocation3 + $0x48] sm:$0xff] %v3975
        %4048 = vst [vmem:[#allocation3 + $0x70] sm:$0xff] %v3978
        %4049 = vst [vmem:[#allocation3 + $0x78] sm:$0xff] %v3981
        %4050 = vst [vmem:[#allocation3 + $0xa0] sm:$0xff] %v3984
        %4051 = vst [vmem:[#allocation3 + $0xa8] sm:$0xff] %v3987
        %4052 = vst [vmem:[#allocation3 + $0xd0] sm:$0xff] %v3990
        %4053 = vst [vmem:[#allocation3 + $0xd8] sm:$0xff] %v3993
        %4054 = vst [vmem:[#allocation3 + $0x100] sm:$0xff] %v3996
        %4055 = vst [vmem:[#allocation3 + $0x108] sm:$0xff] %v3999
        %4056 = vst [vmem:[#allocation3 + $0x130] sm:$0xff] %v4002
        %4057 = vst [vmem:[#allocation3 + $0x138] sm:$0xff] %v4005
        %4058 = vst [vmem:[#allocation3 + $0x160] sm:$0xff] %v4008
        %4059 = vst [vmem:[#allocation3 + $0x168] sm:$0xff] %v4011
        %4060 = vst [vmem:[#allocation3 + $0x190] sm:$0xff] %v4014
        %4061 = vst [vmem:[#allocation3 + $0x198] sm:$0xff] %v4017
        %4062 = vst [vmem:[#allocation3 + $0x1c0] sm:$0xff] %v4020
        %4063 = vst [vmem:[#allocation3 + $0x1c8] sm:$0xff] %v4023
        %v4064 = vld [vmem:[#allocation2] sm:$0xfc]
        %v4065 = vld [vmem:[#allocation2 + $0x8] sm:$0xfc]
        %v4066 = vld [vmem:[#allocation2 + $0x10] sm:$0x3]
        %v4067 = vld [vmem:[#allocation2 + $0x18] sm:$0x3]
        %v4068 = vld [vmem:[#allocation2 + $0x20] sm:$0xfc]
        %v4069 = vld [vmem:[#allocation2 + $0x28] sm:$0xfc]
        %v4070 = vld [vmem:[#allocation2 + $0x30] sm:$0x3]
        %v4071 = vld [vmem:[#allocation2 + $0x38] sm:$0x3]
        %v4072 = vld [vmem:[#allocation2 + $0x40] sm:$0xfc]
        %v4073 = vld [vmem:[#allocation2 + $0x48] sm:$0xfc]
        %v4074 = vld [vmem:[#allocation2 + $0x50] sm:$0x3]
        %v4075 = vld [vmem:[#allocation2 + $0x58] sm:$0x3]
        %v4076 = vld [vmem:[#allocation2 + $0x60] sm:$0xfc]
        %v4077 = vld [vmem:[#allocation2 + $0x68] sm:$0xfc]
        %v4078 = vld [vmem:[#allocation2 + $0x70] sm:$0x3]
        %v4079 = vld [vmem:[#allocation2 + $0x78] sm:$0x3]
        %v4080 = vld [vmem:[#allocation2 + $0x80] sm:$0xfc]
        %v4081 = vld [vmem:[#allocation2 + $0x88] sm:$0xfc]
        %v4082 = vld [vmem:[#allocation2 + $0x90] sm:$0x3]
        %v4083 = vld [vmem:[#allocation2 + $0x98] sm:$0x3]
        %v4084 = vld [vmem:[#allocation2 + $0xa0] sm:$0xfc]
        %v4085 = vld [vmem:[#allocation2 + $0xa8] sm:$0xfc]
        %v4086 = vld [vmem:[#allocation2 + $0xb0] sm:$0x3]
        %v4087 = vld [vmem:[#allocation2 + $0xb8] sm:$0x3]
        %v4088 = vld [vmem:[#allocation2 + $0xc0] sm:$0xfc]
        %v4089 = vld [vmem:[#allocation2 + $0xc8] sm:$0xfc]
        %v4090 = vld [vmem:[#allocation2 + $0xd0] sm:$0x3]
        %v4091 = vld [vmem:[#allocation2 + $0xd8] sm:$0x3]
        %v4092 = vld [vmem:[#allocation2 + $0xe0] sm:$0xfc]
        %v4093 = vld [vmem:[#allocation2 + $0xe8] sm:$0xfc]
        %v4094 = vld [vmem:[#allocation2 + $0xf0] sm:$0x3]
        %v4095 = vld [vmem:[#allocation2 + $0xf8] sm:$0x3]
        %v4096 = vld [vmem:[#allocation2 + $0x100] sm:$0xfc]
        %v4097 = vld [vmem:[#allocation2 + $0x108] sm:$0xfc]
        %v4098 = vld [vmem:[#allocation2 + $0x110] sm:$0x3]
        %v4099 = vld [vmem:[#allocation2 + $0x118] sm:$0x3]
        %v4100 = vld [vmem:[#allocation2 + $0x120] sm:$0xfc]
        %v4101 = vld [vmem:[#allocation2 + $0x128] sm:$0xfc]
        %v4102 = vld [vmem:[#allocation2 + $0x130] sm:$0x3]
        %v4103 = vld [vmem:[#allocation2 + $0x138] sm:$0x3]
        %v4144 = vrot.slane %v4064, 2
        %v4145 = vrot.slane %v4066, 2
        %v4146 = vsel %vm639, %v4144, %v4145
        %v4147 = vrot.slane %v4065, 2
        %v4148 = vrot.slane %v4067, 2
        %v4149 = vsel %vm639, %v4147, %v4148
        %v4150 = vrot.slane %v4068, 2
        %v4151 = vrot.slane %v4070, 2
        %v4152 = vsel %vm639, %v4150, %v4151
        %v4153 = vrot.slane %v4069, 2
        %v4154 = vrot.slane %v4071, 2
        %v4155 = vsel %vm639, %v4153, %v4154
        %v4156 = vrot.slane %v4072, 2
        %v4157 = vrot.slane %v4074, 2
        %v4158 = vsel %vm639, %v4156, %v4157
        %v4159 = vrot.slane %v4073, 2
        %v4160 = vrot.slane %v4075, 2
        %v4161 = vsel %vm639, %v4159, %v4160
        %v4162 = vrot.slane %v4076, 2
        %v4163 = vrot.slane %v4078, 2
        %v4164 = vsel %vm639, %v4162, %v4163
        %v4165 = vrot.slane %v4077, 2
        %v4166 = vrot.slane %v4079, 2
        %v4167 = vsel %vm639, %v4165, %v4166
        %v4168 = vrot.slane %v4080, 2
        %v4169 = vrot.slane %v4082, 2
        %v4170 = vsel %vm639, %v4168, %v4169
        %v4171 = vrot.slane %v4081, 2
        %v4172 = vrot.slane %v4083, 2
        %v4173 = vsel %vm639, %v4171, %v4172
        %v4174 = vrot.slane %v4084, 2
        %v4175 = vrot.slane %v4086, 2
        %v4176 = vsel %vm639, %v4174, %v4175
        %v4177 = vrot.slane %v4085, 2
        %v4178 = vrot.slane %v4087, 2
        %v4179 = vsel %vm639, %v4177, %v4178
        %v4180 = vrot.slane %v4088, 2
        %v4181 = vrot.slane %v4090, 2
        %v4182 = vsel %vm639, %v4180, %v4181
        %v4183 = vrot.slane %v4089, 2
        %v4184 = vrot.slane %v4091, 2
        %v4185 = vsel %vm639, %v4183, %v4184
        %v4186 = vrot.slane %v4092, 2
        %v4187 = vrot.slane %v4094, 2
        %v4188 = vsel %vm639, %v4186, %v4187
        %v4189 = vrot.slane %v4093, 2
        %v4190 = vrot.slane %v4095, 2
        %v4191 = vsel %vm639, %v4189, %v4190
        %v4192 = vrot.slane %v4096, 2
        %v4193 = vrot.slane %v4098, 2
        %v4194 = vsel %vm639, %v4192, %v4193
        %v4195 = vrot.slane %v4097, 2
        %v4196 = vrot.slane %v4099, 2
        %v4197 = vsel %vm639, %v4195, %v4196
        %v4198 = vrot.slane %v4100, 2
        %v4199 = vrot.slane %v4102, 2
        %v4200 = vsel %vm639, %v4198, %v4199
        %v4201 = vrot.slane %v4101, 2
        %v4202 = vrot.slane %v4103, 2
        %v4203 = vsel %vm639, %v4201, %v4202
        %4224 = vst [vmem:[#allocation3 + $0x20] sm:$0xff] %v4146
        %4225 = vst [vmem:[#allocation3 + $0x28] sm:$0xff] %v4149
        %4226 = vst [vmem:[#allocation3 + $0x50] sm:$0xff] %v4152
        %4227 = vst [vmem:[#allocation3 + $0x58] sm:$0xff] %v4155
        %4228 = vst [vmem:[#allocation3 + $0x80] sm:$0xff] %v4158
        %4229 = vst [vmem:[#allocation3 + $0x88] sm:$0xff] %v4161
        %4230 = vst [vmem:[#allocation3 + $0xb0] sm:$0xff] %v4164
        %4231 = vst [vmem:[#allocation3 + $0xb8] sm:$0xff] %v4167
        %4232 = vst [vmem:[#allocation3 + $0xe0] sm:$0xff] %v4170
        %4233 = vst [vmem:[#allocation3 + $0xe8] sm:$0xff] %v4173
        %4234 = vst [vmem:[#allocation3 + $0x110] sm:$0xff] %v4176
        %4235 = vst [vmem:[#allocation3 + $0x118] sm:$0xff] %v4179
        %4236 = vst [vmem:[#allocation3 + $0x140] sm:$0xff] %v4182
        %4237 = vst [vmem:[#allocation3 + $0x148] sm:$0xff] %v4185
        %4238 = vst [vmem:[#allocation3 + $0x170] sm:$0xff] %v4188
        %4239 = vst [vmem:[#allocation3 + $0x178] sm:$0xff] %v4191
        %4240 = vst [vmem:[#allocation3 + $0x1a0] sm:$0xff] %v4194
        %4241 = vst [vmem:[#allocation3 + $0x1a8] sm:$0xff] %v4197
        %4242 = vst [vmem:[#allocation3 + $0x1d0] sm:$0xff] %v4200
        %4243 = vst [vmem:[#allocation3 + $0x1d8] sm:$0xff] %v4203
        %v4244 = vld [vmem:[#allocation3] sm:$0xff]
        %v4245 = vld [vmem:[#allocation3 + $0x8] sm:$0xff]
        %v4246 = vld [vmem:[#allocation3 + $0x10] sm:$0xff]
        %v4247 = vld [vmem:[#allocation3 + $0x18] sm:$0xff]
        %v4248 = vld [vmem:[#allocation3 + $0x20] sm:$0xff]
        %v4249 = vld [vmem:[#allocation3 + $0x28] sm:$0xff]
        %v4250 = vld [vmem:[#allocation3 + $0x30] sm:$0xff]
        %v4251 = vld [vmem:[#allocation3 + $0x38] sm:$0xff]
        %v4252 = vld [vmem:[#allocation3 + $0x40] sm:$0xff]
        %v4253 = vld [vmem:[#allocation3 + $0x48] sm:$0xff]
        %v4254 = vld [vmem:[#allocation3 + $0x50] sm:$0xff]
        %v4255 = vld [vmem:[#allocation3 + $0x58] sm:$0xff]
        %v4256 = vld [vmem:[#allocation3 + $0x60] sm:$0xff]
        %v4257 = vld [vmem:[#allocation3 + $0x68] sm:$0xff]
        %v4258 = vld [vmem:[#allocation3 + $0x70] sm:$0xff]
        %v4259 = vld [vmem:[#allocation3 + $0x78] sm:$0xff]
        %v4260 = vld [vmem:[#allocation3 + $0x80] sm:$0xff]
        %v4261 = vld [vmem:[#allocation3 + $0x88] sm:$0xff]
        %v4262 = vld [vmem:[#allocation3 + $0x90] sm:$0xff]
        %v4263 = vld [vmem:[#allocation3 + $0x98] sm:$0xff]
        %v4264 = vld [vmem:[#allocation3 + $0xa0] sm:$0xff]
        %v4265 = vld [vmem:[#allocation3 + $0xa8] sm:$0xff]
        %v4266 = vld [vmem:[#allocation3 + $0xb0] sm:$0xff]
        %v4267 = vld [vmem:[#allocation3 + $0xb8] sm:$0xff]
        %v4268 = vld [vmem:[#allocation3 + $0xc0] sm:$0xff]
        %v4269 = vld [vmem:[#allocation3 + $0xc8] sm:$0xff]
        %v4270 = vld [vmem:[#allocation3 + $0xd0] sm:$0xff]
        %v4271 = vld [vmem:[#allocation3 + $0xd8] sm:$0xff]
        %v4272 = vld [vmem:[#allocation3 + $0xe0] sm:$0xff]
        %v4273 = vld [vmem:[#allocation3 + $0xe8] sm:$0xff]
        %v4274 = vld [vmem:[#allocation3 + $0xf0] sm:$0xff]
        %v4275 = vld [vmem:[#allocation3 + $0xf8] sm:$0xff]
        %v4276 = vld [vmem:[#allocation3 + $0x100] sm:$0xff]
        %v4277 = vld [vmem:[#allocation3 + $0x108] sm:$0xff]
        %v4278 = vld [vmem:[#allocation3 + $0x110] sm:$0xff]
        %v4279 = vld [vmem:[#allocation3 + $0x118] sm:$0xff]
        %v4280 = vld [vmem:[#allocation3 + $0x120] sm:$0xff]
        %v4281 = vld [vmem:[#allocation3 + $0x128] sm:$0xff]
        %v4282 = vld [vmem:[#allocation3 + $0x130] sm:$0xff]
        %v4283 = vld [vmem:[#allocation3 + $0x138] sm:$0xff]
        %v4284 = vld [vmem:[#allocation3 + $0x140] sm:$0xff]
        %v4285 = vld [vmem:[#allocation3 + $0x148] sm:$0xff]
        %v4286 = vld [vmem:[#allocation3 + $0x150] sm:$0xff]
        %v4287 = vld [vmem:[#allocation3 + $0x158] sm:$0xff]
        %v4288 = vld [vmem:[#allocation3 + $0x160] sm:$0xff]
        %v4289 = vld [vmem:[#allocation3 + $0x168] sm:$0xff]
        %v4290 = vld [vmem:[#allocation3 + $0x170] sm:$0xff]
        %v4291 = vld [vmem:[#allocation3 + $0x178] sm:$0xff]
        %v4292 = vpack.c.bf16 %v4250, %v4244
        %v4293 = vpack.c.bf16 %v4251, %v4245
        %v4294 = vpack.c.bf16 %v4252, %v4246
        %v4295 = vpack.c.bf16 %v4253, %v4247
        %v4296 = vpack.c.bf16 %v4254, %v4248
        %v4297 = vpack.c.bf16 %v4255, %v4249
        %v4298 = vpack.c.bf16 %v4262, %v4256
        %v4299 = vpack.c.bf16 %v4263, %v4257
        %v4300 = vpack.c.bf16 %v4264, %v4258
        %v4301 = vpack.c.bf16 %v4265, %v4259
        %v4302 = vpack.c.bf16 %v4266, %v4260
        %v4303 = vpack.c.bf16 %v4267, %v4261
        %v4304 = vpack.c.bf16 %v4274, %v4268
        %v4305 = vpack.c.bf16 %v4275, %v4269
        %v4306 = vpack.c.bf16 %v4276, %v4270
        %v4307 = vpack.c.bf16 %v4277, %v4271
        %v4308 = vpack.c.bf16 %v4278, %v4272
        %v4309 = vpack.c.bf16 %v4279, %v4273
        %v4310 = vpack.c.bf16 %v4286, %v4280
        %v4311 = vpack.c.bf16 %v4287, %v4281
        %v4312 = vpack.c.bf16 %v4288, %v4282
        %v4313 = vpack.c.bf16 %v4289, %v4283
        %v4314 = vpack.c.bf16 %v4290, %v4284
        %v4315 = vpack.c.bf16 %v4291, %v4285
        %v4316 = vld [vmem:[%s2] sm:$0xff]
        %v4317 = vld [vmem:[%s2 + $0x8] sm:$0xff]
        %v4318 = vld [vmem:[%s2 + $0x10] sm:$0xff]
        %v4319 = vld [vmem:[%s2 + $0x18] sm:$0xff]
        %v4320 = vld [vmem:[%s2 + $0x20] sm:$0xff]
        %v4321 = vld [vmem:[%s2 + $0x28] sm:$0xff]
        %v4322 = vld [vmem:[%s2 + $0x30] sm:$0xff]
        %v4323 = vld [vmem:[%s2 + $0x38] sm:$0xff]
        %v4324 = vld [vmem:[%s2 + $0x40] sm:$0xff]
        %v4325 = vld [vmem:[%s2 + $0x48] sm:$0xff]
        %v4326 = vld [vmem:[%s2 + $0x50] sm:$0xff]
        %v4327 = vld [vmem:[%s2 + $0x58] sm:$0xff]
        %v4328 = vld [vmem:[%s2 + $0x60] sm:$0xff]
        %v4329 = vld [vmem:[%s2 + $0x68] sm:$0xff]
        %v4330 = vld [vmem:[%s2 + $0x70] sm:$0xff]
        %v4331 = vld [vmem:[%s2 + $0x78] sm:$0xff]
        %v4332 = vld [vmem:[%s2 + $0x80] sm:$0xff]
        %v4333 = vld [vmem:[%s2 + $0x88] sm:$0xff]
        %v4334 = vld [vmem:[%s2 + $0x90] sm:$0xff]
        %v4335 = vld [vmem:[%s2 + $0x98] sm:$0xff]
        %v4336 = vld [vmem:[%s2 + $0xa0] sm:$0xff]
        %v4337 = vld [vmem:[%s2 + $0xa8] sm:$0xff]
        %v4338 = vld [vmem:[%s2 + $0xb0] sm:$0xff]
        %v4339 = vld [vmem:[%s2 + $0xb8] sm:$0xff]
        %v4340 = vld [vmem:[%s2 + $0xc0] sm:$0xff]
        %v4341 = vld [vmem:[%s2 + $0xc8] sm:$0xff]
        %v4342 = vld [vmem:[%s2 + $0xd0] sm:$0xff]
        %v4343 = vld [vmem:[%s2 + $0xd8] sm:$0xff]
        %v4344 = vld [vmem:[%s2 + $0xe0] sm:$0xff]
        %v4345 = vld [vmem:[%s2 + $0xe8] sm:$0xff]
        %v4346 = vld [vmem:[%s2 + $0xf0] sm:$0xff]
        %v4347 = vld [vmem:[%s2 + $0xf8] sm:$0xff]
        %v4348 = vld [vmem:[%s2 + $0x100] sm:$0xff]
        %v4349 = vld [vmem:[%s2 + $0x108] sm:$0xff]
        %v4350 = vld [vmem:[%s2 + $0x110] sm:$0xff]
        %v4351 = vld [vmem:[%s2 + $0x118] sm:$0xff]
        %v4352 = vld [vmem:[%s2 + $0x120] sm:$0xff]
        %v4353 = vld [vmem:[%s2 + $0x128] sm:$0xff]
        %v4354 = vld [vmem:[%s2 + $0x130] sm:$0xff]
        %v4355 = vld [vmem:[%s2 + $0x138] sm:$0xff]
        %v4356 = vld [vmem:[%s2 + $0x140] sm:$0xff]
        %v4357 = vld [vmem:[%s2 + $0x148] sm:$0xff]
        %v4358 = vld [vmem:[%s2 + $0x150] sm:$0xff]
        %v4359 = vld [vmem:[%s2 + $0x158] sm:$0xff]
        %v4360 = vld [vmem:[%s2 + $0x160] sm:$0xff]
        %v4361 = vld [vmem:[%s2 + $0x168] sm:$0xff]
        %v4362 = vld [vmem:[%s2 + $0x170] sm:$0xff]
        %v4363 = vld [vmem:[%s2 + $0x178] sm:$0xff]
        %v4364 = vld [vmem:[%s2 + $0x180] sm:$0xff]
        %v4365 = vld [vmem:[%s2 + $0x188] sm:$0xff]
        %v4366 = vld [vmem:[%s2 + $0x190] sm:$0xff]
        %v4367 = vld [vmem:[%s2 + $0x198] sm:$0xff]
        %v4368 = vld [vmem:[%s2 + $0x1a0] sm:$0xff]
        %v4369 = vld [vmem:[%s2 + $0x1a8] sm:$0xff]
        %v4370 = vld [vmem:[%s2 + $0x1b0] sm:$0xff]
        %v4371 = vld [vmem:[%s2 + $0x1b8] sm:$0xff]
        %v4372 = vld [vmem:[%s2 + $0x1c0] sm:$0xff]
        %v4373 = vld [vmem:[%s2 + $0x1c8] sm:$0xff]
        %v4374 = vld [vmem:[%s2 + $0x1d0] sm:$0xff]
        %v4375 = vld [vmem:[%s2 + $0x1d8] sm:$0xff]
        %v4376 = vld [vmem:[%s2 + $0x1e0] sm:$0xff]
        %v4377 = vld [vmem:[%s2 + $0x1e8] sm:$0xff]
        %v4378 = vld [vmem:[%s2 + $0x1f0] sm:$0xff]
        %v4379 = vld [vmem:[%s2 + $0x1f8] sm:$0xff]
        %v4380 = vld [vmem:[%s2 + $0x200] sm:$0xff]
        %v4381 = vld [vmem:[%s2 + $0x208] sm:$0xff]
        %v4382 = vld [vmem:[%s2 + $0x210] sm:$0xff]
        %v4383 = vld [vmem:[%s2 + $0x218] sm:$0xff]
        %v4384 = vld [vmem:[%s2 + $0x220] sm:$0xff]
        %v4385 = vld [vmem:[%s2 + $0x228] sm:$0xff]
        %v4386 = vld [vmem:[%s2 + $0x230] sm:$0xff]
        %v4387 = vld [vmem:[%s2 + $0x238] sm:$0xff]
        %v4388 = vld [vmem:[%s2 + $0x240] sm:$0xff]
        %v4389 = vld [vmem:[%s2 + $0x248] sm:$0xff]
        %v4390 = vld [vmem:[%s2 + $0x250] sm:$0xff]
        %v4391 = vld [vmem:[%s2 + $0x258] sm:$0xff]
        %v4392 = vld [vmem:[%s2 + $0x260] sm:$0xff]
        %v4393 = vld [vmem:[%s2 + $0x268] sm:$0xff]
        %v4394 = vld [vmem:[%s2 + $0x270] sm:$0xff]
        %v4395 = vld [vmem:[%s2 + $0x278] sm:$0xff]
        %v4396 = vld [vmem:[%s2 + $0x280] sm:$0xff]
        %v4397 = vld [vmem:[%s2 + $0x288] sm:$0xff]
        %v4398 = vld [vmem:[%s2 + $0x290] sm:$0xff]
        %v4399 = vld [vmem:[%s2 + $0x298] sm:$0xff]
        %v4400 = vld [vmem:[%s2 + $0x2a0] sm:$0xff]
        %v4401 = vld [vmem:[%s2 + $0x2a8] sm:$0xff]
        %v4402 = vld [vmem:[%s2 + $0x2b0] sm:$0xff]
        %v4403 = vld [vmem:[%s2 + $0x2b8] sm:$0xff]
        %v4404 = vld [vmem:[%s2 + $0x2c0] sm:$0xff]
        %v4405 = vld [vmem:[%s2 + $0x2c8] sm:$0xff]
        %v4406 = vld [vmem:[%s2 + $0x2d0] sm:$0xff]
        %v4407 = vld [vmem:[%s2 + $0x2d8] sm:$0xff]
        %v4408 = vld [vmem:[%s2 + $0x2e0] sm:$0xff]
        %v4409 = vld [vmem:[%s2 + $0x2e8] sm:$0xff]
        %v4410 = vld [vmem:[%s2 + $0x2f0] sm:$0xff]
        %v4411 = vld [vmem:[%s2 + $0x2f8] sm:$0xff]
        %v4412 = vld [vmem:[%s908] sm:$0xff]
        %v4413 = vld [vmem:[%s908 + $0x8] sm:$0xff]
        %v4414 = vld [vmem:[%s908 + $0x10] sm:$0xff]
        %v4415 = vld [vmem:[%s908 + $0x18] sm:$0xff]
        %v4416 = vld [vmem:[%s908 + $0x20] sm:$0xff]
        %v4417 = vld [vmem:[%s908 + $0x28] sm:$0xff]
        %v4418 = vld [vmem:[%s908 + $0x30] sm:$0xff]
        %v4419 = vld [vmem:[%s908 + $0x38] sm:$0xff]
        %v4420 = vld [vmem:[%s908 + $0x40] sm:$0xff]
        %v4421 = vld [vmem:[%s908 + $0x48] sm:$0xff]
        %v4422 = vld [vmem:[%s908 + $0x50] sm:$0xff]
        %v4423 = vld [vmem:[%s908 + $0x58] sm:$0xff]
        %v4424 = vld [vmem:[%s908 + $0x60] sm:$0xff]
        %v4425 = vld [vmem:[%s908 + $0x68] sm:$0xff]
        %v4426 = vld [vmem:[%s908 + $0x70] sm:$0xff]
        %v4427 = vld [vmem:[%s908 + $0x78] sm:$0xff]
        %v4428 = vld [vmem:[%s908 + $0x80] sm:$0xff]
        %v4429 = vld [vmem:[%s908 + $0x88] sm:$0xff]
        %v4430 = vld [vmem:[%s908 + $0x90] sm:$0xff]
        %v4431 = vld [vmem:[%s908 + $0x98] sm:$0xff]
        %v4432 = vld [vmem:[%s908 + $0xa0] sm:$0xff]
        %v4433 = vld [vmem:[%s908 + $0xa8] sm:$0xff]
        %v4434 = vld [vmem:[%s908 + $0xb0] sm:$0xff]
        %v4435 = vld [vmem:[%s908 + $0xb8] sm:$0xff]
        %v4436 = vld [vmem:[%s908 + $0xc0] sm:$0xff]
        %v4437 = vld [vmem:[%s908 + $0xc8] sm:$0xff]
        %v4438 = vld [vmem:[%s908 + $0xd0] sm:$0xff]
        %v4439 = vld [vmem:[%s908 + $0xd8] sm:$0xff]
        %v4440 = vld [vmem:[%s908 + $0xe0] sm:$0xff]
        %v4441 = vld [vmem:[%s908 + $0xe8] sm:$0xff]
        %v4442 = vld [vmem:[%s908 + $0xf0] sm:$0xff]
        %v4443 = vld [vmem:[%s908 + $0xf8] sm:$0xff]
        %v4444 = vld [vmem:[%s908 + $0x100] sm:$0xff]
        %v4445 = vld [vmem:[%s908 + $0x108] sm:$0xff]
        %v4446 = vld [vmem:[%s908 + $0x110] sm:$0xff]
        %v4447 = vld [vmem:[%s908 + $0x118] sm:$0xff]
        %v4448 = vld [vmem:[%s908 + $0x120] sm:$0xff]
        %v4449 = vld [vmem:[%s908 + $0x128] sm:$0xff]
        %v4450 = vld [vmem:[%s908 + $0x130] sm:$0xff]
        %v4451 = vld [vmem:[%s908 + $0x138] sm:$0xff]
        %v4452 = vld [vmem:[%s908 + $0x140] sm:$0xff]
        %v4453 = vld [vmem:[%s908 + $0x148] sm:$0xff]
        %v4454 = vld [vmem:[%s908 + $0x150] sm:$0xff]
        %v4455 = vld [vmem:[%s908 + $0x158] sm:$0xff]
        %v4456 = vld [vmem:[%s908 + $0x160] sm:$0xff]
        %v4457 = vld [vmem:[%s908 + $0x168] sm:$0xff]
        %v4458 = vld [vmem:[%s908 + $0x170] sm:$0xff]
        %v4459 = vld [vmem:[%s908 + $0x178] sm:$0xff]
        %v4460 = vpack.c.bf16 %v4418, %v4412
        %v4461 = vpack.c.bf16 %v4419, %v4413
        %v4462 = vpack.c.bf16 %v4420, %v4414
        %v4463 = vpack.c.bf16 %v4421, %v4415
        %v4464 = vpack.c.bf16 %v4422, %v4416
        %v4465 = vpack.c.bf16 %v4423, %v4417
        %v4466 = vpack.c.bf16 %v4430, %v4424
        %v4467 = vpack.c.bf16 %v4431, %v4425
        %v4468 = vpack.c.bf16 %v4432, %v4426
        %v4469 = vpack.c.bf16 %v4433, %v4427
        %v4470 = vpack.c.bf16 %v4434, %v4428
        %v4471 = vpack.c.bf16 %v4435, %v4429
        %v4472 = vpack.c.bf16 %v4442, %v4436
        %v4473 = vpack.c.bf16 %v4443, %v4437
        %v4474 = vpack.c.bf16 %v4444, %v4438
        %v4475 = vpack.c.bf16 %v4445, %v4439
        %v4476 = vpack.c.bf16 %v4446, %v4440
        %v4477 = vpack.c.bf16 %v4447, %v4441
        %v4478 = vpack.c.bf16 %v4454, %v4448
        %v4479 = vpack.c.bf16 %v4455, %v4449
        %v4480 = vpack.c.bf16 %v4456, %v4450
        %v4481 = vpack.c.bf16 %v4457, %v4451
        %v4482 = vpack.c.bf16 %v4458, %v4452
        %v4483 = vpack.c.bf16 %v4459, %v4453
        %s4484 = scalar_lea.vmem %s2, 768
        %v4485 = vld [vmem:[%s4484] sm:$0xff]
        %v4486 = vld [vmem:[%s4484 + $0x8] sm:$0xff]
        %v4487 = vld [vmem:[%s4484 + $0x10] sm:$0xff]
        %v4488 = vld [vmem:[%s4484 + $0x18] sm:$0xff]
        %v4489 = vld [vmem:[%s4484 + $0x20] sm:$0xff]
        %v4490 = vld [vmem:[%s4484 + $0x28] sm:$0xff]
        %v4491 = vld [vmem:[%s4484 + $0x30] sm:$0xff]
        %v4492 = vld [vmem:[%s4484 + $0x38] sm:$0xff]
        %v4493 = vld [vmem:[%s4484 + $0x40] sm:$0xff]
        %v4494 = vld [vmem:[%s4484 + $0x48] sm:$0xff]
        %v4495 = vld [vmem:[%s4484 + $0x50] sm:$0xff]
        %v4496 = vld [vmem:[%s4484 + $0x58] sm:$0xff]
        %v4497 = vld [vmem:[%s4484 + $0x60] sm:$0xff]
        %v4498 = vld [vmem:[%s4484 + $0x68] sm:$0xff]
        %v4499 = vld [vmem:[%s4484 + $0x70] sm:$0xff]
        %v4500 = vld [vmem:[%s4484 + $0x78] sm:$0xff]
        %v4501 = vld [vmem:[%s4484 + $0x80] sm:$0xff]
        %v4502 = vld [vmem:[%s4484 + $0x88] sm:$0xff]
        %v4503 = vld [vmem:[%s4484 + $0x90] sm:$0xff]
        %v4504 = vld [vmem:[%s4484 + $0x98] sm:$0xff]
        %v4505 = vld [vmem:[%s4484 + $0xa0] sm:$0xff]
        %v4506 = vld [vmem:[%s4484 + $0xa8] sm:$0xff]
        %v4507 = vld [vmem:[%s4484 + $0xb0] sm:$0xff]
        %v4508 = vld [vmem:[%s4484 + $0xb8] sm:$0xff]
        %v4509 = vld [vmem:[%s4484 + $0xc0] sm:$0xff]
        %v4510 = vld [vmem:[%s4484 + $0xc8] sm:$0xff]
        %v4511 = vld [vmem:[%s4484 + $0xd0] sm:$0xff]
        %v4512 = vld [vmem:[%s4484 + $0xd8] sm:$0xff]
        %v4513 = vld [vmem:[%s4484 + $0xe0] sm:$0xff]
        %v4514 = vld [vmem:[%s4484 + $0xe8] sm:$0xff]
        %v4515 = vld [vmem:[%s4484 + $0xf0] sm:$0xff]
        %v4516 = vld [vmem:[%s4484 + $0xf8] sm:$0xff]
        %v4517 = vld [vmem:[%s4484 + $0x100] sm:$0xff]
        %v4518 = vld [vmem:[%s4484 + $0x108] sm:$0xff]
        %v4519 = vld [vmem:[%s4484 + $0x110] sm:$0xff]
        %v4520 = vld [vmem:[%s4484 + $0x118] sm:$0xff]
        %v4521 = vld [vmem:[%s4484 + $0x120] sm:$0xff]
        %v4522 = vld [vmem:[%s4484 + $0x128] sm:$0xff]
        %v4523 = vld [vmem:[%s4484 + $0x130] sm:$0xff]
        %v4524 = vld [vmem:[%s4484 + $0x138] sm:$0xff]
        %v4525 = vld [vmem:[%s4484 + $0x140] sm:$0xff]
        %v4526 = vld [vmem:[%s4484 + $0x148] sm:$0xff]
        %v4527 = vld [vmem:[%s4484 + $0x150] sm:$0xff]
        %v4528 = vld [vmem:[%s4484 + $0x158] sm:$0xff]
        %v4529 = vld [vmem:[%s4484 + $0x160] sm:$0xff]
        %v4530 = vld [vmem:[%s4484 + $0x168] sm:$0xff]
        %v4531 = vld [vmem:[%s4484 + $0x170] sm:$0xff]
        %v4532 = vld [vmem:[%s4484 + $0x178] sm:$0xff]
        %v4533 = vld [vmem:[%s4484 + $0x180] sm:$0xff]
        %v4534 = vld [vmem:[%s4484 + $0x188] sm:$0xff]
        %v4535 = vld [vmem:[%s4484 + $0x190] sm:$0xff]
        %v4536 = vld [vmem:[%s4484 + $0x198] sm:$0xff]
        %v4537 = vld [vmem:[%s4484 + $0x1a0] sm:$0xff]
        %v4538 = vld [vmem:[%s4484 + $0x1a8] sm:$0xff]
        %v4539 = vld [vmem:[%s4484 + $0x1b0] sm:$0xff]
        %v4540 = vld [vmem:[%s4484 + $0x1b8] sm:$0xff]
        %v4541 = vld [vmem:[%s4484 + $0x1c0] sm:$0xff]
        %v4542 = vld [vmem:[%s4484 + $0x1c8] sm:$0xff]
        %v4543 = vld [vmem:[%s4484 + $0x1d0] sm:$0xff]
        %v4544 = vld [vmem:[%s4484 + $0x1d8] sm:$0xff]
        %v4545 = vld [vmem:[%s4484 + $0x1e0] sm:$0xff]
        %v4546 = vld [vmem:[%s4484 + $0x1e8] sm:$0xff]
        %v4547 = vld [vmem:[%s4484 + $0x1f0] sm:$0xff]
        %v4548 = vld [vmem:[%s4484 + $0x1f8] sm:$0xff]
        %v4549 = vld [vmem:[%s4484 + $0x200] sm:$0xff]
        %v4550 = vld [vmem:[%s4484 + $0x208] sm:$0xff]
        %v4551 = vld [vmem:[%s4484 + $0x210] sm:$0xff]
        %v4552 = vld [vmem:[%s4484 + $0x218] sm:$0xff]
        %v4553 = vld [vmem:[%s4484 + $0x220] sm:$0xff]
        %v4554 = vld [vmem:[%s4484 + $0x228] sm:$0xff]
        %v4555 = vld [vmem:[%s4484 + $0x230] sm:$0xff]
        %v4556 = vld [vmem:[%s4484 + $0x238] sm:$0xff]
        %v4557 = vld [vmem:[%s4484 + $0x240] sm:$0xff]
        %v4558 = vld [vmem:[%s4484 + $0x248] sm:$0xff]
        %v4559 = vld [vmem:[%s4484 + $0x250] sm:$0xff]
        %v4560 = vld [vmem:[%s4484 + $0x258] sm:$0xff]
        %v4561 = vld [vmem:[%s4484 + $0x260] sm:$0xff]
        %v4562 = vld [vmem:[%s4484 + $0x268] sm:$0xff]
        %v4563 = vld [vmem:[%s4484 + $0x270] sm:$0xff]
        %v4564 = vld [vmem:[%s4484 + $0x278] sm:$0xff]
        %v4565 = vld [vmem:[%s4484 + $0x280] sm:$0xff]
        %v4566 = vld [vmem:[%s4484 + $0x288] sm:$0xff]
        %v4567 = vld [vmem:[%s4484 + $0x290] sm:$0xff]
        %v4568 = vld [vmem:[%s4484 + $0x298] sm:$0xff]
        %v4569 = vld [vmem:[%s4484 + $0x2a0] sm:$0xff]
        %v4570 = vld [vmem:[%s4484 + $0x2a8] sm:$0xff]
        %v4571 = vld [vmem:[%s4484 + $0x2b0] sm:$0xff]
        %v4572 = vld [vmem:[%s4484 + $0x2b8] sm:$0xff]
        %v4573 = vld [vmem:[%s4484 + $0x2c0] sm:$0xff]
        %v4574 = vld [vmem:[%s4484 + $0x2c8] sm:$0xff]
        %v4575 = vld [vmem:[%s4484 + $0x2d0] sm:$0xff]
        %v4576 = vld [vmem:[%s4484 + $0x2d8] sm:$0xff]
        %v4577 = vld [vmem:[%s4484 + $0x2e0] sm:$0xff]
        %v4578 = vld [vmem:[%s4484 + $0x2e8] sm:$0xff]
        %v4579 = vld [vmem:[%s4484 + $0x2f0] sm:$0xff]
        %v4580 = vld [vmem:[%s4484 + $0x2f8] sm:$0xff]
        %v4677 = vunpack.c.l.b16 %v4485
        %v4678 = vunpack.c.h.b16 %v4485
        %v4679 = vunpack.c.l.b16 %v4486
        %v4680 = vunpack.c.h.b16 %v4486
        %v4681 = vunpack.c.l.b16 %v4487
        %v4682 = vunpack.c.h.b16 %v4487
        %v4683 = vunpack.c.l.b16 %v4488
        %v4684 = vunpack.c.h.b16 %v4488
        %v4685 = vunpack.c.l.b16 %v4489
        %v4686 = vunpack.c.h.b16 %v4489
        %v4687 = vunpack.c.l.b16 %v4490
        %v4688 = vunpack.c.h.b16 %v4490
        %v4689 = vunpack.c.l.b16 %v4491
        %v4690 = vunpack.c.h.b16 %v4491
        %v4691 = vunpack.c.l.b16 %v4492
        %v4692 = vunpack.c.h.b16 %v4492
        %v4693 = vunpack.c.l.b16 %v4493
        %v4694 = vunpack.c.h.b16 %v4493
        %v4695 = vunpack.c.l.b16 %v4494
        %v4696 = vunpack.c.h.b16 %v4494
        %v4697 = vunpack.c.l.b16 %v4495
        %v4698 = vunpack.c.h.b16 %v4495
        %v4699 = vunpack.c.l.b16 %v4496
        %v4700 = vunpack.c.h.b16 %v4496
        %v4701 = vunpack.c.l.b16 %v4497
        %v4702 = vunpack.c.h.b16 %v4497
        %v4703 = vunpack.c.l.b16 %v4498
        %v4704 = vunpack.c.h.b16 %v4498
        %v4705 = vunpack.c.l.b16 %v4499
        %v4706 = vunpack.c.h.b16 %v4499
        %v4707 = vunpack.c.l.b16 %v4500
        %v4708 = vunpack.c.h.b16 %v4500
        %v4709 = vunpack.c.l.b16 %v4501
        %v4710 = vunpack.c.h.b16 %v4501
        %v4711 = vunpack.c.l.b16 %v4502
        %v4712 = vunpack.c.h.b16 %v4502
        %v4713 = vunpack.c.l.b16 %v4503
        %v4714 = vunpack.c.h.b16 %v4503
        %v4715 = vunpack.c.l.b16 %v4504
        %v4716 = vunpack.c.h.b16 %v4504
        %v4717 = vunpack.c.l.b16 %v4505
        %v4718 = vunpack.c.h.b16 %v4505
        %v4719 = vunpack.c.l.b16 %v4506
        %v4720 = vunpack.c.h.b16 %v4506
        %v4721 = vunpack.c.l.b16 %v4507
        %v4722 = vunpack.c.h.b16 %v4507
        %v4723 = vunpack.c.l.b16 %v4508
        %v4724 = vunpack.c.h.b16 %v4508
        %v4725 = vunpack.c.l.b16 %v4509
        %v4726 = vunpack.c.h.b16 %v4509
        %v4727 = vunpack.c.l.b16 %v4510
        %v4728 = vunpack.c.h.b16 %v4510
        %v4729 = vunpack.c.l.b16 %v4511
        %v4730 = vunpack.c.h.b16 %v4511
        %v4731 = vunpack.c.l.b16 %v4512
        %v4732 = vunpack.c.h.b16 %v4512
        %v4733 = vunpack.c.l.b16 %v4513
        %v4734 = vunpack.c.h.b16 %v4513
        %v4735 = vunpack.c.l.b16 %v4514
        %v4736 = vunpack.c.h.b16 %v4514
        %v4737 = vunpack.c.l.b16 %v4515
        %v4738 = vunpack.c.h.b16 %v4515
        %v4739 = vunpack.c.l.b16 %v4516
        %v4740 = vunpack.c.h.b16 %v4516
        %v4741 = vunpack.c.l.b16 %v4517
        %v4742 = vunpack.c.h.b16 %v4517
        %v4743 = vunpack.c.l.b16 %v4518
        %v4744 = vunpack.c.h.b16 %v4518
        %v4745 = vunpack.c.l.b16 %v4519
        %v4746 = vunpack.c.h.b16 %v4519
        %v4747 = vunpack.c.l.b16 %v4520
        %v4748 = vunpack.c.h.b16 %v4520
        %v4749 = vunpack.c.l.b16 %v4521
        %v4750 = vunpack.c.h.b16 %v4521
        %v4751 = vunpack.c.l.b16 %v4522
        %v4752 = vunpack.c.h.b16 %v4522
        %v4753 = vunpack.c.l.b16 %v4523
        %v4754 = vunpack.c.h.b16 %v4523
        %v4755 = vunpack.c.l.b16 %v4524
        %v4756 = vunpack.c.h.b16 %v4524
        %v4757 = vunpack.c.l.b16 %v4525
        %v4758 = vunpack.c.h.b16 %v4525
        %v4759 = vunpack.c.l.b16 %v4526
        %v4760 = vunpack.c.h.b16 %v4526
        %v4761 = vunpack.c.l.b16 %v4527
        %v4762 = vunpack.c.h.b16 %v4527
        %v4763 = vunpack.c.l.b16 %v4528
        %v4764 = vunpack.c.h.b16 %v4528
        %v4765 = vunpack.c.l.b16 %v4529
        %v4766 = vunpack.c.h.b16 %v4529
        %v4767 = vunpack.c.l.b16 %v4530
        %v4768 = vunpack.c.h.b16 %v4530
        %v4769 = vunpack.c.l.b16 %v4531
        %v4770 = vunpack.c.h.b16 %v4531
        %v4771 = vunpack.c.l.b16 %v4532
        %v4772 = vunpack.c.h.b16 %v4532
        %v4773 = vunpack.c.l.b16 %v4533
        %v4774 = vunpack.c.h.b16 %v4533
        %v4775 = vunpack.c.l.b16 %v4534
        %v4776 = vunpack.c.h.b16 %v4534
        %v4777 = vunpack.c.l.b16 %v4535
        %v4778 = vunpack.c.h.b16 %v4535
        %v4779 = vunpack.c.l.b16 %v4536
        %v4780 = vunpack.c.h.b16 %v4536
        %v4781 = vunpack.c.l.b16 %v4537
        %v4782 = vunpack.c.h.b16 %v4537
        %v4783 = vunpack.c.l.b16 %v4538
        %v4784 = vunpack.c.h.b16 %v4538
        %v4785 = vunpack.c.l.b16 %v4539
        %v4786 = vunpack.c.h.b16 %v4539
        %v4787 = vunpack.c.l.b16 %v4540
        %v4788 = vunpack.c.h.b16 %v4540
        %v4789 = vunpack.c.l.b16 %v4541
        %v4790 = vunpack.c.h.b16 %v4541
        %v4791 = vunpack.c.l.b16 %v4542
        %v4792 = vunpack.c.h.b16 %v4542
        %v4793 = vunpack.c.l.b16 %v4543
        %v4794 = vunpack.c.h.b16 %v4543
        %v4795 = vunpack.c.l.b16 %v4544
        %v4796 = vunpack.c.h.b16 %v4544
        %v4797 = vunpack.c.l.b16 %v4545
        %v4798 = vunpack.c.h.b16 %v4545
        %v4799 = vunpack.c.l.b16 %v4546
        %v4800 = vunpack.c.h.b16 %v4546
        %v4801 = vunpack.c.l.b16 %v4547
        %v4802 = vunpack.c.h.b16 %v4547
        %v4803 = vunpack.c.l.b16 %v4548
        %v4804 = vunpack.c.h.b16 %v4548
        %v4805 = vunpack.c.l.b16 %v4549
        %v4806 = vunpack.c.h.b16 %v4549
        %v4807 = vunpack.c.l.b16 %v4550
        %v4808 = vunpack.c.h.b16 %v4550
        %v4809 = vunpack.c.l.b16 %v4551
        %v4810 = vunpack.c.h.b16 %v4551
        %v4811 = vunpack.c.l.b16 %v4552
        %v4812 = vunpack.c.h.b16 %v4552
        %v4813 = vunpack.c.l.b16 %v4553
        %v4814 = vunpack.c.h.b16 %v4553
        %v4815 = vunpack.c.l.b16 %v4554
        %v4816 = vunpack.c.h.b16 %v4554
        %v4817 = vunpack.c.l.b16 %v4555
        %v4818 = vunpack.c.h.b16 %v4555
        %v4819 = vunpack.c.l.b16 %v4556
        %v4820 = vunpack.c.h.b16 %v4556
        %v4821 = vunpack.c.l.b16 %v4557
        %v4822 = vunpack.c.h.b16 %v4557
        %v4823 = vunpack.c.l.b16 %v4558
        %v4824 = vunpack.c.h.b16 %v4558
        %v4825 = vunpack.c.l.b16 %v4559
        %v4826 = vunpack.c.h.b16 %v4559
        %v4827 = vunpack.c.l.b16 %v4560
        %v4828 = vunpack.c.h.b16 %v4560
        %v4829 = vunpack.c.l.b16 %v4561
        %v4830 = vunpack.c.h.b16 %v4561
        %v4831 = vunpack.c.l.b16 %v4562
        %v4832 = vunpack.c.h.b16 %v4562
        %v4833 = vunpack.c.l.b16 %v4563
        %v4834 = vunpack.c.h.b16 %v4563
        %v4835 = vunpack.c.l.b16 %v4564
        %v4836 = vunpack.c.h.b16 %v4564
        %v4837 = vunpack.c.l.b16 %v4565
        %v4838 = vunpack.c.h.b16 %v4565
        %v4839 = vunpack.c.l.b16 %v4566
        %v4840 = vunpack.c.h.b16 %v4566
        %v4841 = vunpack.c.l.b16 %v4567
        %v4842 = vunpack.c.h.b16 %v4567
        %v4843 = vunpack.c.l.b16 %v4568
        %v4844 = vunpack.c.h.b16 %v4568
        %v4845 = vunpack.c.l.b16 %v4569
        %v4846 = vunpack.c.h.b16 %v4569
        %v4847 = vunpack.c.l.b16 %v4570
        %v4848 = vunpack.c.h.b16 %v4570
        %v4849 = vunpack.c.l.b16 %v4571
        %v4850 = vunpack.c.h.b16 %v4571
        %v4851 = vunpack.c.l.b16 %v4572
        %v4852 = vunpack.c.h.b16 %v4572
        %v4853 = vunpack.c.l.b16 %v4573
        %v4854 = vunpack.c.h.b16 %v4573
        %v4855 = vunpack.c.l.b16 %v4574
        %v4856 = vunpack.c.h.b16 %v4574
        %v4857 = vunpack.c.l.b16 %v4575
        %v4858 = vunpack.c.h.b16 %v4575
        %v4859 = vunpack.c.l.b16 %v4576
        %v4860 = vunpack.c.h.b16 %v4576
        %v4861 = vunpack.c.l.b16 %v4577
        %v4862 = vunpack.c.h.b16 %v4577
        %v4863 = vunpack.c.l.b16 %v4578
        %v4864 = vunpack.c.h.b16 %v4578
        %v4865 = vunpack.c.l.b16 %v4579
        %v4866 = vunpack.c.h.b16 %v4579
        %v4867 = vunpack.c.l.b16 %v4580
        %v4868 = vunpack.c.h.b16 %v4580
        %v4869 = vpack.c.b16 %v4679, %v4677
        %v4870 = vpack.c.b16 %v4680, %v4678
        %v4871 = vpack.c.b16 %v4683, %v4681
        %v4872 = vpack.c.b16 %v4684, %v4682
        %v4873 = vpack.c.b16 %v4687, %v4685
        %v4874 = vpack.c.b16 %v4688, %v4686
        %v4875 = vpack.c.b16 %v4691, %v4689
        %v4876 = vpack.c.b16 %v4692, %v4690
        %v4877 = vpack.c.b16 %v4695, %v4693
        %v4878 = vpack.c.b16 %v4696, %v4694
        %v4879 = vpack.c.b16 %v4699, %v4697
        %v4880 = vpack.c.b16 %v4700, %v4698
        %v4881 = vpack.c.b16 %v4703, %v4701
        %v4882 = vpack.c.b16 %v4704, %v4702
        %v4883 = vpack.c.b16 %v4707, %v4705
        %v4884 = vpack.c.b16 %v4708, %v4706
        %v4885 = vpack.c.b16 %v4711, %v4709
        %v4886 = vpack.c.b16 %v4712, %v4710
        %v4887 = vpack.c.b16 %v4715, %v4713
        %v4888 = vpack.c.b16 %v4716, %v4714
        %v4889 = vpack.c.b16 %v4719, %v4717
        %v4890 = vpack.c.b16 %v4720, %v4718
        %v4891 = vpack.c.b16 %v4723, %v4721
        %v4892 = vpack.c.b16 %v4724, %v4722
        %v4893 = vpack.c.b16 %v4727, %v4725
        %v4894 = vpack.c.b16 %v4728, %v4726
        %v4895 = vpack.c.b16 %v4731, %v4729
        %v4896 = vpack.c.b16 %v4732, %v4730
        %v4897 = vpack.c.b16 %v4735, %v4733
        %v4898 = vpack.c.b16 %v4736, %v4734
        %v4899 = vpack.c.b16 %v4739, %v4737
        %v4900 = vpack.c.b16 %v4740, %v4738
        %v4901 = vpack.c.b16 %v4743, %v4741
        %v4902 = vpack.c.b16 %v4744, %v4742
        %v4903 = vpack.c.b16 %v4747, %v4745
        %v4904 = vpack.c.b16 %v4748, %v4746
        %v4905 = vpack.c.b16 %v4751, %v4749
        %v4906 = vpack.c.b16 %v4752, %v4750
        %v4907 = vpack.c.b16 %v4755, %v4753
        %v4908 = vpack.c.b16 %v4756, %v4754
        %v4909 = vpack.c.b16 %v4759, %v4757
        %v4910 = vpack.c.b16 %v4760, %v4758
        %v4911 = vpack.c.b16 %v4763, %v4761
        %v4912 = vpack.c.b16 %v4764, %v4762
        %v4913 = vpack.c.b16 %v4767, %v4765
        %v4914 = vpack.c.b16 %v4768, %v4766
        %v4915 = vpack.c.b16 %v4771, %v4769
        %v4916 = vpack.c.b16 %v4772, %v4770
        %v4917 = vpack.c.b16 %v4775, %v4773
        %v4918 = vpack.c.b16 %v4776, %v4774
        %v4919 = vpack.c.b16 %v4779, %v4777
        %v4920 = vpack.c.b16 %v4780, %v4778
        %v4921 = vpack.c.b16 %v4783, %v4781
        %v4922 = vpack.c.b16 %v4784, %v4782
        %v4923 = vpack.c.b16 %v4787, %v4785
        %v4924 = vpack.c.b16 %v4788, %v4786
        %v4925 = vpack.c.b16 %v4791, %v4789
        %v4926 = vpack.c.b16 %v4792, %v4790
        %v4927 = vpack.c.b16 %v4795, %v4793
        %v4928 = vpack.c.b16 %v4796, %v4794
        %v4929 = vpack.c.b16 %v4799, %v4797
        %v4930 = vpack.c.b16 %v4800, %v4798
        %v4931 = vpack.c.b16 %v4803, %v4801
        %v4932 = vpack.c.b16 %v4804, %v4802
        %v4933 = vpack.c.b16 %v4807, %v4805
        %v4934 = vpack.c.b16 %v4808, %v4806
        %v4935 = vpack.c.b16 %v4811, %v4809
        %v4936 = vpack.c.b16 %v4812, %v4810
        %v4937 = vpack.c.b16 %v4815, %v4813
        %v4938 = vpack.c.b16 %v4816, %v4814
        %v4939 = vpack.c.b16 %v4819, %v4817
        %v4940 = vpack.c.b16 %v4820, %v4818
        %v4941 = vpack.c.b16 %v4823, %v4821
        %v4942 = vpack.c.b16 %v4824, %v4822
        %v4943 = vpack.c.b16 %v4827, %v4825
        %v4944 = vpack.c.b16 %v4828, %v4826
        %v4945 = vpack.c.b16 %v4831, %v4829
        %v4946 = vpack.c.b16 %v4832, %v4830
        %v4947 = vpack.c.b16 %v4835, %v4833
        %v4948 = vpack.c.b16 %v4836, %v4834
        %v4949 = vpack.c.b16 %v4839, %v4837
        %v4950 = vpack.c.b16 %v4840, %v4838
        %v4951 = vpack.c.b16 %v4843, %v4841
        %v4952 = vpack.c.b16 %v4844, %v4842
        %v4953 = vpack.c.b16 %v4847, %v4845
        %v4954 = vpack.c.b16 %v4848, %v4846
        %v4955 = vpack.c.b16 %v4851, %v4849
        %v4956 = vpack.c.b16 %v4852, %v4850
        %v4957 = vpack.c.b16 %v4855, %v4853
        %v4958 = vpack.c.b16 %v4856, %v4854
        %v4959 = vpack.c.b16 %v4859, %v4857
        %v4960 = vpack.c.b16 %v4860, %v4858
        %v4961 = vpack.c.b16 %v4863, %v4861
        %v4962 = vpack.c.b16 %v4864, %v4862
        %v4963 = vpack.c.b16 %v4867, %v4865
        %v4964 = vpack.c.b16 %v4868, %v4866
        %5061 = vmatpush.bf16.msra.mxu0 %v4883
        %5062 = vmatpush.bf16.msra.mxu0 %v4881
        %5063 = vmatpush.bf16.msra.mxu0 %v4879
        %5064 = vmatpush.bf16.msra.mxu0 %v4877
        %5065 = vmatpush.bf16.msra.mxu0 %v4875
        %5066 = vmatpush.bf16.msra.mxu0 %v4873
        %5067 = vmatpush.bf16.msra.mxu0 %v4871
        %5068 = vmatpush.bf16.msra.mxu0 %v4869
        %5069 = vmatmul.bf16.gmra.mxu0 %v4460
        %v5070 = vpop.f32.mrf.mxu0
        %v5071 = vadd.f32 0.0, %v5070
        %v5072 = vpop.f32.mrf.mxu0
        %v5073 = vadd.f32 0.0, %v5072
        %5074 = vmatmul.bf16.gmra.mxu0 %v4466
        %v5075 = vpop.f32.mrf.mxu0
        %v5076 = vadd.f32 0.0, %v5075
        %v5077 = vpop.f32.mrf.mxu0
        %v5078 = vadd.f32 0.0, %v5077
        %5079 = vmatmul.bf16.gmra.mxu0 %v4472
        %v5080 = vpop.f32.mrf.mxu0
        %v5081 = vadd.f32 0.0, %v5080
        %v5082 = vpop.f32.mrf.mxu0
        %v5083 = vadd.f32 0.0, %v5082
        %5084 = vmatmul.bf16.gmra.mxu0 %v4478
        %v5085 = vpop.f32.mrf.mxu0
        %v5086 = vadd.f32 0.0, %v5085
        %v5087 = vpop.f32.mrf.mxu0
        %v5088 = vadd.f32 0.0, %v5087
        %5089 = vdwg.mxu0
        %5090 = vmatpush.bf16.msra.mxu0 %v4899
        %5091 = vmatpush.bf16.msra.mxu0 %v4897
        %5092 = vmatpush.bf16.msra.mxu0 %v4895
        %5093 = vmatpush.bf16.msra.mxu0 %v4893
        %5094 = vmatpush.bf16.msra.mxu0 %v4891
        %5095 = vmatpush.bf16.msra.mxu0 %v4889
        %5096 = vmatpush.bf16.msra.mxu0 %v4887
        %5097 = vmatpush.bf16.msra.mxu0 %v4885
        %5098 = vmatmul.bf16.gmra.mxu0 %v4461
        %v5099 = vpop.f32.mrf.mxu0
        %v5100 = vadd.f32 %v5071, %v5099
        %v5101 = vpop.f32.mrf.mxu0
        %v5102 = vadd.f32 %v5073, %v5101
        %5103 = vmatmul.bf16.gmra.mxu0 %v4467
        %v5104 = vpop.f32.mrf.mxu0
        %v5105 = vadd.f32 %v5076, %v5104
        %v5106 = vpop.f32.mrf.mxu0
        %v5107 = vadd.f32 %v5078, %v5106
        %5108 = vmatmul.bf16.gmra.mxu0 %v4473
        %v5109 = vpop.f32.mrf.mxu0
        %v5110 = vadd.f32 %v5081, %v5109
        %v5111 = vpop.f32.mrf.mxu0
        %v5112 = vadd.f32 %v5083, %v5111
        %5113 = vmatmul.bf16.gmra.mxu0 %v4479
        %v5114 = vpop.f32.mrf.mxu0
        %v5115 = vadd.f32 %v5086, %v5114
        %v5116 = vpop.f32.mrf.mxu0
        %v5117 = vadd.f32 %v5088, %v5116
        %5118 = vdwg.mxu0
        %5119 = vmatpush.bf16.msra.mxu0 %v4915
        %5120 = vmatpush.bf16.msra.mxu0 %v4913
        %5121 = vmatpush.bf16.msra.mxu0 %v4911
        %5122 = vmatpush.bf16.msra.mxu0 %v4909
        %5123 = vmatpush.bf16.msra.mxu0 %v4907
        %5124 = vmatpush.bf16.msra.mxu0 %v4905
        %5125 = vmatpush.bf16.msra.mxu0 %v4903
        %5126 = vmatpush.bf16.msra.mxu0 %v4901
        %5127 = vmatmul.bf16.gmra.mxu0 %v4462
        %v5128 = vpop.f32.mrf.mxu0
        %v5129 = vadd.f32 %v5100, %v5128
        %v5130 = vpop.f32.mrf.mxu0
        %v5131 = vadd.f32 %v5102, %v5130
        %5132 = vmatmul.bf16.gmra.mxu0 %v4468
        %v5133 = vpop.f32.mrf.mxu0
        %v5134 = vadd.f32 %v5105, %v5133
        %v5135 = vpop.f32.mrf.mxu0
        %v5136 = vadd.f32 %v5107, %v5135
        %5137 = vmatmul.bf16.gmra.mxu0 %v4474
        %v5138 = vpop.f32.mrf.mxu0
        %v5139 = vadd.f32 %v5110, %v5138
        %v5140 = vpop.f32.mrf.mxu0
        %v5141 = vadd.f32 %v5112, %v5140
        %5142 = vmatmul.bf16.gmra.mxu0 %v4480
        %v5143 = vpop.f32.mrf.mxu0
        %v5144 = vadd.f32 %v5115, %v5143
        %v5145 = vpop.f32.mrf.mxu0
        %v5146 = vadd.f32 %v5117, %v5145
        %5147 = vdwg.mxu0
        %5148 = vmatpush.bf16.msra.mxu0 %v4931
        %5149 = vmatpush.bf16.msra.mxu0 %v4929
        %5150 = vmatpush.bf16.msra.mxu0 %v4927
        %5151 = vmatpush.bf16.msra.mxu0 %v4925
        %5152 = vmatpush.bf16.msra.mxu0 %v4923
        %5153 = vmatpush.bf16.msra.mxu0 %v4921
        %5154 = vmatpush.bf16.msra.mxu0 %v4919
        %5155 = vmatpush.bf16.msra.mxu0 %v4917
        %5156 = vmatmul.bf16.gmra.mxu0 %v4463
        %v5157 = vpop.f32.mrf.mxu0
        %v5158 = vadd.f32 %v5129, %v5157
        %v5159 = vpop.f32.mrf.mxu0
        %v5160 = vadd.f32 %v5131, %v5159
        %5161 = vmatmul.bf16.gmra.mxu0 %v4469
        %v5162 = vpop.f32.mrf.mxu0
        %v5163 = vadd.f32 %v5134, %v5162
        %v5164 = vpop.f32.mrf.mxu0
        %v5165 = vadd.f32 %v5136, %v5164
        %5166 = vmatmul.bf16.gmra.mxu0 %v4475
        %v5167 = vpop.f32.mrf.mxu0
        %v5168 = vadd.f32 %v5139, %v5167
        %v5169 = vpop.f32.mrf.mxu0
        %v5170 = vadd.f32 %v5141, %v5169
        %5171 = vmatmul.bf16.gmra.mxu0 %v4481
        %v5172 = vpop.f32.mrf.mxu0
        %v5173 = vadd.f32 %v5144, %v5172
        %v5174 = vpop.f32.mrf.mxu0
        %v5175 = vadd.f32 %v5146, %v5174
        %5176 = vdwg.mxu0
        %5177 = vmatpush.bf16.msra.mxu0 %v4947
        %5178 = vmatpush.bf16.msra.mxu0 %v4945
        %5179 = vmatpush.bf16.msra.mxu0 %v4943
        %5180 = vmatpush.bf16.msra.mxu0 %v4941
        %5181 = vmatpush.bf16.msra.mxu0 %v4939
        %5182 = vmatpush.bf16.msra.mxu0 %v4937
        %5183 = vmatpush.bf16.msra.mxu0 %v4935
        %5184 = vmatpush.bf16.msra.mxu0 %v4933
        %5185 = vmatmul.bf16.gmra.mxu0 %v4464
        %v5186 = vpop.f32.mrf.mxu0
        %v5187 = vadd.f32 %v5158, %v5186
        %v5188 = vpop.f32.mrf.mxu0
        %v5189 = vadd.f32 %v5160, %v5188
        %5190 = vmatmul.bf16.gmra.mxu0 %v4470
        %v5191 = vpop.f32.mrf.mxu0
        %v5192 = vadd.f32 %v5163, %v5191
        %v5193 = vpop.f32.mrf.mxu0
        %v5194 = vadd.f32 %v5165, %v5193
        %5195 = vmatmul.bf16.gmra.mxu0 %v4476
        %v5196 = vpop.f32.mrf.mxu0
        %v5197 = vadd.f32 %v5168, %v5196
        %v5198 = vpop.f32.mrf.mxu0
        %v5199 = vadd.f32 %v5170, %v5198
        %5200 = vmatmul.bf16.gmra.mxu0 %v4482
        %v5201 = vpop.f32.mrf.mxu0
        %v5202 = vadd.f32 %v5173, %v5201
        %v5203 = vpop.f32.mrf.mxu0
        %v5204 = vadd.f32 %v5175, %v5203
        %5205 = vdwg.mxu0
        %5206 = vmatpush.bf16.msra.mxu0 %v4963
        %5207 = vmatpush.bf16.msra.mxu0 %v4961
        %5208 = vmatpush.bf16.msra.mxu0 %v4959
        %5209 = vmatpush.bf16.msra.mxu0 %v4957
        %5210 = vmatpush.bf16.msra.mxu0 %v4955
        %5211 = vmatpush.bf16.msra.mxu0 %v4953
        %5212 = vmatpush.bf16.msra.mxu0 %v4951
        %5213 = vmatpush.bf16.msra.mxu0 %v4949
        %5214 = vmatmul.bf16.gmra.mxu0 %v4465
        %v5215 = vpop.f32.mrf.mxu0
        %v5216 = vadd.f32 %v5187, %v5215
        %v5217 = vpop.f32.mrf.mxu0
        %v5218 = vadd.f32 %v5189, %v5217
        %5219 = vmatmul.bf16.gmra.mxu0 %v4471
        %v5220 = vpop.f32.mrf.mxu0
        %v5221 = vadd.f32 %v5192, %v5220
        %v5222 = vpop.f32.mrf.mxu0
        %v5223 = vadd.f32 %v5194, %v5222
        %5224 = vmatmul.bf16.gmra.mxu0 %v4477
        %v5225 = vpop.f32.mrf.mxu0
        %v5226 = vadd.f32 %v5197, %v5225
        %v5227 = vpop.f32.mrf.mxu0
        %v5228 = vadd.f32 %v5199, %v5227
        %5229 = vmatmul.bf16.gmra.mxu0 %v4483
        %v5230 = vpop.f32.mrf.mxu0
        %v5231 = vadd.f32 %v5202, %v5230
        %v5232 = vpop.f32.mrf.mxu0
        %v5233 = vadd.f32 %v5204, %v5232
        %5234 = vdwg.mxu0
        %5235 = vmatpush.bf16.msra.mxu0 %v4884
        %5236 = vmatpush.bf16.msra.mxu0 %v4882
        %5237 = vmatpush.bf16.msra.mxu0 %v4880
        %5238 = vmatpush.bf16.msra.mxu0 %v4878
        %5239 = vmatpush.bf16.msra.mxu0 %v4876
        %5240 = vmatpush.bf16.msra.mxu0 %v4874
        %5241 = vmatpush.bf16.msra.mxu0 %v4872
        %5242 = vmatpush.bf16.msra.mxu0 %v4870
        %5243 = vmatmul.bf16.gmra.mxu0 %v4460
        %v5244 = vpop.f32.mrf.mxu0
        %v5245 = vadd.f32 0.0, %v5244
        %v5246 = vpop.f32.mrf.mxu0
        %v5247 = vadd.f32 0.0, %v5246
        %5248 = vmatmul.bf16.gmra.mxu0 %v4466
        %v5249 = vpop.f32.mrf.mxu0
        %v5250 = vadd.f32 0.0, %v5249
        %v5251 = vpop.f32.mrf.mxu0
        %v5252 = vadd.f32 0.0, %v5251
        %5253 = vmatmul.bf16.gmra.mxu0 %v4472
        %v5254 = vpop.f32.mrf.mxu0
        %v5255 = vadd.f32 0.0, %v5254
        %v5256 = vpop.f32.mrf.mxu0
        %v5257 = vadd.f32 0.0, %v5256
        %5258 = vmatmul.bf16.gmra.mxu0 %v4478
        %v5259 = vpop.f32.mrf.mxu0
        %v5260 = vadd.f32 0.0, %v5259
        %v5261 = vpop.f32.mrf.mxu0
        %v5262 = vadd.f32 0.0, %v5261
        %5263 = vdwg.mxu0
        %5264 = vmatpush.bf16.msra.mxu0 %v4900
        %5265 = vmatpush.bf16.msra.mxu0 %v4898
        %5266 = vmatpush.bf16.msra.mxu0 %v4896
        %5267 = vmatpush.bf16.msra.mxu0 %v4894
        %5268 = vmatpush.bf16.msra.mxu0 %v4892
        %5269 = vmatpush.bf16.msra.mxu0 %v4890
        %5270 = vmatpush.bf16.msra.mxu0 %v4888
        %5271 = vmatpush.bf16.msra.mxu0 %v4886
        %5272 = vmatmul.bf16.gmra.mxu0 %v4461
        %v5273 = vpop.f32.mrf.mxu0
        %v5274 = vadd.f32 %v5245, %v5273
        %v5275 = vpop.f32.mrf.mxu0
        %v5276 = vadd.f32 %v5247, %v5275
        %5277 = vmatmul.bf16.gmra.mxu0 %v4467
        %v5278 = vpop.f32.mrf.mxu0
        %v5279 = vadd.f32 %v5250, %v5278
        %v5280 = vpop.f32.mrf.mxu0
        %v5281 = vadd.f32 %v5252, %v5280
        %5282 = vmatmul.bf16.gmra.mxu0 %v4473
        %v5283 = vpop.f32.mrf.mxu0
        %v5284 = vadd.f32 %v5255, %v5283
        %v5285 = vpop.f32.mrf.mxu0
        %v5286 = vadd.f32 %v5257, %v5285
        %5287 = vmatmul.bf16.gmra.mxu0 %v4479
        %v5288 = vpop.f32.mrf.mxu0
        %v5289 = vadd.f32 %v5260, %v5288
        %v5290 = vpop.f32.mrf.mxu0
        %v5291 = vadd.f32 %v5262, %v5290
        %5292 = vdwg.mxu0
        %5293 = vmatpush.bf16.msra.mxu0 %v4916
        %5294 = vmatpush.bf16.msra.mxu0 %v4914
        %5295 = vmatpush.bf16.msra.mxu0 %v4912
        %5296 = vmatpush.bf16.msra.mxu0 %v4910
        %5297 = vmatpush.bf16.msra.mxu0 %v4908
        %5298 = vmatpush.bf16.msra.mxu0 %v4906
        %5299 = vmatpush.bf16.msra.mxu0 %v4904
        %5300 = vmatpush.bf16.msra.mxu0 %v4902
        %5301 = vmatmul.bf16.gmra.mxu0 %v4462
        %v5302 = vpop.f32.mrf.mxu0
        %v5303 = vadd.f32 %v5274, %v5302
        %v5304 = vpop.f32.mrf.mxu0
        %v5305 = vadd.f32 %v5276, %v5304
        %5306 = vmatmul.bf16.gmra.mxu0 %v4468
        %v5307 = vpop.f32.mrf.mxu0
        %v5308 = vadd.f32 %v5279, %v5307
        %v5309 = vpop.f32.mrf.mxu0
        %v5310 = vadd.f32 %v5281, %v5309
        %5311 = vmatmul.bf16.gmra.mxu0 %v4474
        %v5312 = vpop.f32.mrf.mxu0
        %v5313 = vadd.f32 %v5284, %v5312
        %v5314 = vpop.f32.mrf.mxu0
        %v5315 = vadd.f32 %v5286, %v5314
        %5316 = vmatmul.bf16.gmra.mxu0 %v4480
        %v5317 = vpop.f32.mrf.mxu0
        %v5318 = vadd.f32 %v5289, %v5317
        %v5319 = vpop.f32.mrf.mxu0
        %v5320 = vadd.f32 %v5291, %v5319
        %5321 = vdwg.mxu0
        %5322 = vmatpush.bf16.msra.mxu0 %v4932
        %5323 = vmatpush.bf16.msra.mxu0 %v4930
        %5324 = vmatpush.bf16.msra.mxu0 %v4928
        %5325 = vmatpush.bf16.msra.mxu0 %v4926
        %5326 = vmatpush.bf16.msra.mxu0 %v4924
        %5327 = vmatpush.bf16.msra.mxu0 %v4922
        %5328 = vmatpush.bf16.msra.mxu0 %v4920
        %5329 = vmatpush.bf16.msra.mxu0 %v4918
        %5330 = vmatmul.bf16.gmra.mxu0 %v4463
        %v5331 = vpop.f32.mrf.mxu0
        %v5332 = vadd.f32 %v5303, %v5331
        %v5333 = vpop.f32.mrf.mxu0
        %v5334 = vadd.f32 %v5305, %v5333
        %5335 = vmatmul.bf16.gmra.mxu0 %v4469
        %v5336 = vpop.f32.mrf.mxu0
        %v5337 = vadd.f32 %v5308, %v5336
        %v5338 = vpop.f32.mrf.mxu0
        %v5339 = vadd.f32 %v5310, %v5338
        %5340 = vmatmul.bf16.gmra.mxu0 %v4475
        %v5341 = vpop.f32.mrf.mxu0
        %v5342 = vadd.f32 %v5313, %v5341
        %v5343 = vpop.f32.mrf.mxu0
        %v5344 = vadd.f32 %v5315, %v5343
        %5345 = vmatmul.bf16.gmra.mxu0 %v4481
        %v5346 = vpop.f32.mrf.mxu0
        %v5347 = vadd.f32 %v5318, %v5346
        %v5348 = vpop.f32.mrf.mxu0
        %v5349 = vadd.f32 %v5320, %v5348
        %5350 = vdwg.mxu0
        %5351 = vmatpush.bf16.msra.mxu0 %v4948
        %5352 = vmatpush.bf16.msra.mxu0 %v4946
        %5353 = vmatpush.bf16.msra.mxu0 %v4944
        %5354 = vmatpush.bf16.msra.mxu0 %v4942
        %5355 = vmatpush.bf16.msra.mxu0 %v4940
        %5356 = vmatpush.bf16.msra.mxu0 %v4938
        %5357 = vmatpush.bf16.msra.mxu0 %v4936
        %5358 = vmatpush.bf16.msra.mxu0 %v4934
        %5359 = vmatmul.bf16.gmra.mxu0 %v4464
        %v5360 = vpop.f32.mrf.mxu0
        %v5361 = vadd.f32 %v5332, %v5360
        %v5362 = vpop.f32.mrf.mxu0
        %v5363 = vadd.f32 %v5334, %v5362
        %5364 = vmatmul.bf16.gmra.mxu0 %v4470
        %v5365 = vpop.f32.mrf.mxu0
        %v5366 = vadd.f32 %v5337, %v5365
        %v5367 = vpop.f32.mrf.mxu0
        %v5368 = vadd.f32 %v5339, %v5367
        %5369 = vmatmul.bf16.gmra.mxu0 %v4476
        %v5370 = vpop.f32.mrf.mxu0
        %v5371 = vadd.f32 %v5342, %v5370
        %v5372 = vpop.f32.mrf.mxu0
        %v5373 = vadd.f32 %v5344, %v5372
        %5374 = vmatmul.bf16.gmra.mxu0 %v4482
        %v5375 = vpop.f32.mrf.mxu0
        %v5376 = vadd.f32 %v5347, %v5375
        %v5377 = vpop.f32.mrf.mxu0
        %v5378 = vadd.f32 %v5349, %v5377
        %5379 = vdwg.mxu0
        %5380 = vmatpush.bf16.msra.mxu0 %v4964
        %5381 = vmatpush.bf16.msra.mxu0 %v4962
        %5382 = vmatpush.bf16.msra.mxu0 %v4960
        %5383 = vmatpush.bf16.msra.mxu0 %v4958
        %5384 = vmatpush.bf16.msra.mxu0 %v4956
        %5385 = vmatpush.bf16.msra.mxu0 %v4954
        %5386 = vmatpush.bf16.msra.mxu0 %v4952
        %5387 = vmatpush.bf16.msra.mxu0 %v4950
        %5388 = vmatmul.bf16.gmra.mxu0 %v4465
        %v5389 = vpop.f32.mrf.mxu0
        %v5390 = vadd.f32 %v5361, %v5389
        %v5391 = vpop.f32.mrf.mxu0
        %v5392 = vadd.f32 %v5363, %v5391
        %5393 = vmatmul.bf16.gmra.mxu0 %v4471
        %v5394 = vpop.f32.mrf.mxu0
        %v5395 = vadd.f32 %v5366, %v5394
        %v5396 = vpop.f32.mrf.mxu0
        %v5397 = vadd.f32 %v5368, %v5396
        %5398 = vmatmul.bf16.gmra.mxu0 %v4477
        %v5399 = vpop.f32.mrf.mxu0
        %v5400 = vadd.f32 %v5371, %v5399
        %v5401 = vpop.f32.mrf.mxu0
        %v5402 = vadd.f32 %v5373, %v5401
        %5403 = vmatmul.bf16.gmra.mxu0 %v4483
        %v5404 = vpop.f32.mrf.mxu0
        %v5405 = vadd.f32 %v5376, %v5404
        %v5406 = vpop.f32.mrf.mxu0
        %v5407 = vadd.f32 %v5378, %v5406
        %5408 = vdwg.mxu0
        %v5505 = vunpack.c.l.b16 %v4316
        %v5506 = vunpack.c.h.b16 %v4316
        %v5507 = vunpack.c.l.b16 %v4317
        %v5508 = vunpack.c.h.b16 %v4317
        %v5509 = vunpack.c.l.b16 %v4318
        %v5510 = vunpack.c.h.b16 %v4318
        %v5511 = vunpack.c.l.b16 %v4319
        %v5512 = vunpack.c.h.b16 %v4319
        %v5513 = vunpack.c.l.b16 %v4320
        %v5514 = vunpack.c.h.b16 %v4320
        %v5515 = vunpack.c.l.b16 %v4321
        %v5516 = vunpack.c.h.b16 %v4321
        %v5517 = vunpack.c.l.b16 %v4322
        %v5518 = vunpack.c.h.b16 %v4322
        %v5519 = vunpack.c.l.b16 %v4323
        %v5520 = vunpack.c.h.b16 %v4323
        %v5521 = vunpack.c.l.b16 %v4324
        %v5522 = vunpack.c.h.b16 %v4324
        %v5523 = vunpack.c.l.b16 %v4325
        %v5524 = vunpack.c.h.b16 %v4325
        %v5525 = vunpack.c.l.b16 %v4326
        %v5526 = vunpack.c.h.b16 %v4326
        %v5527 = vunpack.c.l.b16 %v4327
        %v5528 = vunpack.c.h.b16 %v4327
        %v5529 = vunpack.c.l.b16 %v4328
        %v5530 = vunpack.c.h.b16 %v4328
        %v5531 = vunpack.c.l.b16 %v4329
        %v5532 = vunpack.c.h.b16 %v4329
        %v5533 = vunpack.c.l.b16 %v4330
        %v5534 = vunpack.c.h.b16 %v4330
        %v5535 = vunpack.c.l.b16 %v4331
        %v5536 = vunpack.c.h.b16 %v4331
        %v5537 = vunpack.c.l.b16 %v4332
        %v5538 = vunpack.c.h.b16 %v4332
        %v5539 = vunpack.c.l.b16 %v4333
        %v5540 = vunpack.c.h.b16 %v4333
        %v5541 = vunpack.c.l.b16 %v4334
        %v5542 = vunpack.c.h.b16 %v4334
        %v5543 = vunpack.c.l.b16 %v4335
        %v5544 = vunpack.c.h.b16 %v4335
        %v5545 = vunpack.c.l.b16 %v4336
        %v5546 = vunpack.c.h.b16 %v4336
        %v5547 = vunpack.c.l.b16 %v4337
        %v5548 = vunpack.c.h.b16 %v4337
        %v5549 = vunpack.c.l.b16 %v4338
        %v5550 = vunpack.c.h.b16 %v4338
        %v5551 = vunpack.c.l.b16 %v4339
        %v5552 = vunpack.c.h.b16 %v4339
        %v5553 = vunpack.c.l.b16 %v4340
        %v5554 = vunpack.c.h.b16 %v4340
        %v5555 = vunpack.c.l.b16 %v4341
        %v5556 = vunpack.c.h.b16 %v4341
        %v5557 = vunpack.c.l.b16 %v4342
        %v5558 = vunpack.c.h.b16 %v4342
        %v5559 = vunpack.c.l.b16 %v4343
        %v5560 = vunpack.c.h.b16 %v4343
        %v5561 = vunpack.c.l.b16 %v4344
        %v5562 = vunpack.c.h.b16 %v4344
        %v5563 = vunpack.c.l.b16 %v4345
        %v5564 = vunpack.c.h.b16 %v4345
        %v5565 = vunpack.c.l.b16 %v4346
        %v5566 = vunpack.c.h.b16 %v4346
        %v5567 = vunpack.c.l.b16 %v4347
        %v5568 = vunpack.c.h.b16 %v4347
        %v5569 = vunpack.c.l.b16 %v4348
        %v5570 = vunpack.c.h.b16 %v4348
        %v5571 = vunpack.c.l.b16 %v4349
        %v5572 = vunpack.c.h.b16 %v4349
        %v5573 = vunpack.c.l.b16 %v4350
        %v5574 = vunpack.c.h.b16 %v4350
        %v5575 = vunpack.c.l.b16 %v4351
        %v5576 = vunpack.c.h.b16 %v4351
        %v5577 = vunpack.c.l.b16 %v4352
        %v5578 = vunpack.c.h.b16 %v4352
        %v5579 = vunpack.c.l.b16 %v4353
        %v5580 = vunpack.c.h.b16 %v4353
        %v5581 = vunpack.c.l.b16 %v4354
        %v5582 = vunpack.c.h.b16 %v4354
        %v5583 = vunpack.c.l.b16 %v4355
        %v5584 = vunpack.c.h.b16 %v4355
        %v5585 = vunpack.c.l.b16 %v4356
        %v5586 = vunpack.c.h.b16 %v4356
        %v5587 = vunpack.c.l.b16 %v4357
        %v5588 = vunpack.c.h.b16 %v4357
        %v5589 = vunpack.c.l.b16 %v4358
        %v5590 = vunpack.c.h.b16 %v4358
        %v5591 = vunpack.c.l.b16 %v4359
        %v5592 = vunpack.c.h.b16 %v4359
        %v5593 = vunpack.c.l.b16 %v4360
        %v5594 = vunpack.c.h.b16 %v4360
        %v5595 = vunpack.c.l.b16 %v4361
        %v5596 = vunpack.c.h.b16 %v4361
        %v5597 = vunpack.c.l.b16 %v4362
        %v5598 = vunpack.c.h.b16 %v4362
        %v5599 = vunpack.c.l.b16 %v4363
        %v5600 = vunpack.c.h.b16 %v4363
        %v5601 = vunpack.c.l.b16 %v4364
        %v5602 = vunpack.c.h.b16 %v4364
        %v5603 = vunpack.c.l.b16 %v4365
        %v5604 = vunpack.c.h.b16 %v4365
        %v5605 = vunpack.c.l.b16 %v4366
        %v5606 = vunpack.c.h.b16 %v4366
        %v5607 = vunpack.c.l.b16 %v4367
        %v5608 = vunpack.c.h.b16 %v4367
        %v5609 = vunpack.c.l.b16 %v4368
        %v5610 = vunpack.c.h.b16 %v4368
        %v5611 = vunpack.c.l.b16 %v4369
        %v5612 = vunpack.c.h.b16 %v4369
        %v5613 = vunpack.c.l.b16 %v4370
        %v5614 = vunpack.c.h.b16 %v4370
        %v5615 = vunpack.c.l.b16 %v4371
        %v5616 = vunpack.c.h.b16 %v4371
        %v5617 = vunpack.c.l.b16 %v4372
        %v5618 = vunpack.c.h.b16 %v4372
        %v5619 = vunpack.c.l.b16 %v4373
        %v5620 = vunpack.c.h.b16 %v4373
        %v5621 = vunpack.c.l.b16 %v4374
        %v5622 = vunpack.c.h.b16 %v4374
        %v5623 = vunpack.c.l.b16 %v4375
        %v5624 = vunpack.c.h.b16 %v4375
        %v5625 = vunpack.c.l.b16 %v4376
        %v5626 = vunpack.c.h.b16 %v4376
        %v5627 = vunpack.c.l.b16 %v4377
        %v5628 = vunpack.c.h.b16 %v4377
        %v5629 = vunpack.c.l.b16 %v4378
        %v5630 = vunpack.c.h.b16 %v4378
        %v5631 = vunpack.c.l.b16 %v4379
        %v5632 = vunpack.c.h.b16 %v4379
        %v5633 = vunpack.c.l.b16 %v4380
        %v5634 = vunpack.c.h.b16 %v4380
        %v5635 = vunpack.c.l.b16 %v4381
        %v5636 = vunpack.c.h.b16 %v4381
        %v5637 = vunpack.c.l.b16 %v4382
        %v5638 = vunpack.c.h.b16 %v4382
        %v5639 = vunpack.c.l.b16 %v4383
        %v5640 = vunpack.c.h.b16 %v4383
        %v5641 = vunpack.c.l.b16 %v4384
        %v5642 = vunpack.c.h.b16 %v4384
        %v5643 = vunpack.c.l.b16 %v4385
        %v5644 = vunpack.c.h.b16 %v4385
        %v5645 = vunpack.c.l.b16 %v4386
        %v5646 = vunpack.c.h.b16 %v4386
        %v5647 = vunpack.c.l.b16 %v4387
        %v5648 = vunpack.c.h.b16 %v4387
        %v5649 = vunpack.c.l.b16 %v4388
        %v5650 = vunpack.c.h.b16 %v4388
        %v5651 = vunpack.c.l.b16 %v4389
        %v5652 = vunpack.c.h.b16 %v4389
        %v5653 = vunpack.c.l.b16 %v4390
        %v5654 = vunpack.c.h.b16 %v4390
        %v5655 = vunpack.c.l.b16 %v4391
        %v5656 = vunpack.c.h.b16 %v4391
        %v5657 = vunpack.c.l.b16 %v4392
        %v5658 = vunpack.c.h.b16 %v4392
        %v5659 = vunpack.c.l.b16 %v4393
        %v5660 = vunpack.c.h.b16 %v4393
        %v5661 = vunpack.c.l.b16 %v4394
        %v5662 = vunpack.c.h.b16 %v4394
        %v5663 = vunpack.c.l.b16 %v4395
        %v5664 = vunpack.c.h.b16 %v4395
        %v5665 = vunpack.c.l.b16 %v4396
        %v5666 = vunpack.c.h.b16 %v4396
        %v5667 = vunpack.c.l.b16 %v4397
        %v5668 = vunpack.c.h.b16 %v4397
        %v5669 = vunpack.c.l.b16 %v4398
        %v5670 = vunpack.c.h.b16 %v4398
        %v5671 = vunpack.c.l.b16 %v4399
        %v5672 = vunpack.c.h.b16 %v4399
        %v5673 = vunpack.c.l.b16 %v4400
        %v5674 = vunpack.c.h.b16 %v4400
        %v5675 = vunpack.c.l.b16 %v4401
        %v5676 = vunpack.c.h.b16 %v4401
        %v5677 = vunpack.c.l.b16 %v4402
        %v5678 = vunpack.c.h.b16 %v4402
        %v5679 = vunpack.c.l.b16 %v4403
        %v5680 = vunpack.c.h.b16 %v4403
        %v5681 = vunpack.c.l.b16 %v4404
        %v5682 = vunpack.c.h.b16 %v4404
        %v5683 = vunpack.c.l.b16 %v4405
        %v5684 = vunpack.c.h.b16 %v4405
        %v5685 = vunpack.c.l.b16 %v4406
        %v5686 = vunpack.c.h.b16 %v4406
        %v5687 = vunpack.c.l.b16 %v4407
        %v5688 = vunpack.c.h.b16 %v4407
        %v5689 = vunpack.c.l.b16 %v4408
        %v5690 = vunpack.c.h.b16 %v4408
        %v5691 = vunpack.c.l.b16 %v4409
        %v5692 = vunpack.c.h.b16 %v4409
        %v5693 = vunpack.c.l.b16 %v4410
        %v5694 = vunpack.c.h.b16 %v4410
        %v5695 = vunpack.c.l.b16 %v4411
        %v5696 = vunpack.c.h.b16 %v4411
        %v5697 = vpack.c.b16 %v5507, %v5505
        %v5698 = vpack.c.b16 %v5508, %v5506
        %v5699 = vpack.c.b16 %v5511, %v5509
        %v5700 = vpack.c.b16 %v5512, %v5510
        %v5701 = vpack.c.b16 %v5515, %v5513
        %v5702 = vpack.c.b16 %v5516, %v5514
        %v5703 = vpack.c.b16 %v5519, %v5517
        %v5704 = vpack.c.b16 %v5520, %v5518
        %v5705 = vpack.c.b16 %v5523, %v5521
        %v5706 = vpack.c.b16 %v5524, %v5522
        %v5707 = vpack.c.b16 %v5527, %v5525
        %v5708 = vpack.c.b16 %v5528, %v5526
        %v5709 = vpack.c.b16 %v5531, %v5529
        %v5710 = vpack.c.b16 %v5532, %v5530
        %v5711 = vpack.c.b16 %v5535, %v5533
        %v5712 = vpack.c.b16 %v5536, %v5534
        %v5713 = vpack.c.b16 %v5539, %v5537
        %v5714 = vpack.c.b16 %v5540, %v5538
        %v5715 = vpack.c.b16 %v5543, %v5541
        %v5716 = vpack.c.b16 %v5544, %v5542
        %v5717 = vpack.c.b16 %v5547, %v5545
        %v5718 = vpack.c.b16 %v5548, %v5546
        %v5719 = vpack.c.b16 %v5551, %v5549
        %v5720 = vpack.c.b16 %v5552, %v5550
        %v5721 = vpack.c.b16 %v5555, %v5553
        %v5722 = vpack.c.b16 %v5556, %v5554
        %v5723 = vpack.c.b16 %v5559, %v5557
        %v5724 = vpack.c.b16 %v5560, %v5558
        %v5725 = vpack.c.b16 %v5563, %v5561
        %v5726 = vpack.c.b16 %v5564, %v5562
        %v5727 = vpack.c.b16 %v5567, %v5565
        %v5728 = vpack.c.b16 %v5568, %v5566
        %v5729 = vpack.c.b16 %v5571, %v5569
        %v5730 = vpack.c.b16 %v5572, %v5570
        %v5731 = vpack.c.b16 %v5575, %v5573
        %v5732 = vpack.c.b16 %v5576, %v5574
        %v5733 = vpack.c.b16 %v5579, %v5577
        %v5734 = vpack.c.b16 %v5580, %v5578
        %v5735 = vpack.c.b16 %v5583, %v5581
        %v5736 = vpack.c.b16 %v5584, %v5582
        %v5737 = vpack.c.b16 %v5587, %v5585
        %v5738 = vpack.c.b16 %v5588, %v5586
        %v5739 = vpack.c.b16 %v5591, %v5589
        %v5740 = vpack.c.b16 %v5592, %v5590
        %v5741 = vpack.c.b16 %v5595, %v5593
        %v5742 = vpack.c.b16 %v5596, %v5594
        %v5743 = vpack.c.b16 %v5599, %v5597
        %v5744 = vpack.c.b16 %v5600, %v5598
        %v5745 = vpack.c.b16 %v5603, %v5601
        %v5746 = vpack.c.b16 %v5604, %v5602
        %v5747 = vpack.c.b16 %v5607, %v5605
        %v5748 = vpack.c.b16 %v5608, %v5606
        %v5749 = vpack.c.b16 %v5611, %v5609
        %v5750 = vpack.c.b16 %v5612, %v5610
        %v5751 = vpack.c.b16 %v5615, %v5613
        %v5752 = vpack.c.b16 %v5616, %v5614
        %v5753 = vpack.c.b16 %v5619, %v5617
        %v5754 = vpack.c.b16 %v5620, %v5618
        %v5755 = vpack.c.b16 %v5623, %v5621
        %v5756 = vpack.c.b16 %v5624, %v5622
        %v5757 = vpack.c.b16 %v5627, %v5625
        %v5758 = vpack.c.b16 %v5628, %v5626
        %v5759 = vpack.c.b16 %v5631, %v5629
        %v5760 = vpack.c.b16 %v5632, %v5630
        %v5761 = vpack.c.b16 %v5635, %v5633
        %v5762 = vpack.c.b16 %v5636, %v5634
        %v5763 = vpack.c.b16 %v5639, %v5637
        %v5764 = vpack.c.b16 %v5640, %v5638
        %v5765 = vpack.c.b16 %v5643, %v5641
        %v5766 = vpack.c.b16 %v5644, %v5642
        %v5767 = vpack.c.b16 %v5647, %v5645
        %v5768 = vpack.c.b16 %v5648, %v5646
        %v5769 = vpack.c.b16 %v5651, %v5649
        %v5770 = vpack.c.b16 %v5652, %v5650
        %v5771 = vpack.c.b16 %v5655, %v5653
        %v5772 = vpack.c.b16 %v5656, %v5654
        %v5773 = vpack.c.b16 %v5659, %v5657
        %v5774 = vpack.c.b16 %v5660, %v5658
        %v5775 = vpack.c.b16 %v5663, %v5661
        %v5776 = vpack.c.b16 %v5664, %v5662
        %v5777 = vpack.c.b16 %v5667, %v5665
        %v5778 = vpack.c.b16 %v5668, %v5666
        %v5779 = vpack.c.b16 %v5671, %v5669
        %v5780 = vpack.c.b16 %v5672, %v5670
        %v5781 = vpack.c.b16 %v5675, %v5673
        %v5782 = vpack.c.b16 %v5676, %v5674
        %v5783 = vpack.c.b16 %v5679, %v5677
        %v5784 = vpack.c.b16 %v5680, %v5678
        %v5785 = vpack.c.b16 %v5683, %v5681
        %v5786 = vpack.c.b16 %v5684, %v5682
        %v5787 = vpack.c.b16 %v5687, %v5685
        %v5788 = vpack.c.b16 %v5688, %v5686
        %v5789 = vpack.c.b16 %v5691, %v5689
        %v5790 = vpack.c.b16 %v5692, %v5690
        %v5791 = vpack.c.b16 %v5695, %v5693
        %v5792 = vpack.c.b16 %v5696, %v5694
        %5889 = vmatpush.bf16.msra.mxu0 %v5711
        %5890 = vmatpush.bf16.msra.mxu0 %v5709
        %5891 = vmatpush.bf16.msra.mxu0 %v5707
        %5892 = vmatpush.bf16.msra.mxu0 %v5705
        %5893 = vmatpush.bf16.msra.mxu0 %v5703
        %5894 = vmatpush.bf16.msra.mxu0 %v5701
        %5895 = vmatpush.bf16.msra.mxu0 %v5699
        %5896 = vmatpush.bf16.msra.mxu0 %v5697
        %5897 = vmatmul.bf16.gmra.mxu0 %v4292
        %v5898 = vpop.f32.mrf.mxu0
        %v5899 = vadd.f32 %v5216, %v5898
        %v5900 = vpop.f32.mrf.mxu0
        %v5901 = vadd.f32 %v5218, %v5900
        %5902 = vmatmul.bf16.gmra.mxu0 %v4298
        %v5903 = vpop.f32.mrf.mxu0
        %v5904 = vadd.f32 %v5221, %v5903
        %v5905 = vpop.f32.mrf.mxu0
        %v5906 = vadd.f32 %v5223, %v5905
        %5907 = vmatmul.bf16.gmra.mxu0 %v4304
        %v5908 = vpop.f32.mrf.mxu0
        %v5909 = vadd.f32 %v5226, %v5908
        %v5910 = vpop.f32.mrf.mxu0
        %v5911 = vadd.f32 %v5228, %v5910
        %5912 = vmatmul.bf16.gmra.mxu0 %v4310
        %v5913 = vpop.f32.mrf.mxu0
        %v5914 = vadd.f32 %v5231, %v5913
        %v5915 = vpop.f32.mrf.mxu0
        %v5916 = vadd.f32 %v5233, %v5915
        %5917 = vdwg.mxu0
        %5918 = vmatpush.bf16.msra.mxu0 %v5727
        %5919 = vmatpush.bf16.msra.mxu0 %v5725
        %5920 = vmatpush.bf16.msra.mxu0 %v5723
        %5921 = vmatpush.bf16.msra.mxu0 %v5721
        %5922 = vmatpush.bf16.msra.mxu0 %v5719
        %5923 = vmatpush.bf16.msra.mxu0 %v5717
        %5924 = vmatpush.bf16.msra.mxu0 %v5715
        %5925 = vmatpush.bf16.msra.mxu0 %v5713
        %5926 = vmatmul.bf16.gmra.mxu0 %v4293
        %v5927 = vpop.f32.mrf.mxu0
        %v5928 = vadd.f32 %v5899, %v5927
        %v5929 = vpop.f32.mrf.mxu0
        %v5930 = vadd.f32 %v5901, %v5929
        %5931 = vmatmul.bf16.gmra.mxu0 %v4299
        %v5932 = vpop.f32.mrf.mxu0
        %v5933 = vadd.f32 %v5904, %v5932
        %v5934 = vpop.f32.mrf.mxu0
        %v5935 = vadd.f32 %v5906, %v5934
        %5936 = vmatmul.bf16.gmra.mxu0 %v4305
        %v5937 = vpop.f32.mrf.mxu0
        %v5938 = vadd.f32 %v5909, %v5937
        %v5939 = vpop.f32.mrf.mxu0
        %v5940 = vadd.f32 %v5911, %v5939
        %5941 = vmatmul.bf16.gmra.mxu0 %v4311
        %v5942 = vpop.f32.mrf.mxu0
        %v5943 = vadd.f32 %v5914, %v5942
        %v5944 = vpop.f32.mrf.mxu0
        %v5945 = vadd.f32 %v5916, %v5944
        %5946 = vdwg.mxu0
        %5947 = vmatpush.bf16.msra.mxu0 %v5743
        %5948 = vmatpush.bf16.msra.mxu0 %v5741
        %5949 = vmatpush.bf16.msra.mxu0 %v5739
        %5950 = vmatpush.bf16.msra.mxu0 %v5737
        %5951 = vmatpush.bf16.msra.mxu0 %v5735
        %5952 = vmatpush.bf16.msra.mxu0 %v5733
        %5953 = vmatpush.bf16.msra.mxu0 %v5731
        %5954 = vmatpush.bf16.msra.mxu0 %v5729
        %5955 = vmatmul.bf16.gmra.mxu0 %v4294
        %v5956 = vpop.f32.mrf.mxu0
        %v5957 = vadd.f32 %v5928, %v5956
        %v5958 = vpop.f32.mrf.mxu0
        %v5959 = vadd.f32 %v5930, %v5958
        %5960 = vmatmul.bf16.gmra.mxu0 %v4300
        %v5961 = vpop.f32.mrf.mxu0
        %v5962 = vadd.f32 %v5933, %v5961
        %v5963 = vpop.f32.mrf.mxu0
        %v5964 = vadd.f32 %v5935, %v5963
        %5965 = vmatmul.bf16.gmra.mxu0 %v4306
        %v5966 = vpop.f32.mrf.mxu0
        %v5967 = vadd.f32 %v5938, %v5966
        %v5968 = vpop.f32.mrf.mxu0
        %v5969 = vadd.f32 %v5940, %v5968
        %5970 = vmatmul.bf16.gmra.mxu0 %v4312
        %v5971 = vpop.f32.mrf.mxu0
        %v5972 = vadd.f32 %v5943, %v5971
        %v5973 = vpop.f32.mrf.mxu0
        %v5974 = vadd.f32 %v5945, %v5973
        %5975 = vdwg.mxu0
        %5976 = vmatpush.bf16.msra.mxu0 %v5759
        %5977 = vmatpush.bf16.msra.mxu0 %v5757
        %5978 = vmatpush.bf16.msra.mxu0 %v5755
        %5979 = vmatpush.bf16.msra.mxu0 %v5753
        %5980 = vmatpush.bf16.msra.mxu0 %v5751
        %5981 = vmatpush.bf16.msra.mxu0 %v5749
        %5982 = vmatpush.bf16.msra.mxu0 %v5747
        %5983 = vmatpush.bf16.msra.mxu0 %v5745
        %5984 = vmatmul.bf16.gmra.mxu0 %v4295
        %v5985 = vpop.f32.mrf.mxu0
        %v5986 = vadd.f32 %v5957, %v5985
        %v5987 = vpop.f32.mrf.mxu0
        %v5988 = vadd.f32 %v5959, %v5987
        %5989 = vmatmul.bf16.gmra.mxu0 %v4301
        %v5990 = vpop.f32.mrf.mxu0
        %v5991 = vadd.f32 %v5962, %v5990
        %v5992 = vpop.f32.mrf.mxu0
        %v5993 = vadd.f32 %v5964, %v5992
        %5994 = vmatmul.bf16.gmra.mxu0 %v4307
        %v5995 = vpop.f32.mrf.mxu0
        %v5996 = vadd.f32 %v5967, %v5995
        %v5997 = vpop.f32.mrf.mxu0
        %v5998 = vadd.f32 %v5969, %v5997
        %5999 = vmatmul.bf16.gmra.mxu0 %v4313
        %v6000 = vpop.f32.mrf.mxu0
        %v6001 = vadd.f32 %v5972, %v6000
        %v6002 = vpop.f32.mrf.mxu0
        %v6003 = vadd.f32 %v5974, %v6002
        %6004 = vdwg.mxu0
        %6005 = vmatpush.bf16.msra.mxu0 %v5775
        %6006 = vmatpush.bf16.msra.mxu0 %v5773
        %6007 = vmatpush.bf16.msra.mxu0 %v5771
        %6008 = vmatpush.bf16.msra.mxu0 %v5769
        %6009 = vmatpush.bf16.msra.mxu0 %v5767
        %6010 = vmatpush.bf16.msra.mxu0 %v5765
        %6011 = vmatpush.bf16.msra.mxu0 %v5763
        %6012 = vmatpush.bf16.msra.mxu0 %v5761
        %6013 = vmatmul.bf16.gmra.mxu0 %v4296
        %v6014 = vpop.f32.mrf.mxu0
        %v6015 = vadd.f32 %v5986, %v6014
        %v6016 = vpop.f32.mrf.mxu0
        %v6017 = vadd.f32 %v5988, %v6016
        %6018 = vmatmul.bf16.gmra.mxu0 %v4302
        %v6019 = vpop.f32.mrf.mxu0
        %v6020 = vadd.f32 %v5991, %v6019
        %v6021 = vpop.f32.mrf.mxu0
        %v6022 = vadd.f32 %v5993, %v6021
        %6023 = vmatmul.bf16.gmra.mxu0 %v4308
        %v6024 = vpop.f32.mrf.mxu0
        %v6025 = vadd.f32 %v5996, %v6024
        %v6026 = vpop.f32.mrf.mxu0
        %v6027 = vadd.f32 %v5998, %v6026
        %6028 = vmatmul.bf16.gmra.mxu0 %v4314
        %v6029 = vpop.f32.mrf.mxu0
        %v6030 = vadd.f32 %v6001, %v6029
        %v6031 = vpop.f32.mrf.mxu0
        %v6032 = vadd.f32 %v6003, %v6031
        %6033 = vdwg.mxu0
        %6034 = vmatpush.bf16.msra.mxu0 %v5791
        %6035 = vmatpush.bf16.msra.mxu0 %v5789
        %6036 = vmatpush.bf16.msra.mxu0 %v5787
        %6037 = vmatpush.bf16.msra.mxu0 %v5785
        %6038 = vmatpush.bf16.msra.mxu0 %v5783
        %6039 = vmatpush.bf16.msra.mxu0 %v5781
        %6040 = vmatpush.bf16.msra.mxu0 %v5779
        %6041 = vmatpush.bf16.msra.mxu0 %v5777
        %6042 = vmatmul.bf16.gmra.mxu0 %v4297
        %v6043 = vpop.f32.mrf.mxu0
        %v6044 = vadd.f32 %v6015, %v6043
        %v6045 = vpop.f32.mrf.mxu0
        %v6046 = vadd.f32 %v6017, %v6045
        %6047 = vmatmul.bf16.gmra.mxu0 %v4303
        %v6048 = vpop.f32.mrf.mxu0
        %v6049 = vadd.f32 %v6020, %v6048
        %v6050 = vpop.f32.mrf.mxu0
        %v6051 = vadd.f32 %v6022, %v6050
        %6052 = vmatmul.bf16.gmra.mxu0 %v4309
        %v6053 = vpop.f32.mrf.mxu0
        %v6054 = vadd.f32 %v6025, %v6053
        %v6055 = vpop.f32.mrf.mxu0
        %v6056 = vadd.f32 %v6027, %v6055
        %6057 = vmatmul.bf16.gmra.mxu0 %v4315
        %v6058 = vpop.f32.mrf.mxu0
        %v6059 = vadd.f32 %v6030, %v6058
        %v6060 = vpop.f32.mrf.mxu0
        %v6061 = vadd.f32 %v6032, %v6060
        %6062 = vdwg.mxu0
        %6063 = vmatpush.bf16.msra.mxu0 %v5712
        %6064 = vmatpush.bf16.msra.mxu0 %v5710
        %6065 = vmatpush.bf16.msra.mxu0 %v5708
        %6066 = vmatpush.bf16.msra.mxu0 %v5706
        %6067 = vmatpush.bf16.msra.mxu0 %v5704
        %6068 = vmatpush.bf16.msra.mxu0 %v5702
        %6069 = vmatpush.bf16.msra.mxu0 %v5700
        %6070 = vmatpush.bf16.msra.mxu0 %v5698
        %6071 = vmatmul.bf16.gmra.mxu0 %v4292
        %v6072 = vpop.f32.mrf.mxu0
        %v6073 = vadd.f32 %v5390, %v6072
        %v6074 = vpop.f32.mrf.mxu0
        %v6075 = vadd.f32 %v5392, %v6074
        %6076 = vmatmul.bf16.gmra.mxu0 %v4298
        %v6077 = vpop.f32.mrf.mxu0
        %v6078 = vadd.f32 %v5395, %v6077
        %v6079 = vpop.f32.mrf.mxu0
        %v6080 = vadd.f32 %v5397, %v6079
        %6081 = vmatmul.bf16.gmra.mxu0 %v4304
        %v6082 = vpop.f32.mrf.mxu0
        %v6083 = vadd.f32 %v5400, %v6082
        %v6084 = vpop.f32.mrf.mxu0
        %v6085 = vadd.f32 %v5402, %v6084
        %6086 = vmatmul.bf16.gmra.mxu0 %v4310
        %v6087 = vpop.f32.mrf.mxu0
        %v6088 = vadd.f32 %v5405, %v6087
        %v6089 = vpop.f32.mrf.mxu0
        %v6090 = vadd.f32 %v5407, %v6089
        %6091 = vdwg.mxu0
        %6092 = vmatpush.bf16.msra.mxu0 %v5728
        %6093 = vmatpush.bf16.msra.mxu0 %v5726
        %6094 = vmatpush.bf16.msra.mxu0 %v5724
        %6095 = vmatpush.bf16.msra.mxu0 %v5722
        %6096 = vmatpush.bf16.msra.mxu0 %v5720
        %6097 = vmatpush.bf16.msra.mxu0 %v5718
        %6098 = vmatpush.bf16.msra.mxu0 %v5716
        %6099 = vmatpush.bf16.msra.mxu0 %v5714
        %6100 = vmatmul.bf16.gmra.mxu0 %v4293
        %v6101 = vpop.f32.mrf.mxu0
        %v6102 = vadd.f32 %v6073, %v6101
        %v6103 = vpop.f32.mrf.mxu0
        %v6104 = vadd.f32 %v6075, %v6103
        %6105 = vmatmul.bf16.gmra.mxu0 %v4299
        %v6106 = vpop.f32.mrf.mxu0
        %v6107 = vadd.f32 %v6078, %v6106
        %v6108 = vpop.f32.mrf.mxu0
        %v6109 = vadd.f32 %v6080, %v6108
        %6110 = vmatmul.bf16.gmra.mxu0 %v4305
        %v6111 = vpop.f32.mrf.mxu0
        %v6112 = vadd.f32 %v6083, %v6111
        %v6113 = vpop.f32.mrf.mxu0
        %v6114 = vadd.f32 %v6085, %v6113
        %6115 = vmatmul.bf16.gmra.mxu0 %v4311
        %v6116 = vpop.f32.mrf.mxu0
        %v6117 = vadd.f32 %v6088, %v6116
        %v6118 = vpop.f32.mrf.mxu0
        %v6119 = vadd.f32 %v6090, %v6118
        %6120 = vdwg.mxu0
        %6121 = vmatpush.bf16.msra.mxu0 %v5744
        %6122 = vmatpush.bf16.msra.mxu0 %v5742
        %6123 = vmatpush.bf16.msra.mxu0 %v5740
        %6124 = vmatpush.bf16.msra.mxu0 %v5738
        %6125 = vmatpush.bf16.msra.mxu0 %v5736
        %6126 = vmatpush.bf16.msra.mxu0 %v5734
        %6127 = vmatpush.bf16.msra.mxu0 %v5732
        %6128 = vmatpush.bf16.msra.mxu0 %v5730
        %6129 = vmatmul.bf16.gmra.mxu0 %v4294
        %v6130 = vpop.f32.mrf.mxu0
        %v6131 = vadd.f32 %v6102, %v6130
        %v6132 = vpop.f32.mrf.mxu0
        %v6133 = vadd.f32 %v6104, %v6132
        %6134 = vmatmul.bf16.gmra.mxu0 %v4300
        %v6135 = vpop.f32.mrf.mxu0
        %v6136 = vadd.f32 %v6107, %v6135
        %v6137 = vpop.f32.mrf.mxu0
        %v6138 = vadd.f32 %v6109, %v6137
        %6139 = vmatmul.bf16.gmra.mxu0 %v4306
        %v6140 = vpop.f32.mrf.mxu0
        %v6141 = vadd.f32 %v6112, %v6140
        %v6142 = vpop.f32.mrf.mxu0
        %v6143 = vadd.f32 %v6114, %v6142
        %6144 = vmatmul.bf16.gmra.mxu0 %v4312
        %v6145 = vpop.f32.mrf.mxu0
        %v6146 = vadd.f32 %v6117, %v6145
        %v6147 = vpop.f32.mrf.mxu0
        %v6148 = vadd.f32 %v6119, %v6147
        %6149 = vdwg.mxu0
        %6150 = vmatpush.bf16.msra.mxu0 %v5760
        %6151 = vmatpush.bf16.msra.mxu0 %v5758
        %6152 = vmatpush.bf16.msra.mxu0 %v5756
        %6153 = vmatpush.bf16.msra.mxu0 %v5754
        %6154 = vmatpush.bf16.msra.mxu0 %v5752
        %6155 = vmatpush.bf16.msra.mxu0 %v5750
        %6156 = vmatpush.bf16.msra.mxu0 %v5748
        %6157 = vmatpush.bf16.msra.mxu0 %v5746
        %6158 = vmatmul.bf16.gmra.mxu0 %v4295
        %v6159 = vpop.f32.mrf.mxu0
        %v6160 = vadd.f32 %v6131, %v6159
        %v6161 = vpop.f32.mrf.mxu0
        %v6162 = vadd.f32 %v6133, %v6161
        %6163 = vmatmul.bf16.gmra.mxu0 %v4301
        %v6164 = vpop.f32.mrf.mxu0
        %v6165 = vadd.f32 %v6136, %v6164
        %v6166 = vpop.f32.mrf.mxu0
        %v6167 = vadd.f32 %v6138, %v6166
        %6168 = vmatmul.bf16.gmra.mxu0 %v4307
        %v6169 = vpop.f32.mrf.mxu0
        %v6170 = vadd.f32 %v6141, %v6169
        %v6171 = vpop.f32.mrf.mxu0
        %v6172 = vadd.f32 %v6143, %v6171
        %6173 = vmatmul.bf16.gmra.mxu0 %v4313
        %v6174 = vpop.f32.mrf.mxu0
        %v6175 = vadd.f32 %v6146, %v6174
        %v6176 = vpop.f32.mrf.mxu0
        %v6177 = vadd.f32 %v6148, %v6176
        %6178 = vdwg.mxu0
        %6179 = vmatpush.bf16.msra.mxu0 %v5776
        %6180 = vmatpush.bf16.msra.mxu0 %v5774
        %6181 = vmatpush.bf16.msra.mxu0 %v5772
        %6182 = vmatpush.bf16.msra.mxu0 %v5770
        %6183 = vmatpush.bf16.msra.mxu0 %v5768
        %6184 = vmatpush.bf16.msra.mxu0 %v5766
        %6185 = vmatpush.bf16.msra.mxu0 %v5764
        %6186 = vmatpush.bf16.msra.mxu0 %v5762
        %6187 = vmatmul.bf16.gmra.mxu0 %v4296
        %v6188 = vpop.f32.mrf.mxu0
        %v6189 = vadd.f32 %v6160, %v6188
        %v6190 = vpop.f32.mrf.mxu0
        %v6191 = vadd.f32 %v6162, %v6190
        %6192 = vmatmul.bf16.gmra.mxu0 %v4302
        %v6193 = vpop.f32.mrf.mxu0
        %v6194 = vadd.f32 %v6165, %v6193
        %v6195 = vpop.f32.mrf.mxu0
        %v6196 = vadd.f32 %v6167, %v6195
        %6197 = vmatmul.bf16.gmra.mxu0 %v4308
        %v6198 = vpop.f32.mrf.mxu0
        %v6199 = vadd.f32 %v6170, %v6198
        %v6200 = vpop.f32.mrf.mxu0
        %v6201 = vadd.f32 %v6172, %v6200
        %6202 = vmatmul.bf16.gmra.mxu0 %v4314
        %v6203 = vpop.f32.mrf.mxu0
        %v6204 = vadd.f32 %v6175, %v6203
        %v6205 = vpop.f32.mrf.mxu0
        %v6206 = vadd.f32 %v6177, %v6205
        %6207 = vdwg.mxu0
        %6208 = vmatpush.bf16.msra.mxu0 %v5792
        %6209 = vmatpush.bf16.msra.mxu0 %v5790
        %6210 = vmatpush.bf16.msra.mxu0 %v5788
        %6211 = vmatpush.bf16.msra.mxu0 %v5786
        %6212 = vmatpush.bf16.msra.mxu0 %v5784
        %6213 = vmatpush.bf16.msra.mxu0 %v5782
        %6214 = vmatpush.bf16.msra.mxu0 %v5780
        %6215 = vmatpush.bf16.msra.mxu0 %v5778
        %6216 = vmatmul.bf16.gmra.mxu0 %v4297
        %v6217 = vpop.f32.mrf.mxu0
        %v6218 = vadd.f32 %v6189, %v6217
        %v6219 = vpop.f32.mrf.mxu0
        %v6220 = vadd.f32 %v6191, %v6219
        %6221 = vmatmul.bf16.gmra.mxu0 %v4303
        %v6222 = vpop.f32.mrf.mxu0
        %v6223 = vadd.f32 %v6194, %v6222
        %v6224 = vpop.f32.mrf.mxu0
        %v6225 = vadd.f32 %v6196, %v6224
        %6226 = vmatmul.bf16.gmra.mxu0 %v4309
        %v6227 = vpop.f32.mrf.mxu0
        %v6228 = vadd.f32 %v6199, %v6227
        %v6229 = vpop.f32.mrf.mxu0
        %v6230 = vadd.f32 %v6201, %v6229
        %6231 = vmatmul.bf16.gmra.mxu0 %v4315
        %v6232 = vpop.f32.mrf.mxu0
        %v6233 = vadd.f32 %v6204, %v6232
        %v6234 = vpop.f32.mrf.mxu0
        %v6235 = vadd.f32 %v6206, %v6234
        %6236 = vdwg.mxu0
        %v6237 = vld [vmem:[%s2734] sm:$0xff]
        %v6238 = vld [vmem:[%s2734 + $0x8] sm:$0xff]
        %v6239 = vld [vmem:[%s2734 + $0x10] sm:$0xff]
        %v6240 = vld [vmem:[%s2734 + $0x18] sm:$0xff]
        %v6241 = vld [vmem:[%s2734 + $0x20] sm:$0xff]
        %v6242 = vld [vmem:[%s2734 + $0x28] sm:$0xff]
        %v6243 = vld [vmem:[%s2734 + $0x30] sm:$0xff]
        %v6244 = vld [vmem:[%s2734 + $0x38] sm:$0xff]
        %v6245 = vld [vmem:[%s2734 + $0x40] sm:$0xff]
        %v6246 = vld [vmem:[%s2734 + $0x48] sm:$0xff]
        %v6247 = vld [vmem:[%s2734 + $0x50] sm:$0xff]
        %v6248 = vld [vmem:[%s2734 + $0x58] sm:$0xff]
        %v6249 = vld [vmem:[%s2734 + $0x60] sm:$0xff]
        %v6250 = vld [vmem:[%s2734 + $0x68] sm:$0xff]
        %v6251 = vld [vmem:[%s2734 + $0x70] sm:$0xff]
        %v6252 = vld [vmem:[%s2734 + $0x78] sm:$0xff]
        %v6253 = vld [vmem:[%s2734 + $0x80] sm:$0xff]
        %v6254 = vld [vmem:[%s2734 + $0x88] sm:$0xff]
        %v6255 = vld [vmem:[%s2734 + $0x90] sm:$0xff]
        %v6256 = vld [vmem:[%s2734 + $0x98] sm:$0xff]
        %v6257 = vld [vmem:[%s2734 + $0xa0] sm:$0xff]
        %v6258 = vld [vmem:[%s2734 + $0xa8] sm:$0xff]
        %v6259 = vld [vmem:[%s2734 + $0xb0] sm:$0xff]
        %v6260 = vld [vmem:[%s2734 + $0xb8] sm:$0xff]
        %v6261 = vld [vmem:[%s2734 + $0xc0] sm:$0xff]
        %v6262 = vld [vmem:[%s2734 + $0xc8] sm:$0xff]
        %v6263 = vld [vmem:[%s2734 + $0xd0] sm:$0xff]
        %v6264 = vld [vmem:[%s2734 + $0xd8] sm:$0xff]
        %v6265 = vld [vmem:[%s2734 + $0xe0] sm:$0xff]
        %v6266 = vld [vmem:[%s2734 + $0xe8] sm:$0xff]
        %v6267 = vld [vmem:[%s2734 + $0xf0] sm:$0xff]
        %v6268 = vld [vmem:[%s2734 + $0xf8] sm:$0xff]
        %v6269 = vld [vmem:[%s2734 + $0x100] sm:$0xff]
        %v6270 = vld [vmem:[%s2734 + $0x108] sm:$0xff]
        %v6271 = vld [vmem:[%s2734 + $0x110] sm:$0xff]
        %v6272 = vld [vmem:[%s2734 + $0x118] sm:$0xff]
        %v6273 = vld [vmem:[%s2734 + $0x120] sm:$0xff]
        %v6274 = vld [vmem:[%s2734 + $0x128] sm:$0xff]
        %v6275 = vld [vmem:[%s2734 + $0x130] sm:$0xff]
        %v6276 = vld [vmem:[%s2734 + $0x138] sm:$0xff]
        %v6277 = vld [vmem:[%s2734 + $0x140] sm:$0xff]
        %v6278 = vld [vmem:[%s2734 + $0x148] sm:$0xff]
        %v6279 = vld [vmem:[%s2734 + $0x150] sm:$0xff]
        %v6280 = vld [vmem:[%s2734 + $0x158] sm:$0xff]
        %v6281 = vld [vmem:[%s2734 + $0x160] sm:$0xff]
        %v6282 = vld [vmem:[%s2734 + $0x168] sm:$0xff]
        %v6283 = vld [vmem:[%s2734 + $0x170] sm:$0xff]
        %v6284 = vld [vmem:[%s2734 + $0x178] sm:$0xff]
        %v6285 = vpack.c.bf16 %v6243, %v6237
        %v6286 = vpack.c.bf16 %v6244, %v6238
        %v6287 = vpack.c.bf16 %v6245, %v6239
        %v6288 = vpack.c.bf16 %v6246, %v6240
        %v6289 = vpack.c.bf16 %v6247, %v6241
        %v6290 = vpack.c.bf16 %v6248, %v6242
        %v6291 = vpack.c.bf16 %v6255, %v6249
        %v6292 = vpack.c.bf16 %v6256, %v6250
        %v6293 = vpack.c.bf16 %v6257, %v6251
        %v6294 = vpack.c.bf16 %v6258, %v6252
        %v6295 = vpack.c.bf16 %v6259, %v6253
        %v6296 = vpack.c.bf16 %v6260, %v6254
        %v6297 = vpack.c.bf16 %v6267, %v6261
        %v6298 = vpack.c.bf16 %v6268, %v6262
        %v6299 = vpack.c.bf16 %v6269, %v6263
        %v6300 = vpack.c.bf16 %v6270, %v6264
        %v6301 = vpack.c.bf16 %v6271, %v6265
        %v6302 = vpack.c.bf16 %v6272, %v6266
        %v6303 = vpack.c.bf16 %v6279, %v6273
        %v6304 = vpack.c.bf16 %v6280, %v6274
        %v6305 = vpack.c.bf16 %v6281, %v6275
        %v6306 = vpack.c.bf16 %v6282, %v6276
        %v6307 = vpack.c.bf16 %v6283, %v6277
        %v6308 = vpack.c.bf16 %v6284, %v6278
        %s6309 = scalar_lea.vmem %s2, 1536
        %v6310 = vld [vmem:[%s6309] sm:$0xff]
        %v6311 = vld [vmem:[%s6309 + $0x8] sm:$0xff]
        %v6312 = vld [vmem:[%s6309 + $0x10] sm:$0xff]
        %v6313 = vld [vmem:[%s6309 + $0x18] sm:$0xff]
        %v6314 = vld [vmem:[%s6309 + $0x20] sm:$0xff]
        %v6315 = vld [vmem:[%s6309 + $0x28] sm:$0xff]
        %v6316 = vld [vmem:[%s6309 + $0x30] sm:$0xff]
        %v6317 = vld [vmem:[%s6309 + $0x38] sm:$0xff]
        %v6318 = vld [vmem:[%s6309 + $0x40] sm:$0xff]
        %v6319 = vld [vmem:[%s6309 + $0x48] sm:$0xff]
        %v6320 = vld [vmem:[%s6309 + $0x50] sm:$0xff]
        %v6321 = vld [vmem:[%s6309 + $0x58] sm:$0xff]
        %v6322 = vld [vmem:[%s6309 + $0x60] sm:$0xff]
        %v6323 = vld [vmem:[%s6309 + $0x68] sm:$0xff]
        %v6324 = vld [vmem:[%s6309 + $0x70] sm:$0xff]
        %v6325 = vld [vmem:[%s6309 + $0x78] sm:$0xff]
        %v6326 = vld [vmem:[%s6309 + $0x80] sm:$0xff]
        %v6327 = vld [vmem:[%s6309 + $0x88] sm:$0xff]
        %v6328 = vld [vmem:[%s6309 + $0x90] sm:$0xff]
        %v6329 = vld [vmem:[%s6309 + $0x98] sm:$0xff]
        %v6330 = vld [vmem:[%s6309 + $0xa0] sm:$0xff]
        %v6331 = vld [vmem:[%s6309 + $0xa8] sm:$0xff]
        %v6332 = vld [vmem:[%s6309 + $0xb0] sm:$0xff]
        %v6333 = vld [vmem:[%s6309 + $0xb8] sm:$0xff]
        %v6334 = vld [vmem:[%s6309 + $0xc0] sm:$0xff]
        %v6335 = vld [vmem:[%s6309 + $0xc8] sm:$0xff]
        %v6336 = vld [vmem:[%s6309 + $0xd0] sm:$0xff]
        %v6337 = vld [vmem:[%s6309 + $0xd8] sm:$0xff]
        %v6338 = vld [vmem:[%s6309 + $0xe0] sm:$0xff]
        %v6339 = vld [vmem:[%s6309 + $0xe8] sm:$0xff]
        %v6340 = vld [vmem:[%s6309 + $0xf0] sm:$0xff]
        %v6341 = vld [vmem:[%s6309 + $0xf8] sm:$0xff]
        %v6342 = vld [vmem:[%s6309 + $0x100] sm:$0xff]
        %v6343 = vld [vmem:[%s6309 + $0x108] sm:$0xff]
        %v6344 = vld [vmem:[%s6309 + $0x110] sm:$0xff]
        %v6345 = vld [vmem:[%s6309 + $0x118] sm:$0xff]
        %v6346 = vld [vmem:[%s6309 + $0x120] sm:$0xff]
        %v6347 = vld [vmem:[%s6309 + $0x128] sm:$0xff]
        %v6348 = vld [vmem:[%s6309 + $0x130] sm:$0xff]
        %v6349 = vld [vmem:[%s6309 + $0x138] sm:$0xff]
        %v6350 = vld [vmem:[%s6309 + $0x140] sm:$0xff]
        %v6351 = vld [vmem:[%s6309 + $0x148] sm:$0xff]
        %v6352 = vld [vmem:[%s6309 + $0x150] sm:$0xff]
        %v6353 = vld [vmem:[%s6309 + $0x158] sm:$0xff]
        %v6354 = vld [vmem:[%s6309 + $0x160] sm:$0xff]
        %v6355 = vld [vmem:[%s6309 + $0x168] sm:$0xff]
        %v6356 = vld [vmem:[%s6309 + $0x170] sm:$0xff]
        %v6357 = vld [vmem:[%s6309 + $0x178] sm:$0xff]
        %v6358 = vld [vmem:[%s6309 + $0x180] sm:$0xff]
        %v6359 = vld [vmem:[%s6309 + $0x188] sm:$0xff]
        %v6360 = vld [vmem:[%s6309 + $0x190] sm:$0xff]
        %v6361 = vld [vmem:[%s6309 + $0x198] sm:$0xff]
        %v6362 = vld [vmem:[%s6309 + $0x1a0] sm:$0xff]
        %v6363 = vld [vmem:[%s6309 + $0x1a8] sm:$0xff]
        %v6364 = vld [vmem:[%s6309 + $0x1b0] sm:$0xff]
        %v6365 = vld [vmem:[%s6309 + $0x1b8] sm:$0xff]
        %v6366 = vld [vmem:[%s6309 + $0x1c0] sm:$0xff]
        %v6367 = vld [vmem:[%s6309 + $0x1c8] sm:$0xff]
        %v6368 = vld [vmem:[%s6309 + $0x1d0] sm:$0xff]
        %v6369 = vld [vmem:[%s6309 + $0x1d8] sm:$0xff]
        %v6370 = vld [vmem:[%s6309 + $0x1e0] sm:$0xff]
        %v6371 = vld [vmem:[%s6309 + $0x1e8] sm:$0xff]
        %v6372 = vld [vmem:[%s6309 + $0x1f0] sm:$0xff]
        %v6373 = vld [vmem:[%s6309 + $0x1f8] sm:$0xff]
        %v6374 = vld [vmem:[%s6309 + $0x200] sm:$0xff]
        %v6375 = vld [vmem:[%s6309 + $0x208] sm:$0xff]
        %v6376 = vld [vmem:[%s6309 + $0x210] sm:$0xff]
        %v6377 = vld [vmem:[%s6309 + $0x218] sm:$0xff]
        %v6378 = vld [vmem:[%s6309 + $0x220] sm:$0xff]
        %v6379 = vld [vmem:[%s6309 + $0x228] sm:$0xff]
        %v6380 = vld [vmem:[%s6309 + $0x230] sm:$0xff]
        %v6381 = vld [vmem:[%s6309 + $0x238] sm:$0xff]
        %v6382 = vld [vmem:[%s6309 + $0x240] sm:$0xff]
        %v6383 = vld [vmem:[%s6309 + $0x248] sm:$0xff]
        %v6384 = vld [vmem:[%s6309 + $0x250] sm:$0xff]
        %v6385 = vld [vmem:[%s6309 + $0x258] sm:$0xff]
        %v6386 = vld [vmem:[%s6309 + $0x260] sm:$0xff]
        %v6387 = vld [vmem:[%s6309 + $0x268] sm:$0xff]
        %v6388 = vld [vmem:[%s6309 + $0x270] sm:$0xff]
        %v6389 = vld [vmem:[%s6309 + $0x278] sm:$0xff]
        %v6390 = vld [vmem:[%s6309 + $0x280] sm:$0xff]
        %v6391 = vld [vmem:[%s6309 + $0x288] sm:$0xff]
        %v6392 = vld [vmem:[%s6309 + $0x290] sm:$0xff]
        %v6393 = vld [vmem:[%s6309 + $0x298] sm:$0xff]
        %v6394 = vld [vmem:[%s6309 + $0x2a0] sm:$0xff]
        %v6395 = vld [vmem:[%s6309 + $0x2a8] sm:$0xff]
        %v6396 = vld [vmem:[%s6309 + $0x2b0] sm:$0xff]
        %v6397 = vld [vmem:[%s6309 + $0x2b8] sm:$0xff]
        %v6398 = vld [vmem:[%s6309 + $0x2c0] sm:$0xff]
        %v6399 = vld [vmem:[%s6309 + $0x2c8] sm:$0xff]
        %v6400 = vld [vmem:[%s6309 + $0x2d0] sm:$0xff]
        %v6401 = vld [vmem:[%s6309 + $0x2d8] sm:$0xff]
        %v6402 = vld [vmem:[%s6309 + $0x2e0] sm:$0xff]
        %v6403 = vld [vmem:[%s6309 + $0x2e8] sm:$0xff]
        %v6404 = vld [vmem:[%s6309 + $0x2f0] sm:$0xff]
        %v6405 = vld [vmem:[%s6309 + $0x2f8] sm:$0xff]
        %v6502 = vunpack.c.l.b16 %v6310
        %v6503 = vunpack.c.h.b16 %v6310
        %v6504 = vunpack.c.l.b16 %v6311
        %v6505 = vunpack.c.h.b16 %v6311
        %v6506 = vunpack.c.l.b16 %v6312
        %v6507 = vunpack.c.h.b16 %v6312
        %v6508 = vunpack.c.l.b16 %v6313
        %v6509 = vunpack.c.h.b16 %v6313
        %v6510 = vunpack.c.l.b16 %v6314
        %v6511 = vunpack.c.h.b16 %v6314
        %v6512 = vunpack.c.l.b16 %v6315
        %v6513 = vunpack.c.h.b16 %v6315
        %v6514 = vunpack.c.l.b16 %v6316
        %v6515 = vunpack.c.h.b16 %v6316
        %v6516 = vunpack.c.l.b16 %v6317
        %v6517 = vunpack.c.h.b16 %v6317
        %v6518 = vunpack.c.l.b16 %v6318
        %v6519 = vunpack.c.h.b16 %v6318
        %v6520 = vunpack.c.l.b16 %v6319
        %v6521 = vunpack.c.h.b16 %v6319
        %v6522 = vunpack.c.l.b16 %v6320
        %v6523 = vunpack.c.h.b16 %v6320
        %v6524 = vunpack.c.l.b16 %v6321
        %v6525 = vunpack.c.h.b16 %v6321
        %v6526 = vunpack.c.l.b16 %v6322
        %v6527 = vunpack.c.h.b16 %v6322
        %v6528 = vunpack.c.l.b16 %v6323
        %v6529 = vunpack.c.h.b16 %v6323
        %v6530 = vunpack.c.l.b16 %v6324
        %v6531 = vunpack.c.h.b16 %v6324
        %v6532 = vunpack.c.l.b16 %v6325
        %v6533 = vunpack.c.h.b16 %v6325
        %v6534 = vunpack.c.l.b16 %v6326
        %v6535 = vunpack.c.h.b16 %v6326
        %v6536 = vunpack.c.l.b16 %v6327
        %v6537 = vunpack.c.h.b16 %v6327
        %v6538 = vunpack.c.l.b16 %v6328
        %v6539 = vunpack.c.h.b16 %v6328
        %v6540 = vunpack.c.l.b16 %v6329
        %v6541 = vunpack.c.h.b16 %v6329
        %v6542 = vunpack.c.l.b16 %v6330
        %v6543 = vunpack.c.h.b16 %v6330
        %v6544 = vunpack.c.l.b16 %v6331
        %v6545 = vunpack.c.h.b16 %v6331
        %v6546 = vunpack.c.l.b16 %v6332
        %v6547 = vunpack.c.h.b16 %v6332
        %v6548 = vunpack.c.l.b16 %v6333
        %v6549 = vunpack.c.h.b16 %v6333
        %v6550 = vunpack.c.l.b16 %v6334
        %v6551 = vunpack.c.h.b16 %v6334
        %v6552 = vunpack.c.l.b16 %v6335
        %v6553 = vunpack.c.h.b16 %v6335
        %v6554 = vunpack.c.l.b16 %v6336
        %v6555 = vunpack.c.h.b16 %v6336
        %v6556 = vunpack.c.l.b16 %v6337
        %v6557 = vunpack.c.h.b16 %v6337
        %v6558 = vunpack.c.l.b16 %v6338
        %v6559 = vunpack.c.h.b16 %v6338
        %v6560 = vunpack.c.l.b16 %v6339
        %v6561 = vunpack.c.h.b16 %v6339
        %v6562 = vunpack.c.l.b16 %v6340
        %v6563 = vunpack.c.h.b16 %v6340
        %v6564 = vunpack.c.l.b16 %v6341
        %v6565 = vunpack.c.h.b16 %v6341
        %v6566 = vunpack.c.l.b16 %v6342
        %v6567 = vunpack.c.h.b16 %v6342
        %v6568 = vunpack.c.l.b16 %v6343
        %v6569 = vunpack.c.h.b16 %v6343
        %v6570 = vunpack.c.l.b16 %v6344
        %v6571 = vunpack.c.h.b16 %v6344
        %v6572 = vunpack.c.l.b16 %v6345
        %v6573 = vunpack.c.h.b16 %v6345
        %v6574 = vunpack.c.l.b16 %v6346
        %v6575 = vunpack.c.h.b16 %v6346
        %v6576 = vunpack.c.l.b16 %v6347
        %v6577 = vunpack.c.h.b16 %v6347
        %v6578 = vunpack.c.l.b16 %v6348
        %v6579 = vunpack.c.h.b16 %v6348
        %v6580 = vunpack.c.l.b16 %v6349
        %v6581 = vunpack.c.h.b16 %v6349
        %v6582 = vunpack.c.l.b16 %v6350
        %v6583 = vunpack.c.h.b16 %v6350
        %v6584 = vunpack.c.l.b16 %v6351
        %v6585 = vunpack.c.h.b16 %v6351
        %v6586 = vunpack.c.l.b16 %v6352
        %v6587 = vunpack.c.h.b16 %v6352
        %v6588 = vunpack.c.l.b16 %v6353
        %v6589 = vunpack.c.h.b16 %v6353
        %v6590 = vunpack.c.l.b16 %v6354
        %v6591 = vunpack.c.h.b16 %v6354
        %v6592 = vunpack.c.l.b16 %v6355
        %v6593 = vunpack.c.h.b16 %v6355
        %v6594 = vunpack.c.l.b16 %v6356
        %v6595 = vunpack.c.h.b16 %v6356
        %v6596 = vunpack.c.l.b16 %v6357
        %v6597 = vunpack.c.h.b16 %v6357
        %v6598 = vunpack.c.l.b16 %v6358
        %v6599 = vunpack.c.h.b16 %v6358
        %v6600 = vunpack.c.l.b16 %v6359
        %v6601 = vunpack.c.h.b16 %v6359
        %v6602 = vunpack.c.l.b16 %v6360
        %v6603 = vunpack.c.h.b16 %v6360
        %v6604 = vunpack.c.l.b16 %v6361
        %v6605 = vunpack.c.h.b16 %v6361
        %v6606 = vunpack.c.l.b16 %v6362
        %v6607 = vunpack.c.h.b16 %v6362
        %v6608 = vunpack.c.l.b16 %v6363
        %v6609 = vunpack.c.h.b16 %v6363
        %v6610 = vunpack.c.l.b16 %v6364
        %v6611 = vunpack.c.h.b16 %v6364
        %v6612 = vunpack.c.l.b16 %v6365
        %v6613 = vunpack.c.h.b16 %v6365
        %v6614 = vunpack.c.l.b16 %v6366
        %v6615 = vunpack.c.h.b16 %v6366
        %v6616 = vunpack.c.l.b16 %v6367
        %v6617 = vunpack.c.h.b16 %v6367
        %v6618 = vunpack.c.l.b16 %v6368
        %v6619 = vunpack.c.h.b16 %v6368
        %v6620 = vunpack.c.l.b16 %v6369
        %v6621 = vunpack.c.h.b16 %v6369
        %v6622 = vunpack.c.l.b16 %v6370
        %v6623 = vunpack.c.h.b16 %v6370
        %v6624 = vunpack.c.l.b16 %v6371
        %v6625 = vunpack.c.h.b16 %v6371
        %v6626 = vunpack.c.l.b16 %v6372
        %v6627 = vunpack.c.h.b16 %v6372
        %v6628 = vunpack.c.l.b16 %v6373
        %v6629 = vunpack.c.h.b16 %v6373
        %v6630 = vunpack.c.l.b16 %v6374
        %v6631 = vunpack.c.h.b16 %v6374
        %v6632 = vunpack.c.l.b16 %v6375
        %v6633 = vunpack.c.h.b16 %v6375
        %v6634 = vunpack.c.l.b16 %v6376
        %v6635 = vunpack.c.h.b16 %v6376
        %v6636 = vunpack.c.l.b16 %v6377
        %v6637 = vunpack.c.h.b16 %v6377
        %v6638 = vunpack.c.l.b16 %v6378
        %v6639 = vunpack.c.h.b16 %v6378
        %v6640 = vunpack.c.l.b16 %v6379
        %v6641 = vunpack.c.h.b16 %v6379
        %v6642 = vunpack.c.l.b16 %v6380
        %v6643 = vunpack.c.h.b16 %v6380
        %v6644 = vunpack.c.l.b16 %v6381
        %v6645 = vunpack.c.h.b16 %v6381
        %v6646 = vunpack.c.l.b16 %v6382
        %v6647 = vunpack.c.h.b16 %v6382
        %v6648 = vunpack.c.l.b16 %v6383
        %v6649 = vunpack.c.h.b16 %v6383
        %v6650 = vunpack.c.l.b16 %v6384
        %v6651 = vunpack.c.h.b16 %v6384
        %v6652 = vunpack.c.l.b16 %v6385
        %v6653 = vunpack.c.h.b16 %v6385
        %v6654 = vunpack.c.l.b16 %v6386
        %v6655 = vunpack.c.h.b16 %v6386
        %v6656 = vunpack.c.l.b16 %v6387
        %v6657 = vunpack.c.h.b16 %v6387
        %v6658 = vunpack.c.l.b16 %v6388
        %v6659 = vunpack.c.h.b16 %v6388
        %v6660 = vunpack.c.l.b16 %v6389
        %v6661 = vunpack.c.h.b16 %v6389
        %v6662 = vunpack.c.l.b16 %v6390
        %v6663 = vunpack.c.h.b16 %v6390
        %v6664 = vunpack.c.l.b16 %v6391
        %v6665 = vunpack.c.h.b16 %v6391
        %v6666 = vunpack.c.l.b16 %v6392
        %v6667 = vunpack.c.h.b16 %v6392
        %v6668 = vunpack.c.l.b16 %v6393
        %v6669 = vunpack.c.h.b16 %v6393
        %v6670 = vunpack.c.l.b16 %v6394
        %v6671 = vunpack.c.h.b16 %v6394
        %v6672 = vunpack.c.l.b16 %v6395
        %v6673 = vunpack.c.h.b16 %v6395
        %v6674 = vunpack.c.l.b16 %v6396
        %v6675 = vunpack.c.h.b16 %v6396
        %v6676 = vunpack.c.l.b16 %v6397
        %v6677 = vunpack.c.h.b16 %v6397
        %v6678 = vunpack.c.l.b16 %v6398
        %v6679 = vunpack.c.h.b16 %v6398
        %v6680 = vunpack.c.l.b16 %v6399
        %v6681 = vunpack.c.h.b16 %v6399
        %v6682 = vunpack.c.l.b16 %v6400
        %v6683 = vunpack.c.h.b16 %v6400
        %v6684 = vunpack.c.l.b16 %v6401
        %v6685 = vunpack.c.h.b16 %v6401
        %v6686 = vunpack.c.l.b16 %v6402
        %v6687 = vunpack.c.h.b16 %v6402
        %v6688 = vunpack.c.l.b16 %v6403
        %v6689 = vunpack.c.h.b16 %v6403
        %v6690 = vunpack.c.l.b16 %v6404
        %v6691 = vunpack.c.h.b16 %v6404
        %v6692 = vunpack.c.l.b16 %v6405
        %v6693 = vunpack.c.h.b16 %v6405
        %v6694 = vpack.c.b16 %v6504, %v6502
        %v6695 = vpack.c.b16 %v6505, %v6503
        %v6696 = vpack.c.b16 %v6508, %v6506
        %v6697 = vpack.c.b16 %v6509, %v6507
        %v6698 = vpack.c.b16 %v6512, %v6510
        %v6699 = vpack.c.b16 %v6513, %v6511
        %v6700 = vpack.c.b16 %v6516, %v6514
        %v6701 = vpack.c.b16 %v6517, %v6515
        %v6702 = vpack.c.b16 %v6520, %v6518
        %v6703 = vpack.c.b16 %v6521, %v6519
        %v6704 = vpack.c.b16 %v6524, %v6522
        %v6705 = vpack.c.b16 %v6525, %v6523
        %v6706 = vpack.c.b16 %v6528, %v6526
        %v6707 = vpack.c.b16 %v6529, %v6527
        %v6708 = vpack.c.b16 %v6532, %v6530
        %v6709 = vpack.c.b16 %v6533, %v6531
        %v6710 = vpack.c.b16 %v6536, %v6534
        %v6711 = vpack.c.b16 %v6537, %v6535
        %v6712 = vpack.c.b16 %v6540, %v6538
        %v6713 = vpack.c.b16 %v6541, %v6539
        %v6714 = vpack.c.b16 %v6544, %v6542
        %v6715 = vpack.c.b16 %v6545, %v6543
        %v6716 = vpack.c.b16 %v6548, %v6546
        %v6717 = vpack.c.b16 %v6549, %v6547
        %v6718 = vpack.c.b16 %v6552, %v6550
        %v6719 = vpack.c.b16 %v6553, %v6551
        %v6720 = vpack.c.b16 %v6556, %v6554
        %v6721 = vpack.c.b16 %v6557, %v6555
        %v6722 = vpack.c.b16 %v6560, %v6558
        %v6723 = vpack.c.b16 %v6561, %v6559
        %v6724 = vpack.c.b16 %v6564, %v6562
        %v6725 = vpack.c.b16 %v6565, %v6563
        %v6726 = vpack.c.b16 %v6568, %v6566
        %v6727 = vpack.c.b16 %v6569, %v6567
        %v6728 = vpack.c.b16 %v6572, %v6570
        %v6729 = vpack.c.b16 %v6573, %v6571
        %v6730 = vpack.c.b16 %v6576, %v6574
        %v6731 = vpack.c.b16 %v6577, %v6575
        %v6732 = vpack.c.b16 %v6580, %v6578
        %v6733 = vpack.c.b16 %v6581, %v6579
        %v6734 = vpack.c.b16 %v6584, %v6582
        %v6735 = vpack.c.b16 %v6585, %v6583
        %v6736 = vpack.c.b16 %v6588, %v6586
        %v6737 = vpack.c.b16 %v6589, %v6587
        %v6738 = vpack.c.b16 %v6592, %v6590
        %v6739 = vpack.c.b16 %v6593, %v6591
        %v6740 = vpack.c.b16 %v6596, %v6594
        %v6741 = vpack.c.b16 %v6597, %v6595
        %v6742 = vpack.c.b16 %v6600, %v6598
        %v6743 = vpack.c.b16 %v6601, %v6599
        %v6744 = vpack.c.b16 %v6604, %v6602
        %v6745 = vpack.c.b16 %v6605, %v6603
        %v6746 = vpack.c.b16 %v6608, %v6606
        %v6747 = vpack.c.b16 %v6609, %v6607
        %v6748 = vpack.c.b16 %v6612, %v6610
        %v6749 = vpack.c.b16 %v6613, %v6611
        %v6750 = vpack.c.b16 %v6616, %v6614
        %v6751 = vpack.c.b16 %v6617, %v6615
        %v6752 = vpack.c.b16 %v6620, %v6618
        %v6753 = vpack.c.b16 %v6621, %v6619
        %v6754 = vpack.c.b16 %v6624, %v6622
        %v6755 = vpack.c.b16 %v6625, %v6623
        %v6756 = vpack.c.b16 %v6628, %v6626
        %v6757 = vpack.c.b16 %v6629, %v6627
        %v6758 = vpack.c.b16 %v6632, %v6630
        %v6759 = vpack.c.b16 %v6633, %v6631
        %v6760 = vpack.c.b16 %v6636, %v6634
        %v6761 = vpack.c.b16 %v6637, %v6635
        %v6762 = vpack.c.b16 %v6640, %v6638
        %v6763 = vpack.c.b16 %v6641, %v6639
        %v6764 = vpack.c.b16 %v6644, %v6642
        %v6765 = vpack.c.b16 %v6645, %v6643
        %v6766 = vpack.c.b16 %v6648, %v6646
        %v6767 = vpack.c.b16 %v6649, %v6647
        %v6768 = vpack.c.b16 %v6652, %v6650
        %v6769 = vpack.c.b16 %v6653, %v6651
        %v6770 = vpack.c.b16 %v6656, %v6654
        %v6771 = vpack.c.b16 %v6657, %v6655
        %v6772 = vpack.c.b16 %v6660, %v6658
        %v6773 = vpack.c.b16 %v6661, %v6659
        %v6774 = vpack.c.b16 %v6664, %v6662
        %v6775 = vpack.c.b16 %v6665, %v6663
        %v6776 = vpack.c.b16 %v6668, %v6666
        %v6777 = vpack.c.b16 %v6669, %v6667
        %v6778 = vpack.c.b16 %v6672, %v6670
        %v6779 = vpack.c.b16 %v6673, %v6671
        %v6780 = vpack.c.b16 %v6676, %v6674
        %v6781 = vpack.c.b16 %v6677, %v6675
        %v6782 = vpack.c.b16 %v6680, %v6678
        %v6783 = vpack.c.b16 %v6681, %v6679
        %v6784 = vpack.c.b16 %v6684, %v6682
        %v6785 = vpack.c.b16 %v6685, %v6683
        %v6786 = vpack.c.b16 %v6688, %v6686
        %v6787 = vpack.c.b16 %v6689, %v6687
        %v6788 = vpack.c.b16 %v6692, %v6690
        %v6789 = vpack.c.b16 %v6693, %v6691
        %6886 = vmatpush.bf16.msra.mxu0 %v6708
        %6887 = vmatpush.bf16.msra.mxu0 %v6706
        %6888 = vmatpush.bf16.msra.mxu0 %v6704
        %6889 = vmatpush.bf16.msra.mxu0 %v6702
        %6890 = vmatpush.bf16.msra.mxu0 %v6700
        %6891 = vmatpush.bf16.msra.mxu0 %v6698
        %6892 = vmatpush.bf16.msra.mxu0 %v6696
        %6893 = vmatpush.bf16.msra.mxu0 %v6694
        %6894 = vmatmul.bf16.gmra.mxu0 %v6285
        %v6895 = vpop.f32.mrf.mxu0
        %v6896 = vadd.f32 0.0, %v6895
        %v6897 = vpop.f32.mrf.mxu0
        %v6898 = vadd.f32 0.0, %v6897
        %6899 = vmatmul.bf16.gmra.mxu0 %v6291
        %v6900 = vpop.f32.mrf.mxu0
        %v6901 = vadd.f32 0.0, %v6900
        %v6902 = vpop.f32.mrf.mxu0
        %v6903 = vadd.f32 0.0, %v6902
        %6904 = vmatmul.bf16.gmra.mxu0 %v6297
        %v6905 = vpop.f32.mrf.mxu0
        %v6906 = vadd.f32 0.0, %v6905
        %v6907 = vpop.f32.mrf.mxu0
        %v6908 = vadd.f32 0.0, %v6907
        %6909 = vmatmul.bf16.gmra.mxu0 %v6303
        %v6910 = vpop.f32.mrf.mxu0
        %v6911 = vadd.f32 0.0, %v6910
        %v6912 = vpop.f32.mrf.mxu0
        %v6913 = vadd.f32 0.0, %v6912
        %6914 = vdwg.mxu0
        %6915 = vmatpush.bf16.msra.mxu0 %v6724
        %6916 = vmatpush.bf16.msra.mxu0 %v6722
        %6917 = vmatpush.bf16.msra.mxu0 %v6720
        %6918 = vmatpush.bf16.msra.mxu0 %v6718
        %6919 = vmatpush.bf16.msra.mxu0 %v6716
        %6920 = vmatpush.bf16.msra.mxu0 %v6714
        %6921 = vmatpush.bf16.msra.mxu0 %v6712
        %6922 = vmatpush.bf16.msra.mxu0 %v6710
        %6923 = vmatmul.bf16.gmra.mxu0 %v6286
        %v6924 = vpop.f32.mrf.mxu0
        %v6925 = vadd.f32 %v6896, %v6924
        %v6926 = vpop.f32.mrf.mxu0
        %v6927 = vadd.f32 %v6898, %v6926
        %6928 = vmatmul.bf16.gmra.mxu0 %v6292
        %v6929 = vpop.f32.mrf.mxu0
        %v6930 = vadd.f32 %v6901, %v6929
        %v6931 = vpop.f32.mrf.mxu0
        %v6932 = vadd.f32 %v6903, %v6931
        %6933 = vmatmul.bf16.gmra.mxu0 %v6298
        %v6934 = vpop.f32.mrf.mxu0
        %v6935 = vadd.f32 %v6906, %v6934
        %v6936 = vpop.f32.mrf.mxu0
        %v6937 = vadd.f32 %v6908, %v6936
        %6938 = vmatmul.bf16.gmra.mxu0 %v6304
        %v6939 = vpop.f32.mrf.mxu0
        %v6940 = vadd.f32 %v6911, %v6939
        %v6941 = vpop.f32.mrf.mxu0
        %v6942 = vadd.f32 %v6913, %v6941
        %6943 = vdwg.mxu0
        %6944 = vmatpush.bf16.msra.mxu0 %v6740
        %6945 = vmatpush.bf16.msra.mxu0 %v6738
        %6946 = vmatpush.bf16.msra.mxu0 %v6736
        %6947 = vmatpush.bf16.msra.mxu0 %v6734
        %6948 = vmatpush.bf16.msra.mxu0 %v6732
        %6949 = vmatpush.bf16.msra.mxu0 %v6730
        %6950 = vmatpush.bf16.msra.mxu0 %v6728
        %6951 = vmatpush.bf16.msra.mxu0 %v6726
        %6952 = vmatmul.bf16.gmra.mxu0 %v6287
        %v6953 = vpop.f32.mrf.mxu0
        %v6954 = vadd.f32 %v6925, %v6953
        %v6955 = vpop.f32.mrf.mxu0
        %v6956 = vadd.f32 %v6927, %v6955
        %6957 = vmatmul.bf16.gmra.mxu0 %v6293
        %v6958 = vpop.f32.mrf.mxu0
        %v6959 = vadd.f32 %v6930, %v6958
        %v6960 = vpop.f32.mrf.mxu0
        %v6961 = vadd.f32 %v6932, %v6960
        %6962 = vmatmul.bf16.gmra.mxu0 %v6299
        %v6963 = vpop.f32.mrf.mxu0
        %v6964 = vadd.f32 %v6935, %v6963
        %v6965 = vpop.f32.mrf.mxu0
        %v6966 = vadd.f32 %v6937, %v6965
        %6967 = vmatmul.bf16.gmra.mxu0 %v6305
        %v6968 = vpop.f32.mrf.mxu0
        %v6969 = vadd.f32 %v6940, %v6968
        %v6970 = vpop.f32.mrf.mxu0
        %v6971 = vadd.f32 %v6942, %v6970
        %6972 = vdwg.mxu0
        %6973 = vmatpush.bf16.msra.mxu0 %v6756
        %6974 = vmatpush.bf16.msra.mxu0 %v6754
        %6975 = vmatpush.bf16.msra.mxu0 %v6752
        %6976 = vmatpush.bf16.msra.mxu0 %v6750
        %6977 = vmatpush.bf16.msra.mxu0 %v6748
        %6978 = vmatpush.bf16.msra.mxu0 %v6746
        %6979 = vmatpush.bf16.msra.mxu0 %v6744
        %6980 = vmatpush.bf16.msra.mxu0 %v6742
        %6981 = vmatmul.bf16.gmra.mxu0 %v6288
        %v6982 = vpop.f32.mrf.mxu0
        %v6983 = vadd.f32 %v6954, %v6982
        %v6984 = vpop.f32.mrf.mxu0
        %v6985 = vadd.f32 %v6956, %v6984
        %6986 = vmatmul.bf16.gmra.mxu0 %v6294
        %v6987 = vpop.f32.mrf.mxu0
        %v6988 = vadd.f32 %v6959, %v6987
        %v6989 = vpop.f32.mrf.mxu0
        %v6990 = vadd.f32 %v6961, %v6989
        %6991 = vmatmul.bf16.gmra.mxu0 %v6300
        %v6992 = vpop.f32.mrf.mxu0
        %v6993 = vadd.f32 %v6964, %v6992
        %v6994 = vpop.f32.mrf.mxu0
        %v6995 = vadd.f32 %v6966, %v6994
        %6996 = vmatmul.bf16.gmra.mxu0 %v6306
        %v6997 = vpop.f32.mrf.mxu0
        %v6998 = vadd.f32 %v6969, %v6997
        %v6999 = vpop.f32.mrf.mxu0
        %v7000 = vadd.f32 %v6971, %v6999
        %7001 = vdwg.mxu0
        %7002 = vmatpush.bf16.msra.mxu0 %v6772
        %7003 = vmatpush.bf16.msra.mxu0 %v6770
        %7004 = vmatpush.bf16.msra.mxu0 %v6768
        %7005 = vmatpush.bf16.msra.mxu0 %v6766
        %7006 = vmatpush.bf16.msra.mxu0 %v6764
        %7007 = vmatpush.bf16.msra.mxu0 %v6762
        %7008 = vmatpush.bf16.msra.mxu0 %v6760
        %7009 = vmatpush.bf16.msra.mxu0 %v6758
        %7010 = vmatmul.bf16.gmra.mxu0 %v6289
        %v7011 = vpop.f32.mrf.mxu0
        %v7012 = vadd.f32 %v6983, %v7011
        %v7013 = vpop.f32.mrf.mxu0
        %v7014 = vadd.f32 %v6985, %v7013
        %7015 = vmatmul.bf16.gmra.mxu0 %v6295
        %v7016 = vpop.f32.mrf.mxu0
        %v7017 = vadd.f32 %v6988, %v7016
        %v7018 = vpop.f32.mrf.mxu0
        %v7019 = vadd.f32 %v6990, %v7018
        %7020 = vmatmul.bf16.gmra.mxu0 %v6301
        %v7021 = vpop.f32.mrf.mxu0
        %v7022 = vadd.f32 %v6993, %v7021
        %v7023 = vpop.f32.mrf.mxu0
        %v7024 = vadd.f32 %v6995, %v7023
        %7025 = vmatmul.bf16.gmra.mxu0 %v6307
        %v7026 = vpop.f32.mrf.mxu0
        %v7027 = vadd.f32 %v6998, %v7026
        %v7028 = vpop.f32.mrf.mxu0
        %v7029 = vadd.f32 %v7000, %v7028
        %7030 = vdwg.mxu0
        %7031 = vmatpush.bf16.msra.mxu0 %v6788
        %7032 = vmatpush.bf16.msra.mxu0 %v6786
        %7033 = vmatpush.bf16.msra.mxu0 %v6784
        %7034 = vmatpush.bf16.msra.mxu0 %v6782
        %7035 = vmatpush.bf16.msra.mxu0 %v6780
        %7036 = vmatpush.bf16.msra.mxu0 %v6778
        %7037 = vmatpush.bf16.msra.mxu0 %v6776
        %7038 = vmatpush.bf16.msra.mxu0 %v6774
        %7039 = vmatmul.bf16.gmra.mxu0 %v6290
        %v7040 = vpop.f32.mrf.mxu0
        %v7041 = vadd.f32 %v7012, %v7040
        %v7042 = vpop.f32.mrf.mxu0
        %v7043 = vadd.f32 %v7014, %v7042
        %7044 = vmatmul.bf16.gmra.mxu0 %v6296
        %v7045 = vpop.f32.mrf.mxu0
        %v7046 = vadd.f32 %v7017, %v7045
        %v7047 = vpop.f32.mrf.mxu0
        %v7048 = vadd.f32 %v7019, %v7047
        %7049 = vmatmul.bf16.gmra.mxu0 %v6302
        %v7050 = vpop.f32.mrf.mxu0
        %v7051 = vadd.f32 %v7022, %v7050
        %v7052 = vpop.f32.mrf.mxu0
        %v7053 = vadd.f32 %v7024, %v7052
        %7054 = vmatmul.bf16.gmra.mxu0 %v6308
        %v7055 = vpop.f32.mrf.mxu0
        %v7056 = vadd.f32 %v7027, %v7055
        %v7057 = vpop.f32.mrf.mxu0
        %v7058 = vadd.f32 %v7029, %v7057
        %7059 = vdwg.mxu0
        %7060 = vmatpush.bf16.msra.mxu0 %v6709
        %7061 = vmatpush.bf16.msra.mxu0 %v6707
        %7062 = vmatpush.bf16.msra.mxu0 %v6705
        %7063 = vmatpush.bf16.msra.mxu0 %v6703
        %7064 = vmatpush.bf16.msra.mxu0 %v6701
        %7065 = vmatpush.bf16.msra.mxu0 %v6699
        %7066 = vmatpush.bf16.msra.mxu0 %v6697
        %7067 = vmatpush.bf16.msra.mxu0 %v6695
        %7068 = vmatmul.bf16.gmra.mxu0 %v6285
        %v7069 = vpop.f32.mrf.mxu0
        %v7070 = vadd.f32 0.0, %v7069
        %v7071 = vpop.f32.mrf.mxu0
        %v7072 = vadd.f32 0.0, %v7071
        %7073 = vmatmul.bf16.gmra.mxu0 %v6291
        %v7074 = vpop.f32.mrf.mxu0
        %v7075 = vadd.f32 0.0, %v7074
        %v7076 = vpop.f32.mrf.mxu0
        %v7077 = vadd.f32 0.0, %v7076
        %7078 = vmatmul.bf16.gmra.mxu0 %v6297
        %v7079 = vpop.f32.mrf.mxu0
        %v7080 = vadd.f32 0.0, %v7079
        %v7081 = vpop.f32.mrf.mxu0
        %v7082 = vadd.f32 0.0, %v7081
        %7083 = vmatmul.bf16.gmra.mxu0 %v6303
        %v7084 = vpop.f32.mrf.mxu0
        %v7085 = vadd.f32 0.0, %v7084
        %v7086 = vpop.f32.mrf.mxu0
        %v7087 = vadd.f32 0.0, %v7086
        %7088 = vdwg.mxu0
        %7089 = vmatpush.bf16.msra.mxu0 %v6725
        %7090 = vmatpush.bf16.msra.mxu0 %v6723
        %7091 = vmatpush.bf16.msra.mxu0 %v6721
        %7092 = vmatpush.bf16.msra.mxu0 %v6719
        %7093 = vmatpush.bf16.msra.mxu0 %v6717
        %7094 = vmatpush.bf16.msra.mxu0 %v6715
        %7095 = vmatpush.bf16.msra.mxu0 %v6713
        %7096 = vmatpush.bf16.msra.mxu0 %v6711
        %7097 = vmatmul.bf16.gmra.mxu0 %v6286
        %v7098 = vpop.f32.mrf.mxu0
        %v7099 = vadd.f32 %v7070, %v7098
        %v7100 = vpop.f32.mrf.mxu0
        %v7101 = vadd.f32 %v7072, %v7100
        %7102 = vmatmul.bf16.gmra.mxu0 %v6292
        %v7103 = vpop.f32.mrf.mxu0
        %v7104 = vadd.f32 %v7075, %v7103
        %v7105 = vpop.f32.mrf.mxu0
        %v7106 = vadd.f32 %v7077, %v7105
        %7107 = vmatmul.bf16.gmra.mxu0 %v6298
        %v7108 = vpop.f32.mrf.mxu0
        %v7109 = vadd.f32 %v7080, %v7108
        %v7110 = vpop.f32.mrf.mxu0
        %v7111 = vadd.f32 %v7082, %v7110
        %7112 = vmatmul.bf16.gmra.mxu0 %v6304
        %v7113 = vpop.f32.mrf.mxu0
        %v7114 = vadd.f32 %v7085, %v7113
        %v7115 = vpop.f32.mrf.mxu0
        %v7116 = vadd.f32 %v7087, %v7115
        %7117 = vdwg.mxu0
        %7118 = vmatpush.bf16.msra.mxu0 %v6741
        %7119 = vmatpush.bf16.msra.mxu0 %v6739
        %7120 = vmatpush.bf16.msra.mxu0 %v6737
        %7121 = vmatpush.bf16.msra.mxu0 %v6735
        %7122 = vmatpush.bf16.msra.mxu0 %v6733
        %7123 = vmatpush.bf16.msra.mxu0 %v6731
        %7124 = vmatpush.bf16.msra.mxu0 %v6729
        %7125 = vmatpush.bf16.msra.mxu0 %v6727
        %7126 = vmatmul.bf16.gmra.mxu0 %v6287
        %v7127 = vpop.f32.mrf.mxu0
        %v7128 = vadd.f32 %v7099, %v7127
        %v7129 = vpop.f32.mrf.mxu0
        %v7130 = vadd.f32 %v7101, %v7129
        %7131 = vmatmul.bf16.gmra.mxu0 %v6293
        %v7132 = vpop.f32.mrf.mxu0
        %v7133 = vadd.f32 %v7104, %v7132
        %v7134 = vpop.f32.mrf.mxu0
        %v7135 = vadd.f32 %v7106, %v7134
        %7136 = vmatmul.bf16.gmra.mxu0 %v6299
        %v7137 = vpop.f32.mrf.mxu0
        %v7138 = vadd.f32 %v7109, %v7137
        %v7139 = vpop.f32.mrf.mxu0
        %v7140 = vadd.f32 %v7111, %v7139
        %7141 = vmatmul.bf16.gmra.mxu0 %v6305
        %v7142 = vpop.f32.mrf.mxu0
        %v7143 = vadd.f32 %v7114, %v7142
        %v7144 = vpop.f32.mrf.mxu0
        %v7145 = vadd.f32 %v7116, %v7144
        %7146 = vdwg.mxu0
        %7147 = vmatpush.bf16.msra.mxu0 %v6757
        %7148 = vmatpush.bf16.msra.mxu0 %v6755
        %7149 = vmatpush.bf16.msra.mxu0 %v6753
        %7150 = vmatpush.bf16.msra.mxu0 %v6751
        %7151 = vmatpush.bf16.msra.mxu0 %v6749
        %7152 = vmatpush.bf16.msra.mxu0 %v6747
        %7153 = vmatpush.bf16.msra.mxu0 %v6745
        %7154 = vmatpush.bf16.msra.mxu0 %v6743
        %7155 = vmatmul.bf16.gmra.mxu0 %v6288
        %v7156 = vpop.f32.mrf.mxu0
        %v7157 = vadd.f32 %v7128, %v7156
        %v7158 = vpop.f32.mrf.mxu0
        %v7159 = vadd.f32 %v7130, %v7158
        %7160 = vmatmul.bf16.gmra.mxu0 %v6294
        %v7161 = vpop.f32.mrf.mxu0
        %v7162 = vadd.f32 %v7133, %v7161
        %v7163 = vpop.f32.mrf.mxu0
        %v7164 = vadd.f32 %v7135, %v7163
        %7165 = vmatmul.bf16.gmra.mxu0 %v6300
        %v7166 = vpop.f32.mrf.mxu0
        %v7167 = vadd.f32 %v7138, %v7166
        %v7168 = vpop.f32.mrf.mxu0
        %v7169 = vadd.f32 %v7140, %v7168
        %7170 = vmatmul.bf16.gmra.mxu0 %v6306
        %v7171 = vpop.f32.mrf.mxu0
        %v7172 = vadd.f32 %v7143, %v7171
        %v7173 = vpop.f32.mrf.mxu0
        %v7174 = vadd.f32 %v7145, %v7173
        %7175 = vdwg.mxu0
        %7176 = vmatpush.bf16.msra.mxu0 %v6773
        %7177 = vmatpush.bf16.msra.mxu0 %v6771
        %7178 = vmatpush.bf16.msra.mxu0 %v6769
        %7179 = vmatpush.bf16.msra.mxu0 %v6767
        %7180 = vmatpush.bf16.msra.mxu0 %v6765
        %7181 = vmatpush.bf16.msra.mxu0 %v6763
        %7182 = vmatpush.bf16.msra.mxu0 %v6761
        %7183 = vmatpush.bf16.msra.mxu0 %v6759
        %7184 = vmatmul.bf16.gmra.mxu0 %v6289
        %v7185 = vpop.f32.mrf.mxu0
        %v7186 = vadd.f32 %v7157, %v7185
        %v7187 = vpop.f32.mrf.mxu0
        %v7188 = vadd.f32 %v7159, %v7187
        %7189 = vmatmul.bf16.gmra.mxu0 %v6295
        %v7190 = vpop.f32.mrf.mxu0
        %v7191 = vadd.f32 %v7162, %v7190
        %v7192 = vpop.f32.mrf.mxu0
        %v7193 = vadd.f32 %v7164, %v7192
        %7194 = vmatmul.bf16.gmra.mxu0 %v6301
        %v7195 = vpop.f32.mrf.mxu0
        %v7196 = vadd.f32 %v7167, %v7195
        %v7197 = vpop.f32.mrf.mxu0
        %v7198 = vadd.f32 %v7169, %v7197
        %7199 = vmatmul.bf16.gmra.mxu0 %v6307
        %v7200 = vpop.f32.mrf.mxu0
        %v7201 = vadd.f32 %v7172, %v7200
        %v7202 = vpop.f32.mrf.mxu0
        %v7203 = vadd.f32 %v7174, %v7202
        %7204 = vdwg.mxu0
        %7205 = vmatpush.bf16.msra.mxu0 %v6789
        %7206 = vmatpush.bf16.msra.mxu0 %v6787
        %7207 = vmatpush.bf16.msra.mxu0 %v6785
        %7208 = vmatpush.bf16.msra.mxu0 %v6783
        %7209 = vmatpush.bf16.msra.mxu0 %v6781
        %7210 = vmatpush.bf16.msra.mxu0 %v6779
        %7211 = vmatpush.bf16.msra.mxu0 %v6777
        %7212 = vmatpush.bf16.msra.mxu0 %v6775
        %7213 = vmatmul.bf16.gmra.mxu0 %v6290
        %v7214 = vpop.f32.mrf.mxu0
        %v7215 = vadd.f32 %v7186, %v7214
        %v7216 = vpop.f32.mrf.mxu0
        %v7217 = vadd.f32 %v7188, %v7216
        %7218 = vmatmul.bf16.gmra.mxu0 %v6296
        %v7219 = vpop.f32.mrf.mxu0
        %v7220 = vadd.f32 %v7191, %v7219
        %v7221 = vpop.f32.mrf.mxu0
        %v7222 = vadd.f32 %v7193, %v7221
        %7223 = vmatmul.bf16.gmra.mxu0 %v6302
        %v7224 = vpop.f32.mrf.mxu0
        %v7225 = vadd.f32 %v7196, %v7224
        %v7226 = vpop.f32.mrf.mxu0
        %v7227 = vadd.f32 %v7198, %v7226
        %7228 = vmatmul.bf16.gmra.mxu0 %v6308
        %v7229 = vpop.f32.mrf.mxu0
        %v7230 = vadd.f32 %v7201, %v7229
        %v7231 = vpop.f32.mrf.mxu0
        %v7232 = vadd.f32 %v7203, %v7231
        %7233 = vdwg.mxu0
        %v7234 = vadd.f32 %v6044, %v7041
        %v7235 = vadd.f32 %v6218, %v7215
        %v7236 = vadd.f32 %v6046, %v7043
        %v7237 = vadd.f32 %v6220, %v7217
        %v7238 = vadd.f32 %v6049, %v7046
        %v7239 = vadd.f32 %v6223, %v7220
        %v7240 = vadd.f32 %v6051, %v7048
        %v7241 = vadd.f32 %v6225, %v7222
        %v7242 = vadd.f32 %v6054, %v7051
        %v7243 = vadd.f32 %v6228, %v7225
        %v7244 = vadd.f32 %v6056, %v7053
        %v7245 = vadd.f32 %v6230, %v7227
        %v7246 = vadd.f32 %v6059, %v7056
        %v7247 = vadd.f32 %v6233, %v7230
        %v7248 = vadd.f32 %v6061, %v7058
        %v7249 = vadd.f32 %v6235, %v7232
        %v7250 = vmul.f32 %v7234, 0.1
        %v7251 = vmul.f32 %v7235, 0.1
        %v7252 = vmul.f32 %v7236, 0.1
        %v7253 = vmul.f32 %v7237, 0.1
        %v7254 = vmul.f32 %v7238, 0.1
        %v7255 = vmul.f32 %v7239, 0.1
        %v7256 = vmul.f32 %v7240, 0.1
        %v7257 = vmul.f32 %v7241, 0.1
        %v7258 = vmul.f32 %v7242, 0.1
        %v7259 = vmul.f32 %v7243, 0.1
        %v7260 = vmul.f32 %v7244, 0.1
        %v7261 = vmul.f32 %v7245, 0.1
        %v7262 = vmul.f32 %v7246, 0.1
        %v7263 = vmul.f32 %v7247, 0.1
        %v7264 = vmul.f32 %v7248, 0.1
        %v7265 = vmul.f32 %v7249, 0.1
        %v7266 = vld [vmem:[%s168] sm:$0xff]
        %v7267 = vld [vmem:[%s168 + $0x8] sm:$0xff]
        %v7268 = vld [vmem:[%s168 + $0x10] sm:$0xff]
        %v7269 = vld [vmem:[%s168 + $0x18] sm:$0xff]
        %v7270 = vld [vmem:[%s168 + $0x20] sm:$0xff]
        %v7271 = vld [vmem:[%s168 + $0x28] sm:$0xff]
        %v7272 = vld [vmem:[%s168 + $0x30] sm:$0xff]
        %v7273 = vld [vmem:[%s168 + $0x38] sm:$0xff]
        %v7274 = vld [vmem:[%s168 + $0x40] sm:$0xff]
        %v7275 = vld [vmem:[%s168 + $0x48] sm:$0xff]
        %v7276 = vld [vmem:[%s168 + $0x50] sm:$0xff]
        %v7277 = vld [vmem:[%s168 + $0x58] sm:$0xff]
        %v7278 = vld [vmem:[%s168 + $0x60] sm:$0xff]
        %v7279 = vld [vmem:[%s168 + $0x68] sm:$0xff]
        %v7280 = vld [vmem:[%s168 + $0x70] sm:$0xff]
        %v7281 = vld [vmem:[%s168 + $0x78] sm:$0xff]
        %v7282 = vadd.f32 %v7250, %v7266
        %v7283 = vadd.f32 %v7251, %v7267
        %v7284 = vadd.f32 %v7252, %v7268
        %v7285 = vadd.f32 %v7253, %v7269
        %v7286 = vadd.f32 %v7254, %v7270
        %v7287 = vadd.f32 %v7255, %v7271
        %v7288 = vadd.f32 %v7256, %v7272
        %v7289 = vadd.f32 %v7257, %v7273
        %v7290 = vadd.f32 %v7258, %v7274
        %v7291 = vadd.f32 %v7259, %v7275
        %v7292 = vadd.f32 %v7260, %v7276
        %v7293 = vadd.f32 %v7261, %v7277
        %v7294 = vadd.f32 %v7262, %v7278
        %v7295 = vadd.f32 %v7263, %v7279
        %v7296 = vadd.f32 %v7264, %v7280
        %v7297 = vadd.f32 %v7265, %v7281
        %7298 = vst [vmem:[%s163] sm:$0xff] %v7282
        %7299 = vst [vmem:[%s163 + $0x8] sm:$0xff] %v7283
        %7300 = vst [vmem:[%s163 + $0x10] sm:$0xff] %v7284
        %7301 = vst [vmem:[%s163 + $0x18] sm:$0xff] %v7285
        %7302 = vst [vmem:[%s163 + $0x20] sm:$0xff] %v7286
        %7303 = vst [vmem:[%s163 + $0x28] sm:$0xff] %v7287
        %7304 = vst [vmem:[%s163 + $0x30] sm:$0xff] %v7288
        %7305 = vst [vmem:[%s163 + $0x38] sm:$0xff] %v7289
        %7306 = vst [vmem:[%s163 + $0x40] sm:$0xff] %v7290
        %7307 = vst [vmem:[%s163 + $0x48] sm:$0xff] %v7291
        %7308 = vst [vmem:[%s163 + $0x50] sm:$0xff] %v7292
        %7309 = vst [vmem:[%s163 + $0x58] sm:$0xff] %v7293
        %7310 = vst [vmem:[%s163 + $0x60] sm:$0xff] %v7294
        %7311 = vst [vmem:[%s163 + $0x68] sm:$0xff] %v7295
        %7312 = vst [vmem:[%s163 + $0x70] sm:$0xff] %v7296
        %7313 = vst [vmem:[%s163 + $0x78] sm:$0xff] %v7297
        %s7314 = sand.u32 %s93, 1
        %s7315 = scalar_lea.sflag [#allocation5], %s7314
        %s7316 = sand.u32 %s93, 1
        %s7317 = smul.addr %s7316, 128
        %s7318 = scalar_lea.vmem [#allocation4], %s7317
        // Predicated region
        $region33: #{residual_block_forward.1} parent=31 // pred_check
          %p7319 = pneg %p103
        $region34: #{residual_block_forward.1} parent=31 // pred_check_branch
          %7321 = sbr.rel (%p7319) target = $region36
        $region35: #{residual_block_forward.1} parent=31 // pred_region
          %7323 = vsyncadd %s7315, 0
          %s7324 = smul.addr %s17, 16
          %s7325 = smul.addr %s7324, 8
          %s7326 = scalar_lea.hbm %s3, %s7325
          %s7327 = sshll.u32 %s7318, 4
          %s7328 = int_to_ptr.vmem [resolvable:$true] %s7327
          %s7329 = sshll.u32 %s7326, 4
          %s7330 = int_to_ptr.hbm [resolvable:$true] %s7329
          %7335 = dma.vmem_to_hbm [thread:$0]  %s7328, 2048, %s7330, %s7315, 256, 256, 16
        $region36: #{residual_block_forward.1} parent=31 // pred_fallthru
          _
      $region32: #{residual_block_forward.1} parent=5 // pred_fallthru
        _
      %p7336 = scmp.le.s32.totalorder 2, %s12
      // Predicated region
      $region37: #{residual_block_forward.1} parent=5 // pred_check
        %p7337 = pneg %p7336
      $region38: #{residual_block_forward.1} parent=5 // pred_check_branch
        %7339 = sbr.rel (%p7337) target = $region40
      $region39: #{residual_block_forward.1} parent=5 // pred_region
        %s7340 = ssub.s32 %s12, 2
        // Predicated region
        $region41: #{residual_block_forward.1} parent=39 // pred_check
          %p7341 = pneg %p109
        $region42: #{residual_block_forward.1} parent=39 // pred_check_branch
          %7343 = sbr.rel (%p7341) target = $region44
        $region43: #{residual_block_forward.1} parent=39 // pred_region
          %s7344 = sand.u32 %s94, 1
          %s7345 = scalar_lea.sflag [#allocation5], %s7344
          %s7346 = sand.u32 %s94, 1
          %s7347 = smul.addr %s7346, 128
          %s7348 = scalar_lea.vmem [#allocation4], %s7347
          %7350 = dma.done %s7345, 2048
        $region44: #{residual_block_forward.1} parent=39 // pred_fallthru
          _
      $region40: #{residual_block_forward.1} parent=5 // pred_fallthru
        _
    $region6: #{residual_block_forward.1} parent=1 // loop_footer
      %s16 = sadd.s32 1, %s12
    $region7: #{residual_block_forward.1} parent=1 // loop_footer_branch
      %11 = sbr.rel target = $region3
    $region8: #{residual_block_forward.1} parent=1 // loop_exit
      _
    %7351 = vsyncpa [#allocation5], 1
    %s7352 = scalar_lea.sflag [#allocation5], 1
    %7353 = vsyncpa %s7352, 1

</llo_original>
